<compile_context>
chip_gen: v7x
topology: tpu7x:2x2x1
jax: 0.10.0
libtpu: 0.0.40
codegen_flags: <defaults>
</compile_context>

<pallas_src>
import numpy as np
import jax
import jax.numpy as jnp
from jax import lax
from jax.experimental import pallas as pl
from jax.experimental.pallas import tpu as pltpu

DROPOUT_P = 0.2   # eval mode -> identity
K_SIZE = 3
LAYERS = 64
BN_EPS = 1e-5


def resblock_kernel(x_ref, w1_ref, w2_ref, s1_ref, b1_ref, s2_ref, b2_ref,
                    o_ref, pad_ref):
    """One batch tile per grid step.

    x_ref  : (B, H, W*C)     bf16, NHWC with (W, C) flattened (lane-dense)
    w*_ref : (3, W*C, W*C)   bf16 block-Toeplitz conv weights (one per kernel row)
    s*/b*  : (1, W*C)        f32 folded BN scale / bias (conv bias included)
    o_ref  : (B, H, W*C)     bf16 output
    pad_ref: (B, H+2, W*C)   bf16 VMEM scratch, H-padded activation
    """
    B, H, WC = x_ref.shape
    M = B * H

    # Re-zero only the two padding rows each step (interior is fully
    # overwritten below); unconditional so it stays correct under megacore
    # partitioning regardless of which core runs program_id 0. Cost is tiny.
    zrow = jnp.zeros((B, 1, WC), pad_ref.dtype)
    pad_ref[:, 0:1, :] = zrow
    pad_ref[:, H + 1:H + 2, :] = zrow

    x = x_ref[...]
    x2d = x.reshape(M, WC)

    # ---- conv1 ----
    # dh=1 (middle row) tap straight from registers: initializes the
    # accumulator and does not depend on the pad_ref store below.
    acc = jnp.dot(x2d, w1_ref[1], preferred_element_type=jnp.float32)
    pad_ref[:, 1:H + 1, :] = x
    acc += jnp.dot(pad_ref[:, 0:H, :].reshape(M, WC), w1_ref[0],
                   preferred_element_type=jnp.float32)
    acc += jnp.dot(pad_ref[:, 2:H + 2, :].reshape(M, WC), w1_ref[2],
                   preferred_element_type=jnp.float32)

    # BN1 (folded affine) + ReLU.  Dropout == identity (eval mode).
    y = jnp.maximum(acc * s1_ref[...] + b1_ref[...], 0.0)
    y_bf16 = y.astype(pad_ref.dtype)

    # ---- conv2 ----
    acc2 = jnp.dot(y_bf16, w2_ref[1], preferred_element_type=jnp.float32)
    pad_ref[:, 1:H + 1, :] = y_bf16.reshape(B, H, WC)
    acc2 += jnp.dot(pad_ref[:, 0:H, :].reshape(M, WC), w2_ref[0],
                    preferred_element_type=jnp.float32)
    acc2 += jnp.dot(pad_ref[:, 2:H + 2, :].reshape(M, WC), w2_ref[2],
                    preferred_element_type=jnp.float32)

    # BN2 + residual add + ReLU; full-lane (512-wide) store, bf16 writeback.
    res = x2d.astype(jnp.float32)
    out = jnp.maximum(acc2 * s2_ref[...] + b2_ref[...] + res, 0.0)
    o_ref[...] = out.reshape(B, H, WC).astype(o_ref.dtype)


def _pick_batch_tile(n, h):
    """Largest divisor of N such that M = bt*H <= 512.

    Maximizes MXU row fill (target M >= 128-256 when N allows) and minimizes
    the number of grid steps (weights are never re-fetched within a call).
    No `grid >= 2` constraint: a single step is fine (and best) for small N.
    """
    best = 1
    for bt in range(1, n + 1):
        if n % bt == 0 and bt * h <= 512:
            best = bt
    return best


def resblock_pallas_nhwc(x, w1t, w2t, s1, b1, s2, b2):
    """Primary (transpose-free) API.

    x: (N, H, W*C) bf16, lane-dense NHWC with (W, C) flattened.
    Returns (N, H, W*C) bf16.
    """
    N, H, WC = x.shape
    bt = _pick_batch_tile(N, H)
    grid_len = N // bt

    # --- megacore decision: splitting duplicates the weight fetch per core ---
    weight_bytes = 2 * K_SIZE * WC * WC * 2          # both bf16 Toeplitz weights
    act_bytes_per_step = bt * H * WC * (2 + 2)       # bf16 in + bf16 out
    parallel_worth_it = (grid_len >= 2 and
                         (grid_len * act_bytes_per_step) // 2 > weight_bytes)
    semantics = ("parallel",) if parallel_worth_it else ("arbitrary",)

    # --- VMEM budget sized from actual buffers (generous margin, <= 32 MiB) ---
    scratch_bytes = bt * (H + 2) * WC * 2
    vmem_bytes = (2 * weight_bytes            # double-buffered weight inputs
                  + 2 * act_bytes_per_step    # double-buffered in/out tiles
                  + scratch_bytes
                  + 4 * 4 * WC)               # scale / bias
    vmem_limit = min(2 * vmem_bytes + (4 << 20), 32 * 1024 * 1024)

    return pl.pallas_call(
        resblock_kernel,
        out_shape=jax.ShapeDtypeStruct((N, H, WC), jnp.bfloat16),
        grid_spec=pltpu.PrefetchScalarGridSpec(
            num_scalar_prefetch=0,
            grid=(grid_len,),
            in_specs=[
                pl.BlockSpec((bt, H, WC), lambda n: (n, 0, 0)),
                pl.BlockSpec((K_SIZE, WC, WC), lambda n: (0, 0, 0)),
                pl.BlockSpec((K_SIZE, WC, WC), lambda n: (0, 0, 0)),
                pl.BlockSpec((1, WC), lambda n: (0, 0)),
                pl.BlockSpec((1, WC), lambda n: (0, 0)),
                pl.BlockSpec((1, WC), lambda n: (0, 0)),
                pl.BlockSpec((1, WC), lambda n: (0, 0)),
            ],
            out_specs=pl.BlockSpec((bt, H, WC), lambda n: (n, 0, 0)),
            scratch_shapes=[pltpu.VMEM((bt, H + 2, WC), jnp.bfloat16)],
        ),
        compiler_params=pltpu.CompilerParams(
            dimension_semantics=semantics,
            vmem_limit_bytes=vmem_limit),
    )(x, w1t, w2t, s1, b1, s2, b2)


@jax.jit
def resblock_pallas_nchw(x_nchw, w1t, w2t, s1, b1, s2, b2):
    """Convenience wrapper matching the PyTorch NCHW/f32 interface.

    (Prefer resblock_pallas_nhwc to avoid the layout transposes + f32 cast.)
    """
    N, C, H, W = x_nchw.shape
    x = jnp.transpose(x_nchw, (0, 2, 3, 1)).reshape(N, H, W * C).astype(jnp.bfloat16)
    out = resblock_pallas_nhwc(x, w1t, w2t, s1, b1, s2, b2)   # (N, H, W*C) bf16
    return jnp.transpose(out.astype(jnp.float32).reshape(N, H, W, C), (0, 3, 1, 2))


def fold_bn(conv_bias, gamma, beta, mean, var):
    """Fold conv bias + eval-mode BN into per-channel scale / bias."""
    scale = gamma / jnp.sqrt(var + BN_EPS)
    bias = (conv_bias - mean) * scale + beta
    return scale, bias


def build_toeplitz(w_hwio, w_dim):
    """(3,3,C,C) HWIO conv weight -> (3, W*C, W*C) block-Toeplitz bf16 weight.

    T[dh][wi*C:(wi+1)*C, wo*C:(wo+1)*C] = w[dh, wi-wo+1] for 0 <= wi-wo+1 < 3,
    so `x_row_flat @ T[dh]` is the dh-row contribution of a padding=1 conv;
    the W-edge zero padding is realized by omitting out-of-range blocks.
    """
    w = np.asarray(w_hwio, dtype=np.float32)
    C = w.shape[2]
    T = np.zeros((K_SIZE, w_dim * C, w_dim * C), np.float32)
    for dh in range(K_SIZE):
        for dw in range(K_SIZE):
            for wo in range(w_dim):
                wi = wo + dw - 1
                if 0 <= wi < w_dim:
                    T[dh, wi * C:(wi + 1) * C, wo * C:(wo + 1) * C] = w[dh, dw]
    return jnp.asarray(T, dtype=jnp.bfloat16)


def prepare_params(w1, cb1, w2, cb2, g1, be1, m1, v1, g2, be2, m2, v2, w_dim):
    """Host-side, one-time parameter prep (BN fold, Toeplitz weights, tiling)."""
    s1, b1 = fold_bn(cb1, g1, be1, m1, v1)
    s2, b2 = fold_bn(cb2, g2, be2, m2, v2)

    # Per-channel scale/bias tiled across the flattened W*C lane axis
    # (layout is w*C + c, channel fastest).
    def tile(v):
        return jnp.tile(v, w_dim).reshape(1, w_dim * v.shape[0]).astype(jnp.float32)

    return (build_toeplitz(w1, w_dim), build_toeplitz(w2, w_dim),
            tile(s1), tile(b1), tile(s2), tile(b2))


def reference_forward(x_nchw, w1, cb1, w2, cb2, g1, be1, m1, v1, g2, be2, m2, v2):
    """Pure-JAX NHWC reference matching the kernel's bf16-operand precision."""
    x = jnp.transpose(x_nchw, (0, 2, 3, 1))
    xb = x.astype(jnp.bfloat16)
    dn = ("NHWC", "HWIO", "NHWC")
    y = lax.conv_general_dilated(xb, w1.astype(jnp.bfloat16), (1, 1), "SAME",
                                 dimension_numbers=dn,
                                 preferred_element_type=jnp.float32) + cb1
    y = (y - m1) / jnp.sqrt(v1 + BN_EPS) * g1 + be1
    y = jnp.maximum(y, 0.0)
    z = lax.conv_general_dilated(y.astype(jnp.bfloat16), w2.astype(jnp.bfloat16),
                                 (1, 1), "SAME", dimension_numbers=dn,
                                 preferred_element_type=jnp.float32) + cb2
    z = (z - m2) / jnp.sqrt(v2 + BN_EPS) * g2 + be2
    z = jnp.maximum(z + xb.astype(jnp.float32), 0.0)
    return jnp.transpose(z, (0, 3, 1, 2))


if __name__ == "__main__":
    key = jax.random.PRNGKey(0)
    ks = jax.random.split(key, 12)

    N, C, H, W = 8, LAYERS, 8, 8

    x = jax.random.normal(ks[0], (N, C, H, W), jnp.float32)

    # Conv weights in HWIO layout (PyTorch OIHW would be transposed (2,3,1,0)).
    w1 = jax.random.normal(ks[1], (K_SIZE, K_SIZE, C, C), jnp.float32) * 0.05
    w2 = jax.random.normal(ks[2], (K_SIZE, K_SIZE, C, C), jnp.float32) * 0.05
    cb1 = jax.random.normal(ks[3], (C,), jnp.float32) * 0.1
    cb2 = jax.random.normal(ks[4], (C,), jnp.float32) * 0.1

    # BatchNorm parameters / running stats (eval mode).
    g1 = 1.0 + 0.1 * jax.random.normal(ks[5], (C,), jnp.float32)
    be1 = 0.1 * jax.random.normal(ks[6], (C,), jnp.float32)
    m1 = 0.1 * jax.random.normal(ks[7], (C,), jnp.float32)
    v1 = 1.0 + 0.1 * jnp.abs(jax.random.normal(ks[8], (C,), jnp.float32))
    g2 = 1.0 + 0.1 * jax.random.normal(ks[9], (C,), jnp.float32)
    be2 = 0.1 * jax.random.normal(ks[10], (C,), jnp.float32)
    m2 = 0.05 * jax.random.normal(ks[11], (C,), jnp.float32)
    v2 = jnp.ones((C,), jnp.float32) * 1.2

    w1t, w2t, s1, b1, s2, b2 = prepare_params(
        w1, cb1, w2, cb2, g1, be1, m1, v1, g2, be2, m2, v2, W)

    out = resblock_pallas_nchw(x, w1t, w2t, s1, b1, s2, b2)
    out = jax.block_until_ready(out)

    ref = reference_forward(x, w1, cb1, w2, cb2, g1, be1, m1, v1, g2, be2, m2, v2)
    ref = jax.block_until_ready(ref)

    assert out.shape == (N, C, H, W)
    err = jnp.max(jnp.abs(out - ref))
    # Tolerance covers the kernel's bf16 output quantization (~0.4% relative).
    assert jnp.allclose(out, ref, atol=2e-2, rtol=2e-2), f"max abs err = {err}"

    print("KERNEL_OK")
</pallas_src>

<mosaic_0001>
module attributes {stable_mosaic.version = 11 : i64} {
  func.func @resblock_kernel(%arg0: i32, %arg1: memref<8x8x512xbf16, #tpu.memory_space<vmem>>, %arg2: memref<3x512x512xbf16, #tpu.memory_space<vmem>>, %arg3: memref<3x512x512xbf16, #tpu.memory_space<vmem>>, %arg4: memref<1x512xf32, #tpu.memory_space<vmem>>, %arg5: memref<1x512xf32, #tpu.memory_space<vmem>>, %arg6: memref<1x512xf32, #tpu.memory_space<vmem>>, %arg7: memref<1x512xf32, #tpu.memory_space<vmem>>, %arg8: memref<8x8x512xbf16, #tpu.memory_space<vmem>>, %arg9: memref<8x10x512xbf16, #tpu.memory_space<vmem>>) attributes {dimension_semantics = [#tpu.dimension_semantics<arbitrary>], iteration_bounds = array<i64: 1>, scalar_prefetch = 0 : i64, scratch_operands = 1 : i64, tpu.core_type = #tpu.core_type<tc>, window_params = [{transform_indices = @transform_0, window_bounds = array<i64: 8, 8, 512>}, {pipeline_mode = #tpu.pipeline_mode<synchronous>, transform_indices = @transform_1, window_bounds = array<i64: 3, 512, 512>}, {pipeline_mode = #tpu.pipeline_mode<synchronous>, transform_indices = @transform_2, window_bounds = array<i64: 3, 512, 512>}, {pipeline_mode = #tpu.pipeline_mode<synchronous>, transform_indices = @transform_3, window_bounds = array<i64: 1, 512>}, {pipeline_mode = #tpu.pipeline_mode<synchronous>, transform_indices = @transform_4, window_bounds = array<i64: 1, 512>}, {pipeline_mode = #tpu.pipeline_mode<synchronous>, transform_indices = @transform_5, window_bounds = array<i64: 1, 512>}, {pipeline_mode = #tpu.pipeline_mode<synchronous>, transform_indices = @transform_6, window_bounds = array<i64: 1, 512>}, {transform_indices = @transform_7, window_bounds = array<i64: 8, 8, 512>}]} {
    %cst = arith.constant 0.000000e+00 : bf16
    %0 = vector.broadcast %cst : bf16 to vector<8x1x512xbf16>
    %c0 = arith.constant 0 : index
    %c0_0 = arith.constant 0 : index
    %c0_1 = arith.constant 0 : index
    %1 = vector.load %arg9[%c0, %c0_0, %c0_1] : memref<8x10x512xbf16, #tpu.memory_space<vmem>>, vector<8x1x512xbf16>
    tpu.vector_store %arg9[%c0, %c0_0, %c0_1], %0 {strides = array<i32>} : memref<8x10x512xbf16, #tpu.memory_space<vmem>>, vector<8x1x512xbf16>,
    %c0_2 = arith.constant 0 : index
    %c9 = arith.constant 9 : index
    %c0_3 = arith.constant 0 : index
    %2 = vector.load %arg9[%c0_2, %c9, %c0_3] : memref<8x10x512xbf16, #tpu.memory_space<vmem>>, vector<8x1x512xbf16>
    tpu.vector_store %arg9[%c0_2, %c9, %c0_3], %0 {strides = array<i32>} : memref<8x10x512xbf16, #tpu.memory_space<vmem>>, vector<8x1x512xbf16>,
    %c0_4 = arith.constant 0 : index
    %c0_5 = arith.constant 0 : index
    %c0_6 = arith.constant 0 : index
    %3 = vector.load %arg1[%c0_4, %c0_5, %c0_6] : memref<8x8x512xbf16, #tpu.memory_space<vmem>>, vector<8x8x512xbf16>
    %4 = vector.shape_cast %3 : vector<8x8x512xbf16> to vector<64x512xbf16>
    %c1 = arith.constant 1 : index
    %c0_7 = arith.constant 0 : index
    %c0_8 = arith.constant 0 : index
    %5 = vector.load %arg2[%c1, %c0_7, %c0_8] : memref<3x512x512xbf16, #tpu.memory_space<vmem>>, vector<1x512x512xbf16>
    %6 = vector.shape_cast %5 : vector<1x512x512xbf16> to vector<512x512xbf16>
    %cst_9 = arith.constant dense<0.000000e+00> : vector<64x512xf32>
    %7 = tpu.matmul %4, %6, %cst_9 {dimension_numbers = #tpu.dot_dimension_numbers<[1], [0], [0], [1], [0, 0, 1, 1], [], []>} : vector<64x512xbf16>, vector<512x512xbf16>, vector<64x512xf32> -> vector<64x512xf32>
    %c0_10 = arith.constant 0 : index
    %c1_11 = arith.constant 1 : index
    %c0_12 = arith.constant 0 : index
    %8 = vector.load %arg9[%c0_10, %c1_11, %c0_12] : memref<8x10x512xbf16, #tpu.memory_space<vmem>>, vector<8x8x512xbf16>
    tpu.vector_store %arg9[%c0_10, %c1_11, %c0_12], %3 {strides = array<i32>} : memref<8x10x512xbf16, #tpu.memory_space<vmem>>, vector<8x8x512xbf16>,
    %c0_13 = arith.constant 0 : index
    %c0_14 = arith.constant 0 : index
    %c0_15 = arith.constant 0 : index
    %9 = vector.load %arg9[%c0_13, %c0_14, %c0_15] : memref<8x10x512xbf16, #tpu.memory_space<vmem>>, vector<8x8x512xbf16>
    %10 = vector.shape_cast %9 : vector<8x8x512xbf16> to vector<64x512xbf16>
    %c0_16 = arith.constant 0 : index
    %c0_17 = arith.constant 0 : index
    %c0_18 = arith.constant 0 : index
    %11 = vector.load %arg2[%c0_16, %c0_17, %c0_18] : memref<3x512x512xbf16, #tpu.memory_space<vmem>>, vector<1x512x512xbf16>
    %12 = vector.shape_cast %11 : vector<1x512x512xbf16> to vector<512x512xbf16>
    %cst_19 = arith.constant dense<0.000000e+00> : vector<64x512xf32>
    %13 = tpu.matmul %10, %12, %cst_19 {dimension_numbers = #tpu.dot_dimension_numbers<[1], [0], [0], [1], [0, 0, 1, 1], [], []>} : vector<64x512xbf16>, vector<512x512xbf16>, vector<64x512xf32> -> vector<64x512xf32>
    %14 = arith.addf %7, %13 : vector<64x512xf32>
    %c0_20 = arith.constant 0 : index
    %c2 = arith.constant 2 : index
    %c0_21 = arith.constant 0 : index
    %15 = vector.load %arg9[%c0_20, %c2, %c0_21] : memref<8x10x512xbf16, #tpu.memory_space<vmem>>, vector<8x8x512xbf16>
    %16 = vector.shape_cast %15 : vector<8x8x512xbf16> to vector<64x512xbf16>
    %c2_22 = arith.constant 2 : index
    %c0_23 = arith.constant 0 : index
    %c0_24 = arith.constant 0 : index
    %17 = vector.load %arg2[%c2_22, %c0_23, %c0_24] : memref<3x512x512xbf16, #tpu.memory_space<vmem>>, vector<1x512x512xbf16>
    %18 = vector.shape_cast %17 : vector<1x512x512xbf16> to vector<512x512xbf16>
    %cst_25 = arith.constant dense<0.000000e+00> : vector<64x512xf32>
    %19 = tpu.matmul %16, %18, %cst_25 {dimension_numbers = #tpu.dot_dimension_numbers<[1], [0], [0], [1], [0, 0, 1, 1], [], []>} : vector<64x512xbf16>, vector<512x512xbf16>, vector<64x512xf32> -> vector<64x512xf32>
    %20 = arith.addf %14, %19 : vector<64x512xf32>
    %c0_26 = arith.constant 0 : index
    %c0_27 = arith.constant 0 : index
    %21 = vector.load %arg4[%c0_26, %c0_27] : memref<1x512xf32, #tpu.memory_space<vmem>>, vector<1x512xf32>
    %22 = vector.broadcast %21 : vector<1x512xf32> to vector<64x512xf32>
    %23 = arith.mulf %20, %22 : vector<64x512xf32>
    %c0_28 = arith.constant 0 : index
    %c0_29 = arith.constant 0 : index
    %24 = vector.load %arg5[%c0_28, %c0_29] : memref<1x512xf32, #tpu.memory_space<vmem>>, vector<1x512xf32>
    %25 = vector.broadcast %24 : vector<1x512xf32> to vector<64x512xf32>
    %26 = arith.addf %23, %25 : vector<64x512xf32>
    %cst_30 = arith.constant 0.000000e+00 : f32
    %27 = vector.broadcast %cst_30 : f32 to vector<64x512xf32>
    %28 = arith.maximumf %26, %27 : vector<64x512xf32>
    %29 = arith.truncf %28 : vector<64x512xf32> to vector<64x512xbf16>
    %c1_31 = arith.constant 1 : index
    %c0_32 = arith.constant 0 : index
    %c0_33 = arith.constant 0 : index
    %30 = vector.load %arg3[%c1_31, %c0_32, %c0_33] : memref<3x512x512xbf16, #tpu.memory_space<vmem>>, vector<1x512x512xbf16>
    %31 = vector.shape_cast %30 : vector<1x512x512xbf16> to vector<512x512xbf16>
    %cst_34 = arith.constant dense<0.000000e+00> : vector<64x512xf32>
    %32 = tpu.matmul %29, %31, %cst_34 {dimension_numbers = #tpu.dot_dimension_numbers<[1], [0], [0], [1], [0, 0, 1, 1], [], []>} : vector<64x512xbf16>, vector<512x512xbf16>, vector<64x512xf32> -> vector<64x512xf32>
    %33 = vector.shape_cast %29 : vector<64x512xbf16> to vector<8x8x512xbf16>
    %c0_35 = arith.constant 0 : index
    %c1_36 = arith.constant 1 : index
    %c0_37 = arith.constant 0 : index
    %34 = vector.load %arg9[%c0_35, %c1_36, %c0_37] : memref<8x10x512xbf16, #tpu.memory_space<vmem>>, vector<8x8x512xbf16>
    tpu.vector_store %arg9[%c0_35, %c1_36, %c0_37], %33 {strides = array<i32>} : memref<8x10x512xbf16, #tpu.memory_space<vmem>>, vector<8x8x512xbf16>,
    %c0_38 = arith.constant 0 : index
    %c0_39 = arith.constant 0 : index
    %c0_40 = arith.constant 0 : index
    %35 = vector.load %arg9[%c0_38, %c0_39, %c0_40] : memref<8x10x512xbf16, #tpu.memory_space<vmem>>, vector<8x8x512xbf16>
    %36 = vector.shape_cast %35 : vector<8x8x512xbf16> to vector<64x512xbf16>
    %c0_41 = arith.constant 0 : index
    %c0_42 = arith.constant 0 : index
    %c0_43 = arith.constant 0 : index
    %37 = vector.load %arg3[%c0_41, %c0_42, %c0_43] : memref<3x512x512xbf16, #tpu.memory_space<vmem>>, vector<1x512x512xbf16>
    %38 = vector.shape_cast %37 : vector<1x512x512xbf16> to vector<512x512xbf16>
    %cst_44 = arith.constant dense<0.000000e+00> : vector<64x512xf32>
    %39 = tpu.matmul %36, %38, %cst_44 {dimension_numbers = #tpu.dot_dimension_numbers<[1], [0], [0], [1], [0, 0, 1, 1], [], []>} : vector<64x512xbf16>, vector<512x512xbf16>, vector<64x512xf32> -> vector<64x512xf32>
    %40 = arith.addf %32, %39 : vector<64x512xf32>
    %c0_45 = arith.constant 0 : index
    %c2_46 = arith.constant 2 : index
    %c0_47 = arith.constant 0 : index
    %41 = vector.load %arg9[%c0_45, %c2_46, %c0_47] : memref<8x10x512xbf16, #tpu.memory_space<vmem>>, vector<8x8x512xbf16>
    %42 = vector.shape_cast %41 : vector<8x8x512xbf16> to vector<64x512xbf16>
    %c2_48 = arith.constant 2 : index
    %c0_49 = arith.constant 0 : index
    %c0_50 = arith.constant 0 : index
    %43 = vector.load %arg3[%c2_48, %c0_49, %c0_50] : memref<3x512x512xbf16, #tpu.memory_space<vmem>>, vector<1x512x512xbf16>
    %44 = vector.shape_cast %43 : vector<1x512x512xbf16> to vector<512x512xbf16>
    %cst_51 = arith.constant dense<0.000000e+00> : vector<64x512xf32>
    %45 = tpu.matmul %42, %44, %cst_51 {dimension_numbers = #tpu.dot_dimension_numbers<[1], [0], [0], [1], [0, 0, 1, 1], [], []>} : vector<64x512xbf16>, vector<512x512xbf16>, vector<64x512xf32> -> vector<64x512xf32>
    %46 = arith.addf %40, %45 : vector<64x512xf32>
    %47 = arith.extf %4 : vector<64x512xbf16> to vector<64x512xf32>
    %c0_52 = arith.constant 0 : index
    %c0_53 = arith.constant 0 : index
    %48 = vector.load %arg6[%c0_52, %c0_53] : memref<1x512xf32, #tpu.memory_space<vmem>>, vector<1x512xf32>
    %49 = vector.broadcast %48 : vector<1x512xf32> to vector<64x512xf32>
    %50 = arith.mulf %46, %49 : vector<64x512xf32>
    %c0_54 = arith.constant 0 : index
    %c0_55 = arith.constant 0 : index
    %51 = vector.load %arg7[%c0_54, %c0_55] : memref<1x512xf32, #tpu.memory_space<vmem>>, vector<1x512xf32>
    %52 = vector.broadcast %51 : vector<1x512xf32> to vector<64x512xf32>
    %53 = arith.addf %50, %52 : vector<64x512xf32>
    %54 = arith.addf %53, %47 : vector<64x512xf32>
    %cst_56 = arith.constant 0.000000e+00 : f32
    %55 = vector.broadcast %cst_56 : f32 to vector<64x512xf32>
    %56 = arith.maximumf %54, %55 : vector<64x512xf32>
    %57 = vector.shape_cast %56 : vector<64x512xf32> to vector<8x8x512xf32>
    %58 = arith.truncf %57 : vector<8x8x512xf32> to vector<8x8x512xbf16>
    %c0_57 = arith.constant 0 : index
    %c0_58 = arith.constant 0 : index
    %c0_59 = arith.constant 0 : index
    %59 = vector.load %arg8[%c0_57, %c0_58, %c0_59] : memref<8x8x512xbf16, #tpu.memory_space<vmem>>, vector<8x8x512xbf16>
    tpu.vector_store %arg8[%c0_57, %c0_58, %c0_59], %58 {strides = array<i32>} : memref<8x8x512xbf16, #tpu.memory_space<vmem>>, vector<8x8x512xbf16>,
    return
  }
  func.func @transform_0(%arg0: i32) -> (i32, i32, i32) {
    %c0_i32 = arith.constant 0 : i32
    %c0_i32_0 = arith.constant 0 : i32
    %c0_i32_1 = arith.constant 0 : i32
    return %arg0, %c0_i32, %c0_i32_0 : i32, i32, i32
  }
  func.func @transform_1(%arg0: i32) -> (i32, i32, i32) {
    %c0_i32 = arith.constant 0 : i32
    %c0_i32_0 = arith.constant 0 : i32
    %c0_i32_1 = arith.constant 0 : i32
    %c0_i32_2 = arith.constant 0 : i32
    return %c0_i32, %c0_i32_0, %c0_i32_1 : i32, i32, i32
  }
  func.func @transform_2(%arg0: i32) -> (i32, i32, i32) {
    %c0_i32 = arith.constant 0 : i32
    %c0_i32_0 = arith.constant 0 : i32
    %c0_i32_1 = arith.constant 0 : i32
    %c0_i32_2 = arith.constant 0 : i32
    return %c0_i32, %c0_i32_0, %c0_i32_1 : i32, i32, i32
  }
  func.func @transform_3(%arg0: i32) -> (i32, i32) {
    %c0_i32 = arith.constant 0 : i32
    %c0_i32_0 = arith.constant 0 : i32
    %c0_i32_1 = arith.constant 0 : i32
    return %c0_i32, %c0_i32_0 : i32, i32
  }
  func.func @transform_4(%arg0: i32) -> (i32, i32) {
    %c0_i32 = arith.constant 0 : i32
    %c0_i32_0 = arith.constant 0 : i32
    %c0_i32_1 = arith.constant 0 : i32
    return %c0_i32, %c0_i32_0 : i32, i32
  }
  func.func @transform_5(%arg0: i32) -> (i32, i32) {
    %c0_i32 = arith.constant 0 : i32
    %c0_i32_0 = arith.constant 0 : i32
    %c0_i32_1 = arith.constant 0 : i32
    return %c0_i32, %c0_i32_0 : i32, i32
  }
  func.func @transform_6(%arg0: i32) -> (i32, i32) {
    %c0_i32 = arith.constant 0 : i32
    %c0_i32_0 = arith.constant 0 : i32
    %c0_i32_1 = arith.constant 0 : i32
    return %c0_i32, %c0_i32_0 : i32, i32
  }
  func.func @transform_7(%arg0: i32) -> (i32, i32, i32) {
    %c0_i32 = arith.constant 0 : i32
    %c0_i32_0 = arith.constant 0 : i32
    %c0_i32_1 = arith.constant 0 : i32
    return %arg0, %c0_i32, %c0_i32_0 : i32, i32, i32
  }
}

</mosaic_0001>

<llo_original>
// kernel: resblock_pallas_nchw.1
$region0: #{resblock_pallas_nchw.1}
  #allocation0 [shape = 'u32[]', space=smem, size = 0x4, offset = 0x4, fixed_abs, tag = 'smem constant byte address 0x4 - core index']
  #allocation1 [shape = 'u32[144,128]{1,0:T(1,128)}', space=vmem, size = 0x12000, scoped, tag = 'internal scratch']
  #allocation2 [shape = 'bf16[8,10,512]{2,1,0:T(8,128)(2,1)}', space=vmem, size = 0x20000, scoped, tag = 'scratch operand']
  %s0 = inlined_call_operand.vmem [shape: bf16[8,8,512], index: 0, kind: input, shape index: {}]
  %s1 = inlined_call_operand.hbm [shape: bf16[3,512,512], index: 1, kind: input, shape index: {}]
  %s2 = inlined_call_operand.hbm [shape: bf16[3,512,512], index: 2, kind: input, shape index: {}]
  %s3 = inlined_call_operand.hbm [shape: f32[1,512], index: 3, kind: input, shape index: {}]
  %s4 = inlined_call_operand.hbm [shape: f32[1,512], index: 4, kind: input, shape index: {}]
  %s5 = inlined_call_operand.hbm [shape: f32[1,512], index: 5, kind: input, shape index: {}]
  %s6 = inlined_call_operand.hbm [shape: f32[1,512], index: 6, kind: input, shape index: {}]
  %s7 = inlined_call_operand.vmem [shape: bf16[8,8,512], index: 7, kind: output, shape index: {}]
  %s8 = sld [smem:[#allocation0]]
  $region62: #{resblock_pallas_nchw.1} parent=0
    _
  %s10 = ssub.s32 1, %s8
  %s11 = scalar_select 0, %s10, %s8
  $region1: #{resblock_pallas_nchw.1} parent=0
    #allocation3 [shape = 'u8[1572864]{0}', space=vmem, size = 0x180000, scoped, tag = 'input window, operand 1, single buffered']
    #allocation4 [shape = 's32[1]{0}', space=sflag, size = 0x4, scoped, tag = 'scoped memory for resblock_pallas_nchw.1']
    #allocation5 [shape = 'u8[1572864]{0}', space=vmem, size = 0x180000, scoped, tag = 'input window, operand 2, single buffered']
    #allocation6 [shape = 's32[1]{0}', space=sflag, size = 0x4, scoped, tag = 'scoped memory for resblock_pallas_nchw.1']
    #allocation7 [shape = 'u8[2048]{0}', space=vmem, size = 0x800, scoped, tag = 'input window, operand 3, single buffered']
    #allocation8 [shape = 'u8[2048]{0}', space=vmem, size = 0x800, scoped, tag = 'input window, operand 4, single buffered']
    #allocation9 [shape = 's32[1]{0}', space=sflag, size = 0x4, scoped, tag = 'scoped memory for resblock_pallas_nchw.1']
    #allocation10 [shape = 'u8[2048]{0}', space=vmem, size = 0x800, scoped, tag = 'input window, operand 5, single buffered']
    #allocation11 [shape = 'u8[2048]{0}', space=vmem, size = 0x800, scoped, tag = 'input window, operand 6, single buffered']
    #allocation12 [shape = 's32[1]{0}', space=sflag, size = 0x4, scoped, tag = 'scoped memory for resblock_pallas_nchw.1']
    %12 = vsyncpa [#allocation4], 0
    %13 = vsyncpa [#allocation6], 0
    %14 = vsyncpa [#allocation9], 0
    %15 = vsyncpa [#allocation12], 0
    // Predicated region
    $region2: #{resblock_pallas_nchw.1} parent=1 // pred_check
      _
    $region3: #{resblock_pallas_nchw.1} parent=1 // pred_check_branch
      %17 = sbr.rel (0) target = $region5
    $region4: #{resblock_pallas_nchw.1} parent=1 // pred_region
      _
    $region5: #{resblock_pallas_nchw.1} parent=1 // pred_fallthru
      _
    // Predicated region
    $region6: #{resblock_pallas_nchw.1} parent=1 // pred_check
      _
    $region7: #{resblock_pallas_nchw.1} parent=1 // pred_check_branch
      %19 = sbr.rel (0) target = $region9
    $region8: #{resblock_pallas_nchw.1} parent=1 // pred_region
      %s21 = ssub.s32 49152, 49152
      %22 = vsyncadd [#allocation4], %s21
      %s23 = sshll.u32 [#allocation3], 4
      %s24 = int_to_ptr.vmem [resolvable:$true] %s23
      %29 = dma.hbm_to_vmem [thread:$0]  %s1, 49152, %s24, [#allocation4], 256, 256, 16
    $region9: #{resblock_pallas_nchw.1} parent=1 // pred_fallthru
      _
    // Predicated region
    $region10: #{resblock_pallas_nchw.1} parent=1 // pred_check
      _
    $region11: #{resblock_pallas_nchw.1} parent=1 // pred_check_branch
      %31 = sbr.rel (0) target = $region13
    $region12: #{resblock_pallas_nchw.1} parent=1 // pred_region
      %s33 = ssub.s32 49152, 49152
      %34 = vsyncadd [#allocation6], %s33
      %s35 = sshll.u32 [#allocation5], 4
      %s36 = int_to_ptr.vmem [resolvable:$true] %s35
      %41 = dma.hbm_to_vmem [thread:$0]  %s2, 49152, %s36, [#allocation6], 256, 256, 16
    $region13: #{resblock_pallas_nchw.1} parent=1 // pred_fallthru
      _
    // Predicated region
    $region14: #{resblock_pallas_nchw.1} parent=1 // pred_check
      _
    $region15: #{resblock_pallas_nchw.1} parent=1 // pred_check_branch
      %43 = sbr.rel (0) target = $region17
    $region16: #{resblock_pallas_nchw.1} parent=1 // pred_region
      %s45 = ssub.s32 64, 64
      %46 = vsyncadd [#allocation6], %s45
      %s48 = sshll.u32 [#allocation7], 4
      %s49 = int_to_ptr.vmem [resolvable:$true] %s48
      %51 = dma.hbm_to_vmem [thread:$0]  %s3, 64, %s49, [#allocation6]
    $region17: #{resblock_pallas_nchw.1} parent=1 // pred_fallthru
      _
    // Predicated region
    $region18: #{resblock_pallas_nchw.1} parent=1 // pred_check
      _
    $region19: #{resblock_pallas_nchw.1} parent=1 // pred_check_branch
      %53 = sbr.rel (0) target = $region21
    $region20: #{resblock_pallas_nchw.1} parent=1 // pred_region
      %s55 = ssub.s32 64, 64
      %56 = vsyncadd [#allocation9], %s55
      %s58 = sshll.u32 [#allocation8], 4
      %s59 = int_to_ptr.vmem [resolvable:$true] %s58
      %61 = dma.hbm_to_vmem [thread:$0]  %s4, 64, %s59, [#allocation9]
    $region21: #{resblock_pallas_nchw.1} parent=1 // pred_fallthru
      _
    // Predicated region
    $region22: #{resblock_pallas_nchw.1} parent=1 // pred_check
      _
    $region23: #{resblock_pallas_nchw.1} parent=1 // pred_check_branch
      %63 = sbr.rel (0) target = $region25
    $region24: #{resblock_pallas_nchw.1} parent=1 // pred_region
      %s65 = ssub.s32 64, 64
      %66 = vsyncadd [#allocation9], %s65
      %s68 = sshll.u32 [#allocation10], 4
      %s69 = int_to_ptr.vmem [resolvable:$true] %s68
      %71 = dma.hbm_to_vmem [thread:$0]  %s5, 64, %s69, [#allocation9]
    $region25: #{resblock_pallas_nchw.1} parent=1 // pred_fallthru
      _
    // Predicated region
    $region26: #{resblock_pallas_nchw.1} parent=1 // pred_check
      _
    $region27: #{resblock_pallas_nchw.1} parent=1 // pred_check_branch
      %73 = sbr.rel (0) target = $region29
    $region28: #{resblock_pallas_nchw.1} parent=1 // pred_region
      %s75 = ssub.s32 64, 64
      %76 = vsyncadd [#allocation12], %s75
      %s78 = sshll.u32 [#allocation11], 4
      %s79 = int_to_ptr.vmem [resolvable:$true] %s78
      %81 = dma.hbm_to_vmem [thread:$0]  %s6, 64, %s79, [#allocation12]
    $region29: #{resblock_pallas_nchw.1} parent=1 // pred_fallthru
      _
    // Predicated region
    $region30: #{resblock_pallas_nchw.1} parent=1 // pred_check
      _
    $region31: #{resblock_pallas_nchw.1} parent=1 // pred_check_branch
      %83 = sbr.rel (0) target = $region33
    $region32: #{resblock_pallas_nchw.1} parent=1 // pred_region
      %84 = dma.done [#allocation4], 49152
    $region33: #{resblock_pallas_nchw.1} parent=1 // pred_fallthru
      _
    // Predicated region
    $region34: #{resblock_pallas_nchw.1} parent=1 // pred_check
      _
    $region35: #{resblock_pallas_nchw.1} parent=1 // pred_check_branch
      %86 = sbr.rel (0) target = $region37
    $region36: #{resblock_pallas_nchw.1} parent=1 // pred_region
      %87 = dma.done [#allocation6], 49152
    $region37: #{resblock_pallas_nchw.1} parent=1 // pred_fallthru
      _
    // Predicated region
    $region38: #{resblock_pallas_nchw.1} parent=1 // pred_check
      _
    $region39: #{resblock_pallas_nchw.1} parent=1 // pred_check_branch
      %89 = sbr.rel (0) target = $region41
    $region40: #{resblock_pallas_nchw.1} parent=1 // pred_region
      %90 = dma.done [#allocation6], 64
    $region41: #{resblock_pallas_nchw.1} parent=1 // pred_fallthru
      _
    // Predicated region
    $region42: #{resblock_pallas_nchw.1} parent=1 // pred_check
      _
    $region43: #{resblock_pallas_nchw.1} parent=1 // pred_check_branch
      %92 = sbr.rel (0) target = $region45
    $region44: #{resblock_pallas_nchw.1} parent=1 // pred_region
      %93 = dma.done [#allocation9], 64
    $region45: #{resblock_pallas_nchw.1} parent=1 // pred_fallthru
      _
    // Predicated region
    $region46: #{resblock_pallas_nchw.1} parent=1 // pred_check
      _
    $region47: #{resblock_pallas_nchw.1} parent=1 // pred_check_branch
      %95 = sbr.rel (0) target = $region49
    $region48: #{resblock_pallas_nchw.1} parent=1 // pred_region
      %96 = dma.done [#allocation9], 64
    $region49: #{resblock_pallas_nchw.1} parent=1 // pred_fallthru
      _
    // Predicated region
    $region50: #{resblock_pallas_nchw.1} parent=1 // pred_check
      _
    $region51: #{resblock_pallas_nchw.1} parent=1 // pred_check_branch
      %98 = sbr.rel (0) target = $region53
    $region52: #{resblock_pallas_nchw.1} parent=1 // pred_region
      %99 = dma.done [#allocation12], 64
    $region53: #{resblock_pallas_nchw.1} parent=1 // pred_fallthru
      _
    %vm101 = vcmask 1040384
    %vm102 = vsmask.f32 256
    %vm103 = vmand %vm101, %vm102
    %vm104 = vcmask 1044484
    %vm105 = vsmask.f32 4352
    %vm106 = vmand %vm104, %vm105
    %vm107 = vmor %vm106, %vm103
    %v108 = vld [vmem:[#allocation2] sm:$0x11]
    %v109 = vsel %vm107, 0, %v108
    %110 = vst [vmem:[#allocation2] sm:$0x11] %v109
    %v111 = vld [vmem:[#allocation2 + $0x8] sm:$0x11]
    %v112 = vsel %vm107, 0, %v111
    %113 = vst [vmem:[#allocation2 + $0x8] sm:$0x11] %v112
    %v114 = vld [vmem:[#allocation2 + $0x20] sm:$0x11]
    %v115 = vsel %vm107, 0, %v114
    %116 = vst [vmem:[#allocation2 + $0x20] sm:$0x11] %v115
    %v117 = vld [vmem:[#allocation2 + $0x28] sm:$0x11]
    %v118 = vsel %vm107, 0, %v117
    %119 = vst [vmem:[#allocation2 + $0x28] sm:$0x11] %v118
    %v120 = vld [vmem:[#allocation2 + $0x40] sm:$0x11]
    %v121 = vsel %vm107, 0, %v120
    %122 = vst [vmem:[#allocation2 + $0x40] sm:$0x11] %v121
    %v123 = vld [vmem:[#allocation2 + $0x48] sm:$0x11]
    %v124 = vsel %vm107, 0, %v123
    %125 = vst [vmem:[#allocation2 + $0x48] sm:$0x11] %v124
    %v126 = vld [vmem:[#allocation2 + $0x60] sm:$0x11]
    %v127 = vsel %vm107, 0, %v126
    %128 = vst [vmem:[#allocation2 + $0x60] sm:$0x11] %v127
    %v129 = vld [vmem:[#allocation2 + $0x68] sm:$0x11]
    %v130 = vsel %vm107, 0, %v129
    %131 = vst [vmem:[#allocation2 + $0x68] sm:$0x11] %v130
    %v132 = vld [vmem:[#allocation2 + $0x80] sm:$0x11]
    %v133 = vsel %vm107, 0, %v132
    %134 = vst [vmem:[#allocation2 + $0x80] sm:$0x11] %v133
    %v135 = vld [vmem:[#allocation2 + $0x88] sm:$0x11]
    %v136 = vsel %vm107, 0, %v135
    %137 = vst [vmem:[#allocation2 + $0x88] sm:$0x11] %v136
    %v138 = vld [vmem:[#allocation2 + $0xa0] sm:$0x11]
    %v139 = vsel %vm107, 0, %v138
    %140 = vst [vmem:[#allocation2 + $0xa0] sm:$0x11] %v139
    %v141 = vld [vmem:[#allocation2 + $0xa8] sm:$0x11]
    %v142 = vsel %vm107, 0, %v141
    %143 = vst [vmem:[#allocation2 + $0xa8] sm:$0x11] %v142
    %v144 = vld [vmem:[#allocation2 + $0xc0] sm:$0x11]
    %v145 = vsel %vm107, 0, %v144
    %146 = vst [vmem:[#allocation2 + $0xc0] sm:$0x11] %v145
    %v147 = vld [vmem:[#allocation2 + $0xc8] sm:$0x11]
    %v148 = vsel %vm107, 0, %v147
    %149 = vst [vmem:[#allocation2 + $0xc8] sm:$0x11] %v148
    %v150 = vld [vmem:[#allocation2 + $0xe0] sm:$0x11]
    %v151 = vsel %vm107, 0, %v150
    %152 = vst [vmem:[#allocation2 + $0xe0] sm:$0x11] %v151
    %v153 = vld [vmem:[#allocation2 + $0xe8] sm:$0x11]
    %v154 = vsel %vm107, 0, %v153
    %155 = vst [vmem:[#allocation2 + $0xe8] sm:$0x11] %v154
    %vm156 = vsmask.f32 7938
    %vm157 = vmand %vm101, %vm156
    %vm158 = vsmask.f32 7954
    %vm159 = vmand %vm104, %vm158
    %vm160 = vmor %vm159, %vm157
    %v161 = vld [vmem:[#allocation2 + $0x10] sm:$0x11]
    %v162 = vsel %vm160, 0, %v161
    %163 = vst [vmem:[#allocation2 + $0x10] sm:$0x11] %v162
    %v164 = vld [vmem:[#allocation2 + $0x18] sm:$0x11]
    %v165 = vsel %vm160, 0, %v164
    %166 = vst [vmem:[#allocation2 + $0x18] sm:$0x11] %v165
    %v167 = vld [vmem:[#allocation2 + $0x30] sm:$0x11]
    %v168 = vsel %vm160, 0, %v167
    %169 = vst [vmem:[#allocation2 + $0x30] sm:$0x11] %v168
    %v170 = vld [vmem:[#allocation2 + $0x38] sm:$0x11]
    %v171 = vsel %vm160, 0, %v170
    %172 = vst [vmem:[#allocation2 + $0x38] sm:$0x11] %v171
    %v173 = vld [vmem:[#allocation2 + $0x50] sm:$0x11]
    %v174 = vsel %vm160, 0, %v173
    %175 = vst [vmem:[#allocation2 + $0x50] sm:$0x11] %v174
    %v176 = vld [vmem:[#allocation2 + $0x58] sm:$0x11]
    %v177 = vsel %vm160, 0, %v176
    %178 = vst [vmem:[#allocation2 + $0x58] sm:$0x11] %v177
    %v179 = vld [vmem:[#allocation2 + $0x70] sm:$0x11]
    %v180 = vsel %vm160, 0, %v179
    %181 = vst [vmem:[#allocation2 + $0x70] sm:$0x11] %v180
    %v182 = vld [vmem:[#allocation2 + $0x78] sm:$0x11]
    %v183 = vsel %vm160, 0, %v182
    %184 = vst [vmem:[#allocation2 + $0x78] sm:$0x11] %v183
    %v185 = vld [vmem:[#allocation2 + $0x90] sm:$0x11]
    %v186 = vsel %vm160, 0, %v185
    %187 = vst [vmem:[#allocation2 + $0x90] sm:$0x11] %v186
    %v188 = vld [vmem:[#allocation2 + $0x98] sm:$0x11]
    %v189 = vsel %vm160, 0, %v188
    %190 = vst [vmem:[#allocation2 + $0x98] sm:$0x11] %v189
    %v191 = vld [vmem:[#allocation2 + $0xb0] sm:$0x11]
    %v192 = vsel %vm160, 0, %v191
    %193 = vst [vmem:[#allocation2 + $0xb0] sm:$0x11] %v192
    %v194 = vld [vmem:[#allocation2 + $0xb8] sm:$0x11]
    %v195 = vsel %vm160, 0, %v194
    %196 = vst [vmem:[#allocation2 + $0xb8] sm:$0x11] %v195
    %v197 = vld [vmem:[#allocation2 + $0xd0] sm:$0x11]
    %v198 = vsel %vm160, 0, %v197
    %199 = vst [vmem:[#allocation2 + $0xd0] sm:$0x11] %v198
    %v200 = vld [vmem:[#allocation2 + $0xd8] sm:$0x11]
    %v201 = vsel %vm160, 0, %v200
    %202 = vst [vmem:[#allocation2 + $0xd8] sm:$0x11] %v201
    %v203 = vld [vmem:[#allocation2 + $0xf0] sm:$0x11]
    %v204 = vsel %vm160, 0, %v203
    %205 = vst [vmem:[#allocation2 + $0xf0] sm:$0x11] %v204
    %v206 = vld [vmem:[#allocation2 + $0xf8] sm:$0x11]
    %v207 = vsel %vm160, 0, %v206
    %208 = vst [vmem:[#allocation2 + $0xf8] sm:$0x11] %v207
    %v209 = vld [vmem:[%s0] sm:$0xff]
    %v210 = vld [vmem:[%s0 + $0x8] sm:$0xff]
    %v211 = vld [vmem:[%s0 + $0x10] sm:$0xff]
    %v212 = vld [vmem:[%s0 + $0x18] sm:$0xff]
    %v213 = vld [vmem:[%s0 + $0x20] sm:$0xff]
    %v214 = vld [vmem:[%s0 + $0x28] sm:$0xff]
    %v215 = vld [vmem:[%s0 + $0x30] sm:$0xff]
    %v216 = vld [vmem:[%s0 + $0x38] sm:$0xff]
    %v217 = vld [vmem:[%s0 + $0x40] sm:$0xff]
    %v218 = vld [vmem:[%s0 + $0x48] sm:$0xff]
    %v219 = vld [vmem:[%s0 + $0x50] sm:$0xff]
    %v220 = vld [vmem:[%s0 + $0x58] sm:$0xff]
    %v221 = vld [vmem:[%s0 + $0x60] sm:$0xff]
    %v222 = vld [vmem:[%s0 + $0x68] sm:$0xff]
    %v223 = vld [vmem:[%s0 + $0x70] sm:$0xff]
    %v224 = vld [vmem:[%s0 + $0x78] sm:$0xff]
    %s225 = scalar_lea.vmem [#allocation3], 1024
    %v226 = vld [vmem:[%s225] sm:$0xff]
    %v227 = vld [vmem:[%s225 + $0x8] sm:$0xff]
    %v228 = vld [vmem:[%s225 + $0x10] sm:$0xff]
    %v229 = vld [vmem:[%s225 + $0x18] sm:$0xff]
    %v230 = vld [vmem:[%s225 + $0x20] sm:$0xff]
    %v231 = vld [vmem:[%s225 + $0x28] sm:$0xff]
    %v232 = vld [vmem:[%s225 + $0x30] sm:$0xff]
    %v233 = vld [vmem:[%s225 + $0x38] sm:$0xff]
    %v234 = vld [vmem:[%s225 + $0x40] sm:$0xff]
    %v235 = vld [vmem:[%s225 + $0x48] sm:$0xff]
    %v236 = vld [vmem:[%s225 + $0x50] sm:$0xff]
    %v237 = vld [vmem:[%s225 + $0x58] sm:$0xff]
    %v238 = vld [vmem:[%s225 + $0x60] sm:$0xff]
    %v239 = vld [vmem:[%s225 + $0x68] sm:$0xff]
    %v240 = vld [vmem:[%s225 + $0x70] sm:$0xff]
    %v241 = vld [vmem:[%s225 + $0x78] sm:$0xff]
    %v242 = vld [vmem:[%s225 + $0x80] sm:$0xff]
    %v243 = vld [vmem:[%s225 + $0x88] sm:$0xff]
    %v244 = vld [vmem:[%s225 + $0x90] sm:$0xff]
    %v245 = vld [vmem:[%s225 + $0x98] sm:$0xff]
    %v246 = vld [vmem:[%s225 + $0xa0] sm:$0xff]
    %v247 = vld [vmem:[%s225 + $0xa8] sm:$0xff]
    %v248 = vld [vmem:[%s225 + $0xb0] sm:$0xff]
    %v249 = vld [vmem:[%s225 + $0xb8] sm:$0xff]
    %v250 = vld [vmem:[%s225 + $0xc0] sm:$0xff]
    %v251 = vld [vmem:[%s225 + $0xc8] sm:$0xff]
    %v252 = vld [vmem:[%s225 + $0xd0] sm:$0xff]
    %v253 = vld [vmem:[%s225 + $0xd8] sm:$0xff]
    %v254 = vld [vmem:[%s225 + $0xe0] sm:$0xff]
    %v255 = vld [vmem:[%s225 + $0xe8] sm:$0xff]
    %v256 = vld [vmem:[%s225 + $0xf0] sm:$0xff]
    %v257 = vld [vmem:[%s225 + $0xf8] sm:$0xff]
    %v258 = vld [vmem:[%s225 + $0x100] sm:$0xff]
    %v259 = vld [vmem:[%s225 + $0x108] sm:$0xff]
    %v260 = vld [vmem:[%s225 + $0x110] sm:$0xff]
    %v261 = vld [vmem:[%s225 + $0x118] sm:$0xff]
    %v262 = vld [vmem:[%s225 + $0x120] sm:$0xff]
    %v263 = vld [vmem:[%s225 + $0x128] sm:$0xff]
    %v264 = vld [vmem:[%s225 + $0x130] sm:$0xff]
    %v265 = vld [vmem:[%s225 + $0x138] sm:$0xff]
    %v266 = vld [vmem:[%s225 + $0x140] sm:$0xff]
    %v267 = vld [vmem:[%s225 + $0x148] sm:$0xff]
    %v268 = vld [vmem:[%s225 + $0x150] sm:$0xff]
    %v269 = vld [vmem:[%s225 + $0x158] sm:$0xff]
    %v270 = vld [vmem:[%s225 + $0x160] sm:$0xff]
    %v271 = vld [vmem:[%s225 + $0x168] sm:$0xff]
    %v272 = vld [vmem:[%s225 + $0x170] sm:$0xff]
    %v273 = vld [vmem:[%s225 + $0x178] sm:$0xff]
    %v274 = vld [vmem:[%s225 + $0x180] sm:$0xff]
    %v275 = vld [vmem:[%s225 + $0x188] sm:$0xff]
    %v276 = vld [vmem:[%s225 + $0x190] sm:$0xff]
    %v277 = vld [vmem:[%s225 + $0x198] sm:$0xff]
    %v278 = vld [vmem:[%s225 + $0x1a0] sm:$0xff]
    %v279 = vld [vmem:[%s225 + $0x1a8] sm:$0xff]
    %v280 = vld [vmem:[%s225 + $0x1b0] sm:$0xff]
    %v281 = vld [vmem:[%s225 + $0x1b8] sm:$0xff]
    %v282 = vld [vmem:[%s225 + $0x1c0] sm:$0xff]
    %v283 = vld [vmem:[%s225 + $0x1c8] sm:$0xff]
    %v284 = vld [vmem:[%s225 + $0x1d0] sm:$0xff]
    %v285 = vld [vmem:[%s225 + $0x1d8] sm:$0xff]
    %v286 = vld [vmem:[%s225 + $0x1e0] sm:$0xff]
    %v287 = vld [vmem:[%s225 + $0x1e8] sm:$0xff]
    %v288 = vld [vmem:[%s225 + $0x1f0] sm:$0xff]
    %v289 = vld [vmem:[%s225 + $0x1f8] sm:$0xff]
    %v290 = vld [vmem:[%s225 + $0x200] sm:$0xff]
    %v291 = vld [vmem:[%s225 + $0x208] sm:$0xff]
    %v292 = vld [vmem:[%s225 + $0x210] sm:$0xff]
    %v293 = vld [vmem:[%s225 + $0x218] sm:$0xff]
    %v294 = vld [vmem:[%s225 + $0x220] sm:$0xff]
    %v295 = vld [vmem:[%s225 + $0x228] sm:$0xff]
    %v296 = vld [vmem:[%s225 + $0x230] sm:$0xff]
    %v297 = vld [vmem:[%s225 + $0x238] sm:$0xff]
    %v298 = vld [vmem:[%s225 + $0x240] sm:$0xff]
    %v299 = vld [vmem:[%s225 + $0x248] sm:$0xff]
    %v300 = vld [vmem:[%s225 + $0x250] sm:$0xff]
    %v301 = vld [vmem:[%s225 + $0x258] sm:$0xff]
    %v302 = vld [vmem:[%s225 + $0x260] sm:$0xff]
    %v303 = vld [vmem:[%s225 + $0x268] sm:$0xff]
    %v304 = vld [vmem:[%s225 + $0x270] sm:$0xff]
    %v305 = vld [vmem:[%s225 + $0x278] sm:$0xff]
    %v306 = vld [vmem:[%s225 + $0x280] sm:$0xff]
    %v307 = vld [vmem:[%s225 + $0x288] sm:$0xff]
    %v308 = vld [vmem:[%s225 + $0x290] sm:$0xff]
    %v309 = vld [vmem:[%s225 + $0x298] sm:$0xff]
    %v310 = vld [vmem:[%s225 + $0x2a0] sm:$0xff]
    %v311 = vld [vmem:[%s225 + $0x2a8] sm:$0xff]
    %v312 = vld [vmem:[%s225 + $0x2b0] sm:$0xff]
    %v313 = vld [vmem:[%s225 + $0x2b8] sm:$0xff]
    %v314 = vld [vmem:[%s225 + $0x2c0] sm:$0xff]
    %v315 = vld [vmem:[%s225 + $0x2c8] sm:$0xff]
    %v316 = vld [vmem:[%s225 + $0x2d0] sm:$0xff]
    %v317 = vld [vmem:[%s225 + $0x2d8] sm:$0xff]
    %v318 = vld [vmem:[%s225 + $0x2e0] sm:$0xff]
    %v319 = vld [vmem:[%s225 + $0x2e8] sm:$0xff]
    %v320 = vld [vmem:[%s225 + $0x2f0] sm:$0xff]
    %v321 = vld [vmem:[%s225 + $0x2f8] sm:$0xff]
    %v322 = vld [vmem:[%s225 + $0x300] sm:$0xff]
    %v323 = vld [vmem:[%s225 + $0x308] sm:$0xff]
    %v324 = vld [vmem:[%s225 + $0x310] sm:$0xff]
    %v325 = vld [vmem:[%s225 + $0x318] sm:$0xff]
    %v326 = vld [vmem:[%s225 + $0x320] sm:$0xff]
    %v327 = vld [vmem:[%s225 + $0x328] sm:$0xff]
    %v328 = vld [vmem:[%s225 + $0x330] sm:$0xff]
    %v329 = vld [vmem:[%s225 + $0x338] sm:$0xff]
    %v330 = vld [vmem:[%s225 + $0x340] sm:$0xff]
    %v331 = vld [vmem:[%s225 + $0x348] sm:$0xff]
    %v332 = vld [vmem:[%s225 + $0x350] sm:$0xff]
    %v333 = vld [vmem:[%s225 + $0x358] sm:$0xff]
    %v334 = vld [vmem:[%s225 + $0x360] sm:$0xff]
    %v335 = vld [vmem:[%s225 + $0x368] sm:$0xff]
    %v336 = vld [vmem:[%s225 + $0x370] sm:$0xff]
    %v337 = vld [vmem:[%s225 + $0x378] sm:$0xff]
    %v338 = vld [vmem:[%s225 + $0x380] sm:$0xff]
    %v339 = vld [vmem:[%s225 + $0x388] sm:$0xff]
    %v340 = vld [vmem:[%s225 + $0x390] sm:$0xff]
    %v341 = vld [vmem:[%s225 + $0x398] sm:$0xff]
    %v342 = vld [vmem:[%s225 + $0x3a0] sm:$0xff]
    %v343 = vld [vmem:[%s225 + $0x3a8] sm:$0xff]
    %v344 = vld [vmem:[%s225 + $0x3b0] sm:$0xff]
    %v345 = vld [vmem:[%s225 + $0x3b8] sm:$0xff]
    %v346 = vld [vmem:[%s225 + $0x3c0] sm:$0xff]
    %v347 = vld [vmem:[%s225 + $0x3c8] sm:$0xff]
    %v348 = vld [vmem:[%s225 + $0x3d0] sm:$0xff]
    %v349 = vld [vmem:[%s225 + $0x3d8] sm:$0xff]
    %v350 = vld [vmem:[%s225 + $0x3e0] sm:$0xff]
    %v351 = vld [vmem:[%s225 + $0x3e8] sm:$0xff]
    %v352 = vld [vmem:[%s225 + $0x3f0] sm:$0xff]
    %v353 = vld [vmem:[%s225 + $0x3f8] sm:$0xff]
    %v355 = vshrl.u32 %v209, 16
    %v357 = vrot.slane %v355, 7
    %v358 = vshll.u32 %v209, 16
    %v360 = vor.u32 %v357, %v358
    %v362 = vshrl.u32 %v210, 16
    %v364 = vrot.slane %v362, 7
    %v365 = vshll.u32 %v210, 16
    %v367 = vor.u32 %v364, %v365
    %v368 = vrot.slane %v357, 4
    %v369 = vrot.slane %v364, 4
    %v371 = vshrl.u32 %v211, 16
    %v373 = vrot.slane %v371, 7
    %v374 = vshll.u32 %v211, 16
    %v376 = vor.u32 %v373, %v374
    %v378 = vshrl.u32 %v212, 16
    %v380 = vrot.slane %v378, 7
    %v381 = vshll.u32 %v212, 16
    %v383 = vor.u32 %v380, %v381
    %v384 = vrot.slane %v373, 4
    %v385 = vrot.slane %v380, 4
    %v387 = vshrl.u32 %v213, 16
    %v389 = vrot.slane %v387, 7
    %v390 = vshll.u32 %v213, 16
    %v392 = vor.u32 %v389, %v390
    %v394 = vshrl.u32 %v214, 16
    %v396 = vrot.slane %v394, 7
    %v397 = vshll.u32 %v214, 16
    %v399 = vor.u32 %v396, %v397
    %v400 = vrot.slane %v389, 4
    %v401 = vrot.slane %v396, 4
    %v403 = vshrl.u32 %v215, 16
    %v405 = vrot.slane %v403, 7
    %v406 = vshll.u32 %v215, 16
    %v408 = vor.u32 %v405, %v406
    %v410 = vshrl.u32 %v216, 16
    %v412 = vrot.slane %v410, 7
    %v413 = vshll.u32 %v216, 16
    %v415 = vor.u32 %v412, %v413
    %v416 = vrot.slane %v405, 4
    %v417 = vrot.slane %v412, 4
    %v419 = vshrl.u32 %v217, 16
    %v421 = vrot.slane %v419, 7
    %v422 = vshll.u32 %v217, 16
    %v424 = vor.u32 %v421, %v422
    %v426 = vshrl.u32 %v218, 16
    %v428 = vrot.slane %v426, 7
    %v429 = vshll.u32 %v218, 16
    %v431 = vor.u32 %v428, %v429
    %v432 = vrot.slane %v421, 4
    %v433 = vrot.slane %v428, 4
    %v435 = vshrl.u32 %v219, 16
    %v437 = vrot.slane %v435, 7
    %v438 = vshll.u32 %v219, 16
    %v440 = vor.u32 %v437, %v438
    %v442 = vshrl.u32 %v220, 16
    %v444 = vrot.slane %v442, 7
    %v445 = vshll.u32 %v220, 16
    %v447 = vor.u32 %v444, %v445
    %v448 = vrot.slane %v437, 4
    %v449 = vrot.slane %v444, 4
    %v451 = vshrl.u32 %v221, 16
    %v453 = vrot.slane %v451, 7
    %v454 = vshll.u32 %v221, 16
    %v456 = vor.u32 %v453, %v454
    %v458 = vshrl.u32 %v222, 16
    %v460 = vrot.slane %v458, 7
    %v461 = vshll.u32 %v222, 16
    %v463 = vor.u32 %v460, %v461
    %v464 = vrot.slane %v453, 4
    %v465 = vrot.slane %v460, 4
    %v467 = vshrl.u32 %v223, 16
    %v469 = vrot.slane %v467, 7
    %v470 = vshll.u32 %v223, 16
    %v472 = vor.u32 %v469, %v470
    %v474 = vshrl.u32 %v224, 16
    %v476 = vrot.slane %v474, 7
    %v477 = vshll.u32 %v224, 16
    %v479 = vor.u32 %v476, %v477
    %v480 = vrot.slane %v469, 4
    %v481 = vrot.slane %v476, 4
    %vm514 = vcmask 1043456
    %vm515 = vmand %vm514, %vm156
    %vm516 = vcmask 1047556
    %vm517 = vmand %vm516, %vm158
    %vm518 = vmor %vm517, %vm515
    %v519 = vld [vmem:[#allocation2] sm:$0xff]
    %v520 = vsel %vm518, %v360, %v519
    %521 = vst [vmem:[#allocation2] sm:$0xff] %v520
    %v522 = vld [vmem:[#allocation2 + $0x8] sm:$0xff]
    %v523 = vsel %vm518, %v367, %v522
    %524 = vst [vmem:[#allocation2 + $0x8] sm:$0xff] %v523
    %v525 = vld [vmem:[#allocation2 + $0x10] sm:$0x11]
    %v526 = vsel %vm107, %v368, %v525
    %527 = vst [vmem:[#allocation2 + $0x10] sm:$0x11] %v526
    %v528 = vld [vmem:[#allocation2 + $0x18] sm:$0x11]
    %v529 = vsel %vm107, %v369, %v528
    %530 = vst [vmem:[#allocation2 + $0x18] sm:$0x11] %v529
    %v531 = vld [vmem:[#allocation2 + $0x20] sm:$0xff]
    %v532 = vsel %vm518, %v376, %v531
    %533 = vst [vmem:[#allocation2 + $0x20] sm:$0xff] %v532
    %v534 = vld [vmem:[#allocation2 + $0x28] sm:$0xff]
    %v535 = vsel %vm518, %v383, %v534
    %536 = vst [vmem:[#allocation2 + $0x28] sm:$0xff] %v535
    %v537 = vld [vmem:[#allocation2 + $0x30] sm:$0x11]
    %v538 = vsel %vm107, %v384, %v537
    %539 = vst [vmem:[#allocation2 + $0x30] sm:$0x11] %v538
    %v540 = vld [vmem:[#allocation2 + $0x38] sm:$0x11]
    %v541 = vsel %vm107, %v385, %v540
    %542 = vst [vmem:[#allocation2 + $0x38] sm:$0x11] %v541
    %v543 = vld [vmem:[#allocation2 + $0x40] sm:$0xff]
    %v544 = vsel %vm518, %v392, %v543
    %545 = vst [vmem:[#allocation2 + $0x40] sm:$0xff] %v544
    %v546 = vld [vmem:[#allocation2 + $0x48] sm:$0xff]
    %v547 = vsel %vm518, %v399, %v546
    %548 = vst [vmem:[#allocation2 + $0x48] sm:$0xff] %v547
    %v549 = vld [vmem:[#allocation2 + $0x50] sm:$0x11]
    %v550 = vsel %vm107, %v400, %v549
    %551 = vst [vmem:[#allocation2 + $0x50] sm:$0x11] %v550
    %v552 = vld [vmem:[#allocation2 + $0x58] sm:$0x11]
    %v553 = vsel %vm107, %v401, %v552
    %554 = vst [vmem:[#allocation2 + $0x58] sm:$0x11] %v553
    %v555 = vld [vmem:[#allocation2 + $0x60] sm:$0xff]
    %v556 = vsel %vm518, %v408, %v555
    %557 = vst [vmem:[#allocation2 + $0x60] sm:$0xff] %v556
    %v558 = vld [vmem:[#allocation2 + $0x68] sm:$0xff]
    %v559 = vsel %vm518, %v415, %v558
    %560 = vst [vmem:[#allocation2 + $0x68] sm:$0xff] %v559
    %v561 = vld [vmem:[#allocation2 + $0x70] sm:$0x11]
    %v562 = vsel %vm107, %v416, %v561
    %563 = vst [vmem:[#allocation2 + $0x70] sm:$0x11] %v562
    %v564 = vld [vmem:[#allocation2 + $0x78] sm:$0x11]
    %v565 = vsel %vm107, %v417, %v564
    %566 = vst [vmem:[#allocation2 + $0x78] sm:$0x11] %v565
    %v567 = vld [vmem:[#allocation2 + $0x80] sm:$0xff]
    %v568 = vsel %vm518, %v424, %v567
    %569 = vst [vmem:[#allocation2 + $0x80] sm:$0xff] %v568
    %v570 = vld [vmem:[#allocation2 + $0x88] sm:$0xff]
    %v571 = vsel %vm518, %v431, %v570
    %572 = vst [vmem:[#allocation2 + $0x88] sm:$0xff] %v571
    %v573 = vld [vmem:[#allocation2 + $0x90] sm:$0x11]
    %v574 = vsel %vm107, %v432, %v573
    %575 = vst [vmem:[#allocation2 + $0x90] sm:$0x11] %v574
    %v576 = vld [vmem:[#allocation2 + $0x98] sm:$0x11]
    %v577 = vsel %vm107, %v433, %v576
    %578 = vst [vmem:[#allocation2 + $0x98] sm:$0x11] %v577
    %v579 = vld [vmem:[#allocation2 + $0xa0] sm:$0xff]
    %v580 = vsel %vm518, %v440, %v579
    %581 = vst [vmem:[#allocation2 + $0xa0] sm:$0xff] %v580
    %v582 = vld [vmem:[#allocation2 + $0xa8] sm:$0xff]
    %v583 = vsel %vm518, %v447, %v582
    %584 = vst [vmem:[#allocation2 + $0xa8] sm:$0xff] %v583
    %v585 = vld [vmem:[#allocation2 + $0xb0] sm:$0x11]
    %v586 = vsel %vm107, %v448, %v585
    %587 = vst [vmem:[#allocation2 + $0xb0] sm:$0x11] %v586
    %v588 = vld [vmem:[#allocation2 + $0xb8] sm:$0x11]
    %v589 = vsel %vm107, %v449, %v588
    %590 = vst [vmem:[#allocation2 + $0xb8] sm:$0x11] %v589
    %v591 = vld [vmem:[#allocation2 + $0xc0] sm:$0xff]
    %v592 = vsel %vm518, %v456, %v591
    %593 = vst [vmem:[#allocation2 + $0xc0] sm:$0xff] %v592
    %v594 = vld [vmem:[#allocation2 + $0xc8] sm:$0xff]
    %v595 = vsel %vm518, %v463, %v594
    %596 = vst [vmem:[#allocation2 + $0xc8] sm:$0xff] %v595
    %v597 = vld [vmem:[#allocation2 + $0xd0] sm:$0x11]
    %v598 = vsel %vm107, %v464, %v597
    %599 = vst [vmem:[#allocation2 + $0xd0] sm:$0x11] %v598
    %v600 = vld [vmem:[#allocation2 + $0xd8] sm:$0x11]
    %v601 = vsel %vm107, %v465, %v600
    %602 = vst [vmem:[#allocation2 + $0xd8] sm:$0x11] %v601
    %v603 = vld [vmem:[#allocation2 + $0xe0] sm:$0xff]
    %v604 = vsel %vm518, %v472, %v603
    %605 = vst [vmem:[#allocation2 + $0xe0] sm:$0xff] %v604
    %v606 = vld [vmem:[#allocation2 + $0xe8] sm:$0xff]
    %v607 = vsel %vm518, %v479, %v606
    %608 = vst [vmem:[#allocation2 + $0xe8] sm:$0xff] %v607
    %v609 = vld [vmem:[#allocation2 + $0xf0] sm:$0x11]
    %v610 = vsel %vm107, %v480, %v609
    %611 = vst [vmem:[#allocation2 + $0xf0] sm:$0x11] %v610
    %v612 = vld [vmem:[#allocation2 + $0xf8] sm:$0x11]
    %v613 = vsel %vm107, %v481, %v612
    %614 = vst [vmem:[#allocation2 + $0xf8] sm:$0x11] %v613
    %v615 = vld [vmem:[#allocation2] sm:$0xff]
    %v616 = vld [vmem:[#allocation2 + $0x8] sm:$0xff]
    %v617 = vld [vmem:[#allocation2 + $0x20] sm:$0xff]
    %v618 = vld [vmem:[#allocation2 + $0x28] sm:$0xff]
    %v619 = vld [vmem:[#allocation2 + $0x40] sm:$0xff]
    %v620 = vld [vmem:[#allocation2 + $0x48] sm:$0xff]
    %v621 = vld [vmem:[#allocation2 + $0x60] sm:$0xff]
    %v622 = vld [vmem:[#allocation2 + $0x68] sm:$0xff]
    %v623 = vld [vmem:[#allocation2 + $0x80] sm:$0xff]
    %v624 = vld [vmem:[#allocation2 + $0x88] sm:$0xff]
    %v625 = vld [vmem:[#allocation2 + $0xa0] sm:$0xff]
    %v626 = vld [vmem:[#allocation2 + $0xa8] sm:$0xff]
    %v627 = vld [vmem:[#allocation2 + $0xc0] sm:$0xff]
    %v628 = vld [vmem:[#allocation2 + $0xc8] sm:$0xff]
    %v629 = vld [vmem:[#allocation2 + $0xe0] sm:$0xff]
    %v630 = vld [vmem:[#allocation2 + $0xe8] sm:$0xff]
    %v631 = vld [vmem:[#allocation3] sm:$0xff]
    %v632 = vld [vmem:[#allocation3 + $0x8] sm:$0xff]
    %v633 = vld [vmem:[#allocation3 + $0x10] sm:$0xff]
    %v634 = vld [vmem:[#allocation3 + $0x18] sm:$0xff]
    %v635 = vld [vmem:[#allocation3 + $0x20] sm:$0xff]
    %v636 = vld [vmem:[#allocation3 + $0x28] sm:$0xff]
    %v637 = vld [vmem:[#allocation3 + $0x30] sm:$0xff]
    %v638 = vld [vmem:[#allocation3 + $0x38] sm:$0xff]
    %v639 = vld [vmem:[#allocation3 + $0x40] sm:$0xff]
    %v640 = vld [vmem:[#allocation3 + $0x48] sm:$0xff]
    %v641 = vld [vmem:[#allocation3 + $0x50] sm:$0xff]
    %v642 = vld [vmem:[#allocation3 + $0x58] sm:$0xff]
    %v643 = vld [vmem:[#allocation3 + $0x60] sm:$0xff]
    %v644 = vld [vmem:[#allocation3 + $0x68] sm:$0xff]
    %v645 = vld [vmem:[#allocation3 + $0x70] sm:$0xff]
    %v646 = vld [vmem:[#allocation3 + $0x78] sm:$0xff]
    %v647 = vld [vmem:[#allocation3 + $0x80] sm:$0xff]
    %v648 = vld [vmem:[#allocation3 + $0x88] sm:$0xff]
    %v649 = vld [vmem:[#allocation3 + $0x90] sm:$0xff]
    %v650 = vld [vmem:[#allocation3 + $0x98] sm:$0xff]
    %v651 = vld [vmem:[#allocation3 + $0xa0] sm:$0xff]
    %v652 = vld [vmem:[#allocation3 + $0xa8] sm:$0xff]
    %v653 = vld [vmem:[#allocation3 + $0xb0] sm:$0xff]
    %v654 = vld [vmem:[#allocation3 + $0xb8] sm:$0xff]
    %v655 = vld [vmem:[#allocation3 + $0xc0] sm:$0xff]
    %v656 = vld [vmem:[#allocation3 + $0xc8] sm:$0xff]
    %v657 = vld [vmem:[#allocation3 + $0xd0] sm:$0xff]
    %v658 = vld [vmem:[#allocation3 + $0xd8] sm:$0xff]
    %v659 = vld [vmem:[#allocation3 + $0xe0] sm:$0xff]
    %v660 = vld [vmem:[#allocation3 + $0xe8] sm:$0xff]
    %v661 = vld [vmem:[#allocation3 + $0xf0] sm:$0xff]
    %v662 = vld [vmem:[#allocation3 + $0xf8] sm:$0xff]
    %v663 = vld [vmem:[#allocation3 + $0x100] sm:$0xff]
    %v664 = vld [vmem:[#allocation3 + $0x108] sm:$0xff]
    %v665 = vld [vmem:[#allocation3 + $0x110] sm:$0xff]
    %v666 = vld [vmem:[#allocation3 + $0x118] sm:$0xff]
    %v667 = vld [vmem:[#allocation3 + $0x120] sm:$0xff]
    %v668 = vld [vmem:[#allocation3 + $0x128] sm:$0xff]
    %v669 = vld [vmem:[#allocation3 + $0x130] sm:$0xff]
    %v670 = vld [vmem:[#allocation3 + $0x138] sm:$0xff]
    %v671 = vld [vmem:[#allocation3 + $0x140] sm:$0xff]
    %v672 = vld [vmem:[#allocation3 + $0x148] sm:$0xff]
    %v673 = vld [vmem:[#allocation3 + $0x150] sm:$0xff]
    %v674 = vld [vmem:[#allocation3 + $0x158] sm:$0xff]
    %v675 = vld [vmem:[#allocation3 + $0x160] sm:$0xff]
    %v676 = vld [vmem:[#allocation3 + $0x168] sm:$0xff]
    %v677 = vld [vmem:[#allocation3 + $0x170] sm:$0xff]
    %v678 = vld [vmem:[#allocation3 + $0x178] sm:$0xff]
    %v679 = vld [vmem:[#allocation3 + $0x180] sm:$0xff]
    %v680 = vld [vmem:[#allocation3 + $0x188] sm:$0xff]
    %v681 = vld [vmem:[#allocation3 + $0x190] sm:$0xff]
    %v682 = vld [vmem:[#allocation3 + $0x198] sm:$0xff]
    %v683 = vld [vmem:[#allocation3 + $0x1a0] sm:$0xff]
    %v684 = vld [vmem:[#allocation3 + $0x1a8] sm:$0xff]
    %v685 = vld [vmem:[#allocation3 + $0x1b0] sm:$0xff]
    %v686 = vld [vmem:[#allocation3 + $0x1b8] sm:$0xff]
    %v687 = vld [vmem:[#allocation3 + $0x1c0] sm:$0xff]
    %v688 = vld [vmem:[#allocation3 + $0x1c8] sm:$0xff]
    %v689 = vld [vmem:[#allocation3 + $0x1d0] sm:$0xff]
    %v690 = vld [vmem:[#allocation3 + $0x1d8] sm:$0xff]
    %v691 = vld [vmem:[#allocation3 + $0x1e0] sm:$0xff]
    %v692 = vld [vmem:[#allocation3 + $0x1e8] sm:$0xff]
    %v693 = vld [vmem:[#allocation3 + $0x1f0] sm:$0xff]
    %v694 = vld [vmem:[#allocation3 + $0x1f8] sm:$0xff]
    %v695 = vld [vmem:[#allocation3 + $0x200] sm:$0xff]
    %v696 = vld [vmem:[#allocation3 + $0x208] sm:$0xff]
    %v697 = vld [vmem:[#allocation3 + $0x210] sm:$0xff]
    %v698 = vld [vmem:[#allocation3 + $0x218] sm:$0xff]
    %v699 = vld [vmem:[#allocation3 + $0x220] sm:$0xff]
    %v700 = vld [vmem:[#allocation3 + $0x228] sm:$0xff]
    %v701 = vld [vmem:[#allocation3 + $0x230] sm:$0xff]
    %v702 = vld [vmem:[#allocation3 + $0x238] sm:$0xff]
    %v703 = vld [vmem:[#allocation3 + $0x240] sm:$0xff]
    %v704 = vld [vmem:[#allocation3 + $0x248] sm:$0xff]
    %v705 = vld [vmem:[#allocation3 + $0x250] sm:$0xff]
    %v706 = vld [vmem:[#allocation3 + $0x258] sm:$0xff]
    %v707 = vld [vmem:[#allocation3 + $0x260] sm:$0xff]
    %v708 = vld [vmem:[#allocation3 + $0x268] sm:$0xff]
    %v709 = vld [vmem:[#allocation3 + $0x270] sm:$0xff]
    %v710 = vld [vmem:[#allocation3 + $0x278] sm:$0xff]
    %v711 = vld [vmem:[#allocation3 + $0x280] sm:$0xff]
    %v712 = vld [vmem:[#allocation3 + $0x288] sm:$0xff]
    %v713 = vld [vmem:[#allocation3 + $0x290] sm:$0xff]
    %v714 = vld [vmem:[#allocation3 + $0x298] sm:$0xff]
    %v715 = vld [vmem:[#allocation3 + $0x2a0] sm:$0xff]
    %v716 = vld [vmem:[#allocation3 + $0x2a8] sm:$0xff]
    %v717 = vld [vmem:[#allocation3 + $0x2b0] sm:$0xff]
    %v718 = vld [vmem:[#allocation3 + $0x2b8] sm:$0xff]
    %v719 = vld [vmem:[#allocation3 + $0x2c0] sm:$0xff]
    %v720 = vld [vmem:[#allocation3 + $0x2c8] sm:$0xff]
    %v721 = vld [vmem:[#allocation3 + $0x2d0] sm:$0xff]
    %v722 = vld [vmem:[#allocation3 + $0x2d8] sm:$0xff]
    %v723 = vld [vmem:[#allocation3 + $0x2e0] sm:$0xff]
    %v724 = vld [vmem:[#allocation3 + $0x2e8] sm:$0xff]
    %v725 = vld [vmem:[#allocation3 + $0x2f0] sm:$0xff]
    %v726 = vld [vmem:[#allocation3 + $0x2f8] sm:$0xff]
    %v727 = vld [vmem:[#allocation3 + $0x300] sm:$0xff]
    %v728 = vld [vmem:[#allocation3 + $0x308] sm:$0xff]
    %v729 = vld [vmem:[#allocation3 + $0x310] sm:$0xff]
    %v730 = vld [vmem:[#allocation3 + $0x318] sm:$0xff]
    %v731 = vld [vmem:[#allocation3 + $0x320] sm:$0xff]
    %v732 = vld [vmem:[#allocation3 + $0x328] sm:$0xff]
    %v733 = vld [vmem:[#allocation3 + $0x330] sm:$0xff]
    %v734 = vld [vmem:[#allocation3 + $0x338] sm:$0xff]
    %v735 = vld [vmem:[#allocation3 + $0x340] sm:$0xff]
    %v736 = vld [vmem:[#allocation3 + $0x348] sm:$0xff]
    %v737 = vld [vmem:[#allocation3 + $0x350] sm:$0xff]
    %v738 = vld [vmem:[#allocation3 + $0x358] sm:$0xff]
    %v739 = vld [vmem:[#allocation3 + $0x360] sm:$0xff]
    %v740 = vld [vmem:[#allocation3 + $0x368] sm:$0xff]
    %v741 = vld [vmem:[#allocation3 + $0x370] sm:$0xff]
    %v742 = vld [vmem:[#allocation3 + $0x378] sm:$0xff]
    %v743 = vld [vmem:[#allocation3 + $0x380] sm:$0xff]
    %v744 = vld [vmem:[#allocation3 + $0x388] sm:$0xff]
    %v745 = vld [vmem:[#allocation3 + $0x390] sm:$0xff]
    %v746 = vld [vmem:[#allocation3 + $0x398] sm:$0xff]
    %v747 = vld [vmem:[#allocation3 + $0x3a0] sm:$0xff]
    %v748 = vld [vmem:[#allocation3 + $0x3a8] sm:$0xff]
    %v749 = vld [vmem:[#allocation3 + $0x3b0] sm:$0xff]
    %v750 = vld [vmem:[#allocation3 + $0x3b8] sm:$0xff]
    %v751 = vld [vmem:[#allocation3 + $0x3c0] sm:$0xff]
    %v752 = vld [vmem:[#allocation3 + $0x3c8] sm:$0xff]
    %v753 = vld [vmem:[#allocation3 + $0x3d0] sm:$0xff]
    %v754 = vld [vmem:[#allocation3 + $0x3d8] sm:$0xff]
    %v755 = vld [vmem:[#allocation3 + $0x3e0] sm:$0xff]
    %v756 = vld [vmem:[#allocation3 + $0x3e8] sm:$0xff]
    %v757 = vld [vmem:[#allocation3 + $0x3f0] sm:$0xff]
    %v758 = vld [vmem:[#allocation3 + $0x3f8] sm:$0xff]
    %v775 = vunpack.c.l.b16 %v615
    %v776 = vunpack.c.h.b16 %v615
    %v777 = vunpack.c.l.b16 %v616
    %v778 = vunpack.c.h.b16 %v616
    %v779 = vunpack.c.l.b16 %v617
    %v780 = vunpack.c.h.b16 %v617
    %v781 = vunpack.c.l.b16 %v618
    %v782 = vunpack.c.h.b16 %v618
    %v783 = vunpack.c.l.b16 %v619
    %v784 = vunpack.c.h.b16 %v619
    %v785 = vunpack.c.l.b16 %v620
    %v786 = vunpack.c.h.b16 %v620
    %v787 = vunpack.c.l.b16 %v621
    %v788 = vunpack.c.h.b16 %v621
    %v789 = vunpack.c.l.b16 %v622
    %v790 = vunpack.c.h.b16 %v622
    %v791 = vunpack.c.l.b16 %v623
    %v792 = vunpack.c.h.b16 %v623
    %v793 = vunpack.c.l.b16 %v624
    %v794 = vunpack.c.h.b16 %v624
    %v795 = vunpack.c.l.b16 %v625
    %v796 = vunpack.c.h.b16 %v625
    %v797 = vunpack.c.l.b16 %v626
    %v798 = vunpack.c.h.b16 %v626
    %v799 = vunpack.c.l.b16 %v627
    %v800 = vunpack.c.h.b16 %v627
    %v801 = vunpack.c.l.b16 %v628
    %v802 = vunpack.c.h.b16 %v628
    %v803 = vunpack.c.l.b16 %v629
    %v804 = vunpack.c.h.b16 %v629
    %v805 = vunpack.c.l.b16 %v630
    %v806 = vunpack.c.h.b16 %v630
    %v807 = vpack.c.b16 %v779, %v775
    %v808 = vpack.c.b16 %v780, %v776
    %v809 = vpack.c.b16 %v781, %v777
    %v810 = vpack.c.b16 %v782, %v778
    %v811 = vpack.c.b16 %v787, %v783
    %v812 = vpack.c.b16 %v788, %v784
    %v813 = vpack.c.b16 %v789, %v785
    %v814 = vpack.c.b16 %v790, %v786
    %v815 = vpack.c.b16 %v795, %v791
    %v816 = vpack.c.b16 %v796, %v792
    %v817 = vpack.c.b16 %v797, %v793
    %v818 = vpack.c.b16 %v798, %v794
    %v819 = vpack.c.b16 %v803, %v799
    %v820 = vpack.c.b16 %v804, %v800
    %v821 = vpack.c.b16 %v805, %v801
    %v822 = vpack.c.b16 %v806, %v802
    %v967 = vunpack.c.l.b16 %v631
    %v968 = vunpack.c.h.b16 %v631
    %v969 = vunpack.c.l.b16 %v632
    %v970 = vunpack.c.h.b16 %v632
    %v971 = vunpack.c.l.b16 %v633
    %v972 = vunpack.c.h.b16 %v633
    %v973 = vunpack.c.l.b16 %v634
    %v974 = vunpack.c.h.b16 %v634
    %v975 = vunpack.c.l.b16 %v635
    %v976 = vunpack.c.h.b16 %v635
    %v977 = vunpack.c.l.b16 %v636
    %v978 = vunpack.c.h.b16 %v636
    %v979 = vunpack.c.l.b16 %v637
    %v980 = vunpack.c.h.b16 %v637
    %v981 = vunpack.c.l.b16 %v638
    %v982 = vunpack.c.h.b16 %v638
    %v983 = vunpack.c.l.b16 %v639
    %v984 = vunpack.c.h.b16 %v639
    %v985 = vunpack.c.l.b16 %v640
    %v986 = vunpack.c.h.b16 %v640
    %v987 = vunpack.c.l.b16 %v641
    %v988 = vunpack.c.h.b16 %v641
    %v989 = vunpack.c.l.b16 %v642
    %v990 = vunpack.c.h.b16 %v642
    %v991 = vunpack.c.l.b16 %v643
    %v992 = vunpack.c.h.b16 %v643
    %v993 = vunpack.c.l.b16 %v644
    %v994 = vunpack.c.h.b16 %v644
    %v995 = vunpack.c.l.b16 %v645
    %v996 = vunpack.c.h.b16 %v645
    %v997 = vunpack.c.l.b16 %v646
    %v998 = vunpack.c.h.b16 %v646
    %v999 = vunpack.c.l.b16 %v647
    %v1000 = vunpack.c.h.b16 %v647
    %v1001 = vunpack.c.l.b16 %v648
    %v1002 = vunpack.c.h.b16 %v648
    %v1003 = vunpack.c.l.b16 %v649
    %v1004 = vunpack.c.h.b16 %v649
    %v1005 = vunpack.c.l.b16 %v650
    %v1006 = vunpack.c.h.b16 %v650
    %v1007 = vunpack.c.l.b16 %v651
    %v1008 = vunpack.c.h.b16 %v651
    %v1009 = vunpack.c.l.b16 %v652
    %v1010 = vunpack.c.h.b16 %v652
    %v1011 = vunpack.c.l.b16 %v653
    %v1012 = vunpack.c.h.b16 %v653
    %v1013 = vunpack.c.l.b16 %v654
    %v1014 = vunpack.c.h.b16 %v654
    %v1015 = vunpack.c.l.b16 %v655
    %v1016 = vunpack.c.h.b16 %v655
    %v1017 = vunpack.c.l.b16 %v656
    %v1018 = vunpack.c.h.b16 %v656
    %v1019 = vunpack.c.l.b16 %v657
    %v1020 = vunpack.c.h.b16 %v657
    %v1021 = vunpack.c.l.b16 %v658
    %v1022 = vunpack.c.h.b16 %v658
    %v1023 = vunpack.c.l.b16 %v659
    %v1024 = vunpack.c.h.b16 %v659
    %v1025 = vunpack.c.l.b16 %v660
    %v1026 = vunpack.c.h.b16 %v660
    %v1027 = vunpack.c.l.b16 %v661
    %v1028 = vunpack.c.h.b16 %v661
    %v1029 = vunpack.c.l.b16 %v662
    %v1030 = vunpack.c.h.b16 %v662
    %v1031 = vunpack.c.l.b16 %v663
    %v1032 = vunpack.c.h.b16 %v663
    %v1033 = vunpack.c.l.b16 %v664
    %v1034 = vunpack.c.h.b16 %v664
    %v1035 = vunpack.c.l.b16 %v665
    %v1036 = vunpack.c.h.b16 %v665
    %v1037 = vunpack.c.l.b16 %v666
    %v1038 = vunpack.c.h.b16 %v666
    %v1039 = vunpack.c.l.b16 %v667
    %v1040 = vunpack.c.h.b16 %v667
    %v1041 = vunpack.c.l.b16 %v668
    %v1042 = vunpack.c.h.b16 %v668
    %v1043 = vunpack.c.l.b16 %v669
    %v1044 = vunpack.c.h.b16 %v669
    %v1045 = vunpack.c.l.b16 %v670
    %v1046 = vunpack.c.h.b16 %v670
    %v1047 = vunpack.c.l.b16 %v671
    %v1048 = vunpack.c.h.b16 %v671
    %v1049 = vunpack.c.l.b16 %v672
    %v1050 = vunpack.c.h.b16 %v672
    %v1051 = vunpack.c.l.b16 %v673
    %v1052 = vunpack.c.h.b16 %v673
    %v1053 = vunpack.c.l.b16 %v674
    %v1054 = vunpack.c.h.b16 %v674
    %v1055 = vunpack.c.l.b16 %v675
    %v1056 = vunpack.c.h.b16 %v675
    %v1057 = vunpack.c.l.b16 %v676
    %v1058 = vunpack.c.h.b16 %v676
    %v1059 = vunpack.c.l.b16 %v677
    %v1060 = vunpack.c.h.b16 %v677
    %v1061 = vunpack.c.l.b16 %v678
    %v1062 = vunpack.c.h.b16 %v678
    %v1063 = vunpack.c.l.b16 %v679
    %v1064 = vunpack.c.h.b16 %v679
    %v1065 = vunpack.c.l.b16 %v680
    %v1066 = vunpack.c.h.b16 %v680
    %v1067 = vunpack.c.l.b16 %v681
    %v1068 = vunpack.c.h.b16 %v681
    %v1069 = vunpack.c.l.b16 %v682
    %v1070 = vunpack.c.h.b16 %v682
    %v1071 = vunpack.c.l.b16 %v683
    %v1072 = vunpack.c.h.b16 %v683
    %v1073 = vunpack.c.l.b16 %v684
    %v1074 = vunpack.c.h.b16 %v684
    %v1075 = vunpack.c.l.b16 %v685
    %v1076 = vunpack.c.h.b16 %v685
    %v1077 = vunpack.c.l.b16 %v686
    %v1078 = vunpack.c.h.b16 %v686
    %v1079 = vunpack.c.l.b16 %v687
    %v1080 = vunpack.c.h.b16 %v687
    %v1081 = vunpack.c.l.b16 %v688
    %v1082 = vunpack.c.h.b16 %v688
    %v1083 = vunpack.c.l.b16 %v689
    %v1084 = vunpack.c.h.b16 %v689
    %v1085 = vunpack.c.l.b16 %v690
    %v1086 = vunpack.c.h.b16 %v690
    %v1087 = vunpack.c.l.b16 %v691
    %v1088 = vunpack.c.h.b16 %v691
    %v1089 = vunpack.c.l.b16 %v692
    %v1090 = vunpack.c.h.b16 %v692
    %v1091 = vunpack.c.l.b16 %v693
    %v1092 = vunpack.c.h.b16 %v693
    %v1093 = vunpack.c.l.b16 %v694
    %v1094 = vunpack.c.h.b16 %v694
    %v1095 = vunpack.c.l.b16 %v695
    %v1096 = vunpack.c.h.b16 %v695
    %v1097 = vunpack.c.l.b16 %v696
    %v1098 = vunpack.c.h.b16 %v696
    %v1099 = vunpack.c.l.b16 %v697
    %v1100 = vunpack.c.h.b16 %v697
    %v1101 = vunpack.c.l.b16 %v698
    %v1102 = vunpack.c.h.b16 %v698
    %v1103 = vunpack.c.l.b16 %v699
    %v1104 = vunpack.c.h.b16 %v699
    %v1105 = vunpack.c.l.b16 %v700
    %v1106 = vunpack.c.h.b16 %v700
    %v1107 = vunpack.c.l.b16 %v701
    %v1108 = vunpack.c.h.b16 %v701
    %v1109 = vunpack.c.l.b16 %v702
    %v1110 = vunpack.c.h.b16 %v702
    %v1111 = vunpack.c.l.b16 %v703
    %v1112 = vunpack.c.h.b16 %v703
    %v1113 = vunpack.c.l.b16 %v704
    %v1114 = vunpack.c.h.b16 %v704
    %v1115 = vunpack.c.l.b16 %v705
    %v1116 = vunpack.c.h.b16 %v705
    %v1117 = vunpack.c.l.b16 %v706
    %v1118 = vunpack.c.h.b16 %v706
    %v1119 = vunpack.c.l.b16 %v707
    %v1120 = vunpack.c.h.b16 %v707
    %v1121 = vunpack.c.l.b16 %v708
    %v1122 = vunpack.c.h.b16 %v708
    %v1123 = vunpack.c.l.b16 %v709
    %v1124 = vunpack.c.h.b16 %v709
    %v1125 = vunpack.c.l.b16 %v710
    %v1126 = vunpack.c.h.b16 %v710
    %v1127 = vunpack.c.l.b16 %v711
    %v1128 = vunpack.c.h.b16 %v711
    %v1129 = vunpack.c.l.b16 %v712
    %v1130 = vunpack.c.h.b16 %v712
    %v1131 = vunpack.c.l.b16 %v713
    %v1132 = vunpack.c.h.b16 %v713
    %v1133 = vunpack.c.l.b16 %v714
    %v1134 = vunpack.c.h.b16 %v714
    %v1135 = vunpack.c.l.b16 %v715
    %v1136 = vunpack.c.h.b16 %v715
    %v1137 = vunpack.c.l.b16 %v716
    %v1138 = vunpack.c.h.b16 %v716
    %v1139 = vunpack.c.l.b16 %v717
    %v1140 = vunpack.c.h.b16 %v717
    %v1141 = vunpack.c.l.b16 %v718
    %v1142 = vunpack.c.h.b16 %v718
    %v1143 = vunpack.c.l.b16 %v719
    %v1144 = vunpack.c.h.b16 %v719
    %v1145 = vunpack.c.l.b16 %v720
    %v1146 = vunpack.c.h.b16 %v720
    %v1147 = vunpack.c.l.b16 %v721
    %v1148 = vunpack.c.h.b16 %v721
    %v1149 = vunpack.c.l.b16 %v722
    %v1150 = vunpack.c.h.b16 %v722
    %v1151 = vunpack.c.l.b16 %v723
    %v1152 = vunpack.c.h.b16 %v723
    %v1153 = vunpack.c.l.b16 %v724
    %v1154 = vunpack.c.h.b16 %v724
    %v1155 = vunpack.c.l.b16 %v725
    %v1156 = vunpack.c.h.b16 %v725
    %v1157 = vunpack.c.l.b16 %v726
    %v1158 = vunpack.c.h.b16 %v726
    %v1159 = vunpack.c.l.b16 %v727
    %v1160 = vunpack.c.h.b16 %v727
    %v1161 = vunpack.c.l.b16 %v728
    %v1162 = vunpack.c.h.b16 %v728
    %v1163 = vunpack.c.l.b16 %v729
    %v1164 = vunpack.c.h.b16 %v729
    %v1165 = vunpack.c.l.b16 %v730
    %v1166 = vunpack.c.h.b16 %v730
    %v1167 = vunpack.c.l.b16 %v731
    %v1168 = vunpack.c.h.b16 %v731
    %v1169 = vunpack.c.l.b16 %v732
    %v1170 = vunpack.c.h.b16 %v732
    %v1171 = vunpack.c.l.b16 %v733
    %v1172 = vunpack.c.h.b16 %v733
    %v1173 = vunpack.c.l.b16 %v734
    %v1174 = vunpack.c.h.b16 %v734
    %v1175 = vunpack.c.l.b16 %v735
    %v1176 = vunpack.c.h.b16 %v735
    %v1177 = vunpack.c.l.b16 %v736
    %v1178 = vunpack.c.h.b16 %v736
    %v1179 = vunpack.c.l.b16 %v737
    %v1180 = vunpack.c.h.b16 %v737
    %v1181 = vunpack.c.l.b16 %v738
    %v1182 = vunpack.c.h.b16 %v738
    %v1183 = vunpack.c.l.b16 %v739
    %v1184 = vunpack.c.h.b16 %v739
    %v1185 = vunpack.c.l.b16 %v740
    %v1186 = vunpack.c.h.b16 %v740
    %v1187 = vunpack.c.l.b16 %v741
    %v1188 = vunpack.c.h.b16 %v741
    %v1189 = vunpack.c.l.b16 %v742
    %v1190 = vunpack.c.h.b16 %v742
    %v1191 = vunpack.c.l.b16 %v743
    %v1192 = vunpack.c.h.b16 %v743
    %v1193 = vunpack.c.l.b16 %v744
    %v1194 = vunpack.c.h.b16 %v744
    %v1195 = vunpack.c.l.b16 %v745
    %v1196 = vunpack.c.h.b16 %v745
    %v1197 = vunpack.c.l.b16 %v746
    %v1198 = vunpack.c.h.b16 %v746
    %v1199 = vunpack.c.l.b16 %v747
    %v1200 = vunpack.c.h.b16 %v747
    %v1201 = vunpack.c.l.b16 %v748
    %v1202 = vunpack.c.h.b16 %v748
    %v1203 = vunpack.c.l.b16 %v749
    %v1204 = vunpack.c.h.b16 %v749
    %v1205 = vunpack.c.l.b16 %v750
    %v1206 = vunpack.c.h.b16 %v750
    %v1207 = vunpack.c.l.b16 %v751
    %v1208 = vunpack.c.h.b16 %v751
    %v1209 = vunpack.c.l.b16 %v752
    %v1210 = vunpack.c.h.b16 %v752
    %v1211 = vunpack.c.l.b16 %v753
    %v1212 = vunpack.c.h.b16 %v753
    %v1213 = vunpack.c.l.b16 %v754
    %v1214 = vunpack.c.h.b16 %v754
    %v1215 = vunpack.c.l.b16 %v755
    %v1216 = vunpack.c.h.b16 %v755
    %v1217 = vunpack.c.l.b16 %v756
    %v1218 = vunpack.c.h.b16 %v756
    %v1219 = vunpack.c.l.b16 %v757
    %v1220 = vunpack.c.h.b16 %v757
    %v1221 = vunpack.c.l.b16 %v758
    %v1222 = vunpack.c.h.b16 %v758
    %v1223 = vpack.c.b16 %v971, %v967
    %v1224 = vpack.c.b16 %v972, %v968
    %v1225 = vpack.c.b16 %v973, %v969
    %v1226 = vpack.c.b16 %v974, %v970
    %v1227 = vpack.c.b16 %v979, %v975
    %v1228 = vpack.c.b16 %v980, %v976
    %v1229 = vpack.c.b16 %v981, %v977
    %v1230 = vpack.c.b16 %v982, %v978
    %v1231 = vpack.c.b16 %v987, %v983
    %v1232 = vpack.c.b16 %v988, %v984
    %v1233 = vpack.c.b16 %v989, %v985
    %v1234 = vpack.c.b16 %v990, %v986
    %v1235 = vpack.c.b16 %v995, %v991
    %v1236 = vpack.c.b16 %v996, %v992
    %v1237 = vpack.c.b16 %v997, %v993
    %v1238 = vpack.c.b16 %v998, %v994
    %v1239 = vpack.c.b16 %v1003, %v999
    %v1240 = vpack.c.b16 %v1004, %v1000
    %v1241 = vpack.c.b16 %v1005, %v1001
    %v1242 = vpack.c.b16 %v1006, %v1002
    %v1243 = vpack.c.b16 %v1011, %v1007
    %v1244 = vpack.c.b16 %v1012, %v1008
    %v1245 = vpack.c.b16 %v1013, %v1009
    %v1246 = vpack.c.b16 %v1014, %v1010
    %v1247 = vpack.c.b16 %v1019, %v1015
    %v1248 = vpack.c.b16 %v1020, %v1016
    %v1249 = vpack.c.b16 %v1021, %v1017
    %v1250 = vpack.c.b16 %v1022, %v1018
    %v1251 = vpack.c.b16 %v1027, %v1023
    %v1252 = vpack.c.b16 %v1028, %v1024
    %v1253 = vpack.c.b16 %v1029, %v1025
    %v1254 = vpack.c.b16 %v1030, %v1026
    %v1255 = vpack.c.b16 %v1035, %v1031
    %v1256 = vpack.c.b16 %v1036, %v1032
    %v1257 = vpack.c.b16 %v1037, %v1033
    %v1258 = vpack.c.b16 %v1038, %v1034
    %v1259 = vpack.c.b16 %v1043, %v1039
    %v1260 = vpack.c.b16 %v1044, %v1040
    %v1261 = vpack.c.b16 %v1045, %v1041
    %v1262 = vpack.c.b16 %v1046, %v1042
    %v1263 = vpack.c.b16 %v1051, %v1047
    %v1264 = vpack.c.b16 %v1052, %v1048
    %v1265 = vpack.c.b16 %v1053, %v1049
    %v1266 = vpack.c.b16 %v1054, %v1050
    %v1267 = vpack.c.b16 %v1059, %v1055
    %v1268 = vpack.c.b16 %v1060, %v1056
    %v1269 = vpack.c.b16 %v1061, %v1057
    %v1270 = vpack.c.b16 %v1062, %v1058
    %v1271 = vpack.c.b16 %v1067, %v1063
    %v1272 = vpack.c.b16 %v1068, %v1064
    %v1273 = vpack.c.b16 %v1069, %v1065
    %v1274 = vpack.c.b16 %v1070, %v1066
    %v1275 = vpack.c.b16 %v1075, %v1071
    %v1276 = vpack.c.b16 %v1076, %v1072
    %v1277 = vpack.c.b16 %v1077, %v1073
    %v1278 = vpack.c.b16 %v1078, %v1074
    %v1279 = vpack.c.b16 %v1083, %v1079
    %v1280 = vpack.c.b16 %v1084, %v1080
    %v1281 = vpack.c.b16 %v1085, %v1081
    %v1282 = vpack.c.b16 %v1086, %v1082
    %v1283 = vpack.c.b16 %v1091, %v1087
    %v1284 = vpack.c.b16 %v1092, %v1088
    %v1285 = vpack.c.b16 %v1093, %v1089
    %v1286 = vpack.c.b16 %v1094, %v1090
    %v1287 = vpack.c.b16 %v1099, %v1095
    %v1288 = vpack.c.b16 %v1100, %v1096
    %v1289 = vpack.c.b16 %v1101, %v1097
    %v1290 = vpack.c.b16 %v1102, %v1098
    %v1291 = vpack.c.b16 %v1107, %v1103
    %v1292 = vpack.c.b16 %v1108, %v1104
    %v1293 = vpack.c.b16 %v1109, %v1105
    %v1294 = vpack.c.b16 %v1110, %v1106
    %v1295 = vpack.c.b16 %v1115, %v1111
    %v1296 = vpack.c.b16 %v1116, %v1112
    %v1297 = vpack.c.b16 %v1117, %v1113
    %v1298 = vpack.c.b16 %v1118, %v1114
    %v1299 = vpack.c.b16 %v1123, %v1119
    %v1300 = vpack.c.b16 %v1124, %v1120
    %v1301 = vpack.c.b16 %v1125, %v1121
    %v1302 = vpack.c.b16 %v1126, %v1122
    %v1303 = vpack.c.b16 %v1131, %v1127
    %v1304 = vpack.c.b16 %v1132, %v1128
    %v1305 = vpack.c.b16 %v1133, %v1129
    %v1306 = vpack.c.b16 %v1134, %v1130
    %v1307 = vpack.c.b16 %v1139, %v1135
    %v1308 = vpack.c.b16 %v1140, %v1136
    %v1309 = vpack.c.b16 %v1141, %v1137
    %v1310 = vpack.c.b16 %v1142, %v1138
    %v1311 = vpack.c.b16 %v1147, %v1143
    %v1312 = vpack.c.b16 %v1148, %v1144
    %v1313 = vpack.c.b16 %v1149, %v1145
    %v1314 = vpack.c.b16 %v1150, %v1146
    %v1315 = vpack.c.b16 %v1155, %v1151
    %v1316 = vpack.c.b16 %v1156, %v1152
    %v1317 = vpack.c.b16 %v1157, %v1153
    %v1318 = vpack.c.b16 %v1158, %v1154
    %v1319 = vpack.c.b16 %v1163, %v1159
    %v1320 = vpack.c.b16 %v1164, %v1160
    %v1321 = vpack.c.b16 %v1165, %v1161
    %v1322 = vpack.c.b16 %v1166, %v1162
    %v1323 = vpack.c.b16 %v1171, %v1167
    %v1324 = vpack.c.b16 %v1172, %v1168
    %v1325 = vpack.c.b16 %v1173, %v1169
    %v1326 = vpack.c.b16 %v1174, %v1170
    %v1327 = vpack.c.b16 %v1179, %v1175
    %v1328 = vpack.c.b16 %v1180, %v1176
    %v1329 = vpack.c.b16 %v1181, %v1177
    %v1330 = vpack.c.b16 %v1182, %v1178
    %v1331 = vpack.c.b16 %v1187, %v1183
    %v1332 = vpack.c.b16 %v1188, %v1184
    %v1333 = vpack.c.b16 %v1189, %v1185
    %v1334 = vpack.c.b16 %v1190, %v1186
    %v1335 = vpack.c.b16 %v1195, %v1191
    %v1336 = vpack.c.b16 %v1196, %v1192
    %v1337 = vpack.c.b16 %v1197, %v1193
    %v1338 = vpack.c.b16 %v1198, %v1194
    %v1339 = vpack.c.b16 %v1203, %v1199
    %v1340 = vpack.c.b16 %v1204, %v1200
    %v1341 = vpack.c.b16 %v1205, %v1201
    %v1342 = vpack.c.b16 %v1206, %v1202
    %v1343 = vpack.c.b16 %v1211, %v1207
    %v1344 = vpack.c.b16 %v1212, %v1208
    %v1345 = vpack.c.b16 %v1213, %v1209
    %v1346 = vpack.c.b16 %v1214, %v1210
    %v1347 = vpack.c.b16 %v1219, %v1215
    %v1348 = vpack.c.b16 %v1220, %v1216
    %v1349 = vpack.c.b16 %v1221, %v1217
    %v1350 = vpack.c.b16 %v1222, %v1218
    %1479 = vmatprep.subr.bf16.mxu0 %v1224
    %1480 = vmatpush1.bf16.msra.mxu0 %v1223
    %1481 = vmatprep.subr.bf16.mxu0 %v1228
    %1482 = vmatpush1.bf16.msra.mxu0 %v1227
    %1483 = vmatprep.subr.bf16.mxu0 %v1232
    %1484 = vmatpush1.bf16.msra.mxu0 %v1231
    %1485 = vmatprep.subr.bf16.mxu0 %v1236
    %1486 = vmatpush1.bf16.msra.mxu0 %v1235
    %1487 = vmatprep.subr.bf16.mxu0 %v1240
    %1488 = vmatpush1.bf16.msra.mxu0 %v1239
    %1489 = vmatprep.subr.bf16.mxu0 %v1244
    %1490 = vmatpush1.bf16.msra.mxu0 %v1243
    %1491 = vmatprep.subr.bf16.mxu0 %v1248
    %1492 = vmatpush1.bf16.msra.mxu0 %v1247
    %1493 = vmatprep.subr.bf16.mxu0 %v1252
    %1494 = vmatpush1.bf16.msra.mxu0 %v1251
    %1495 = vmatprep.subr.bf16.mxu0 %v1256
    %1496 = vmatpush1.bf16.msra.mxu0 %v1255
    %1497 = vmatprep.subr.bf16.mxu0 %v1260
    %1498 = vmatpush1.bf16.msra.mxu0 %v1259
    %1499 = vmatprep.subr.bf16.mxu0 %v1264
    %1500 = vmatpush1.bf16.msra.mxu0 %v1263
    %1501 = vmatprep.subr.bf16.mxu0 %v1268
    %1502 = vmatpush1.bf16.msra.mxu0 %v1267
    %1503 = vmatprep.subr.bf16.mxu0 %v1272
    %1504 = vmatpush1.bf16.msra.mxu0 %v1271
    %1505 = vmatprep.subr.bf16.mxu0 %v1276
    %1506 = vmatpush1.bf16.msra.mxu0 %v1275
    %1507 = vmatprep.subr.bf16.mxu0 %v1280
    %1508 = vmatpush1.bf16.msra.mxu0 %v1279
    %1509 = vmatprep.subr.bf16.mxu0 %v1284
    %1510 = vmatpush1.bf16.msra.mxu0 %v1283
    %1511 = vmatprep.mubr.bf16.mxu0 %v808
    %1512 = vmatmul.mubr.bf16.gmra.mrb[0].mxu0 %v807
    %v1513 = vpop.f32.mrb[0].mxu0
    %v1514 = vadd.f32 0.0, %v1513
    %v1515 = vpop.f32.mrb[0].mxu0
    %v1516 = vadd.f32 0.0, %v1515
    %v1517 = vpop.f32.mrb[0].mxu0
    %v1518 = vadd.f32 0.0, %v1517
    %v1519 = vpop.f32.mrb[0].mxu0
    %v1520 = vadd.f32 0.0, %v1519
    %1521 = vmatprep.mubr.bf16.mxu0 %v812
    %1522 = vmatmul.mubr.bf16.gmra.mrb[0].mxu0 %v811
    %v1523 = vpop.f32.mrb[0].mxu0
    %v1524 = vadd.f32 0.0, %v1523
    %v1525 = vpop.f32.mrb[0].mxu0
    %v1526 = vadd.f32 0.0, %v1525
    %v1527 = vpop.f32.mrb[0].mxu0
    %v1528 = vadd.f32 0.0, %v1527
    %v1529 = vpop.f32.mrb[0].mxu0
    %v1530 = vadd.f32 0.0, %v1529
    %1531 = vmatprep.mubr.bf16.mxu0 %v816
    %1532 = vmatmul.mubr.bf16.gmra.mrb[0].mxu0 %v815
    %v1533 = vpop.f32.mrb[0].mxu0
    %v1534 = vadd.f32 0.0, %v1533
    %v1535 = vpop.f32.mrb[0].mxu0
    %v1536 = vadd.f32 0.0, %v1535
    %v1537 = vpop.f32.mrb[0].mxu0
    %v1538 = vadd.f32 0.0, %v1537
    %v1539 = vpop.f32.mrb[0].mxu0
    %v1540 = vadd.f32 0.0, %v1539
    %1541 = vmatprep.mubr.bf16.mxu0 %v820
    %1542 = vmatmul.mubr.bf16.gmra.mrb[0].mxu0 %v819
    %v1543 = vpop.f32.mrb[0].mxu0
    %v1544 = vadd.f32 0.0, %v1543
    %v1545 = vpop.f32.mrb[0].mxu0
    %v1546 = vadd.f32 0.0, %v1545
    %v1547 = vpop.f32.mrb[0].mxu0
    %v1548 = vadd.f32 0.0, %v1547
    %v1549 = vpop.f32.mrb[0].mxu0
    %v1550 = vadd.f32 0.0, %v1549
    %1551 = vdwg.mxu0
    %1552 = vmatprep.subr.bf16.mxu0 %v1288
    %1553 = vmatpush1.bf16.msra.mxu0 %v1287
    %1554 = vmatprep.subr.bf16.mxu0 %v1292
    %1555 = vmatpush1.bf16.msra.mxu0 %v1291
    %1556 = vmatprep.subr.bf16.mxu0 %v1296
    %1557 = vmatpush1.bf16.msra.mxu0 %v1295
    %1558 = vmatprep.subr.bf16.mxu0 %v1300
    %1559 = vmatpush1.bf16.msra.mxu0 %v1299
    %1560 = vmatprep.subr.bf16.mxu0 %v1304
    %1561 = vmatpush1.bf16.msra.mxu0 %v1303
    %1562 = vmatprep.subr.bf16.mxu0 %v1308
    %1563 = vmatpush1.bf16.msra.mxu0 %v1307
    %1564 = vmatprep.subr.bf16.mxu0 %v1312
    %1565 = vmatpush1.bf16.msra.mxu0 %v1311
    %1566 = vmatprep.subr.bf16.mxu0 %v1316
    %1567 = vmatpush1.bf16.msra.mxu0 %v1315
    %1568 = vmatprep.subr.bf16.mxu0 %v1320
    %1569 = vmatpush1.bf16.msra.mxu0 %v1319
    %1570 = vmatprep.subr.bf16.mxu0 %v1324
    %1571 = vmatpush1.bf16.msra.mxu0 %v1323
    %1572 = vmatprep.subr.bf16.mxu0 %v1328
    %1573 = vmatpush1.bf16.msra.mxu0 %v1327
    %1574 = vmatprep.subr.bf16.mxu0 %v1332
    %1575 = vmatpush1.bf16.msra.mxu0 %v1331
    %1576 = vmatprep.subr.bf16.mxu0 %v1336
    %1577 = vmatpush1.bf16.msra.mxu0 %v1335
    %1578 = vmatprep.subr.bf16.mxu0 %v1340
    %1579 = vmatpush1.bf16.msra.mxu0 %v1339
    %1580 = vmatprep.subr.bf16.mxu0 %v1344
    %1581 = vmatpush1.bf16.msra.mxu0 %v1343
    %1582 = vmatprep.subr.bf16.mxu0 %v1348
    %1583 = vmatpush1.bf16.msra.mxu0 %v1347
    %1584 = vmatprep.mubr.bf16.mxu0 %v810
    %1585 = vmatmul.mubr.bf16.gmra.mrb[0].mxu0 %v809
    %v1586 = vpop.f32.mrb[0].mxu0
    %v1587 = vadd.f32 %v1514, %v1586
    %v1588 = vpop.f32.mrb[0].mxu0
    %v1589 = vadd.f32 %v1516, %v1588
    %v1590 = vpop.f32.mrb[0].mxu0
    %v1591 = vadd.f32 %v1518, %v1590
    %v1592 = vpop.f32.mrb[0].mxu0
    %v1593 = vadd.f32 %v1520, %v1592
    %1594 = vmatprep.mubr.bf16.mxu0 %v814
    %1595 = vmatmul.mubr.bf16.gmra.mrb[0].mxu0 %v813
    %v1596 = vpop.f32.mrb[0].mxu0
    %v1597 = vadd.f32 %v1524, %v1596
    %v1598 = vpop.f32.mrb[0].mxu0
    %v1599 = vadd.f32 %v1526, %v1598
    %v1600 = vpop.f32.mrb[0].mxu0
    %v1601 = vadd.f32 %v1528, %v1600
    %v1602 = vpop.f32.mrb[0].mxu0
    %v1603 = vadd.f32 %v1530, %v1602
    %1604 = vmatprep.mubr.bf16.mxu0 %v818
    %1605 = vmatmul.mubr.bf16.gmra.mrb[0].mxu0 %v817
    %v1606 = vpop.f32.mrb[0].mxu0
    %v1607 = vadd.f32 %v1534, %v1606
    %v1608 = vpop.f32.mrb[0].mxu0
    %v1609 = vadd.f32 %v1536, %v1608
    %v1610 = vpop.f32.mrb[0].mxu0
    %v1611 = vadd.f32 %v1538, %v1610
    %v1612 = vpop.f32.mrb[0].mxu0
    %v1613 = vadd.f32 %v1540, %v1612
    %1614 = vmatprep.mubr.bf16.mxu0 %v822
    %1615 = vmatmul.mubr.bf16.gmra.mrb[0].mxu0 %v821
    %v1616 = vpop.f32.mrb[0].mxu0
    %v1617 = vadd.f32 %v1544, %v1616
    %v1618 = vpop.f32.mrb[0].mxu0
    %v1619 = vadd.f32 %v1546, %v1618
    %v1620 = vpop.f32.mrb[0].mxu0
    %v1621 = vadd.f32 %v1548, %v1620
    %v1622 = vpop.f32.mrb[0].mxu0
    %v1623 = vadd.f32 %v1550, %v1622
    %1624 = vdwg.mxu0
    %1625 = vmatprep.subr.bf16.mxu0 %v1226
    %1626 = vmatpush1.bf16.msra.mxu0 %v1225
    %1627 = vmatprep.subr.bf16.mxu0 %v1230
    %1628 = vmatpush1.bf16.msra.mxu0 %v1229
    %1629 = vmatprep.subr.bf16.mxu0 %v1234
    %1630 = vmatpush1.bf16.msra.mxu0 %v1233
    %1631 = vmatprep.subr.bf16.mxu0 %v1238
    %1632 = vmatpush1.bf16.msra.mxu0 %v1237
    %1633 = vmatprep.subr.bf16.mxu0 %v1242
    %1634 = vmatpush1.bf16.msra.mxu0 %v1241
    %1635 = vmatprep.subr.bf16.mxu0 %v1246
    %1636 = vmatpush1.bf16.msra.mxu0 %v1245
    %1637 = vmatprep.subr.bf16.mxu0 %v1250
    %1638 = vmatpush1.bf16.msra.mxu0 %v1249
    %1639 = vmatprep.subr.bf16.mxu0 %v1254
    %1640 = vmatpush1.bf16.msra.mxu0 %v1253
    %1641 = vmatprep.subr.bf16.mxu0 %v1258
    %1642 = vmatpush1.bf16.msra.mxu0 %v1257
    %1643 = vmatprep.subr.bf16.mxu0 %v1262
    %1644 = vmatpush1.bf16.msra.mxu0 %v1261
    %1645 = vmatprep.subr.bf16.mxu0 %v1266
    %1646 = vmatpush1.bf16.msra.mxu0 %v1265
    %1647 = vmatprep.subr.bf16.mxu0 %v1270
    %1648 = vmatpush1.bf16.msra.mxu0 %v1269
    %1649 = vmatprep.subr.bf16.mxu0 %v1274
    %1650 = vmatpush1.bf16.msra.mxu0 %v1273
    %1651 = vmatprep.subr.bf16.mxu0 %v1278
    %1652 = vmatpush1.bf16.msra.mxu0 %v1277
    %1653 = vmatprep.subr.bf16.mxu0 %v1282
    %1654 = vmatpush1.bf16.msra.mxu0 %v1281
    %1655 = vmatprep.subr.bf16.mxu0 %v1286
    %1656 = vmatpush1.bf16.msra.mxu0 %v1285
    %1657 = vmatprep.mubr.bf16.mxu0 %v808
    %1658 = vmatmul.mubr.bf16.gmra.mrb[0].mxu0 %v807
    %v1659 = vpop.f32.mrb[0].mxu0
    %v1660 = vadd.f32 0.0, %v1659
    %v1661 = vpop.f32.mrb[0].mxu0
    %v1662 = vadd.f32 0.0, %v1661
    %v1663 = vpop.f32.mrb[0].mxu0
    %v1664 = vadd.f32 0.0, %v1663
    %v1665 = vpop.f32.mrb[0].mxu0
    %v1666 = vadd.f32 0.0, %v1665
    %1667 = vmatprep.mubr.bf16.mxu0 %v812
    %1668 = vmatmul.mubr.bf16.gmra.mrb[0].mxu0 %v811
    %v1669 = vpop.f32.mrb[0].mxu0
    %v1670 = vadd.f32 0.0, %v1669
    %v1671 = vpop.f32.mrb[0].mxu0
    %v1672 = vadd.f32 0.0, %v1671
    %v1673 = vpop.f32.mrb[0].mxu0
    %v1674 = vadd.f32 0.0, %v1673
    %v1675 = vpop.f32.mrb[0].mxu0
    %v1676 = vadd.f32 0.0, %v1675
    %1677 = vmatprep.mubr.bf16.mxu0 %v816
    %1678 = vmatmul.mubr.bf16.gmra.mrb[0].mxu0 %v815
    %v1679 = vpop.f32.mrb[0].mxu0
    %v1680 = vadd.f32 0.0, %v1679
    %v1681 = vpop.f32.mrb[0].mxu0
    %v1682 = vadd.f32 0.0, %v1681
    %v1683 = vpop.f32.mrb[0].mxu0
    %v1684 = vadd.f32 0.0, %v1683
    %v1685 = vpop.f32.mrb[0].mxu0
    %v1686 = vadd.f32 0.0, %v1685
    %1687 = vmatprep.mubr.bf16.mxu0 %v820
    %1688 = vmatmul.mubr.bf16.gmra.mrb[0].mxu0 %v819
    %v1689 = vpop.f32.mrb[0].mxu0
    %v1690 = vadd.f32 0.0, %v1689
    %v1691 = vpop.f32.mrb[0].mxu0
    %v1692 = vadd.f32 0.0, %v1691
    %v1693 = vpop.f32.mrb[0].mxu0
    %v1694 = vadd.f32 0.0, %v1693
    %v1695 = vpop.f32.mrb[0].mxu0
    %v1696 = vadd.f32 0.0, %v1695
    %1697 = vdwg.mxu0
    %1698 = vmatprep.subr.bf16.mxu0 %v1290
    %1699 = vmatpush1.bf16.msra.mxu0 %v1289
    %1700 = vmatprep.subr.bf16.mxu0 %v1294
    %1701 = vmatpush1.bf16.msra.mxu0 %v1293
    %1702 = vmatprep.subr.bf16.mxu0 %v1298
    %1703 = vmatpush1.bf16.msra.mxu0 %v1297
    %1704 = vmatprep.subr.bf16.mxu0 %v1302
    %1705 = vmatpush1.bf16.msra.mxu0 %v1301
    %1706 = vmatprep.subr.bf16.mxu0 %v1306
    %1707 = vmatpush1.bf16.msra.mxu0 %v1305
    %1708 = vmatprep.subr.bf16.mxu0 %v1310
    %1709 = vmatpush1.bf16.msra.mxu0 %v1309
    %1710 = vmatprep.subr.bf16.mxu0 %v1314
    %1711 = vmatpush1.bf16.msra.mxu0 %v1313
    %1712 = vmatprep.subr.bf16.mxu0 %v1318
    %1713 = vmatpush1.bf16.msra.mxu0 %v1317
    %1714 = vmatprep.subr.bf16.mxu0 %v1322
    %1715 = vmatpush1.bf16.msra.mxu0 %v1321
    %1716 = vmatprep.subr.bf16.mxu0 %v1326
    %1717 = vmatpush1.bf16.msra.mxu0 %v1325
    %1718 = vmatprep.subr.bf16.mxu0 %v1330
    %1719 = vmatpush1.bf16.msra.mxu0 %v1329
    %1720 = vmatprep.subr.bf16.mxu0 %v1334
    %1721 = vmatpush1.bf16.msra.mxu0 %v1333
    %1722 = vmatprep.subr.bf16.mxu0 %v1338
    %1723 = vmatpush1.bf16.msra.mxu0 %v1337
    %1724 = vmatprep.subr.bf16.mxu0 %v1342
    %1725 = vmatpush1.bf16.msra.mxu0 %v1341
    %1726 = vmatprep.subr.bf16.mxu0 %v1346
    %1727 = vmatpush1.bf16.msra.mxu0 %v1345
    %1728 = vmatprep.subr.bf16.mxu0 %v1350
    %1729 = vmatpush1.bf16.msra.mxu0 %v1349
    %1730 = vmatprep.mubr.bf16.mxu0 %v810
    %1731 = vmatmul.mubr.bf16.gmra.mrb[0].mxu0 %v809
    %v1732 = vpop.f32.mrb[0].mxu0
    %v1733 = vadd.f32 %v1660, %v1732
    %v1734 = vpop.f32.mrb[0].mxu0
    %v1735 = vadd.f32 %v1662, %v1734
    %v1736 = vpop.f32.mrb[0].mxu0
    %v1737 = vadd.f32 %v1664, %v1736
    %v1738 = vpop.f32.mrb[0].mxu0
    %v1739 = vadd.f32 %v1666, %v1738
    %1740 = vmatprep.mubr.bf16.mxu0 %v814
    %1741 = vmatmul.mubr.bf16.gmra.mrb[0].mxu0 %v813
    %v1742 = vpop.f32.mrb[0].mxu0
    %v1743 = vadd.f32 %v1670, %v1742
    %v1744 = vpop.f32.mrb[0].mxu0
    %v1745 = vadd.f32 %v1672, %v1744
    %v1746 = vpop.f32.mrb[0].mxu0
    %v1747 = vadd.f32 %v1674, %v1746
    %v1748 = vpop.f32.mrb[0].mxu0
    %v1749 = vadd.f32 %v1676, %v1748
    %1750 = vmatprep.mubr.bf16.mxu0 %v818
    %1751 = vmatmul.mubr.bf16.gmra.mrb[0].mxu0 %v817
    %v1752 = vpop.f32.mrb[0].mxu0
    %v1753 = vadd.f32 %v1680, %v1752
    %v1754 = vpop.f32.mrb[0].mxu0
    %v1755 = vadd.f32 %v1682, %v1754
    %v1756 = vpop.f32.mrb[0].mxu0
    %v1757 = vadd.f32 %v1684, %v1756
    %v1758 = vpop.f32.mrb[0].mxu0
    %v1759 = vadd.f32 %v1686, %v1758
    %1760 = vmatprep.mubr.bf16.mxu0 %v822
    %1761 = vmatmul.mubr.bf16.gmra.mrb[0].mxu0 %v821
    %v1762 = vpop.f32.mrb[0].mxu0
    %v1763 = vadd.f32 %v1690, %v1762
    %v1764 = vpop.f32.mrb[0].mxu0
    %v1765 = vadd.f32 %v1692, %v1764
    %v1766 = vpop.f32.mrb[0].mxu0
    %v1767 = vadd.f32 %v1694, %v1766
    %v1768 = vpop.f32.mrb[0].mxu0
    %v1769 = vadd.f32 %v1696, %v1768
    %1770 = vdwg.mxu0
    %v1787 = vunpack.c.l.b16 %v209
    %v1788 = vunpack.c.h.b16 %v209
    %v1789 = vunpack.c.l.b16 %v210
    %v1790 = vunpack.c.h.b16 %v210
    %v1791 = vunpack.c.l.b16 %v211
    %v1792 = vunpack.c.h.b16 %v211
    %v1793 = vunpack.c.l.b16 %v212
    %v1794 = vunpack.c.h.b16 %v212
    %v1795 = vunpack.c.l.b16 %v213
    %v1796 = vunpack.c.h.b16 %v213
    %v1797 = vunpack.c.l.b16 %v214
    %v1798 = vunpack.c.h.b16 %v214
    %v1799 = vunpack.c.l.b16 %v215
    %v1800 = vunpack.c.h.b16 %v215
    %v1801 = vunpack.c.l.b16 %v216
    %v1802 = vunpack.c.h.b16 %v216
    %v1803 = vunpack.c.l.b16 %v217
    %v1804 = vunpack.c.h.b16 %v217
    %v1805 = vunpack.c.l.b16 %v218
    %v1806 = vunpack.c.h.b16 %v218
    %v1807 = vunpack.c.l.b16 %v219
    %v1808 = vunpack.c.h.b16 %v219
    %v1809 = vunpack.c.l.b16 %v220
    %v1810 = vunpack.c.h.b16 %v220
    %v1811 = vunpack.c.l.b16 %v221
    %v1812 = vunpack.c.h.b16 %v221
    %v1813 = vunpack.c.l.b16 %v222
    %v1814 = vunpack.c.h.b16 %v222
    %v1815 = vunpack.c.l.b16 %v223
    %v1816 = vunpack.c.h.b16 %v223
    %v1817 = vunpack.c.l.b16 %v224
    %v1818 = vunpack.c.h.b16 %v224
    %v1819 = vpack.c.b16 %v1791, %v1787
    %v1820 = vpack.c.b16 %v1792, %v1788
    %v1821 = vpack.c.b16 %v1793, %v1789
    %v1822 = vpack.c.b16 %v1794, %v1790
    %v1823 = vpack.c.b16 %v1799, %v1795
    %v1824 = vpack.c.b16 %v1800, %v1796
    %v1825 = vpack.c.b16 %v1801, %v1797
    %v1826 = vpack.c.b16 %v1802, %v1798
    %v1827 = vpack.c.b16 %v1807, %v1803
    %v1828 = vpack.c.b16 %v1808, %v1804
    %v1829 = vpack.c.b16 %v1809, %v1805
    %v1830 = vpack.c.b16 %v1810, %v1806
    %v1831 = vpack.c.b16 %v1815, %v1811
    %v1832 = vpack.c.b16 %v1816, %v1812
    %v1833 = vpack.c.b16 %v1817, %v1813
    %v1834 = vpack.c.b16 %v1818, %v1814
    %v1979 = vunpack.c.l.b16 %v226
    %v1980 = vunpack.c.h.b16 %v226
    %v1981 = vunpack.c.l.b16 %v227
    %v1982 = vunpack.c.h.b16 %v227
    %v1983 = vunpack.c.l.b16 %v228
    %v1984 = vunpack.c.h.b16 %v228
    %v1985 = vunpack.c.l.b16 %v229
    %v1986 = vunpack.c.h.b16 %v229
    %v1987 = vunpack.c.l.b16 %v230
    %v1988 = vunpack.c.h.b16 %v230
    %v1989 = vunpack.c.l.b16 %v231
    %v1990 = vunpack.c.h.b16 %v231
    %v1991 = vunpack.c.l.b16 %v232
    %v1992 = vunpack.c.h.b16 %v232
    %v1993 = vunpack.c.l.b16 %v233
    %v1994 = vunpack.c.h.b16 %v233
    %v1995 = vunpack.c.l.b16 %v234
    %v1996 = vunpack.c.h.b16 %v234
    %v1997 = vunpack.c.l.b16 %v235
    %v1998 = vunpack.c.h.b16 %v235
    %v1999 = vunpack.c.l.b16 %v236
    %v2000 = vunpack.c.h.b16 %v236
    %v2001 = vunpack.c.l.b16 %v237
    %v2002 = vunpack.c.h.b16 %v237
    %v2003 = vunpack.c.l.b16 %v238
    %v2004 = vunpack.c.h.b16 %v238
    %v2005 = vunpack.c.l.b16 %v239
    %v2006 = vunpack.c.h.b16 %v239
    %v2007 = vunpack.c.l.b16 %v240
    %v2008 = vunpack.c.h.b16 %v240
    %v2009 = vunpack.c.l.b16 %v241
    %v2010 = vunpack.c.h.b16 %v241
    %v2011 = vunpack.c.l.b16 %v242
    %v2012 = vunpack.c.h.b16 %v242
    %v2013 = vunpack.c.l.b16 %v243
    %v2014 = vunpack.c.h.b16 %v243
    %v2015 = vunpack.c.l.b16 %v244
    %v2016 = vunpack.c.h.b16 %v244
    %v2017 = vunpack.c.l.b16 %v245
    %v2018 = vunpack.c.h.b16 %v245
    %v2019 = vunpack.c.l.b16 %v246
    %v2020 = vunpack.c.h.b16 %v246
    %v2021 = vunpack.c.l.b16 %v247
    %v2022 = vunpack.c.h.b16 %v247
    %v2023 = vunpack.c.l.b16 %v248
    %v2024 = vunpack.c.h.b16 %v248
    %v2025 = vunpack.c.l.b16 %v249
    %v2026 = vunpack.c.h.b16 %v249
    %v2027 = vunpack.c.l.b16 %v250
    %v2028 = vunpack.c.h.b16 %v250
    %v2029 = vunpack.c.l.b16 %v251
    %v2030 = vunpack.c.h.b16 %v251
    %v2031 = vunpack.c.l.b16 %v252
    %v2032 = vunpack.c.h.b16 %v252
    %v2033 = vunpack.c.l.b16 %v253
    %v2034 = vunpack.c.h.b16 %v253
    %v2035 = vunpack.c.l.b16 %v254
    %v2036 = vunpack.c.h.b16 %v254
    %v2037 = vunpack.c.l.b16 %v255
    %v2038 = vunpack.c.h.b16 %v255
    %v2039 = vunpack.c.l.b16 %v256
    %v2040 = vunpack.c.h.b16 %v256
    %v2041 = vunpack.c.l.b16 %v257
    %v2042 = vunpack.c.h.b16 %v257
    %v2043 = vunpack.c.l.b16 %v258
    %v2044 = vunpack.c.h.b16 %v258
    %v2045 = vunpack.c.l.b16 %v259
    %v2046 = vunpack.c.h.b16 %v259
    %v2047 = vunpack.c.l.b16 %v260
    %v2048 = vunpack.c.h.b16 %v260
    %v2049 = vunpack.c.l.b16 %v261
    %v2050 = vunpack.c.h.b16 %v261
    %v2051 = vunpack.c.l.b16 %v262
    %v2052 = vunpack.c.h.b16 %v262
    %v2053 = vunpack.c.l.b16 %v263
    %v2054 = vunpack.c.h.b16 %v263
    %v2055 = vunpack.c.l.b16 %v264
    %v2056 = vunpack.c.h.b16 %v264
    %v2057 = vunpack.c.l.b16 %v265
    %v2058 = vunpack.c.h.b16 %v265
    %v2059 = vunpack.c.l.b16 %v266
    %v2060 = vunpack.c.h.b16 %v266
    %v2061 = vunpack.c.l.b16 %v267
    %v2062 = vunpack.c.h.b16 %v267
    %v2063 = vunpack.c.l.b16 %v268
    %v2064 = vunpack.c.h.b16 %v268
    %v2065 = vunpack.c.l.b16 %v269
    %v2066 = vunpack.c.h.b16 %v269
    %v2067 = vunpack.c.l.b16 %v270
    %v2068 = vunpack.c.h.b16 %v270
    %v2069 = vunpack.c.l.b16 %v271
    %v2070 = vunpack.c.h.b16 %v271
    %v2071 = vunpack.c.l.b16 %v272
    %v2072 = vunpack.c.h.b16 %v272
    %v2073 = vunpack.c.l.b16 %v273
    %v2074 = vunpack.c.h.b16 %v273
    %v2075 = vunpack.c.l.b16 %v274
    %v2076 = vunpack.c.h.b16 %v274
    %v2077 = vunpack.c.l.b16 %v275
    %v2078 = vunpack.c.h.b16 %v275
    %v2079 = vunpack.c.l.b16 %v276
    %v2080 = vunpack.c.h.b16 %v276
    %v2081 = vunpack.c.l.b16 %v277
    %v2082 = vunpack.c.h.b16 %v277
    %v2083 = vunpack.c.l.b16 %v278
    %v2084 = vunpack.c.h.b16 %v278
    %v2085 = vunpack.c.l.b16 %v279
    %v2086 = vunpack.c.h.b16 %v279
    %v2087 = vunpack.c.l.b16 %v280
    %v2088 = vunpack.c.h.b16 %v280
    %v2089 = vunpack.c.l.b16 %v281
    %v2090 = vunpack.c.h.b16 %v281
    %v2091 = vunpack.c.l.b16 %v282
    %v2092 = vunpack.c.h.b16 %v282
    %v2093 = vunpack.c.l.b16 %v283
    %v2094 = vunpack.c.h.b16 %v283
    %v2095 = vunpack.c.l.b16 %v284
    %v2096 = vunpack.c.h.b16 %v284
    %v2097 = vunpack.c.l.b16 %v285
    %v2098 = vunpack.c.h.b16 %v285
    %v2099 = vunpack.c.l.b16 %v286
    %v2100 = vunpack.c.h.b16 %v286
    %v2101 = vunpack.c.l.b16 %v287
    %v2102 = vunpack.c.h.b16 %v287
    %v2103 = vunpack.c.l.b16 %v288
    %v2104 = vunpack.c.h.b16 %v288
    %v2105 = vunpack.c.l.b16 %v289
    %v2106 = vunpack.c.h.b16 %v289
    %v2107 = vunpack.c.l.b16 %v290
    %v2108 = vunpack.c.h.b16 %v290
    %v2109 = vunpack.c.l.b16 %v291
    %v2110 = vunpack.c.h.b16 %v291
    %v2111 = vunpack.c.l.b16 %v292
    %v2112 = vunpack.c.h.b16 %v292
    %v2113 = vunpack.c.l.b16 %v293
    %v2114 = vunpack.c.h.b16 %v293
    %v2115 = vunpack.c.l.b16 %v294
    %v2116 = vunpack.c.h.b16 %v294
    %v2117 = vunpack.c.l.b16 %v295
    %v2118 = vunpack.c.h.b16 %v295
    %v2119 = vunpack.c.l.b16 %v296
    %v2120 = vunpack.c.h.b16 %v296
    %v2121 = vunpack.c.l.b16 %v297
    %v2122 = vunpack.c.h.b16 %v297
    %v2123 = vunpack.c.l.b16 %v298
    %v2124 = vunpack.c.h.b16 %v298
    %v2125 = vunpack.c.l.b16 %v299
    %v2126 = vunpack.c.h.b16 %v299
    %v2127 = vunpack.c.l.b16 %v300
    %v2128 = vunpack.c.h.b16 %v300
    %v2129 = vunpack.c.l.b16 %v301
    %v2130 = vunpack.c.h.b16 %v301
    %v2131 = vunpack.c.l.b16 %v302
    %v2132 = vunpack.c.h.b16 %v302
    %v2133 = vunpack.c.l.b16 %v303
    %v2134 = vunpack.c.h.b16 %v303
    %v2135 = vunpack.c.l.b16 %v304
    %v2136 = vunpack.c.h.b16 %v304
    %v2137 = vunpack.c.l.b16 %v305
    %v2138 = vunpack.c.h.b16 %v305
    %v2139 = vunpack.c.l.b16 %v306
    %v2140 = vunpack.c.h.b16 %v306
    %v2141 = vunpack.c.l.b16 %v307
    %v2142 = vunpack.c.h.b16 %v307
    %v2143 = vunpack.c.l.b16 %v308
    %v2144 = vunpack.c.h.b16 %v308
    %v2145 = vunpack.c.l.b16 %v309
    %v2146 = vunpack.c.h.b16 %v309
    %v2147 = vunpack.c.l.b16 %v310
    %v2148 = vunpack.c.h.b16 %v310
    %v2149 = vunpack.c.l.b16 %v311
    %v2150 = vunpack.c.h.b16 %v311
    %v2151 = vunpack.c.l.b16 %v312
    %v2152 = vunpack.c.h.b16 %v312
    %v2153 = vunpack.c.l.b16 %v313
    %v2154 = vunpack.c.h.b16 %v313
    %v2155 = vunpack.c.l.b16 %v314
    %v2156 = vunpack.c.h.b16 %v314
    %v2157 = vunpack.c.l.b16 %v315
    %v2158 = vunpack.c.h.b16 %v315
    %v2159 = vunpack.c.l.b16 %v316
    %v2160 = vunpack.c.h.b16 %v316
    %v2161 = vunpack.c.l.b16 %v317
    %v2162 = vunpack.c.h.b16 %v317
    %v2163 = vunpack.c.l.b16 %v318
    %v2164 = vunpack.c.h.b16 %v318
    %v2165 = vunpack.c.l.b16 %v319
    %v2166 = vunpack.c.h.b16 %v319
    %v2167 = vunpack.c.l.b16 %v320
    %v2168 = vunpack.c.h.b16 %v320
    %v2169 = vunpack.c.l.b16 %v321
    %v2170 = vunpack.c.h.b16 %v321
    %v2171 = vunpack.c.l.b16 %v322
    %v2172 = vunpack.c.h.b16 %v322
    %v2173 = vunpack.c.l.b16 %v323
    %v2174 = vunpack.c.h.b16 %v323
    %v2175 = vunpack.c.l.b16 %v324
    %v2176 = vunpack.c.h.b16 %v324
    %v2177 = vunpack.c.l.b16 %v325
    %v2178 = vunpack.c.h.b16 %v325
    %v2179 = vunpack.c.l.b16 %v326
    %v2180 = vunpack.c.h.b16 %v326
    %v2181 = vunpack.c.l.b16 %v327
    %v2182 = vunpack.c.h.b16 %v327
    %v2183 = vunpack.c.l.b16 %v328
    %v2184 = vunpack.c.h.b16 %v328
    %v2185 = vunpack.c.l.b16 %v329
    %v2186 = vunpack.c.h.b16 %v329
    %v2187 = vunpack.c.l.b16 %v330
    %v2188 = vunpack.c.h.b16 %v330
    %v2189 = vunpack.c.l.b16 %v331
    %v2190 = vunpack.c.h.b16 %v331
    %v2191 = vunpack.c.l.b16 %v332
    %v2192 = vunpack.c.h.b16 %v332
    %v2193 = vunpack.c.l.b16 %v333
    %v2194 = vunpack.c.h.b16 %v333
    %v2195 = vunpack.c.l.b16 %v334
    %v2196 = vunpack.c.h.b16 %v334
    %v2197 = vunpack.c.l.b16 %v335
    %v2198 = vunpack.c.h.b16 %v335
    %v2199 = vunpack.c.l.b16 %v336
    %v2200 = vunpack.c.h.b16 %v336
    %v2201 = vunpack.c.l.b16 %v337
    %v2202 = vunpack.c.h.b16 %v337
    %v2203 = vunpack.c.l.b16 %v338
    %v2204 = vunpack.c.h.b16 %v338
    %v2205 = vunpack.c.l.b16 %v339
    %v2206 = vunpack.c.h.b16 %v339
    %v2207 = vunpack.c.l.b16 %v340
    %v2208 = vunpack.c.h.b16 %v340
    %v2209 = vunpack.c.l.b16 %v341
    %v2210 = vunpack.c.h.b16 %v341
    %v2211 = vunpack.c.l.b16 %v342
    %v2212 = vunpack.c.h.b16 %v342
    %v2213 = vunpack.c.l.b16 %v343
    %v2214 = vunpack.c.h.b16 %v343
    %v2215 = vunpack.c.l.b16 %v344
    %v2216 = vunpack.c.h.b16 %v344
    %v2217 = vunpack.c.l.b16 %v345
    %v2218 = vunpack.c.h.b16 %v345
    %v2219 = vunpack.c.l.b16 %v346
    %v2220 = vunpack.c.h.b16 %v346
    %v2221 = vunpack.c.l.b16 %v347
    %v2222 = vunpack.c.h.b16 %v347
    %v2223 = vunpack.c.l.b16 %v348
    %v2224 = vunpack.c.h.b16 %v348
    %v2225 = vunpack.c.l.b16 %v349
    %v2226 = vunpack.c.h.b16 %v349
    %v2227 = vunpack.c.l.b16 %v350
    %v2228 = vunpack.c.h.b16 %v350
    %v2229 = vunpack.c.l.b16 %v351
    %v2230 = vunpack.c.h.b16 %v351
    %v2231 = vunpack.c.l.b16 %v352
    %v2232 = vunpack.c.h.b16 %v352
    %v2233 = vunpack.c.l.b16 %v353
    %v2234 = vunpack.c.h.b16 %v353
    %v2235 = vpack.c.b16 %v1983, %v1979
    %v2236 = vpack.c.b16 %v1984, %v1980
    %v2237 = vpack.c.b16 %v1985, %v1981
    %v2238 = vpack.c.b16 %v1986, %v1982
    %v2239 = vpack.c.b16 %v1991, %v1987
    %v2240 = vpack.c.b16 %v1992, %v1988
    %v2241 = vpack.c.b16 %v1993, %v1989
    %v2242 = vpack.c.b16 %v1994, %v1990
    %v2243 = vpack.c.b16 %v1999, %v1995
    %v2244 = vpack.c.b16 %v2000, %v1996
    %v2245 = vpack.c.b16 %v2001, %v1997
    %v2246 = vpack.c.b16 %v2002, %v1998
    %v2247 = vpack.c.b16 %v2007, %v2003
    %v2248 = vpack.c.b16 %v2008, %v2004
    %v2249 = vpack.c.b16 %v2009, %v2005
    %v2250 = vpack.c.b16 %v2010, %v2006
    %v2251 = vpack.c.b16 %v2015, %v2011
    %v2252 = vpack.c.b16 %v2016, %v2012
    %v2253 = vpack.c.b16 %v2017, %v2013
    %v2254 = vpack.c.b16 %v2018, %v2014
    %v2255 = vpack.c.b16 %v2023, %v2019
    %v2256 = vpack.c.b16 %v2024, %v2020
    %v2257 = vpack.c.b16 %v2025, %v2021
    %v2258 = vpack.c.b16 %v2026, %v2022
    %v2259 = vpack.c.b16 %v2031, %v2027
    %v2260 = vpack.c.b16 %v2032, %v2028
    %v2261 = vpack.c.b16 %v2033, %v2029
    %v2262 = vpack.c.b16 %v2034, %v2030
    %v2263 = vpack.c.b16 %v2039, %v2035
    %v2264 = vpack.c.b16 %v2040, %v2036
    %v2265 = vpack.c.b16 %v2041, %v2037
    %v2266 = vpack.c.b16 %v2042, %v2038
    %v2267 = vpack.c.b16 %v2047, %v2043
    %v2268 = vpack.c.b16 %v2048, %v2044
    %v2269 = vpack.c.b16 %v2049, %v2045
    %v2270 = vpack.c.b16 %v2050, %v2046
    %v2271 = vpack.c.b16 %v2055, %v2051
    %v2272 = vpack.c.b16 %v2056, %v2052
    %v2273 = vpack.c.b16 %v2057, %v2053
    %v2274 = vpack.c.b16 %v2058, %v2054
    %v2275 = vpack.c.b16 %v2063, %v2059
    %v2276 = vpack.c.b16 %v2064, %v2060
    %v2277 = vpack.c.b16 %v2065, %v2061
    %v2278 = vpack.c.b16 %v2066, %v2062
    %v2279 = vpack.c.b16 %v2071, %v2067
    %v2280 = vpack.c.b16 %v2072, %v2068
    %v2281 = vpack.c.b16 %v2073, %v2069
    %v2282 = vpack.c.b16 %v2074, %v2070
    %v2283 = vpack.c.b16 %v2079, %v2075
    %v2284 = vpack.c.b16 %v2080, %v2076
    %v2285 = vpack.c.b16 %v2081, %v2077
    %v2286 = vpack.c.b16 %v2082, %v2078
    %v2287 = vpack.c.b16 %v2087, %v2083
    %v2288 = vpack.c.b16 %v2088, %v2084
    %v2289 = vpack.c.b16 %v2089, %v2085
    %v2290 = vpack.c.b16 %v2090, %v2086
    %v2291 = vpack.c.b16 %v2095, %v2091
    %v2292 = vpack.c.b16 %v2096, %v2092
    %v2293 = vpack.c.b16 %v2097, %v2093
    %v2294 = vpack.c.b16 %v2098, %v2094
    %v2295 = vpack.c.b16 %v2103, %v2099
    %v2296 = vpack.c.b16 %v2104, %v2100
    %v2297 = vpack.c.b16 %v2105, %v2101
    %v2298 = vpack.c.b16 %v2106, %v2102
    %v2299 = vpack.c.b16 %v2111, %v2107
    %v2300 = vpack.c.b16 %v2112, %v2108
    %v2301 = vpack.c.b16 %v2113, %v2109
    %v2302 = vpack.c.b16 %v2114, %v2110
    %v2303 = vpack.c.b16 %v2119, %v2115
    %v2304 = vpack.c.b16 %v2120, %v2116
    %v2305 = vpack.c.b16 %v2121, %v2117
    %v2306 = vpack.c.b16 %v2122, %v2118
    %v2307 = vpack.c.b16 %v2127, %v2123
    %v2308 = vpack.c.b16 %v2128, %v2124
    %v2309 = vpack.c.b16 %v2129, %v2125
    %v2310 = vpack.c.b16 %v2130, %v2126
    %v2311 = vpack.c.b16 %v2135, %v2131
    %v2312 = vpack.c.b16 %v2136, %v2132
    %v2313 = vpack.c.b16 %v2137, %v2133
    %v2314 = vpack.c.b16 %v2138, %v2134
    %v2315 = vpack.c.b16 %v2143, %v2139
    %v2316 = vpack.c.b16 %v2144, %v2140
    %v2317 = vpack.c.b16 %v2145, %v2141
    %v2318 = vpack.c.b16 %v2146, %v2142
    %v2319 = vpack.c.b16 %v2151, %v2147
    %v2320 = vpack.c.b16 %v2152, %v2148
    %v2321 = vpack.c.b16 %v2153, %v2149
    %v2322 = vpack.c.b16 %v2154, %v2150
    %v2323 = vpack.c.b16 %v2159, %v2155
    %v2324 = vpack.c.b16 %v2160, %v2156
    %v2325 = vpack.c.b16 %v2161, %v2157
    %v2326 = vpack.c.b16 %v2162, %v2158
    %v2327 = vpack.c.b16 %v2167, %v2163
    %v2328 = vpack.c.b16 %v2168, %v2164
    %v2329 = vpack.c.b16 %v2169, %v2165
    %v2330 = vpack.c.b16 %v2170, %v2166
    %v2331 = vpack.c.b16 %v2175, %v2171
    %v2332 = vpack.c.b16 %v2176, %v2172
    %v2333 = vpack.c.b16 %v2177, %v2173
    %v2334 = vpack.c.b16 %v2178, %v2174
    %v2335 = vpack.c.b16 %v2183, %v2179
    %v2336 = vpack.c.b16 %v2184, %v2180
    %v2337 = vpack.c.b16 %v2185, %v2181
    %v2338 = vpack.c.b16 %v2186, %v2182
    %v2339 = vpack.c.b16 %v2191, %v2187
    %v2340 = vpack.c.b16 %v2192, %v2188
    %v2341 = vpack.c.b16 %v2193, %v2189
    %v2342 = vpack.c.b16 %v2194, %v2190
    %v2343 = vpack.c.b16 %v2199, %v2195
    %v2344 = vpack.c.b16 %v2200, %v2196
    %v2345 = vpack.c.b16 %v2201, %v2197
    %v2346 = vpack.c.b16 %v2202, %v2198
    %v2347 = vpack.c.b16 %v2207, %v2203
    %v2348 = vpack.c.b16 %v2208, %v2204
    %v2349 = vpack.c.b16 %v2209, %v2205
    %v2350 = vpack.c.b16 %v2210, %v2206
    %v2351 = vpack.c.b16 %v2215, %v2211
    %v2352 = vpack.c.b16 %v2216, %v2212
    %v2353 = vpack.c.b16 %v2217, %v2213
    %v2354 = vpack.c.b16 %v2218, %v2214
    %v2355 = vpack.c.b16 %v2223, %v2219
    %v2356 = vpack.c.b16 %v2224, %v2220
    %v2357 = vpack.c.b16 %v2225, %v2221
    %v2358 = vpack.c.b16 %v2226, %v2222
    %v2359 = vpack.c.b16 %v2231, %v2227
    %v2360 = vpack.c.b16 %v2232, %v2228
    %v2361 = vpack.c.b16 %v2233, %v2229
    %v2362 = vpack.c.b16 %v2234, %v2230
    %2491 = vmatprep.subr.bf16.mxu0 %v2236
    %2492 = vmatpush1.bf16.msra.mxu0 %v2235
    %2493 = vmatprep.subr.bf16.mxu0 %v2240
    %2494 = vmatpush1.bf16.msra.mxu0 %v2239
    %2495 = vmatprep.subr.bf16.mxu0 %v2244
    %2496 = vmatpush1.bf16.msra.mxu0 %v2243
    %2497 = vmatprep.subr.bf16.mxu0 %v2248
    %2498 = vmatpush1.bf16.msra.mxu0 %v2247
    %2499 = vmatprep.subr.bf16.mxu0 %v2252
    %2500 = vmatpush1.bf16.msra.mxu0 %v2251
    %2501 = vmatprep.subr.bf16.mxu0 %v2256
    %2502 = vmatpush1.bf16.msra.mxu0 %v2255
    %2503 = vmatprep.subr.bf16.mxu0 %v2260
    %2504 = vmatpush1.bf16.msra.mxu0 %v2259
    %2505 = vmatprep.subr.bf16.mxu0 %v2264
    %2506 = vmatpush1.bf16.msra.mxu0 %v2263
    %2507 = vmatprep.subr.bf16.mxu0 %v2268
    %2508 = vmatpush1.bf16.msra.mxu0 %v2267
    %2509 = vmatprep.subr.bf16.mxu0 %v2272
    %2510 = vmatpush1.bf16.msra.mxu0 %v2271
    %2511 = vmatprep.subr.bf16.mxu0 %v2276
    %2512 = vmatpush1.bf16.msra.mxu0 %v2275
    %2513 = vmatprep.subr.bf16.mxu0 %v2280
    %2514 = vmatpush1.bf16.msra.mxu0 %v2279
    %2515 = vmatprep.subr.bf16.mxu0 %v2284
    %2516 = vmatpush1.bf16.msra.mxu0 %v2283
    %2517 = vmatprep.subr.bf16.mxu0 %v2288
    %2518 = vmatpush1.bf16.msra.mxu0 %v2287
    %2519 = vmatprep.subr.bf16.mxu0 %v2292
    %2520 = vmatpush1.bf16.msra.mxu0 %v2291
    %2521 = vmatprep.subr.bf16.mxu0 %v2296
    %2522 = vmatpush1.bf16.msra.mxu0 %v2295
    %2523 = vmatprep.mubr.bf16.mxu0 %v1820
    %2524 = vmatmul.mubr.bf16.gmra.mrb[0].mxu0 %v1819
    %v2525 = vpop.f32.mrb[0].mxu0
    %v2526 = vadd.f32 %v1587, %v2525
    %v2527 = vpop.f32.mrb[0].mxu0
    %v2528 = vadd.f32 %v1589, %v2527
    %v2529 = vpop.f32.mrb[0].mxu0
    %v2530 = vadd.f32 %v1591, %v2529
    %v2531 = vpop.f32.mrb[0].mxu0
    %v2532 = vadd.f32 %v1593, %v2531
    %2533 = vmatprep.mubr.bf16.mxu0 %v1824
    %2534 = vmatmul.mubr.bf16.gmra.mrb[0].mxu0 %v1823
    %v2535 = vpop.f32.mrb[0].mxu0
    %v2536 = vadd.f32 %v1597, %v2535
    %v2537 = vpop.f32.mrb[0].mxu0
    %v2538 = vadd.f32 %v1599, %v2537
    %v2539 = vpop.f32.mrb[0].mxu0
    %v2540 = vadd.f32 %v1601, %v2539
    %v2541 = vpop.f32.mrb[0].mxu0
    %v2542 = vadd.f32 %v1603, %v2541
    %2543 = vmatprep.mubr.bf16.mxu0 %v1828
    %2544 = vmatmul.mubr.bf16.gmra.mrb[0].mxu0 %v1827
    %v2545 = vpop.f32.mrb[0].mxu0
    %v2546 = vadd.f32 %v1607, %v2545
    %v2547 = vpop.f32.mrb[0].mxu0
    %v2548 = vadd.f32 %v1609, %v2547
    %v2549 = vpop.f32.mrb[0].mxu0
    %v2550 = vadd.f32 %v1611, %v2549
    %v2551 = vpop.f32.mrb[0].mxu0
    %v2552 = vadd.f32 %v1613, %v2551
    %2553 = vmatprep.mubr.bf16.mxu0 %v1832
    %2554 = vmatmul.mubr.bf16.gmra.mrb[0].mxu0 %v1831
    %v2555 = vpop.f32.mrb[0].mxu0
    %v2556 = vadd.f32 %v1617, %v2555
    %v2557 = vpop.f32.mrb[0].mxu0
    %v2558 = vadd.f32 %v1619, %v2557
    %v2559 = vpop.f32.mrb[0].mxu0
    %v2560 = vadd.f32 %v1621, %v2559
    %v2561 = vpop.f32.mrb[0].mxu0
    %v2562 = vadd.f32 %v1623, %v2561
    %2563 = vdwg.mxu0
    %2564 = vmatprep.subr.bf16.mxu0 %v2300
    %2565 = vmatpush1.bf16.msra.mxu0 %v2299
    %2566 = vmatprep.subr.bf16.mxu0 %v2304
    %2567 = vmatpush1.bf16.msra.mxu0 %v2303
    %2568 = vmatprep.subr.bf16.mxu0 %v2308
    %2569 = vmatpush1.bf16.msra.mxu0 %v2307
    %2570 = vmatprep.subr.bf16.mxu0 %v2312
    %2571 = vmatpush1.bf16.msra.mxu0 %v2311
    %2572 = vmatprep.subr.bf16.mxu0 %v2316
    %2573 = vmatpush1.bf16.msra.mxu0 %v2315
    %2574 = vmatprep.subr.bf16.mxu0 %v2320
    %2575 = vmatpush1.bf16.msra.mxu0 %v2319
    %2576 = vmatprep.subr.bf16.mxu0 %v2324
    %2577 = vmatpush1.bf16.msra.mxu0 %v2323
    %2578 = vmatprep.subr.bf16.mxu0 %v2328
    %2579 = vmatpush1.bf16.msra.mxu0 %v2327
    %2580 = vmatprep.subr.bf16.mxu0 %v2332
    %2581 = vmatpush1.bf16.msra.mxu0 %v2331
    %2582 = vmatprep.subr.bf16.mxu0 %v2336
    %2583 = vmatpush1.bf16.msra.mxu0 %v2335
    %2584 = vmatprep.subr.bf16.mxu0 %v2340
    %2585 = vmatpush1.bf16.msra.mxu0 %v2339
    %2586 = vmatprep.subr.bf16.mxu0 %v2344
    %2587 = vmatpush1.bf16.msra.mxu0 %v2343
    %2588 = vmatprep.subr.bf16.mxu0 %v2348
    %2589 = vmatpush1.bf16.msra.mxu0 %v2347
    %2590 = vmatprep.subr.bf16.mxu0 %v2352
    %2591 = vmatpush1.bf16.msra.mxu0 %v2351
    %2592 = vmatprep.subr.bf16.mxu0 %v2356
    %2593 = vmatpush1.bf16.msra.mxu0 %v2355
    %2594 = vmatprep.subr.bf16.mxu0 %v2360
    %2595 = vmatpush1.bf16.msra.mxu0 %v2359
    %2596 = vmatprep.mubr.bf16.mxu0 %v1822
    %2597 = vmatmul.mubr.bf16.gmra.mrb[0].mxu0 %v1821
    %v2598 = vpop.f32.mrb[0].mxu0
    %v2599 = vadd.f32 %v2526, %v2598
    %v2600 = vpop.f32.mrb[0].mxu0
    %v2601 = vadd.f32 %v2528, %v2600
    %v2602 = vpop.f32.mrb[0].mxu0
    %v2603 = vadd.f32 %v2530, %v2602
    %v2604 = vpop.f32.mrb[0].mxu0
    %v2605 = vadd.f32 %v2532, %v2604
    %2606 = vmatprep.mubr.bf16.mxu0 %v1826
    %2607 = vmatmul.mubr.bf16.gmra.mrb[0].mxu0 %v1825
    %v2608 = vpop.f32.mrb[0].mxu0
    %v2609 = vadd.f32 %v2536, %v2608
    %v2610 = vpop.f32.mrb[0].mxu0
    %v2611 = vadd.f32 %v2538, %v2610
    %v2612 = vpop.f32.mrb[0].mxu0
    %v2613 = vadd.f32 %v2540, %v2612
    %v2614 = vpop.f32.mrb[0].mxu0
    %v2615 = vadd.f32 %v2542, %v2614
    %2616 = vmatprep.mubr.bf16.mxu0 %v1830
    %2617 = vmatmul.mubr.bf16.gmra.mrb[0].mxu0 %v1829
    %v2618 = vpop.f32.mrb[0].mxu0
    %v2619 = vadd.f32 %v2546, %v2618
    %v2620 = vpop.f32.mrb[0].mxu0
    %v2621 = vadd.f32 %v2548, %v2620
    %v2622 = vpop.f32.mrb[0].mxu0
    %v2623 = vadd.f32 %v2550, %v2622
    %v2624 = vpop.f32.mrb[0].mxu0
    %v2625 = vadd.f32 %v2552, %v2624
    %2626 = vmatprep.mubr.bf16.mxu0 %v1834
    %2627 = vmatmul.mubr.bf16.gmra.mrb[0].mxu0 %v1833
    %v2628 = vpop.f32.mrb[0].mxu0
    %v2629 = vadd.f32 %v2556, %v2628
    %v2630 = vpop.f32.mrb[0].mxu0
    %v2631 = vadd.f32 %v2558, %v2630
    %v2632 = vpop.f32.mrb[0].mxu0
    %v2633 = vadd.f32 %v2560, %v2632
    %v2634 = vpop.f32.mrb[0].mxu0
    %v2635 = vadd.f32 %v2562, %v2634
    %2636 = vdwg.mxu0
    %2637 = vmatprep.subr.bf16.mxu0 %v2238
    %2638 = vmatpush1.bf16.msra.mxu0 %v2237
    %2639 = vmatprep.subr.bf16.mxu0 %v2242
    %2640 = vmatpush1.bf16.msra.mxu0 %v2241
    %2641 = vmatprep.subr.bf16.mxu0 %v2246
    %2642 = vmatpush1.bf16.msra.mxu0 %v2245
    %2643 = vmatprep.subr.bf16.mxu0 %v2250
    %2644 = vmatpush1.bf16.msra.mxu0 %v2249
    %2645 = vmatprep.subr.bf16.mxu0 %v2254
    %2646 = vmatpush1.bf16.msra.mxu0 %v2253
    %2647 = vmatprep.subr.bf16.mxu0 %v2258
    %2648 = vmatpush1.bf16.msra.mxu0 %v2257
    %2649 = vmatprep.subr.bf16.mxu0 %v2262
    %2650 = vmatpush1.bf16.msra.mxu0 %v2261
    %2651 = vmatprep.subr.bf16.mxu0 %v2266
    %2652 = vmatpush1.bf16.msra.mxu0 %v2265
    %2653 = vmatprep.subr.bf16.mxu0 %v2270
    %2654 = vmatpush1.bf16.msra.mxu0 %v2269
    %2655 = vmatprep.subr.bf16.mxu0 %v2274
    %2656 = vmatpush1.bf16.msra.mxu0 %v2273
    %2657 = vmatprep.subr.bf16.mxu0 %v2278
    %2658 = vmatpush1.bf16.msra.mxu0 %v2277
    %2659 = vmatprep.subr.bf16.mxu0 %v2282
    %2660 = vmatpush1.bf16.msra.mxu0 %v2281
    %2661 = vmatprep.subr.bf16.mxu0 %v2286
    %2662 = vmatpush1.bf16.msra.mxu0 %v2285
    %2663 = vmatprep.subr.bf16.mxu0 %v2290
    %2664 = vmatpush1.bf16.msra.mxu0 %v2289
    %2665 = vmatprep.subr.bf16.mxu0 %v2294
    %2666 = vmatpush1.bf16.msra.mxu0 %v2293
    %2667 = vmatprep.subr.bf16.mxu0 %v2298
    %2668 = vmatpush1.bf16.msra.mxu0 %v2297
    %2669 = vmatprep.mubr.bf16.mxu0 %v1820
    %2670 = vmatmul.mubr.bf16.gmra.mrb[0].mxu0 %v1819
    %v2671 = vpop.f32.mrb[0].mxu0
    %v2672 = vadd.f32 %v1733, %v2671
    %v2673 = vpop.f32.mrb[0].mxu0
    %v2674 = vadd.f32 %v1735, %v2673
    %v2675 = vpop.f32.mrb[0].mxu0
    %v2676 = vadd.f32 %v1737, %v2675
    %v2677 = vpop.f32.mrb[0].mxu0
    %v2678 = vadd.f32 %v1739, %v2677
    %2679 = vmatprep.mubr.bf16.mxu0 %v1824
    %2680 = vmatmul.mubr.bf16.gmra.mrb[0].mxu0 %v1823
    %v2681 = vpop.f32.mrb[0].mxu0
    %v2682 = vadd.f32 %v1743, %v2681
    %v2683 = vpop.f32.mrb[0].mxu0
    %v2684 = vadd.f32 %v1745, %v2683
    %v2685 = vpop.f32.mrb[0].mxu0
    %v2686 = vadd.f32 %v1747, %v2685
    %v2687 = vpop.f32.mrb[0].mxu0
    %v2688 = vadd.f32 %v1749, %v2687
    %2689 = vmatprep.mubr.bf16.mxu0 %v1828
    %2690 = vmatmul.mubr.bf16.gmra.mrb[0].mxu0 %v1827
    %v2691 = vpop.f32.mrb[0].mxu0
    %v2692 = vadd.f32 %v1753, %v2691
    %v2693 = vpop.f32.mrb[0].mxu0
    %v2694 = vadd.f32 %v1755, %v2693
    %v2695 = vpop.f32.mrb[0].mxu0
    %v2696 = vadd.f32 %v1757, %v2695
    %v2697 = vpop.f32.mrb[0].mxu0
    %v2698 = vadd.f32 %v1759, %v2697
    %2699 = vmatprep.mubr.bf16.mxu0 %v1832
    %2700 = vmatmul.mubr.bf16.gmra.mrb[0].mxu0 %v1831
    %v2701 = vpop.f32.mrb[0].mxu0
    %v2702 = vadd.f32 %v1763, %v2701
    %v2703 = vpop.f32.mrb[0].mxu0
    %v2704 = vadd.f32 %v1765, %v2703
    %v2705 = vpop.f32.mrb[0].mxu0
    %v2706 = vadd.f32 %v1767, %v2705
    %v2707 = vpop.f32.mrb[0].mxu0
    %v2708 = vadd.f32 %v1769, %v2707
    %2709 = vdwg.mxu0
    %2710 = vmatprep.subr.bf16.mxu0 %v2302
    %2711 = vmatpush1.bf16.msra.mxu0 %v2301
    %2712 = vmatprep.subr.bf16.mxu0 %v2306
    %2713 = vmatpush1.bf16.msra.mxu0 %v2305
    %2714 = vmatprep.subr.bf16.mxu0 %v2310
    %2715 = vmatpush1.bf16.msra.mxu0 %v2309
    %2716 = vmatprep.subr.bf16.mxu0 %v2314
    %2717 = vmatpush1.bf16.msra.mxu0 %v2313
    %2718 = vmatprep.subr.bf16.mxu0 %v2318
    %2719 = vmatpush1.bf16.msra.mxu0 %v2317
    %2720 = vmatprep.subr.bf16.mxu0 %v2322
    %2721 = vmatpush1.bf16.msra.mxu0 %v2321
    %2722 = vmatprep.subr.bf16.mxu0 %v2326
    %2723 = vmatpush1.bf16.msra.mxu0 %v2325
    %2724 = vmatprep.subr.bf16.mxu0 %v2330
    %2725 = vmatpush1.bf16.msra.mxu0 %v2329
    %2726 = vmatprep.subr.bf16.mxu0 %v2334
    %2727 = vmatpush1.bf16.msra.mxu0 %v2333
    %2728 = vmatprep.subr.bf16.mxu0 %v2338
    %2729 = vmatpush1.bf16.msra.mxu0 %v2337
    %2730 = vmatprep.subr.bf16.mxu0 %v2342
    %2731 = vmatpush1.bf16.msra.mxu0 %v2341
    %2732 = vmatprep.subr.bf16.mxu0 %v2346
    %2733 = vmatpush1.bf16.msra.mxu0 %v2345
    %2734 = vmatprep.subr.bf16.mxu0 %v2350
    %2735 = vmatpush1.bf16.msra.mxu0 %v2349
    %2736 = vmatprep.subr.bf16.mxu0 %v2354
    %2737 = vmatpush1.bf16.msra.mxu0 %v2353
    %2738 = vmatprep.subr.bf16.mxu0 %v2358
    %2739 = vmatpush1.bf16.msra.mxu0 %v2357
    %2740 = vmatprep.subr.bf16.mxu0 %v2362
    %2741 = vmatpush1.bf16.msra.mxu0 %v2361
    %2742 = vmatprep.mubr.bf16.mxu0 %v1822
    %2743 = vmatmul.mubr.bf16.gmra.mrb[0].mxu0 %v1821
    %v2744 = vpop.f32.mrb[0].mxu0
    %v2745 = vadd.f32 %v2672, %v2744
    %v2746 = vpop.f32.mrb[0].mxu0
    %v2747 = vadd.f32 %v2674, %v2746
    %v2748 = vpop.f32.mrb[0].mxu0
    %v2749 = vadd.f32 %v2676, %v2748
    %v2750 = vpop.f32.mrb[0].mxu0
    %v2751 = vadd.f32 %v2678, %v2750
    %2752 = vmatprep.mubr.bf16.mxu0 %v1826
    %2753 = vmatmul.mubr.bf16.gmra.mrb[0].mxu0 %v1825
    %v2754 = vpop.f32.mrb[0].mxu0
    %v2755 = vadd.f32 %v2682, %v2754
    %v2756 = vpop.f32.mrb[0].mxu0
    %v2757 = vadd.f32 %v2684, %v2756
    %v2758 = vpop.f32.mrb[0].mxu0
    %v2759 = vadd.f32 %v2686, %v2758
    %v2760 = vpop.f32.mrb[0].mxu0
    %v2761 = vadd.f32 %v2688, %v2760
    %2762 = vmatprep.mubr.bf16.mxu0 %v1830
    %2763 = vmatmul.mubr.bf16.gmra.mrb[0].mxu0 %v1829
    %v2764 = vpop.f32.mrb[0].mxu0
    %v2765 = vadd.f32 %v2692, %v2764
    %v2766 = vpop.f32.mrb[0].mxu0
    %v2767 = vadd.f32 %v2694, %v2766
    %v2768 = vpop.f32.mrb[0].mxu0
    %v2769 = vadd.f32 %v2696, %v2768
    %v2770 = vpop.f32.mrb[0].mxu0
    %v2771 = vadd.f32 %v2698, %v2770
    %2772 = vmatprep.mubr.bf16.mxu0 %v1834
    %2773 = vmatmul.mubr.bf16.gmra.mrb[0].mxu0 %v1833
    %v2774 = vpop.f32.mrb[0].mxu0
    %v2775 = vadd.f32 %v2702, %v2774
    %v2776 = vpop.f32.mrb[0].mxu0
    %v2777 = vadd.f32 %v2704, %v2776
    %v2778 = vpop.f32.mrb[0].mxu0
    %v2779 = vadd.f32 %v2706, %v2778
    %v2780 = vpop.f32.mrb[0].mxu0
    %v2781 = vadd.f32 %v2708, %v2780
    %2782 = vdwg.mxu0
    %v2783 = vld [vmem:[#allocation2] sm:$0xee]
    %v2784 = vld [vmem:[#allocation2 + $0x8] sm:$0xee]
    %v2785 = vld [vmem:[#allocation2 + $0x10] sm:$0x11]
    %v2786 = vld [vmem:[#allocation2 + $0x18] sm:$0x11]
    %v2787 = vld [vmem:[#allocation2 + $0x20] sm:$0xee]
    %v2788 = vld [vmem:[#allocation2 + $0x28] sm:$0xee]
    %v2789 = vld [vmem:[#allocation2 + $0x30] sm:$0x11]
    %v2790 = vld [vmem:[#allocation2 + $0x38] sm:$0x11]
    %v2791 = vld [vmem:[#allocation2 + $0x40] sm:$0xee]
    %v2792 = vld [vmem:[#allocation2 + $0x48] sm:$0xee]
    %v2793 = vld [vmem:[#allocation2 + $0x50] sm:$0x11]
    %v2794 = vld [vmem:[#allocation2 + $0x58] sm:$0x11]
    %v2795 = vld [vmem:[#allocation2 + $0x60] sm:$0xee]
    %v2796 = vld [vmem:[#allocation2 + $0x68] sm:$0xee]
    %v2797 = vld [vmem:[#allocation2 + $0x70] sm:$0x11]
    %v2798 = vld [vmem:[#allocation2 + $0x78] sm:$0x11]
    %v2799 = vld [vmem:[#allocation2 + $0x80] sm:$0xee]
    %v2800 = vld [vmem:[#allocation2 + $0x88] sm:$0xee]
    %v2801 = vld [vmem:[#allocation2 + $0x90] sm:$0x11]
    %v2802 = vld [vmem:[#allocation2 + $0x98] sm:$0x11]
    %v2803 = vld [vmem:[#allocation2 + $0xa0] sm:$0xee]
    %v2804 = vld [vmem:[#allocation2 + $0xa8] sm:$0xee]
    %v2805 = vld [vmem:[#allocation2 + $0xb0] sm:$0x11]
    %v2806 = vld [vmem:[#allocation2 + $0xb8] sm:$0x11]
    %v2807 = vld [vmem:[#allocation2 + $0xc0] sm:$0xee]
    %v2808 = vld [vmem:[#allocation2 + $0xc8] sm:$0xee]
    %v2809 = vld [vmem:[#allocation2 + $0xd0] sm:$0x11]
    %v2810 = vld [vmem:[#allocation2 + $0xd8] sm:$0x11]
    %v2811 = vld [vmem:[#allocation2 + $0xe0] sm:$0xee]
    %v2812 = vld [vmem:[#allocation2 + $0xe8] sm:$0xee]
    %v2813 = vld [vmem:[#allocation2 + $0xf0] sm:$0x11]
    %v2814 = vld [vmem:[#allocation2 + $0xf8] sm:$0x11]
    %vm2847 = vcmask 1042432
    %vm2848 = vcmask 1046532
    %vm2849 = vmor %vm2847, %vm2848
    %v2850 = vrot.slane %v2783, 5
    %v2851 = vrot.slane %v2850, 4
    %v2852 = vrot.slane %v2785, 5
    %v2853 = vsel %vm2849, %v2851, %v2852
    %v2854 = vrot.slane %v2784, 5
    %v2855 = vrot.slane %v2854, 4
    %v2856 = vrot.slane %v2786, 5
    %v2857 = vsel %vm2849, %v2855, %v2856
    %v2858 = vrot.slane %v2787, 5
    %v2859 = vrot.slane %v2858, 4
    %v2860 = vrot.slane %v2789, 5
    %v2861 = vsel %vm2849, %v2859, %v2860
    %v2862 = vrot.slane %v2788, 5
    %v2863 = vrot.slane %v2862, 4
    %v2864 = vrot.slane %v2790, 5
    %v2865 = vsel %vm2849, %v2863, %v2864
    %v2866 = vrot.slane %v2791, 5
    %v2867 = vrot.slane %v2866, 4
    %v2868 = vrot.slane %v2793, 5
    %v2869 = vsel %vm2849, %v2867, %v2868
    %v2870 = vrot.slane %v2792, 5
    %v2871 = vrot.slane %v2870, 4
    %v2872 = vrot.slane %v2794, 5
    %v2873 = vsel %vm2849, %v2871, %v2872
    %v2874 = vrot.slane %v2795, 5
    %v2875 = vrot.slane %v2874, 4
    %v2876 = vrot.slane %v2797, 5
    %v2877 = vsel %vm2849, %v2875, %v2876
    %v2878 = vrot.slane %v2796, 5
    %v2879 = vrot.slane %v2878, 4
    %v2880 = vrot.slane %v2798, 5
    %v2881 = vsel %vm2849, %v2879, %v2880
    %v2882 = vrot.slane %v2799, 5
    %v2883 = vrot.slane %v2882, 4
    %v2884 = vrot.slane %v2801, 5
    %v2885 = vsel %vm2849, %v2883, %v2884
    %v2886 = vrot.slane %v2800, 5
    %v2887 = vrot.slane %v2886, 4
    %v2888 = vrot.slane %v2802, 5
    %v2889 = vsel %vm2849, %v2887, %v2888
    %v2890 = vrot.slane %v2803, 5
    %v2891 = vrot.slane %v2890, 4
    %v2892 = vrot.slane %v2805, 5
    %v2893 = vsel %vm2849, %v2891, %v2892
    %v2894 = vrot.slane %v2804, 5
    %v2895 = vrot.slane %v2894, 4
    %v2896 = vrot.slane %v2806, 5
    %v2897 = vsel %vm2849, %v2895, %v2896
    %v2898 = vrot.slane %v2807, 5
    %v2899 = vrot.slane %v2898, 4
    %v2900 = vrot.slane %v2809, 5
    %v2901 = vsel %vm2849, %v2899, %v2900
    %v2902 = vrot.slane %v2808, 5
    %v2903 = vrot.slane %v2902, 4
    %v2904 = vrot.slane %v2810, 5
    %v2905 = vsel %vm2849, %v2903, %v2904
    %v2906 = vrot.slane %v2811, 5
    %v2907 = vrot.slane %v2906, 4
    %v2908 = vrot.slane %v2813, 5
    %v2909 = vsel %vm2849, %v2907, %v2908
    %v2910 = vrot.slane %v2812, 5
    %v2911 = vrot.slane %v2910, 4
    %v2912 = vrot.slane %v2814, 5
    %v2913 = vsel %vm2849, %v2911, %v2912
    %s2914 = scalar_lea.vmem [#allocation3], 2048
    %v2915 = vld [vmem:[%s2914] sm:$0xff]
    %v2916 = vld [vmem:[%s2914 + $0x8] sm:$0xff]
    %v2917 = vld [vmem:[%s2914 + $0x10] sm:$0xff]
    %v2918 = vld [vmem:[%s2914 + $0x18] sm:$0xff]
    %v2919 = vld [vmem:[%s2914 + $0x20] sm:$0xff]
    %v2920 = vld [vmem:[%s2914 + $0x28] sm:$0xff]
    %v2921 = vld [vmem:[%s2914 + $0x30] sm:$0xff]
    %v2922 = vld [vmem:[%s2914 + $0x38] sm:$0xff]
    %v2923 = vld [vmem:[%s2914 + $0x40] sm:$0xff]
    %v2924 = vld [vmem:[%s2914 + $0x48] sm:$0xff]
    %v2925 = vld [vmem:[%s2914 + $0x50] sm:$0xff]
    %v2926 = vld [vmem:[%s2914 + $0x58] sm:$0xff]
    %v2927 = vld [vmem:[%s2914 + $0x60] sm:$0xff]
    %v2928 = vld [vmem:[%s2914 + $0x68] sm:$0xff]
    %v2929 = vld [vmem:[%s2914 + $0x70] sm:$0xff]
    %v2930 = vld [vmem:[%s2914 + $0x78] sm:$0xff]
    %v2931 = vld [vmem:[%s2914 + $0x80] sm:$0xff]
    %v2932 = vld [vmem:[%s2914 + $0x88] sm:$0xff]
    %v2933 = vld [vmem:[%s2914 + $0x90] sm:$0xff]
    %v2934 = vld [vmem:[%s2914 + $0x98] sm:$0xff]
    %v2935 = vld [vmem:[%s2914 + $0xa0] sm:$0xff]
    %v2936 = vld [vmem:[%s2914 + $0xa8] sm:$0xff]
    %v2937 = vld [vmem:[%s2914 + $0xb0] sm:$0xff]
    %v2938 = vld [vmem:[%s2914 + $0xb8] sm:$0xff]
    %v2939 = vld [vmem:[%s2914 + $0xc0] sm:$0xff]
    %v2940 = vld [vmem:[%s2914 + $0xc8] sm:$0xff]
    %v2941 = vld [vmem:[%s2914 + $0xd0] sm:$0xff]
    %v2942 = vld [vmem:[%s2914 + $0xd8] sm:$0xff]
    %v2943 = vld [vmem:[%s2914 + $0xe0] sm:$0xff]
    %v2944 = vld [vmem:[%s2914 + $0xe8] sm:$0xff]
    %v2945 = vld [vmem:[%s2914 + $0xf0] sm:$0xff]
    %v2946 = vld [vmem:[%s2914 + $0xf8] sm:$0xff]
    %v2947 = vld [vmem:[%s2914 + $0x100] sm:$0xff]
    %v2948 = vld [vmem:[%s2914 + $0x108] sm:$0xff]
    %v2949 = vld [vmem:[%s2914 + $0x110] sm:$0xff]
    %v2950 = vld [vmem:[%s2914 + $0x118] sm:$0xff]
    %v2951 = vld [vmem:[%s2914 + $0x120] sm:$0xff]
    %v2952 = vld [vmem:[%s2914 + $0x128] sm:$0xff]
    %v2953 = vld [vmem:[%s2914 + $0x130] sm:$0xff]
    %v2954 = vld [vmem:[%s2914 + $0x138] sm:$0xff]
    %v2955 = vld [vmem:[%s2914 + $0x140] sm:$0xff]
    %v2956 = vld [vmem:[%s2914 + $0x148] sm:$0xff]
    %v2957 = vld [vmem:[%s2914 + $0x150] sm:$0xff]
    %v2958 = vld [vmem:[%s2914 + $0x158] sm:$0xff]
    %v2959 = vld [vmem:[%s2914 + $0x160] sm:$0xff]
    %v2960 = vld [vmem:[%s2914 + $0x168] sm:$0xff]
    %v2961 = vld [vmem:[%s2914 + $0x170] sm:$0xff]
    %v2962 = vld [vmem:[%s2914 + $0x178] sm:$0xff]
    %v2963 = vld [vmem:[%s2914 + $0x180] sm:$0xff]
    %v2964 = vld [vmem:[%s2914 + $0x188] sm:$0xff]
    %v2965 = vld [vmem:[%s2914 + $0x190] sm:$0xff]
    %v2966 = vld [vmem:[%s2914 + $0x198] sm:$0xff]
    %v2967 = vld [vmem:[%s2914 + $0x1a0] sm:$0xff]
    %v2968 = vld [vmem:[%s2914 + $0x1a8] sm:$0xff]
    %v2969 = vld [vmem:[%s2914 + $0x1b0] sm:$0xff]
    %v2970 = vld [vmem:[%s2914 + $0x1b8] sm:$0xff]
    %v2971 = vld [vmem:[%s2914 + $0x1c0] sm:$0xff]
    %v2972 = vld [vmem:[%s2914 + $0x1c8] sm:$0xff]
    %v2973 = vld [vmem:[%s2914 + $0x1d0] sm:$0xff]
    %v2974 = vld [vmem:[%s2914 + $0x1d8] sm:$0xff]
    %v2975 = vld [vmem:[%s2914 + $0x1e0] sm:$0xff]
    %v2976 = vld [vmem:[%s2914 + $0x1e8] sm:$0xff]
    %v2977 = vld [vmem:[%s2914 + $0x1f0] sm:$0xff]
    %v2978 = vld [vmem:[%s2914 + $0x1f8] sm:$0xff]
    %v2979 = vld [vmem:[%s2914 + $0x200] sm:$0xff]
    %v2980 = vld [vmem:[%s2914 + $0x208] sm:$0xff]
    %v2981 = vld [vmem:[%s2914 + $0x210] sm:$0xff]
    %v2982 = vld [vmem:[%s2914 + $0x218] sm:$0xff]
    %v2983 = vld [vmem:[%s2914 + $0x220] sm:$0xff]
    %v2984 = vld [vmem:[%s2914 + $0x228] sm:$0xff]
    %v2985 = vld [vmem:[%s2914 + $0x230] sm:$0xff]
    %v2986 = vld [vmem:[%s2914 + $0x238] sm:$0xff]
    %v2987 = vld [vmem:[%s2914 + $0x240] sm:$0xff]
    %v2988 = vld [vmem:[%s2914 + $0x248] sm:$0xff]
    %v2989 = vld [vmem:[%s2914 + $0x250] sm:$0xff]
    %v2990 = vld [vmem:[%s2914 + $0x258] sm:$0xff]
    %v2991 = vld [vmem:[%s2914 + $0x260] sm:$0xff]
    %v2992 = vld [vmem:[%s2914 + $0x268] sm:$0xff]
    %v2993 = vld [vmem:[%s2914 + $0x270] sm:$0xff]
    %v2994 = vld [vmem:[%s2914 + $0x278] sm:$0xff]
    %v2995 = vld [vmem:[%s2914 + $0x280] sm:$0xff]
    %v2996 = vld [vmem:[%s2914 + $0x288] sm:$0xff]
    %v2997 = vld [vmem:[%s2914 + $0x290] sm:$0xff]
    %v2998 = vld [vmem:[%s2914 + $0x298] sm:$0xff]
    %v2999 = vld [vmem:[%s2914 + $0x2a0] sm:$0xff]
    %v3000 = vld [vmem:[%s2914 + $0x2a8] sm:$0xff]
    %v3001 = vld [vmem:[%s2914 + $0x2b0] sm:$0xff]
    %v3002 = vld [vmem:[%s2914 + $0x2b8] sm:$0xff]
    %v3003 = vld [vmem:[%s2914 + $0x2c0] sm:$0xff]
    %v3004 = vld [vmem:[%s2914 + $0x2c8] sm:$0xff]
    %v3005 = vld [vmem:[%s2914 + $0x2d0] sm:$0xff]
    %v3006 = vld [vmem:[%s2914 + $0x2d8] sm:$0xff]
    %v3007 = vld [vmem:[%s2914 + $0x2e0] sm:$0xff]
    %v3008 = vld [vmem:[%s2914 + $0x2e8] sm:$0xff]
    %v3009 = vld [vmem:[%s2914 + $0x2f0] sm:$0xff]
    %v3010 = vld [vmem:[%s2914 + $0x2f8] sm:$0xff]
    %v3011 = vld [vmem:[%s2914 + $0x300] sm:$0xff]
    %v3012 = vld [vmem:[%s2914 + $0x308] sm:$0xff]
    %v3013 = vld [vmem:[%s2914 + $0x310] sm:$0xff]
    %v3014 = vld [vmem:[%s2914 + $0x318] sm:$0xff]
    %v3015 = vld [vmem:[%s2914 + $0x320] sm:$0xff]
    %v3016 = vld [vmem:[%s2914 + $0x328] sm:$0xff]
    %v3017 = vld [vmem:[%s2914 + $0x330] sm:$0xff]
    %v3018 = vld [vmem:[%s2914 + $0x338] sm:$0xff]
    %v3019 = vld [vmem:[%s2914 + $0x340] sm:$0xff]
    %v3020 = vld [vmem:[%s2914 + $0x348] sm:$0xff]
    %v3021 = vld [vmem:[%s2914 + $0x350] sm:$0xff]
    %v3022 = vld [vmem:[%s2914 + $0x358] sm:$0xff]
    %v3023 = vld [vmem:[%s2914 + $0x360] sm:$0xff]
    %v3024 = vld [vmem:[%s2914 + $0x368] sm:$0xff]
    %v3025 = vld [vmem:[%s2914 + $0x370] sm:$0xff]
    %v3026 = vld [vmem:[%s2914 + $0x378] sm:$0xff]
    %v3027 = vld [vmem:[%s2914 + $0x380] sm:$0xff]
    %v3028 = vld [vmem:[%s2914 + $0x388] sm:$0xff]
    %v3029 = vld [vmem:[%s2914 + $0x390] sm:$0xff]
    %v3030 = vld [vmem:[%s2914 + $0x398] sm:$0xff]
    %v3031 = vld [vmem:[%s2914 + $0x3a0] sm:$0xff]
    %v3032 = vld [vmem:[%s2914 + $0x3a8] sm:$0xff]
    %v3033 = vld [vmem:[%s2914 + $0x3b0] sm:$0xff]
    %v3034 = vld [vmem:[%s2914 + $0x3b8] sm:$0xff]
    %v3035 = vld [vmem:[%s2914 + $0x3c0] sm:$0xff]
    %v3036 = vld [vmem:[%s2914 + $0x3c8] sm:$0xff]
    %v3037 = vld [vmem:[%s2914 + $0x3d0] sm:$0xff]
    %v3038 = vld [vmem:[%s2914 + $0x3d8] sm:$0xff]
    %v3039 = vld [vmem:[%s2914 + $0x3e0] sm:$0xff]
    %v3040 = vld [vmem:[%s2914 + $0x3e8] sm:$0xff]
    %v3041 = vld [vmem:[%s2914 + $0x3f0] sm:$0xff]
    %v3042 = vld [vmem:[%s2914 + $0x3f8] sm:$0xff]
    %v3043 = vunpack.c.l.b16 %v2853
    %v3044 = vunpack.c.h.b16 %v2853
    %v3045 = vunpack.c.l.b16 %v2857
    %v3046 = vunpack.c.h.b16 %v2857
    %v3047 = vunpack.c.l.b16 %v2861
    %v3048 = vunpack.c.h.b16 %v2861
    %v3049 = vunpack.c.l.b16 %v2865
    %v3050 = vunpack.c.h.b16 %v2865
    %v3051 = vunpack.c.l.b16 %v2869
    %v3052 = vunpack.c.h.b16 %v2869
    %v3053 = vunpack.c.l.b16 %v2873
    %v3054 = vunpack.c.h.b16 %v2873
    %v3055 = vunpack.c.l.b16 %v2877
    %v3056 = vunpack.c.h.b16 %v2877
    %v3057 = vunpack.c.l.b16 %v2881
    %v3058 = vunpack.c.h.b16 %v2881
    %v3059 = vunpack.c.l.b16 %v2885
    %v3060 = vunpack.c.h.b16 %v2885
    %v3061 = vunpack.c.l.b16 %v2889
    %v3062 = vunpack.c.h.b16 %v2889
    %v3063 = vunpack.c.l.b16 %v2893
    %v3064 = vunpack.c.h.b16 %v2893
    %v3065 = vunpack.c.l.b16 %v2897
    %v3066 = vunpack.c.h.b16 %v2897
    %v3067 = vunpack.c.l.b16 %v2901
    %v3068 = vunpack.c.h.b16 %v2901
    %v3069 = vunpack.c.l.b16 %v2905
    %v3070 = vunpack.c.h.b16 %v2905
    %v3071 = vunpack.c.l.b16 %v2909
    %v3072 = vunpack.c.h.b16 %v2909
    %v3073 = vunpack.c.l.b16 %v2913
    %v3074 = vunpack.c.h.b16 %v2913
    %v3075 = vpack.c.b16 %v3047, %v3043
    %v3076 = vpack.c.b16 %v3048, %v3044
    %v3077 = vpack.c.b16 %v3049, %v3045
    %v3078 = vpack.c.b16 %v3050, %v3046
    %v3079 = vpack.c.b16 %v3055, %v3051
    %v3080 = vpack.c.b16 %v3056, %v3052
    %v3081 = vpack.c.b16 %v3057, %v3053
    %v3082 = vpack.c.b16 %v3058, %v3054
    %v3083 = vpack.c.b16 %v3063, %v3059
    %v3084 = vpack.c.b16 %v3064, %v3060
    %v3085 = vpack.c.b16 %v3065, %v3061
    %v3086 = vpack.c.b16 %v3066, %v3062
    %v3087 = vpack.c.b16 %v3071, %v3067
    %v3088 = vpack.c.b16 %v3072, %v3068
    %v3089 = vpack.c.b16 %v3073, %v3069
    %v3090 = vpack.c.b16 %v3074, %v3070
    %v3235 = vunpack.c.l.b16 %v2915
    %v3236 = vunpack.c.h.b16 %v2915
    %v3237 = vunpack.c.l.b16 %v2916
    %v3238 = vunpack.c.h.b16 %v2916
    %v3239 = vunpack.c.l.b16 %v2917
    %v3240 = vunpack.c.h.b16 %v2917
    %v3241 = vunpack.c.l.b16 %v2918
    %v3242 = vunpack.c.h.b16 %v2918
    %v3243 = vunpack.c.l.b16 %v2919
    %v3244 = vunpack.c.h.b16 %v2919
    %v3245 = vunpack.c.l.b16 %v2920
    %v3246 = vunpack.c.h.b16 %v2920
    %v3247 = vunpack.c.l.b16 %v2921
    %v3248 = vunpack.c.h.b16 %v2921
    %v3249 = vunpack.c.l.b16 %v2922
    %v3250 = vunpack.c.h.b16 %v2922
    %v3251 = vunpack.c.l.b16 %v2923
    %v3252 = vunpack.c.h.b16 %v2923
    %v3253 = vunpack.c.l.b16 %v2924
    %v3254 = vunpack.c.h.b16 %v2924
    %v3255 = vunpack.c.l.b16 %v2925
    %v3256 = vunpack.c.h.b16 %v2925
    %v3257 = vunpack.c.l.b16 %v2926
    %v3258 = vunpack.c.h.b16 %v2926
    %v3259 = vunpack.c.l.b16 %v2927
    %v3260 = vunpack.c.h.b16 %v2927
    %v3261 = vunpack.c.l.b16 %v2928
    %v3262 = vunpack.c.h.b16 %v2928
    %v3263 = vunpack.c.l.b16 %v2929
    %v3264 = vunpack.c.h.b16 %v2929
    %v3265 = vunpack.c.l.b16 %v2930
    %v3266 = vunpack.c.h.b16 %v2930
    %v3267 = vunpack.c.l.b16 %v2931
    %v3268 = vunpack.c.h.b16 %v2931
    %v3269 = vunpack.c.l.b16 %v2932
    %v3270 = vunpack.c.h.b16 %v2932
    %v3271 = vunpack.c.l.b16 %v2933
    %v3272 = vunpack.c.h.b16 %v2933
    %v3273 = vunpack.c.l.b16 %v2934
    %v3274 = vunpack.c.h.b16 %v2934
    %v3275 = vunpack.c.l.b16 %v2935
    %v3276 = vunpack.c.h.b16 %v2935
    %v3277 = vunpack.c.l.b16 %v2936
    %v3278 = vunpack.c.h.b16 %v2936
    %v3279 = vunpack.c.l.b16 %v2937
    %v3280 = vunpack.c.h.b16 %v2937
    %v3281 = vunpack.c.l.b16 %v2938
    %v3282 = vunpack.c.h.b16 %v2938
    %v3283 = vunpack.c.l.b16 %v2939
    %v3284 = vunpack.c.h.b16 %v2939
    %v3285 = vunpack.c.l.b16 %v2940
    %v3286 = vunpack.c.h.b16 %v2940
    %v3287 = vunpack.c.l.b16 %v2941
    %v3288 = vunpack.c.h.b16 %v2941
    %v3289 = vunpack.c.l.b16 %v2942
    %v3290 = vunpack.c.h.b16 %v2942
    %v3291 = vunpack.c.l.b16 %v2943
    %v3292 = vunpack.c.h.b16 %v2943
    %v3293 = vunpack.c.l.b16 %v2944
    %v3294 = vunpack.c.h.b16 %v2944
    %v3295 = vunpack.c.l.b16 %v2945
    %v3296 = vunpack.c.h.b16 %v2945
    %v3297 = vunpack.c.l.b16 %v2946
    %v3298 = vunpack.c.h.b16 %v2946
    %v3299 = vunpack.c.l.b16 %v2947
    %v3300 = vunpack.c.h.b16 %v2947
    %v3301 = vunpack.c.l.b16 %v2948
    %v3302 = vunpack.c.h.b16 %v2948
    %v3303 = vunpack.c.l.b16 %v2949
    %v3304 = vunpack.c.h.b16 %v2949
    %v3305 = vunpack.c.l.b16 %v2950
    %v3306 = vunpack.c.h.b16 %v2950
    %v3307 = vunpack.c.l.b16 %v2951
    %v3308 = vunpack.c.h.b16 %v2951
    %v3309 = vunpack.c.l.b16 %v2952
    %v3310 = vunpack.c.h.b16 %v2952
    %v3311 = vunpack.c.l.b16 %v2953
    %v3312 = vunpack.c.h.b16 %v2953
    %v3313 = vunpack.c.l.b16 %v2954
    %v3314 = vunpack.c.h.b16 %v2954
    %v3315 = vunpack.c.l.b16 %v2955
    %v3316 = vunpack.c.h.b16 %v2955
    %v3317 = vunpack.c.l.b16 %v2956
    %v3318 = vunpack.c.h.b16 %v2956
    %v3319 = vunpack.c.l.b16 %v2957
    %v3320 = vunpack.c.h.b16 %v2957
    %v3321 = vunpack.c.l.b16 %v2958
    %v3322 = vunpack.c.h.b16 %v2958
    %v3323 = vunpack.c.l.b16 %v2959
    %v3324 = vunpack.c.h.b16 %v2959
    %v3325 = vunpack.c.l.b16 %v2960
    %v3326 = vunpack.c.h.b16 %v2960
    %v3327 = vunpack.c.l.b16 %v2961
    %v3328 = vunpack.c.h.b16 %v2961
    %v3329 = vunpack.c.l.b16 %v2962
    %v3330 = vunpack.c.h.b16 %v2962
    %v3331 = vunpack.c.l.b16 %v2963
    %v3332 = vunpack.c.h.b16 %v2963
    %v3333 = vunpack.c.l.b16 %v2964
    %v3334 = vunpack.c.h.b16 %v2964
    %v3335 = vunpack.c.l.b16 %v2965
    %v3336 = vunpack.c.h.b16 %v2965
    %v3337 = vunpack.c.l.b16 %v2966
    %v3338 = vunpack.c.h.b16 %v2966
    %v3339 = vunpack.c.l.b16 %v2967
    %v3340 = vunpack.c.h.b16 %v2967
    %v3341 = vunpack.c.l.b16 %v2968
    %v3342 = vunpack.c.h.b16 %v2968
    %v3343 = vunpack.c.l.b16 %v2969
    %v3344 = vunpack.c.h.b16 %v2969
    %v3345 = vunpack.c.l.b16 %v2970
    %v3346 = vunpack.c.h.b16 %v2970
    %v3347 = vunpack.c.l.b16 %v2971
    %v3348 = vunpack.c.h.b16 %v2971
    %v3349 = vunpack.c.l.b16 %v2972
    %v3350 = vunpack.c.h.b16 %v2972
    %v3351 = vunpack.c.l.b16 %v2973
    %v3352 = vunpack.c.h.b16 %v2973
    %v3353 = vunpack.c.l.b16 %v2974
    %v3354 = vunpack.c.h.b16 %v2974
    %v3355 = vunpack.c.l.b16 %v2975
    %v3356 = vunpack.c.h.b16 %v2975
    %v3357 = vunpack.c.l.b16 %v2976
    %v3358 = vunpack.c.h.b16 %v2976
    %v3359 = vunpack.c.l.b16 %v2977
    %v3360 = vunpack.c.h.b16 %v2977
    %v3361 = vunpack.c.l.b16 %v2978
    %v3362 = vunpack.c.h.b16 %v2978
    %v3363 = vunpack.c.l.b16 %v2979
    %v3364 = vunpack.c.h.b16 %v2979
    %v3365 = vunpack.c.l.b16 %v2980
    %v3366 = vunpack.c.h.b16 %v2980
    %v3367 = vunpack.c.l.b16 %v2981
    %v3368 = vunpack.c.h.b16 %v2981
    %v3369 = vunpack.c.l.b16 %v2982
    %v3370 = vunpack.c.h.b16 %v2982
    %v3371 = vunpack.c.l.b16 %v2983
    %v3372 = vunpack.c.h.b16 %v2983
    %v3373 = vunpack.c.l.b16 %v2984
    %v3374 = vunpack.c.h.b16 %v2984
    %v3375 = vunpack.c.l.b16 %v2985
    %v3376 = vunpack.c.h.b16 %v2985
    %v3377 = vunpack.c.l.b16 %v2986
    %v3378 = vunpack.c.h.b16 %v2986
    %v3379 = vunpack.c.l.b16 %v2987
    %v3380 = vunpack.c.h.b16 %v2987
    %v3381 = vunpack.c.l.b16 %v2988
    %v3382 = vunpack.c.h.b16 %v2988
    %v3383 = vunpack.c.l.b16 %v2989
    %v3384 = vunpack.c.h.b16 %v2989
    %v3385 = vunpack.c.l.b16 %v2990
    %v3386 = vunpack.c.h.b16 %v2990
    %v3387 = vunpack.c.l.b16 %v2991
    %v3388 = vunpack.c.h.b16 %v2991
    %v3389 = vunpack.c.l.b16 %v2992
    %v3390 = vunpack.c.h.b16 %v2992
    %v3391 = vunpack.c.l.b16 %v2993
    %v3392 = vunpack.c.h.b16 %v2993
    %v3393 = vunpack.c.l.b16 %v2994
    %v3394 = vunpack.c.h.b16 %v2994
    %v3395 = vunpack.c.l.b16 %v2995
    %v3396 = vunpack.c.h.b16 %v2995
    %v3397 = vunpack.c.l.b16 %v2996
    %v3398 = vunpack.c.h.b16 %v2996
    %v3399 = vunpack.c.l.b16 %v2997
    %v3400 = vunpack.c.h.b16 %v2997
    %v3401 = vunpack.c.l.b16 %v2998
    %v3402 = vunpack.c.h.b16 %v2998
    %v3403 = vunpack.c.l.b16 %v2999
    %v3404 = vunpack.c.h.b16 %v2999
    %v3405 = vunpack.c.l.b16 %v3000
    %v3406 = vunpack.c.h.b16 %v3000
    %v3407 = vunpack.c.l.b16 %v3001
    %v3408 = vunpack.c.h.b16 %v3001
    %v3409 = vunpack.c.l.b16 %v3002
    %v3410 = vunpack.c.h.b16 %v3002
    %v3411 = vunpack.c.l.b16 %v3003
    %v3412 = vunpack.c.h.b16 %v3003
    %v3413 = vunpack.c.l.b16 %v3004
    %v3414 = vunpack.c.h.b16 %v3004
    %v3415 = vunpack.c.l.b16 %v3005
    %v3416 = vunpack.c.h.b16 %v3005
    %v3417 = vunpack.c.l.b16 %v3006
    %v3418 = vunpack.c.h.b16 %v3006
    %v3419 = vunpack.c.l.b16 %v3007
    %v3420 = vunpack.c.h.b16 %v3007
    %v3421 = vunpack.c.l.b16 %v3008
    %v3422 = vunpack.c.h.b16 %v3008
    %v3423 = vunpack.c.l.b16 %v3009
    %v3424 = vunpack.c.h.b16 %v3009
    %v3425 = vunpack.c.l.b16 %v3010
    %v3426 = vunpack.c.h.b16 %v3010
    %v3427 = vunpack.c.l.b16 %v3011
    %v3428 = vunpack.c.h.b16 %v3011
    %v3429 = vunpack.c.l.b16 %v3012
    %v3430 = vunpack.c.h.b16 %v3012
    %v3431 = vunpack.c.l.b16 %v3013
    %v3432 = vunpack.c.h.b16 %v3013
    %v3433 = vunpack.c.l.b16 %v3014
    %v3434 = vunpack.c.h.b16 %v3014
    %v3435 = vunpack.c.l.b16 %v3015
    %v3436 = vunpack.c.h.b16 %v3015
    %v3437 = vunpack.c.l.b16 %v3016
    %v3438 = vunpack.c.h.b16 %v3016
    %v3439 = vunpack.c.l.b16 %v3017
    %v3440 = vunpack.c.h.b16 %v3017
    %v3441 = vunpack.c.l.b16 %v3018
    %v3442 = vunpack.c.h.b16 %v3018
    %v3443 = vunpack.c.l.b16 %v3019
    %v3444 = vunpack.c.h.b16 %v3019
    %v3445 = vunpack.c.l.b16 %v3020
    %v3446 = vunpack.c.h.b16 %v3020
    %v3447 = vunpack.c.l.b16 %v3021
    %v3448 = vunpack.c.h.b16 %v3021
    %v3449 = vunpack.c.l.b16 %v3022
    %v3450 = vunpack.c.h.b16 %v3022
    %v3451 = vunpack.c.l.b16 %v3023
    %v3452 = vunpack.c.h.b16 %v3023
    %v3453 = vunpack.c.l.b16 %v3024
    %v3454 = vunpack.c.h.b16 %v3024
    %v3455 = vunpack.c.l.b16 %v3025
    %v3456 = vunpack.c.h.b16 %v3025
    %v3457 = vunpack.c.l.b16 %v3026
    %v3458 = vunpack.c.h.b16 %v3026
    %v3459 = vunpack.c.l.b16 %v3027
    %v3460 = vunpack.c.h.b16 %v3027
    %v3461 = vunpack.c.l.b16 %v3028
    %v3462 = vunpack.c.h.b16 %v3028
    %v3463 = vunpack.c.l.b16 %v3029
    %v3464 = vunpack.c.h.b16 %v3029
    %v3465 = vunpack.c.l.b16 %v3030
    %v3466 = vunpack.c.h.b16 %v3030
    %v3467 = vunpack.c.l.b16 %v3031
    %v3468 = vunpack.c.h.b16 %v3031
    %v3469 = vunpack.c.l.b16 %v3032
    %v3470 = vunpack.c.h.b16 %v3032
    %v3471 = vunpack.c.l.b16 %v3033
    %v3472 = vunpack.c.h.b16 %v3033
    %v3473 = vunpack.c.l.b16 %v3034
    %v3474 = vunpack.c.h.b16 %v3034
    %v3475 = vunpack.c.l.b16 %v3035
    %v3476 = vunpack.c.h.b16 %v3035
    %v3477 = vunpack.c.l.b16 %v3036
    %v3478 = vunpack.c.h.b16 %v3036
    %v3479 = vunpack.c.l.b16 %v3037
    %v3480 = vunpack.c.h.b16 %v3037
    %v3481 = vunpack.c.l.b16 %v3038
    %v3482 = vunpack.c.h.b16 %v3038
    %v3483 = vunpack.c.l.b16 %v3039
    %v3484 = vunpack.c.h.b16 %v3039
    %v3485 = vunpack.c.l.b16 %v3040
    %v3486 = vunpack.c.h.b16 %v3040
    %v3487 = vunpack.c.l.b16 %v3041
    %v3488 = vunpack.c.h.b16 %v3041
    %v3489 = vunpack.c.l.b16 %v3042
    %v3490 = vunpack.c.h.b16 %v3042
    %v3491 = vpack.c.b16 %v3239, %v3235
    %v3492 = vpack.c.b16 %v3240, %v3236
    %v3493 = vpack.c.b16 %v3241, %v3237
    %v3494 = vpack.c.b16 %v3242, %v3238
    %v3495 = vpack.c.b16 %v3247, %v3243
    %v3496 = vpack.c.b16 %v3248, %v3244
    %v3497 = vpack.c.b16 %v3249, %v3245
    %v3498 = vpack.c.b16 %v3250, %v3246
    %v3499 = vpack.c.b16 %v3255, %v3251
    %v3500 = vpack.c.b16 %v3256, %v3252
    %v3501 = vpack.c.b16 %v3257, %v3253
    %v3502 = vpack.c.b16 %v3258, %v3254
    %v3503 = vpack.c.b16 %v3263, %v3259
    %v3504 = vpack.c.b16 %v3264, %v3260
    %v3505 = vpack.c.b16 %v3265, %v3261
    %v3506 = vpack.c.b16 %v3266, %v3262
    %v3507 = vpack.c.b16 %v3271, %v3267
    %v3508 = vpack.c.b16 %v3272, %v3268
    %v3509 = vpack.c.b16 %v3273, %v3269
    %v3510 = vpack.c.b16 %v3274, %v3270
    %v3511 = vpack.c.b16 %v3279, %v3275
    %v3512 = vpack.c.b16 %v3280, %v3276
    %v3513 = vpack.c.b16 %v3281, %v3277
    %v3514 = vpack.c.b16 %v3282, %v3278
    %v3515 = vpack.c.b16 %v3287, %v3283
    %v3516 = vpack.c.b16 %v3288, %v3284
    %v3517 = vpack.c.b16 %v3289, %v3285
    %v3518 = vpack.c.b16 %v3290, %v3286
    %v3519 = vpack.c.b16 %v3295, %v3291
    %v3520 = vpack.c.b16 %v3296, %v3292
    %v3521 = vpack.c.b16 %v3297, %v3293
    %v3522 = vpack.c.b16 %v3298, %v3294
    %v3523 = vpack.c.b16 %v3303, %v3299
    %v3524 = vpack.c.b16 %v3304, %v3300
    %v3525 = vpack.c.b16 %v3305, %v3301
    %v3526 = vpack.c.b16 %v3306, %v3302
    %v3527 = vpack.c.b16 %v3311, %v3307
    %v3528 = vpack.c.b16 %v3312, %v3308
    %v3529 = vpack.c.b16 %v3313, %v3309
    %v3530 = vpack.c.b16 %v3314, %v3310
    %v3531 = vpack.c.b16 %v3319, %v3315
    %v3532 = vpack.c.b16 %v3320, %v3316
    %v3533 = vpack.c.b16 %v3321, %v3317
    %v3534 = vpack.c.b16 %v3322, %v3318
    %v3535 = vpack.c.b16 %v3327, %v3323
    %v3536 = vpack.c.b16 %v3328, %v3324
    %v3537 = vpack.c.b16 %v3329, %v3325
    %v3538 = vpack.c.b16 %v3330, %v3326
    %v3539 = vpack.c.b16 %v3335, %v3331
    %v3540 = vpack.c.b16 %v3336, %v3332
    %v3541 = vpack.c.b16 %v3337, %v3333
    %v3542 = vpack.c.b16 %v3338, %v3334
    %v3543 = vpack.c.b16 %v3343, %v3339
    %v3544 = vpack.c.b16 %v3344, %v3340
    %v3545 = vpack.c.b16 %v3345, %v3341
    %v3546 = vpack.c.b16 %v3346, %v3342
    %v3547 = vpack.c.b16 %v3351, %v3347
    %v3548 = vpack.c.b16 %v3352, %v3348
    %v3549 = vpack.c.b16 %v3353, %v3349
    %v3550 = vpack.c.b16 %v3354, %v3350
    %v3551 = vpack.c.b16 %v3359, %v3355
    %v3552 = vpack.c.b16 %v3360, %v3356
    %v3553 = vpack.c.b16 %v3361, %v3357
    %v3554 = vpack.c.b16 %v3362, %v3358
    %v3555 = vpack.c.b16 %v3367, %v3363
    %v3556 = vpack.c.b16 %v3368, %v3364
    %v3557 = vpack.c.b16 %v3369, %v3365
    %v3558 = vpack.c.b16 %v3370, %v3366
    %v3559 = vpack.c.b16 %v3375, %v3371
    %v3560 = vpack.c.b16 %v3376, %v3372
    %v3561 = vpack.c.b16 %v3377, %v3373
    %v3562 = vpack.c.b16 %v3378, %v3374
    %v3563 = vpack.c.b16 %v3383, %v3379
    %v3564 = vpack.c.b16 %v3384, %v3380
    %v3565 = vpack.c.b16 %v3385, %v3381
    %v3566 = vpack.c.b16 %v3386, %v3382
    %v3567 = vpack.c.b16 %v3391, %v3387
    %v3568 = vpack.c.b16 %v3392, %v3388
    %v3569 = vpack.c.b16 %v3393, %v3389
    %v3570 = vpack.c.b16 %v3394, %v3390
    %v3571 = vpack.c.b16 %v3399, %v3395
    %v3572 = vpack.c.b16 %v3400, %v3396
    %v3573 = vpack.c.b16 %v3401, %v3397
    %v3574 = vpack.c.b16 %v3402, %v3398
    %v3575 = vpack.c.b16 %v3407, %v3403
    %v3576 = vpack.c.b16 %v3408, %v3404
    %v3577 = vpack.c.b16 %v3409, %v3405
    %v3578 = vpack.c.b16 %v3410, %v3406
    %v3579 = vpack.c.b16 %v3415, %v3411
    %v3580 = vpack.c.b16 %v3416, %v3412
    %v3581 = vpack.c.b16 %v3417, %v3413
    %v3582 = vpack.c.b16 %v3418, %v3414
    %v3583 = vpack.c.b16 %v3423, %v3419
    %v3584 = vpack.c.b16 %v3424, %v3420
    %v3585 = vpack.c.b16 %v3425, %v3421
    %v3586 = vpack.c.b16 %v3426, %v3422
    %v3587 = vpack.c.b16 %v3431, %v3427
    %v3588 = vpack.c.b16 %v3432, %v3428
    %v3589 = vpack.c.b16 %v3433, %v3429
    %v3590 = vpack.c.b16 %v3434, %v3430
    %v3591 = vpack.c.b16 %v3439, %v3435
    %v3592 = vpack.c.b16 %v3440, %v3436
    %v3593 = vpack.c.b16 %v3441, %v3437
    %v3594 = vpack.c.b16 %v3442, %v3438
    %v3595 = vpack.c.b16 %v3447, %v3443
    %v3596 = vpack.c.b16 %v3448, %v3444
    %v3597 = vpack.c.b16 %v3449, %v3445
    %v3598 = vpack.c.b16 %v3450, %v3446
    %v3599 = vpack.c.b16 %v3455, %v3451
    %v3600 = vpack.c.b16 %v3456, %v3452
    %v3601 = vpack.c.b16 %v3457, %v3453
    %v3602 = vpack.c.b16 %v3458, %v3454
    %v3603 = vpack.c.b16 %v3463, %v3459
    %v3604 = vpack.c.b16 %v3464, %v3460
    %v3605 = vpack.c.b16 %v3465, %v3461
    %v3606 = vpack.c.b16 %v3466, %v3462
    %v3607 = vpack.c.b16 %v3471, %v3467
    %v3608 = vpack.c.b16 %v3472, %v3468
    %v3609 = vpack.c.b16 %v3473, %v3469
    %v3610 = vpack.c.b16 %v3474, %v3470
    %v3611 = vpack.c.b16 %v3479, %v3475
    %v3612 = vpack.c.b16 %v3480, %v3476
    %v3613 = vpack.c.b16 %v3481, %v3477
    %v3614 = vpack.c.b16 %v3482, %v3478
    %v3615 = vpack.c.b16 %v3487, %v3483
    %v3616 = vpack.c.b16 %v3488, %v3484
    %v3617 = vpack.c.b16 %v3489, %v3485
    %v3618 = vpack.c.b16 %v3490, %v3486
    %3747 = vmatprep.subr.bf16.mxu0 %v3492
    %3748 = vmatpush1.bf16.msra.mxu0 %v3491
    %3749 = vmatprep.subr.bf16.mxu0 %v3496
    %3750 = vmatpush1.bf16.msra.mxu0 %v3495
    %3751 = vmatprep.subr.bf16.mxu0 %v3500
    %3752 = vmatpush1.bf16.msra.mxu0 %v3499
    %3753 = vmatprep.subr.bf16.mxu0 %v3504
    %3754 = vmatpush1.bf16.msra.mxu0 %v3503
    %3755 = vmatprep.subr.bf16.mxu0 %v3508
    %3756 = vmatpush1.bf16.msra.mxu0 %v3507
    %3757 = vmatprep.subr.bf16.mxu0 %v3512
    %3758 = vmatpush1.bf16.msra.mxu0 %v3511
    %3759 = vmatprep.subr.bf16.mxu0 %v3516
    %3760 = vmatpush1.bf16.msra.mxu0 %v3515
    %3761 = vmatprep.subr.bf16.mxu0 %v3520
    %3762 = vmatpush1.bf16.msra.mxu0 %v3519
    %3763 = vmatprep.subr.bf16.mxu0 %v3524
    %3764 = vmatpush1.bf16.msra.mxu0 %v3523
    %3765 = vmatprep.subr.bf16.mxu0 %v3528
    %3766 = vmatpush1.bf16.msra.mxu0 %v3527
    %3767 = vmatprep.subr.bf16.mxu0 %v3532
    %3768 = vmatpush1.bf16.msra.mxu0 %v3531
    %3769 = vmatprep.subr.bf16.mxu0 %v3536
    %3770 = vmatpush1.bf16.msra.mxu0 %v3535
    %3771 = vmatprep.subr.bf16.mxu0 %v3540
    %3772 = vmatpush1.bf16.msra.mxu0 %v3539
    %3773 = vmatprep.subr.bf16.mxu0 %v3544
    %3774 = vmatpush1.bf16.msra.mxu0 %v3543
    %3775 = vmatprep.subr.bf16.mxu0 %v3548
    %3776 = vmatpush1.bf16.msra.mxu0 %v3547
    %3777 = vmatprep.subr.bf16.mxu0 %v3552
    %3778 = vmatpush1.bf16.msra.mxu0 %v3551
    %3779 = vmatprep.mubr.bf16.mxu0 %v3076
    %3780 = vmatmul.mubr.bf16.gmra.mrb[0].mxu0 %v3075
    %v3781 = vpop.f32.mrb[0].mxu0
    %v3782 = vadd.f32 0.0, %v3781
    %v3783 = vpop.f32.mrb[0].mxu0
    %v3784 = vadd.f32 0.0, %v3783
    %v3785 = vpop.f32.mrb[0].mxu0
    %v3786 = vadd.f32 0.0, %v3785
    %v3787 = vpop.f32.mrb[0].mxu0
    %v3788 = vadd.f32 0.0, %v3787
    %3789 = vmatprep.mubr.bf16.mxu0 %v3080
    %3790 = vmatmul.mubr.bf16.gmra.mrb[0].mxu0 %v3079
    %v3791 = vpop.f32.mrb[0].mxu0
    %v3792 = vadd.f32 0.0, %v3791
    %v3793 = vpop.f32.mrb[0].mxu0
    %v3794 = vadd.f32 0.0, %v3793
    %v3795 = vpop.f32.mrb[0].mxu0
    %v3796 = vadd.f32 0.0, %v3795
    %v3797 = vpop.f32.mrb[0].mxu0
    %v3798 = vadd.f32 0.0, %v3797
    %3799 = vmatprep.mubr.bf16.mxu0 %v3084
    %3800 = vmatmul.mubr.bf16.gmra.mrb[0].mxu0 %v3083
    %v3801 = vpop.f32.mrb[0].mxu0
    %v3802 = vadd.f32 0.0, %v3801
    %v3803 = vpop.f32.mrb[0].mxu0
    %v3804 = vadd.f32 0.0, %v3803
    %v3805 = vpop.f32.mrb[0].mxu0
    %v3806 = vadd.f32 0.0, %v3805
    %v3807 = vpop.f32.mrb[0].mxu0
    %v3808 = vadd.f32 0.0, %v3807
    %3809 = vmatprep.mubr.bf16.mxu0 %v3088
    %3810 = vmatmul.mubr.bf16.gmra.mrb[0].mxu0 %v3087
    %v3811 = vpop.f32.mrb[0].mxu0
    %v3812 = vadd.f32 0.0, %v3811
    %v3813 = vpop.f32.mrb[0].mxu0
    %v3814 = vadd.f32 0.0, %v3813
    %v3815 = vpop.f32.mrb[0].mxu0
    %v3816 = vadd.f32 0.0, %v3815
    %v3817 = vpop.f32.mrb[0].mxu0
    %v3818 = vadd.f32 0.0, %v3817
    %3819 = vdwg.mxu0
    %3820 = vmatprep.subr.bf16.mxu0 %v3556
    %3821 = vmatpush1.bf16.msra.mxu0 %v3555
    %3822 = vmatprep.subr.bf16.mxu0 %v3560
    %3823 = vmatpush1.bf16.msra.mxu0 %v3559
    %3824 = vmatprep.subr.bf16.mxu0 %v3564
    %3825 = vmatpush1.bf16.msra.mxu0 %v3563
    %3826 = vmatprep.subr.bf16.mxu0 %v3568
    %3827 = vmatpush1.bf16.msra.mxu0 %v3567
    %3828 = vmatprep.subr.bf16.mxu0 %v3572
    %3829 = vmatpush1.bf16.msra.mxu0 %v3571
    %3830 = vmatprep.subr.bf16.mxu0 %v3576
    %3831 = vmatpush1.bf16.msra.mxu0 %v3575
    %3832 = vmatprep.subr.bf16.mxu0 %v3580
    %3833 = vmatpush1.bf16.msra.mxu0 %v3579
    %3834 = vmatprep.subr.bf16.mxu0 %v3584
    %3835 = vmatpush1.bf16.msra.mxu0 %v3583
    %3836 = vmatprep.subr.bf16.mxu0 %v3588
    %3837 = vmatpush1.bf16.msra.mxu0 %v3587
    %3838 = vmatprep.subr.bf16.mxu0 %v3592
    %3839 = vmatpush1.bf16.msra.mxu0 %v3591
    %3840 = vmatprep.subr.bf16.mxu0 %v3596
    %3841 = vmatpush1.bf16.msra.mxu0 %v3595
    %3842 = vmatprep.subr.bf16.mxu0 %v3600
    %3843 = vmatpush1.bf16.msra.mxu0 %v3599
    %3844 = vmatprep.subr.bf16.mxu0 %v3604
    %3845 = vmatpush1.bf16.msra.mxu0 %v3603
    %3846 = vmatprep.subr.bf16.mxu0 %v3608
    %3847 = vmatpush1.bf16.msra.mxu0 %v3607
    %3848 = vmatprep.subr.bf16.mxu0 %v3612
    %3849 = vmatpush1.bf16.msra.mxu0 %v3611
    %3850 = vmatprep.subr.bf16.mxu0 %v3616
    %3851 = vmatpush1.bf16.msra.mxu0 %v3615
    %3852 = vmatprep.mubr.bf16.mxu0 %v3078
    %3853 = vmatmul.mubr.bf16.gmra.mrb[0].mxu0 %v3077
    %v3854 = vpop.f32.mrb[0].mxu0
    %v3855 = vadd.f32 %v3782, %v3854
    %v3856 = vpop.f32.mrb[0].mxu0
    %v3857 = vadd.f32 %v3784, %v3856
    %v3858 = vpop.f32.mrb[0].mxu0
    %v3859 = vadd.f32 %v3786, %v3858
    %v3860 = vpop.f32.mrb[0].mxu0
    %v3861 = vadd.f32 %v3788, %v3860
    %3862 = vmatprep.mubr.bf16.mxu0 %v3082
    %3863 = vmatmul.mubr.bf16.gmra.mrb[0].mxu0 %v3081
    %v3864 = vpop.f32.mrb[0].mxu0
    %v3865 = vadd.f32 %v3792, %v3864
    %v3866 = vpop.f32.mrb[0].mxu0
    %v3867 = vadd.f32 %v3794, %v3866
    %v3868 = vpop.f32.mrb[0].mxu0
    %v3869 = vadd.f32 %v3796, %v3868
    %v3870 = vpop.f32.mrb[0].mxu0
    %v3871 = vadd.f32 %v3798, %v3870
    %3872 = vmatprep.mubr.bf16.mxu0 %v3086
    %3873 = vmatmul.mubr.bf16.gmra.mrb[0].mxu0 %v3085
    %v3874 = vpop.f32.mrb[0].mxu0
    %v3875 = vadd.f32 %v3802, %v3874
    %v3876 = vpop.f32.mrb[0].mxu0
    %v3877 = vadd.f32 %v3804, %v3876
    %v3878 = vpop.f32.mrb[0].mxu0
    %v3879 = vadd.f32 %v3806, %v3878
    %v3880 = vpop.f32.mrb[0].mxu0
    %v3881 = vadd.f32 %v3808, %v3880
    %3882 = vmatprep.mubr.bf16.mxu0 %v3090
    %3883 = vmatmul.mubr.bf16.gmra.mrb[0].mxu0 %v3089
    %v3884 = vpop.f32.mrb[0].mxu0
    %v3885 = vadd.f32 %v3812, %v3884
    %v3886 = vpop.f32.mrb[0].mxu0
    %v3887 = vadd.f32 %v3814, %v3886
    %v3888 = vpop.f32.mrb[0].mxu0
    %v3889 = vadd.f32 %v3816, %v3888
    %v3890 = vpop.f32.mrb[0].mxu0
    %v3891 = vadd.f32 %v3818, %v3890
    %3892 = vdwg.mxu0
    %3893 = vmatprep.subr.bf16.mxu0 %v3494
    %3894 = vmatpush1.bf16.msra.mxu0 %v3493
    %3895 = vmatprep.subr.bf16.mxu0 %v3498
    %3896 = vmatpush1.bf16.msra.mxu0 %v3497
    %3897 = vmatprep.subr.bf16.mxu0 %v3502
    %3898 = vmatpush1.bf16.msra.mxu0 %v3501
    %3899 = vmatprep.subr.bf16.mxu0 %v3506
    %3900 = vmatpush1.bf16.msra.mxu0 %v3505
    %3901 = vmatprep.subr.bf16.mxu0 %v3510
    %3902 = vmatpush1.bf16.msra.mxu0 %v3509
    %3903 = vmatprep.subr.bf16.mxu0 %v3514
    %3904 = vmatpush1.bf16.msra.mxu0 %v3513
    %3905 = vmatprep.subr.bf16.mxu0 %v3518
    %3906 = vmatpush1.bf16.msra.mxu0 %v3517
    %3907 = vmatprep.subr.bf16.mxu0 %v3522
    %3908 = vmatpush1.bf16.msra.mxu0 %v3521
    %3909 = vmatprep.subr.bf16.mxu0 %v3526
    %3910 = vmatpush1.bf16.msra.mxu0 %v3525
    %3911 = vmatprep.subr.bf16.mxu0 %v3530
    %3912 = vmatpush1.bf16.msra.mxu0 %v3529
    %3913 = vmatprep.subr.bf16.mxu0 %v3534
    %3914 = vmatpush1.bf16.msra.mxu0 %v3533
    %3915 = vmatprep.subr.bf16.mxu0 %v3538
    %3916 = vmatpush1.bf16.msra.mxu0 %v3537
    %3917 = vmatprep.subr.bf16.mxu0 %v3542
    %3918 = vmatpush1.bf16.msra.mxu0 %v3541
    %3919 = vmatprep.subr.bf16.mxu0 %v3546
    %3920 = vmatpush1.bf16.msra.mxu0 %v3545
    %3921 = vmatprep.subr.bf16.mxu0 %v3550
    %3922 = vmatpush1.bf16.msra.mxu0 %v3549
    %3923 = vmatprep.subr.bf16.mxu0 %v3554
    %3924 = vmatpush1.bf16.msra.mxu0 %v3553
    %3925 = vmatprep.mubr.bf16.mxu0 %v3076
    %3926 = vmatmul.mubr.bf16.gmra.mrb[0].mxu0 %v3075
    %v3927 = vpop.f32.mrb[0].mxu0
    %v3928 = vadd.f32 0.0, %v3927
    %v3929 = vpop.f32.mrb[0].mxu0
    %v3930 = vadd.f32 0.0, %v3929
    %v3931 = vpop.f32.mrb[0].mxu0
    %v3932 = vadd.f32 0.0, %v3931
    %v3933 = vpop.f32.mrb[0].mxu0
    %v3934 = vadd.f32 0.0, %v3933
    %3935 = vmatprep.mubr.bf16.mxu0 %v3080
    %3936 = vmatmul.mubr.bf16.gmra.mrb[0].mxu0 %v3079
    %v3937 = vpop.f32.mrb[0].mxu0
    %v3938 = vadd.f32 0.0, %v3937
    %v3939 = vpop.f32.mrb[0].mxu0
    %v3940 = vadd.f32 0.0, %v3939
    %v3941 = vpop.f32.mrb[0].mxu0
    %v3942 = vadd.f32 0.0, %v3941
    %v3943 = vpop.f32.mrb[0].mxu0
    %v3944 = vadd.f32 0.0, %v3943
    %3945 = vmatprep.mubr.bf16.mxu0 %v3084
    %3946 = vmatmul.mubr.bf16.gmra.mrb[0].mxu0 %v3083
    %v3947 = vpop.f32.mrb[0].mxu0
    %v3948 = vadd.f32 0.0, %v3947
    %v3949 = vpop.f32.mrb[0].mxu0
    %v3950 = vadd.f32 0.0, %v3949
    %v3951 = vpop.f32.mrb[0].mxu0
    %v3952 = vadd.f32 0.0, %v3951
    %v3953 = vpop.f32.mrb[0].mxu0
    %v3954 = vadd.f32 0.0, %v3953
    %3955 = vmatprep.mubr.bf16.mxu0 %v3088
    %3956 = vmatmul.mubr.bf16.gmra.mrb[0].mxu0 %v3087
    %v3957 = vpop.f32.mrb[0].mxu0
    %v3958 = vadd.f32 0.0, %v3957
    %v3959 = vpop.f32.mrb[0].mxu0
    %v3960 = vadd.f32 0.0, %v3959
    %v3961 = vpop.f32.mrb[0].mxu0
    %v3962 = vadd.f32 0.0, %v3961
    %v3963 = vpop.f32.mrb[0].mxu0
    %v3964 = vadd.f32 0.0, %v3963
    %3965 = vdwg.mxu0
    %3966 = vmatprep.subr.bf16.mxu0 %v3558
    %3967 = vmatpush1.bf16.msra.mxu0 %v3557
    %3968 = vmatprep.subr.bf16.mxu0 %v3562
    %3969 = vmatpush1.bf16.msra.mxu0 %v3561
    %3970 = vmatprep.subr.bf16.mxu0 %v3566
    %3971 = vmatpush1.bf16.msra.mxu0 %v3565
    %3972 = vmatprep.subr.bf16.mxu0 %v3570
    %3973 = vmatpush1.bf16.msra.mxu0 %v3569
    %3974 = vmatprep.subr.bf16.mxu0 %v3574
    %3975 = vmatpush1.bf16.msra.mxu0 %v3573
    %3976 = vmatprep.subr.bf16.mxu0 %v3578
    %3977 = vmatpush1.bf16.msra.mxu0 %v3577
    %3978 = vmatprep.subr.bf16.mxu0 %v3582
    %3979 = vmatpush1.bf16.msra.mxu0 %v3581
    %3980 = vmatprep.subr.bf16.mxu0 %v3586
    %3981 = vmatpush1.bf16.msra.mxu0 %v3585
    %3982 = vmatprep.subr.bf16.mxu0 %v3590
    %3983 = vmatpush1.bf16.msra.mxu0 %v3589
    %3984 = vmatprep.subr.bf16.mxu0 %v3594
    %3985 = vmatpush1.bf16.msra.mxu0 %v3593
    %3986 = vmatprep.subr.bf16.mxu0 %v3598
    %3987 = vmatpush1.bf16.msra.mxu0 %v3597
    %3988 = vmatprep.subr.bf16.mxu0 %v3602
    %3989 = vmatpush1.bf16.msra.mxu0 %v3601
    %3990 = vmatprep.subr.bf16.mxu0 %v3606
    %3991 = vmatpush1.bf16.msra.mxu0 %v3605
    %3992 = vmatprep.subr.bf16.mxu0 %v3610
    %3993 = vmatpush1.bf16.msra.mxu0 %v3609
    %3994 = vmatprep.subr.bf16.mxu0 %v3614
    %3995 = vmatpush1.bf16.msra.mxu0 %v3613
    %3996 = vmatprep.subr.bf16.mxu0 %v3618
    %3997 = vmatpush1.bf16.msra.mxu0 %v3617
    %3998 = vmatprep.mubr.bf16.mxu0 %v3078
    %3999 = vmatmul.mubr.bf16.gmra.mrb[0].mxu0 %v3077
    %v4000 = vpop.f32.mrb[0].mxu0
    %v4001 = vadd.f32 %v3928, %v4000
    %v4002 = vpop.f32.mrb[0].mxu0
    %v4003 = vadd.f32 %v3930, %v4002
    %v4004 = vpop.f32.mrb[0].mxu0
    %v4005 = vadd.f32 %v3932, %v4004
    %v4006 = vpop.f32.mrb[0].mxu0
    %v4007 = vadd.f32 %v3934, %v4006
    %4008 = vmatprep.mubr.bf16.mxu0 %v3082
    %4009 = vmatmul.mubr.bf16.gmra.mrb[0].mxu0 %v3081
    %v4010 = vpop.f32.mrb[0].mxu0
    %v4011 = vadd.f32 %v3938, %v4010
    %v4012 = vpop.f32.mrb[0].mxu0
    %v4013 = vadd.f32 %v3940, %v4012
    %v4014 = vpop.f32.mrb[0].mxu0
    %v4015 = vadd.f32 %v3942, %v4014
    %v4016 = vpop.f32.mrb[0].mxu0
    %v4017 = vadd.f32 %v3944, %v4016
    %4018 = vmatprep.mubr.bf16.mxu0 %v3086
    %4019 = vmatmul.mubr.bf16.gmra.mrb[0].mxu0 %v3085
    %v4020 = vpop.f32.mrb[0].mxu0
    %v4021 = vadd.f32 %v3948, %v4020
    %v4022 = vpop.f32.mrb[0].mxu0
    %v4023 = vadd.f32 %v3950, %v4022
    %v4024 = vpop.f32.mrb[0].mxu0
    %v4025 = vadd.f32 %v3952, %v4024
    %v4026 = vpop.f32.mrb[0].mxu0
    %v4027 = vadd.f32 %v3954, %v4026
    %4028 = vmatprep.mubr.bf16.mxu0 %v3090
    %4029 = vmatmul.mubr.bf16.gmra.mrb[0].mxu0 %v3089
    %v4030 = vpop.f32.mrb[0].mxu0
    %v4031 = vadd.f32 %v3958, %v4030
    %v4032 = vpop.f32.mrb[0].mxu0
    %v4033 = vadd.f32 %v3960, %v4032
    %v4034 = vpop.f32.mrb[0].mxu0
    %v4035 = vadd.f32 %v3962, %v4034
    %v4036 = vpop.f32.mrb[0].mxu0
    %v4037 = vadd.f32 %v3964, %v4036
    %4038 = vdwg.mxu0
    %v4039 = vadd.f32 %v2599, %v3855
    %v4040 = vadd.f32 %v2601, %v3857
    %v4041 = vadd.f32 %v2745, %v4001
    %v4042 = vadd.f32 %v2747, %v4003
    %v4043 = vadd.f32 %v2603, %v3859
    %v4044 = vadd.f32 %v2605, %v3861
    %v4045 = vadd.f32 %v2749, %v4005
    %v4046 = vadd.f32 %v2751, %v4007
    %v4047 = vadd.f32 %v2609, %v3865
    %v4048 = vadd.f32 %v2611, %v3867
    %v4049 = vadd.f32 %v2755, %v4011
    %v4050 = vadd.f32 %v2757, %v4013
    %v4051 = vadd.f32 %v2613, %v3869
    %v4052 = vadd.f32 %v2615, %v3871
    %v4053 = vadd.f32 %v2759, %v4015
    %v4054 = vadd.f32 %v2761, %v4017
    %v4055 = vadd.f32 %v2619, %v3875
    %v4056 = vadd.f32 %v2621, %v3877
    %v4057 = vadd.f32 %v2765, %v4021
    %v4058 = vadd.f32 %v2767, %v4023
    %v4059 = vadd.f32 %v2623, %v3879
    %v4060 = vadd.f32 %v2625, %v3881
    %v4061 = vadd.f32 %v2769, %v4025
    %v4062 = vadd.f32 %v2771, %v4027
    %v4063 = vadd.f32 %v2629, %v3885
    %v4064 = vadd.f32 %v2631, %v3887
    %v4065 = vadd.f32 %v2775, %v4031
    %v4066 = vadd.f32 %v2777, %v4033
    %v4067 = vadd.f32 %v2633, %v3889
    %v4068 = vadd.f32 %v2635, %v3891
    %v4069 = vadd.f32 %v2779, %v4035
    %v4070 = vadd.f32 %v2781, %v4037
    %v4071 = vld [vmem:[#allocation7] sm:$0xf]
    %v4073 = vlaneseq
    %v4074 = vshrl.u32 %v4073, 7
    %v4075 = vsub.s32 0, %v4074
    %v4076 = vrot.slane %v4071, %v4075
    %v4077 = vlaneseq
    %v4078 = vshrl.u32 %v4077, 7
    %v4079 = vsub.s32 1, %v4078
    %v4080 = vrot.slane %v4071, %v4079
    %v4081 = vlaneseq
    %v4082 = vshrl.u32 %v4081, 7
    %v4083 = vsub.s32 2, %v4082
    %v4084 = vrot.slane %v4071, %v4083
    %v4085 = vlaneseq
    %v4086 = vshrl.u32 %v4085, 7
    %v4087 = vsub.s32 3, %v4086
    %v4088 = vrot.slane %v4071, %v4087
    %v4093 = vmul.f32 %v4039, %v4076
    %v4094 = vmul.f32 %v4040, %v4080
    %v4095 = vmul.f32 %v4041, %v4084
    %v4096 = vmul.f32 %v4042, %v4088
    %v4097 = vmul.f32 %v4043, %v4076
    %v4098 = vmul.f32 %v4044, %v4080
    %v4099 = vmul.f32 %v4045, %v4084
    %v4100 = vmul.f32 %v4046, %v4088
    %v4101 = vmul.f32 %v4047, %v4076
    %v4102 = vmul.f32 %v4048, %v4080
    %v4103 = vmul.f32 %v4049, %v4084
    %v4104 = vmul.f32 %v4050, %v4088
    %v4105 = vmul.f32 %v4051, %v4076
    %v4106 = vmul.f32 %v4052, %v4080
    %v4107 = vmul.f32 %v4053, %v4084
    %v4108 = vmul.f32 %v4054, %v4088
    %v4109 = vmul.f32 %v4055, %v4076
    %v4110 = vmul.f32 %v4056, %v4080
    %v4111 = vmul.f32 %v4057, %v4084
    %v4112 = vmul.f32 %v4058, %v4088
    %v4113 = vmul.f32 %v4059, %v4076
    %v4114 = vmul.f32 %v4060, %v4080
    %v4115 = vmul.f32 %v4061, %v4084
    %v4116 = vmul.f32 %v4062, %v4088
    %v4117 = vmul.f32 %v4063, %v4076
    %v4118 = vmul.f32 %v4064, %v4080
    %v4119 = vmul.f32 %v4065, %v4084
    %v4120 = vmul.f32 %v4066, %v4088
    %v4121 = vmul.f32 %v4067, %v4076
    %v4122 = vmul.f32 %v4068, %v4080
    %v4123 = vmul.f32 %v4069, %v4084
    %v4124 = vmul.f32 %v4070, %v4088
    %v4125 = vld [vmem:[#allocation8] sm:$0xf]
    %v4127 = vlaneseq
    %v4128 = vshrl.u32 %v4127, 7
    %v4129 = vsub.s32 0, %v4128
    %v4130 = vrot.slane %v4125, %v4129
    %v4131 = vlaneseq
    %v4132 = vshrl.u32 %v4131, 7
    %v4133 = vsub.s32 1, %v4132
    %v4134 = vrot.slane %v4125, %v4133
    %v4135 = vlaneseq
    %v4136 = vshrl.u32 %v4135, 7
    %v4137 = vsub.s32 2, %v4136
    %v4138 = vrot.slane %v4125, %v4137
    %v4139 = vlaneseq
    %v4140 = vshrl.u32 %v4139, 7
    %v4141 = vsub.s32 3, %v4140
    %v4142 = vrot.slane %v4125, %v4141
    %v4147 = vadd.f32 %v4093, %v4130
    %v4148 = vadd.f32 %v4094, %v4134
    %v4149 = vadd.f32 %v4095, %v4138
    %v4150 = vadd.f32 %v4096, %v4142
    %v4151 = vadd.f32 %v4097, %v4130
    %v4152 = vadd.f32 %v4098, %v4134
    %v4153 = vadd.f32 %v4099, %v4138
    %v4154 = vadd.f32 %v4100, %v4142
    %v4155 = vadd.f32 %v4101, %v4130
    %v4156 = vadd.f32 %v4102, %v4134
    %v4157 = vadd.f32 %v4103, %v4138
    %v4158 = vadd.f32 %v4104, %v4142
    %v4159 = vadd.f32 %v4105, %v4130
    %v4160 = vadd.f32 %v4106, %v4134
    %v4161 = vadd.f32 %v4107, %v4138
    %v4162 = vadd.f32 %v4108, %v4142
    %v4163 = vadd.f32 %v4109, %v4130
    %v4164 = vadd.f32 %v4110, %v4134
    %v4165 = vadd.f32 %v4111, %v4138
    %v4166 = vadd.f32 %v4112, %v4142
    %v4167 = vadd.f32 %v4113, %v4130
    %v4168 = vadd.f32 %v4114, %v4134
    %v4169 = vadd.f32 %v4115, %v4138
    %v4170 = vadd.f32 %v4116, %v4142
    %v4171 = vadd.f32 %v4117, %v4130
    %v4172 = vadd.f32 %v4118, %v4134
    %v4173 = vadd.f32 %v4119, %v4138
    %v4174 = vadd.f32 %v4120, %v4142
    %v4175 = vadd.f32 %v4121, %v4130
    %v4176 = vadd.f32 %v4122, %v4134
    %v4177 = vadd.f32 %v4123, %v4138
    %v4178 = vadd.f32 %v4124, %v4142
    %v4179 = vmax.f32 %v4147, 0.0
    %v4180 = vmax.f32 %v4148, 0.0
    %v4181 = vmax.f32 %v4149, 0.0
    %v4182 = vmax.f32 %v4150, 0.0
    %v4183 = vmax.f32 %v4151, 0.0
    %v4184 = vmax.f32 %v4152, 0.0
    %v4185 = vmax.f32 %v4153, 0.0
    %v4186 = vmax.f32 %v4154, 0.0
    %v4187 = vmax.f32 %v4155, 0.0
    %v4188 = vmax.f32 %v4156, 0.0
    %v4189 = vmax.f32 %v4157, 0.0
    %v4190 = vmax.f32 %v4158, 0.0
    %v4191 = vmax.f32 %v4159, 0.0
    %v4192 = vmax.f32 %v4160, 0.0
    %v4193 = vmax.f32 %v4161, 0.0
    %v4194 = vmax.f32 %v4162, 0.0
    %v4195 = vmax.f32 %v4163, 0.0
    %v4196 = vmax.f32 %v4164, 0.0
    %v4197 = vmax.f32 %v4165, 0.0
    %v4198 = vmax.f32 %v4166, 0.0
    %v4199 = vmax.f32 %v4167, 0.0
    %v4200 = vmax.f32 %v4168, 0.0
    %v4201 = vmax.f32 %v4169, 0.0
    %v4202 = vmax.f32 %v4170, 0.0
    %v4203 = vmax.f32 %v4171, 0.0
    %v4204 = vmax.f32 %v4172, 0.0
    %v4205 = vmax.f32 %v4173, 0.0
    %v4206 = vmax.f32 %v4174, 0.0
    %v4207 = vmax.f32 %v4175, 0.0
    %v4208 = vmax.f32 %v4176, 0.0
    %v4209 = vmax.f32 %v4177, 0.0
    %v4210 = vmax.f32 %v4178, 0.0
    %v4211 = vpack.c.bf16 %v4183, %v4179
    %v4212 = vpack.c.bf16 %v4184, %v4180
    %v4213 = vpack.c.bf16 %v4185, %v4181
    %v4214 = vpack.c.bf16 %v4186, %v4182
    %v4215 = vpack.c.bf16 %v4191, %v4187
    %v4216 = vpack.c.bf16 %v4192, %v4188
    %v4217 = vpack.c.bf16 %v4193, %v4189
    %v4218 = vpack.c.bf16 %v4194, %v4190
    %v4219 = vpack.c.bf16 %v4199, %v4195
    %v4220 = vpack.c.bf16 %v4200, %v4196
    %v4221 = vpack.c.bf16 %v4201, %v4197
    %v4222 = vpack.c.bf16 %v4202, %v4198
    %v4223 = vpack.c.bf16 %v4207, %v4203
    %v4224 = vpack.c.bf16 %v4208, %v4204
    %v4225 = vpack.c.bf16 %v4209, %v4205
    %v4226 = vpack.c.bf16 %v4210, %v4206
    %s4227 = scalar_lea.vmem [#allocation5], 1024
    %v4228 = vld [vmem:[%s4227] sm:$0xff]
    %v4229 = vld [vmem:[%s4227 + $0x8] sm:$0xff]
    %v4230 = vld [vmem:[%s4227 + $0x10] sm:$0xff]
    %v4231 = vld [vmem:[%s4227 + $0x18] sm:$0xff]
    %v4232 = vld [vmem:[%s4227 + $0x20] sm:$0xff]
    %v4233 = vld [vmem:[%s4227 + $0x28] sm:$0xff]
    %v4234 = vld [vmem:[%s4227 + $0x30] sm:$0xff]
    %v4235 = vld [vmem:[%s4227 + $0x38] sm:$0xff]
    %v4236 = vld [vmem:[%s4227 + $0x40] sm:$0xff]
    %v4237 = vld [vmem:[%s4227 + $0x48] sm:$0xff]
    %v4238 = vld [vmem:[%s4227 + $0x50] sm:$0xff]
    %v4239 = vld [vmem:[%s4227 + $0x58] sm:$0xff]
    %v4240 = vld [vmem:[%s4227 + $0x60] sm:$0xff]
    %v4241 = vld [vmem:[%s4227 + $0x68] sm:$0xff]
    %v4242 = vld [vmem:[%s4227 + $0x70] sm:$0xff]
    %v4243 = vld [vmem:[%s4227 + $0x78] sm:$0xff]
    %v4244 = vld [vmem:[%s4227 + $0x80] sm:$0xff]
    %v4245 = vld [vmem:[%s4227 + $0x88] sm:$0xff]
    %v4246 = vld [vmem:[%s4227 + $0x90] sm:$0xff]
    %v4247 = vld [vmem:[%s4227 + $0x98] sm:$0xff]
    %v4248 = vld [vmem:[%s4227 + $0xa0] sm:$0xff]
    %v4249 = vld [vmem:[%s4227 + $0xa8] sm:$0xff]
    %v4250 = vld [vmem:[%s4227 + $0xb0] sm:$0xff]
    %v4251 = vld [vmem:[%s4227 + $0xb8] sm:$0xff]
    %v4252 = vld [vmem:[%s4227 + $0xc0] sm:$0xff]
    %v4253 = vld [vmem:[%s4227 + $0xc8] sm:$0xff]
    %v4254 = vld [vmem:[%s4227 + $0xd0] sm:$0xff]
    %v4255 = vld [vmem:[%s4227 + $0xd8] sm:$0xff]
    %v4256 = vld [vmem:[%s4227 + $0xe0] sm:$0xff]
    %v4257 = vld [vmem:[%s4227 + $0xe8] sm:$0xff]
    %v4258 = vld [vmem:[%s4227 + $0xf0] sm:$0xff]
    %v4259 = vld [vmem:[%s4227 + $0xf8] sm:$0xff]
    %v4260 = vld [vmem:[%s4227 + $0x100] sm:$0xff]
    %v4261 = vld [vmem:[%s4227 + $0x108] sm:$0xff]
    %v4262 = vld [vmem:[%s4227 + $0x110] sm:$0xff]
    %v4263 = vld [vmem:[%s4227 + $0x118] sm:$0xff]
    %v4264 = vld [vmem:[%s4227 + $0x120] sm:$0xff]
    %v4265 = vld [vmem:[%s4227 + $0x128] sm:$0xff]
    %v4266 = vld [vmem:[%s4227 + $0x130] sm:$0xff]
    %v4267 = vld [vmem:[%s4227 + $0x138] sm:$0xff]
    %v4268 = vld [vmem:[%s4227 + $0x140] sm:$0xff]
    %v4269 = vld [vmem:[%s4227 + $0x148] sm:$0xff]
    %v4270 = vld [vmem:[%s4227 + $0x150] sm:$0xff]
    %v4271 = vld [vmem:[%s4227 + $0x158] sm:$0xff]
    %v4272 = vld [vmem:[%s4227 + $0x160] sm:$0xff]
    %v4273 = vld [vmem:[%s4227 + $0x168] sm:$0xff]
    %v4274 = vld [vmem:[%s4227 + $0x170] sm:$0xff]
    %v4275 = vld [vmem:[%s4227 + $0x178] sm:$0xff]
    %v4276 = vld [vmem:[%s4227 + $0x180] sm:$0xff]
    %v4277 = vld [vmem:[%s4227 + $0x188] sm:$0xff]
    %v4278 = vld [vmem:[%s4227 + $0x190] sm:$0xff]
    %v4279 = vld [vmem:[%s4227 + $0x198] sm:$0xff]
    %v4280 = vld [vmem:[%s4227 + $0x1a0] sm:$0xff]
    %v4281 = vld [vmem:[%s4227 + $0x1a8] sm:$0xff]
    %v4282 = vld [vmem:[%s4227 + $0x1b0] sm:$0xff]
    %v4283 = vld [vmem:[%s4227 + $0x1b8] sm:$0xff]
    %v4284 = vld [vmem:[%s4227 + $0x1c0] sm:$0xff]
    %v4285 = vld [vmem:[%s4227 + $0x1c8] sm:$0xff]
    %v4286 = vld [vmem:[%s4227 + $0x1d0] sm:$0xff]
    %v4287 = vld [vmem:[%s4227 + $0x1d8] sm:$0xff]
    %v4288 = vld [vmem:[%s4227 + $0x1e0] sm:$0xff]
    %v4289 = vld [vmem:[%s4227 + $0x1e8] sm:$0xff]
    %v4290 = vld [vmem:[%s4227 + $0x1f0] sm:$0xff]
    %v4291 = vld [vmem:[%s4227 + $0x1f8] sm:$0xff]
    %v4292 = vld [vmem:[%s4227 + $0x200] sm:$0xff]
    %v4293 = vld [vmem:[%s4227 + $0x208] sm:$0xff]
    %v4294 = vld [vmem:[%s4227 + $0x210] sm:$0xff]
    %v4295 = vld [vmem:[%s4227 + $0x218] sm:$0xff]
    %v4296 = vld [vmem:[%s4227 + $0x220] sm:$0xff]
    %v4297 = vld [vmem:[%s4227 + $0x228] sm:$0xff]
    %v4298 = vld [vmem:[%s4227 + $0x230] sm:$0xff]
    %v4299 = vld [vmem:[%s4227 + $0x238] sm:$0xff]
    %v4300 = vld [vmem:[%s4227 + $0x240] sm:$0xff]
    %v4301 = vld [vmem:[%s4227 + $0x248] sm:$0xff]
    %v4302 = vld [vmem:[%s4227 + $0x250] sm:$0xff]
    %v4303 = vld [vmem:[%s4227 + $0x258] sm:$0xff]
    %v4304 = vld [vmem:[%s4227 + $0x260] sm:$0xff]
    %v4305 = vld [vmem:[%s4227 + $0x268] sm:$0xff]
    %v4306 = vld [vmem:[%s4227 + $0x270] sm:$0xff]
    %v4307 = vld [vmem:[%s4227 + $0x278] sm:$0xff]
    %v4308 = vld [vmem:[%s4227 + $0x280] sm:$0xff]
    %v4309 = vld [vmem:[%s4227 + $0x288] sm:$0xff]
    %v4310 = vld [vmem:[%s4227 + $0x290] sm:$0xff]
    %v4311 = vld [vmem:[%s4227 + $0x298] sm:$0xff]
    %v4312 = vld [vmem:[%s4227 + $0x2a0] sm:$0xff]
    %v4313 = vld [vmem:[%s4227 + $0x2a8] sm:$0xff]
    %v4314 = vld [vmem:[%s4227 + $0x2b0] sm:$0xff]
    %v4315 = vld [vmem:[%s4227 + $0x2b8] sm:$0xff]
    %v4316 = vld [vmem:[%s4227 + $0x2c0] sm:$0xff]
    %v4317 = vld [vmem:[%s4227 + $0x2c8] sm:$0xff]
    %v4318 = vld [vmem:[%s4227 + $0x2d0] sm:$0xff]
    %v4319 = vld [vmem:[%s4227 + $0x2d8] sm:$0xff]
    %v4320 = vld [vmem:[%s4227 + $0x2e0] sm:$0xff]
    %v4321 = vld [vmem:[%s4227 + $0x2e8] sm:$0xff]
    %v4322 = vld [vmem:[%s4227 + $0x2f0] sm:$0xff]
    %v4323 = vld [vmem:[%s4227 + $0x2f8] sm:$0xff]
    %v4324 = vld [vmem:[%s4227 + $0x300] sm:$0xff]
    %v4325 = vld [vmem:[%s4227 + $0x308] sm:$0xff]
    %v4326 = vld [vmem:[%s4227 + $0x310] sm:$0xff]
    %v4327 = vld [vmem:[%s4227 + $0x318] sm:$0xff]
    %v4328 = vld [vmem:[%s4227 + $0x320] sm:$0xff]
    %v4329 = vld [vmem:[%s4227 + $0x328] sm:$0xff]
    %v4330 = vld [vmem:[%s4227 + $0x330] sm:$0xff]
    %v4331 = vld [vmem:[%s4227 + $0x338] sm:$0xff]
    %v4332 = vld [vmem:[%s4227 + $0x340] sm:$0xff]
    %v4333 = vld [vmem:[%s4227 + $0x348] sm:$0xff]
    %v4334 = vld [vmem:[%s4227 + $0x350] sm:$0xff]
    %v4335 = vld [vmem:[%s4227 + $0x358] sm:$0xff]
    %v4336 = vld [vmem:[%s4227 + $0x360] sm:$0xff]
    %v4337 = vld [vmem:[%s4227 + $0x368] sm:$0xff]
    %v4338 = vld [vmem:[%s4227 + $0x370] sm:$0xff]
    %v4339 = vld [vmem:[%s4227 + $0x378] sm:$0xff]
    %v4340 = vld [vmem:[%s4227 + $0x380] sm:$0xff]
    %v4341 = vld [vmem:[%s4227 + $0x388] sm:$0xff]
    %v4342 = vld [vmem:[%s4227 + $0x390] sm:$0xff]
    %v4343 = vld [vmem:[%s4227 + $0x398] sm:$0xff]
    %v4344 = vld [vmem:[%s4227 + $0x3a0] sm:$0xff]
    %v4345 = vld [vmem:[%s4227 + $0x3a8] sm:$0xff]
    %v4346 = vld [vmem:[%s4227 + $0x3b0] sm:$0xff]
    %v4347 = vld [vmem:[%s4227 + $0x3b8] sm:$0xff]
    %v4348 = vld [vmem:[%s4227 + $0x3c0] sm:$0xff]
    %v4349 = vld [vmem:[%s4227 + $0x3c8] sm:$0xff]
    %v4350 = vld [vmem:[%s4227 + $0x3d0] sm:$0xff]
    %v4351 = vld [vmem:[%s4227 + $0x3d8] sm:$0xff]
    %v4352 = vld [vmem:[%s4227 + $0x3e0] sm:$0xff]
    %v4353 = vld [vmem:[%s4227 + $0x3e8] sm:$0xff]
    %v4354 = vld [vmem:[%s4227 + $0x3f0] sm:$0xff]
    %v4355 = vld [vmem:[%s4227 + $0x3f8] sm:$0xff]
    %v4372 = vunpack.c.l.b16 %v4211
    %v4373 = vunpack.c.l.b16 %v4212
    %v4374 = vunpack.c.l.b16 %v4213
    %v4375 = vunpack.c.l.b16 %v4214
    %v4376 = vunpack.c.h.b16 %v4211
    %v4377 = vunpack.c.h.b16 %v4212
    %v4378 = vunpack.c.h.b16 %v4213
    %v4379 = vunpack.c.h.b16 %v4214
    %v4380 = vunpack.c.l.b16 %v4215
    %v4381 = vunpack.c.l.b16 %v4216
    %v4382 = vunpack.c.l.b16 %v4217
    %v4383 = vunpack.c.l.b16 %v4218
    %v4384 = vunpack.c.h.b16 %v4215
    %v4385 = vunpack.c.h.b16 %v4216
    %v4386 = vunpack.c.h.b16 %v4217
    %v4387 = vunpack.c.h.b16 %v4218
    %v4388 = vunpack.c.l.b16 %v4219
    %v4389 = vunpack.c.l.b16 %v4220
    %v4390 = vunpack.c.l.b16 %v4221
    %v4391 = vunpack.c.l.b16 %v4222
    %v4392 = vunpack.c.h.b16 %v4219
    %v4393 = vunpack.c.h.b16 %v4220
    %v4394 = vunpack.c.h.b16 %v4221
    %v4395 = vunpack.c.h.b16 %v4222
    %v4396 = vunpack.c.l.b16 %v4223
    %v4397 = vunpack.c.l.b16 %v4224
    %v4398 = vunpack.c.l.b16 %v4225
    %v4399 = vunpack.c.l.b16 %v4226
    %v4400 = vunpack.c.h.b16 %v4223
    %v4401 = vunpack.c.h.b16 %v4224
    %v4402 = vunpack.c.h.b16 %v4225
    %v4403 = vunpack.c.h.b16 %v4226
    %v4404 = vpack.c.b16 %v4373, %v4372
    %v4405 = vpack.c.b16 %v4375, %v4374
    %v4406 = vpack.c.b16 %v4377, %v4376
    %v4407 = vpack.c.b16 %v4379, %v4378
    %v4408 = vpack.c.b16 %v4381, %v4380
    %v4409 = vpack.c.b16 %v4383, %v4382
    %v4410 = vpack.c.b16 %v4385, %v4384
    %v4411 = vpack.c.b16 %v4387, %v4386
    %v4412 = vpack.c.b16 %v4389, %v4388
    %v4413 = vpack.c.b16 %v4391, %v4390
    %v4414 = vpack.c.b16 %v4393, %v4392
    %v4415 = vpack.c.b16 %v4395, %v4394
    %v4416 = vpack.c.b16 %v4397, %v4396
    %v4417 = vpack.c.b16 %v4399, %v4398
    %v4418 = vpack.c.b16 %v4401, %v4400
    %v4419 = vpack.c.b16 %v4403, %v4402
    %v4421 = vshrl.u32 %v4404, 16
    %v4423 = vrot.slane %v4421, 7
    %v4424 = vshll.u32 %v4404, 16
    %v4426 = vor.u32 %v4423, %v4424
    %v4428 = vshrl.u32 %v4405, 16
    %v4430 = vrot.slane %v4428, 7
    %v4431 = vshll.u32 %v4405, 16
    %v4433 = vor.u32 %v4430, %v4431
    %v4434 = vrot.slane %v4423, 4
    %v4435 = vrot.slane %v4430, 4
    %v4437 = vshrl.u32 %v4406, 16
    %v4439 = vrot.slane %v4437, 7
    %v4440 = vshll.u32 %v4406, 16
    %v4442 = vor.u32 %v4439, %v4440
    %v4444 = vshrl.u32 %v4407, 16
    %v4446 = vrot.slane %v4444, 7
    %v4447 = vshll.u32 %v4407, 16
    %v4449 = vor.u32 %v4446, %v4447
    %v4450 = vrot.slane %v4439, 4
    %v4451 = vrot.slane %v4446, 4
    %v4453 = vshrl.u32 %v4408, 16
    %v4455 = vrot.slane %v4453, 7
    %v4456 = vshll.u32 %v4408, 16
    %v4458 = vor.u32 %v4455, %v4456
    %v4460 = vshrl.u32 %v4409, 16
    %v4462 = vrot.slane %v4460, 7
    %v4463 = vshll.u32 %v4409, 16
    %v4465 = vor.u32 %v4462, %v4463
    %v4466 = vrot.slane %v4455, 4
    %v4467 = vrot.slane %v4462, 4
    %v4469 = vshrl.u32 %v4410, 16
    %v4471 = vrot.slane %v4469, 7
    %v4472 = vshll.u32 %v4410, 16
    %v4474 = vor.u32 %v4471, %v4472
    %v4476 = vshrl.u32 %v4411, 16
    %v4478 = vrot.slane %v4476, 7
    %v4479 = vshll.u32 %v4411, 16
    %v4481 = vor.u32 %v4478, %v4479
    %v4482 = vrot.slane %v4471, 4
    %v4483 = vrot.slane %v4478, 4
    %v4485 = vshrl.u32 %v4412, 16
    %v4487 = vrot.slane %v4485, 7
    %v4488 = vshll.u32 %v4412, 16
    %v4490 = vor.u32 %v4487, %v4488
    %v4492 = vshrl.u32 %v4413, 16
    %v4494 = vrot.slane %v4492, 7
    %v4495 = vshll.u32 %v4413, 16
    %v4497 = vor.u32 %v4494, %v4495
    %v4498 = vrot.slane %v4487, 4
    %v4499 = vrot.slane %v4494, 4
    %v4501 = vshrl.u32 %v4414, 16
    %v4503 = vrot.slane %v4501, 7
    %v4504 = vshll.u32 %v4414, 16
    %v4506 = vor.u32 %v4503, %v4504
    %v4508 = vshrl.u32 %v4415, 16
    %v4510 = vrot.slane %v4508, 7
    %v4511 = vshll.u32 %v4415, 16
    %v4513 = vor.u32 %v4510, %v4511
    %v4514 = vrot.slane %v4503, 4
    %v4515 = vrot.slane %v4510, 4
    %v4517 = vshrl.u32 %v4416, 16
    %v4519 = vrot.slane %v4517, 7
    %v4520 = vshll.u32 %v4416, 16
    %v4522 = vor.u32 %v4519, %v4520
    %v4524 = vshrl.u32 %v4417, 16
    %v4526 = vrot.slane %v4524, 7
    %v4527 = vshll.u32 %v4417, 16
    %v4529 = vor.u32 %v4526, %v4527
    %v4530 = vrot.slane %v4519, 4
    %v4531 = vrot.slane %v4526, 4
    %v4533 = vshrl.u32 %v4418, 16
    %v4535 = vrot.slane %v4533, 7
    %v4536 = vshll.u32 %v4418, 16
    %v4538 = vor.u32 %v4535, %v4536
    %v4540 = vshrl.u32 %v4419, 16
    %v4542 = vrot.slane %v4540, 7
    %v4543 = vshll.u32 %v4419, 16
    %v4545 = vor.u32 %v4542, %v4543
    %v4546 = vrot.slane %v4535, 4
    %v4547 = vrot.slane %v4542, 4
    %v4580 = vld [vmem:[#allocation2] sm:$0xff]
    %v4581 = vsel %vm518, %v4426, %v4580
    %4582 = vst [vmem:[#allocation2] sm:$0xff] %v4581
    %v4583 = vld [vmem:[#allocation2 + $0x8] sm:$0xff]
    %v4584 = vsel %vm518, %v4433, %v4583
    %4585 = vst [vmem:[#allocation2 + $0x8] sm:$0xff] %v4584
    %v4586 = vld [vmem:[#allocation2 + $0x10] sm:$0x11]
    %v4587 = vsel %vm107, %v4434, %v4586
    %4588 = vst [vmem:[#allocation2 + $0x10] sm:$0x11] %v4587
    %v4589 = vld [vmem:[#allocation2 + $0x18] sm:$0x11]
    %v4590 = vsel %vm107, %v4435, %v4589
    %4591 = vst [vmem:[#allocation2 + $0x18] sm:$0x11] %v4590
    %v4592 = vld [vmem:[#allocation2 + $0x20] sm:$0xff]
    %v4593 = vsel %vm518, %v4442, %v4592
    %4594 = vst [vmem:[#allocation2 + $0x20] sm:$0xff] %v4593
    %v4595 = vld [vmem:[#allocation2 + $0x28] sm:$0xff]
    %v4596 = vsel %vm518, %v4449, %v4595
    %4597 = vst [vmem:[#allocation2 + $0x28] sm:$0xff] %v4596
    %v4598 = vld [vmem:[#allocation2 + $0x30] sm:$0x11]
    %v4599 = vsel %vm107, %v4450, %v4598
    %4600 = vst [vmem:[#allocation2 + $0x30] sm:$0x11] %v4599
    %v4601 = vld [vmem:[#allocation2 + $0x38] sm:$0x11]
    %v4602 = vsel %vm107, %v4451, %v4601
    %4603 = vst [vmem:[#allocation2 + $0x38] sm:$0x11] %v4602
    %v4604 = vld [vmem:[#allocation2 + $0x40] sm:$0xff]
    %v4605 = vsel %vm518, %v4458, %v4604
    %4606 = vst [vmem:[#allocation2 + $0x40] sm:$0xff] %v4605
    %v4607 = vld [vmem:[#allocation2 + $0x48] sm:$0xff]
    %v4608 = vsel %vm518, %v4465, %v4607
    %4609 = vst [vmem:[#allocation2 + $0x48] sm:$0xff] %v4608
    %v4610 = vld [vmem:[#allocation2 + $0x50] sm:$0x11]
    %v4611 = vsel %vm107, %v4466, %v4610
    %4612 = vst [vmem:[#allocation2 + $0x50] sm:$0x11] %v4611
    %v4613 = vld [vmem:[#allocation2 + $0x58] sm:$0x11]
    %v4614 = vsel %vm107, %v4467, %v4613
    %4615 = vst [vmem:[#allocation2 + $0x58] sm:$0x11] %v4614
    %v4616 = vld [vmem:[#allocation2 + $0x60] sm:$0xff]
    %v4617 = vsel %vm518, %v4474, %v4616
    %4618 = vst [vmem:[#allocation2 + $0x60] sm:$0xff] %v4617
    %v4619 = vld [vmem:[#allocation2 + $0x68] sm:$0xff]
    %v4620 = vsel %vm518, %v4481, %v4619
    %4621 = vst [vmem:[#allocation2 + $0x68] sm:$0xff] %v4620
    %v4622 = vld [vmem:[#allocation2 + $0x70] sm:$0x11]
    %v4623 = vsel %vm107, %v4482, %v4622
    %4624 = vst [vmem:[#allocation2 + $0x70] sm:$0x11] %v4623
    %v4625 = vld [vmem:[#allocation2 + $0x78] sm:$0x11]
    %v4626 = vsel %vm107, %v4483, %v4625
    %4627 = vst [vmem:[#allocation2 + $0x78] sm:$0x11] %v4626
    %v4628 = vld [vmem:[#allocation2 + $0x80] sm:$0xff]
    %v4629 = vsel %vm518, %v4490, %v4628
    %4630 = vst [vmem:[#allocation2 + $0x80] sm:$0xff] %v4629
    %v4631 = vld [vmem:[#allocation2 + $0x88] sm:$0xff]
    %v4632 = vsel %vm518, %v4497, %v4631
    %4633 = vst [vmem:[#allocation2 + $0x88] sm:$0xff] %v4632
    %v4634 = vld [vmem:[#allocation2 + $0x90] sm:$0x11]
    %v4635 = vsel %vm107, %v4498, %v4634
    %4636 = vst [vmem:[#allocation2 + $0x90] sm:$0x11] %v4635
    %v4637 = vld [vmem:[#allocation2 + $0x98] sm:$0x11]
    %v4638 = vsel %vm107, %v4499, %v4637
    %4639 = vst [vmem:[#allocation2 + $0x98] sm:$0x11] %v4638
    %v4640 = vld [vmem:[#allocation2 + $0xa0] sm:$0xff]
    %v4641 = vsel %vm518, %v4506, %v4640
    %4642 = vst [vmem:[#allocation2 + $0xa0] sm:$0xff] %v4641
    %v4643 = vld [vmem:[#allocation2 + $0xa8] sm:$0xff]
    %v4644 = vsel %vm518, %v4513, %v4643
    %4645 = vst [vmem:[#allocation2 + $0xa8] sm:$0xff] %v4644
    %v4646 = vld [vmem:[#allocation2 + $0xb0] sm:$0x11]
    %v4647 = vsel %vm107, %v4514, %v4646
    %4648 = vst [vmem:[#allocation2 + $0xb0] sm:$0x11] %v4647
    %v4649 = vld [vmem:[#allocation2 + $0xb8] sm:$0x11]
    %v4650 = vsel %vm107, %v4515, %v4649
    %4651 = vst [vmem:[#allocation2 + $0xb8] sm:$0x11] %v4650
    %v4652 = vld [vmem:[#allocation2 + $0xc0] sm:$0xff]
    %v4653 = vsel %vm518, %v4522, %v4652
    %4654 = vst [vmem:[#allocation2 + $0xc0] sm:$0xff] %v4653
    %v4655 = vld [vmem:[#allocation2 + $0xc8] sm:$0xff]
    %v4656 = vsel %vm518, %v4529, %v4655
    %4657 = vst [vmem:[#allocation2 + $0xc8] sm:$0xff] %v4656
    %v4658 = vld [vmem:[#allocation2 + $0xd0] sm:$0x11]
    %v4659 = vsel %vm107, %v4530, %v4658
    %4660 = vst [vmem:[#allocation2 + $0xd0] sm:$0x11] %v4659
    %v4661 = vld [vmem:[#allocation2 + $0xd8] sm:$0x11]
    %v4662 = vsel %vm107, %v4531, %v4661
    %4663 = vst [vmem:[#allocation2 + $0xd8] sm:$0x11] %v4662
    %v4664 = vld [vmem:[#allocation2 + $0xe0] sm:$0xff]
    %v4665 = vsel %vm518, %v4538, %v4664
    %4666 = vst [vmem:[#allocation2 + $0xe0] sm:$0xff] %v4665
    %v4667 = vld [vmem:[#allocation2 + $0xe8] sm:$0xff]
    %v4668 = vsel %vm518, %v4545, %v4667
    %4669 = vst [vmem:[#allocation2 + $0xe8] sm:$0xff] %v4668
    %v4670 = vld [vmem:[#allocation2 + $0xf0] sm:$0x11]
    %v4671 = vsel %vm107, %v4546, %v4670
    %4672 = vst [vmem:[#allocation2 + $0xf0] sm:$0x11] %v4671
    %v4673 = vld [vmem:[#allocation2 + $0xf8] sm:$0x11]
    %v4674 = vsel %vm107, %v4547, %v4673
    %4675 = vst [vmem:[#allocation2 + $0xf8] sm:$0x11] %v4674
    %v4676 = vld [vmem:[#allocation2] sm:$0xff]
    %v4677 = vld [vmem:[#allocation2 + $0x8] sm:$0xff]
    %v4678 = vld [vmem:[#allocation2 + $0x20] sm:$0xff]
    %v4679 = vld [vmem:[#allocation2 + $0x28] sm:$0xff]
    %v4680 = vld [vmem:[#allocation2 + $0x40] sm:$0xff]
    %v4681 = vld [vmem:[#allocation2 + $0x48] sm:$0xff]
    %v4682 = vld [vmem:[#allocation2 + $0x60] sm:$0xff]
    %v4683 = vld [vmem:[#allocation2 + $0x68] sm:$0xff]
    %v4684 = vld [vmem:[#allocation2 + $0x80] sm:$0xff]
    %v4685 = vld [vmem:[#allocation2 + $0x88] sm:$0xff]
    %v4686 = vld [vmem:[#allocation2 + $0xa0] sm:$0xff]
    %v4687 = vld [vmem:[#allocation2 + $0xa8] sm:$0xff]
    %v4688 = vld [vmem:[#allocation2 + $0xc0] sm:$0xff]
    %v4689 = vld [vmem:[#allocation2 + $0xc8] sm:$0xff]
    %v4690 = vld [vmem:[#allocation2 + $0xe0] sm:$0xff]
    %v4691 = vld [vmem:[#allocation2 + $0xe8] sm:$0xff]
    %v4692 = vld [vmem:[#allocation5] sm:$0xff]
    %v4693 = vld [vmem:[#allocation5 + $0x8] sm:$0xff]
    %v4694 = vld [vmem:[#allocation5 + $0x10] sm:$0xff]
    %v4695 = vld [vmem:[#allocation5 + $0x18] sm:$0xff]
    %v4696 = vld [vmem:[#allocation5 + $0x20] sm:$0xff]
    %v4697 = vld [vmem:[#allocation5 + $0x28] sm:$0xff]
    %v4698 = vld [vmem:[#allocation5 + $0x30] sm:$0xff]
    %v4699 = vld [vmem:[#allocation5 + $0x38] sm:$0xff]
    %v4700 = vld [vmem:[#allocation5 + $0x40] sm:$0xff]
    %v4701 = vld [vmem:[#allocation5 + $0x48] sm:$0xff]
    %v4702 = vld [vmem:[#allocation5 + $0x50] sm:$0xff]
    %v4703 = vld [vmem:[#allocation5 + $0x58] sm:$0xff]
    %v4704 = vld [vmem:[#allocation5 + $0x60] sm:$0xff]
    %v4705 = vld [vmem:[#allocation5 + $0x68] sm:$0xff]
    %v4706 = vld [vmem:[#allocation5 + $0x70] sm:$0xff]
    %v4707 = vld [vmem:[#allocation5 + $0x78] sm:$0xff]
    %v4708 = vld [vmem:[#allocation5 + $0x80] sm:$0xff]
    %v4709 = vld [vmem:[#allocation5 + $0x88] sm:$0xff]
    %v4710 = vld [vmem:[#allocation5 + $0x90] sm:$0xff]
    %v4711 = vld [vmem:[#allocation5 + $0x98] sm:$0xff]
    %v4712 = vld [vmem:[#allocation5 + $0xa0] sm:$0xff]
    %v4713 = vld [vmem:[#allocation5 + $0xa8] sm:$0xff]
    %v4714 = vld [vmem:[#allocation5 + $0xb0] sm:$0xff]
    %v4715 = vld [vmem:[#allocation5 + $0xb8] sm:$0xff]
    %v4716 = vld [vmem:[#allocation5 + $0xc0] sm:$0xff]
    %v4717 = vld [vmem:[#allocation5 + $0xc8] sm:$0xff]
    %v4718 = vld [vmem:[#allocation5 + $0xd0] sm:$0xff]
    %v4719 = vld [vmem:[#allocation5 + $0xd8] sm:$0xff]
    %v4720 = vld [vmem:[#allocation5 + $0xe0] sm:$0xff]
    %v4721 = vld [vmem:[#allocation5 + $0xe8] sm:$0xff]
    %v4722 = vld [vmem:[#allocation5 + $0xf0] sm:$0xff]
    %v4723 = vld [vmem:[#allocation5 + $0xf8] sm:$0xff]
    %v4724 = vld [vmem:[#allocation5 + $0x100] sm:$0xff]
    %v4725 = vld [vmem:[#allocation5 + $0x108] sm:$0xff]
    %v4726 = vld [vmem:[#allocation5 + $0x110] sm:$0xff]
    %v4727 = vld [vmem:[#allocation5 + $0x118] sm:$0xff]
    %v4728 = vld [vmem:[#allocation5 + $0x120] sm:$0xff]
    %v4729 = vld [vmem:[#allocation5 + $0x128] sm:$0xff]
    %v4730 = vld [vmem:[#allocation5 + $0x130] sm:$0xff]
    %v4731 = vld [vmem:[#allocation5 + $0x138] sm:$0xff]
    %v4732 = vld [vmem:[#allocation5 + $0x140] sm:$0xff]
    %v4733 = vld [vmem:[#allocation5 + $0x148] sm:$0xff]
    %v4734 = vld [vmem:[#allocation5 + $0x150] sm:$0xff]
    %v4735 = vld [vmem:[#allocation5 + $0x158] sm:$0xff]
    %v4736 = vld [vmem:[#allocation5 + $0x160] sm:$0xff]
    %v4737 = vld [vmem:[#allocation5 + $0x168] sm:$0xff]
    %v4738 = vld [vmem:[#allocation5 + $0x170] sm:$0xff]
    %v4739 = vld [vmem:[#allocation5 + $0x178] sm:$0xff]
    %v4740 = vld [vmem:[#allocation5 + $0x180] sm:$0xff]
    %v4741 = vld [vmem:[#allocation5 + $0x188] sm:$0xff]
    %v4742 = vld [vmem:[#allocation5 + $0x190] sm:$0xff]
    %v4743 = vld [vmem:[#allocation5 + $0x198] sm:$0xff]
    %v4744 = vld [vmem:[#allocation5 + $0x1a0] sm:$0xff]
    %v4745 = vld [vmem:[#allocation5 + $0x1a8] sm:$0xff]
    %v4746 = vld [vmem:[#allocation5 + $0x1b0] sm:$0xff]
    %v4747 = vld [vmem:[#allocation5 + $0x1b8] sm:$0xff]
    %v4748 = vld [vmem:[#allocation5 + $0x1c0] sm:$0xff]
    %v4749 = vld [vmem:[#allocation5 + $0x1c8] sm:$0xff]
    %v4750 = vld [vmem:[#allocation5 + $0x1d0] sm:$0xff]
    %v4751 = vld [vmem:[#allocation5 + $0x1d8] sm:$0xff]
    %v4752 = vld [vmem:[#allocation5 + $0x1e0] sm:$0xff]
    %v4753 = vld [vmem:[#allocation5 + $0x1e8] sm:$0xff]
    %v4754 = vld [vmem:[#allocation5 + $0x1f0] sm:$0xff]
    %v4755 = vld [vmem:[#allocation5 + $0x1f8] sm:$0xff]
    %v4756 = vld [vmem:[#allocation5 + $0x200] sm:$0xff]
    %v4757 = vld [vmem:[#allocation5 + $0x208] sm:$0xff]
    %v4758 = vld [vmem:[#allocation5 + $0x210] sm:$0xff]
    %v4759 = vld [vmem:[#allocation5 + $0x218] sm:$0xff]
    %v4760 = vld [vmem:[#allocation5 + $0x220] sm:$0xff]
    %v4761 = vld [vmem:[#allocation5 + $0x228] sm:$0xff]
    %v4762 = vld [vmem:[#allocation5 + $0x230] sm:$0xff]
    %v4763 = vld [vmem:[#allocation5 + $0x238] sm:$0xff]
    %v4764 = vld [vmem:[#allocation5 + $0x240] sm:$0xff]
    %v4765 = vld [vmem:[#allocation5 + $0x248] sm:$0xff]
    %v4766 = vld [vmem:[#allocation5 + $0x250] sm:$0xff]
    %v4767 = vld [vmem:[#allocation5 + $0x258] sm:$0xff]
    %v4768 = vld [vmem:[#allocation5 + $0x260] sm:$0xff]
    %v4769 = vld [vmem:[#allocation5 + $0x268] sm:$0xff]
    %v4770 = vld [vmem:[#allocation5 + $0x270] sm:$0xff]
    %v4771 = vld [vmem:[#allocation5 + $0x278] sm:$0xff]
    %v4772 = vld [vmem:[#allocation5 + $0x280] sm:$0xff]
    %v4773 = vld [vmem:[#allocation5 + $0x288] sm:$0xff]
    %v4774 = vld [vmem:[#allocation5 + $0x290] sm:$0xff]
    %v4775 = vld [vmem:[#allocation5 + $0x298] sm:$0xff]
    %v4776 = vld [vmem:[#allocation5 + $0x2a0] sm:$0xff]
    %v4777 = vld [vmem:[#allocation5 + $0x2a8] sm:$0xff]
    %v4778 = vld [vmem:[#allocation5 + $0x2b0] sm:$0xff]
    %v4779 = vld [vmem:[#allocation5 + $0x2b8] sm:$0xff]
    %v4780 = vld [vmem:[#allocation5 + $0x2c0] sm:$0xff]
    %v4781 = vld [vmem:[#allocation5 + $0x2c8] sm:$0xff]
    %v4782 = vld [vmem:[#allocation5 + $0x2d0] sm:$0xff]
    %v4783 = vld [vmem:[#allocation5 + $0x2d8] sm:$0xff]
    %v4784 = vld [vmem:[#allocation5 + $0x2e0] sm:$0xff]
    %v4785 = vld [vmem:[#allocation5 + $0x2e8] sm:$0xff]
    %v4786 = vld [vmem:[#allocation5 + $0x2f0] sm:$0xff]
    %v4787 = vld [vmem:[#allocation5 + $0x2f8] sm:$0xff]
    %v4788 = vld [vmem:[#allocation5 + $0x300] sm:$0xff]
    %v4789 = vld [vmem:[#allocation5 + $0x308] sm:$0xff]
    %v4790 = vld [vmem:[#allocation5 + $0x310] sm:$0xff]
    %v4791 = vld [vmem:[#allocation5 + $0x318] sm:$0xff]
    %v4792 = vld [vmem:[#allocation5 + $0x320] sm:$0xff]
    %v4793 = vld [vmem:[#allocation5 + $0x328] sm:$0xff]
    %v4794 = vld [vmem:[#allocation5 + $0x330] sm:$0xff]
    %v4795 = vld [vmem:[#allocation5 + $0x338] sm:$0xff]
    %v4796 = vld [vmem:[#allocation5 + $0x340] sm:$0xff]
    %v4797 = vld [vmem:[#allocation5 + $0x348] sm:$0xff]
    %v4798 = vld [vmem:[#allocation5 + $0x350] sm:$0xff]
    %v4799 = vld [vmem:[#allocation5 + $0x358] sm:$0xff]
    %v4800 = vld [vmem:[#allocation5 + $0x360] sm:$0xff]
    %v4801 = vld [vmem:[#allocation5 + $0x368] sm:$0xff]
    %v4802 = vld [vmem:[#allocation5 + $0x370] sm:$0xff]
    %v4803 = vld [vmem:[#allocation5 + $0x378] sm:$0xff]
    %v4804 = vld [vmem:[#allocation5 + $0x380] sm:$0xff]
    %v4805 = vld [vmem:[#allocation5 + $0x388] sm:$0xff]
    %v4806 = vld [vmem:[#allocation5 + $0x390] sm:$0xff]
    %v4807 = vld [vmem:[#allocation5 + $0x398] sm:$0xff]
    %v4808 = vld [vmem:[#allocation5 + $0x3a0] sm:$0xff]
    %v4809 = vld [vmem:[#allocation5 + $0x3a8] sm:$0xff]
    %v4810 = vld [vmem:[#allocation5 + $0x3b0] sm:$0xff]
    %v4811 = vld [vmem:[#allocation5 + $0x3b8] sm:$0xff]
    %v4812 = vld [vmem:[#allocation5 + $0x3c0] sm:$0xff]
    %v4813 = vld [vmem:[#allocation5 + $0x3c8] sm:$0xff]
    %v4814 = vld [vmem:[#allocation5 + $0x3d0] sm:$0xff]
    %v4815 = vld [vmem:[#allocation5 + $0x3d8] sm:$0xff]
    %v4816 = vld [vmem:[#allocation5 + $0x3e0] sm:$0xff]
    %v4817 = vld [vmem:[#allocation5 + $0x3e8] sm:$0xff]
    %v4818 = vld [vmem:[#allocation5 + $0x3f0] sm:$0xff]
    %v4819 = vld [vmem:[#allocation5 + $0x3f8] sm:$0xff]
    %v4836 = vunpack.c.l.b16 %v4676
    %v4837 = vunpack.c.h.b16 %v4676
    %v4838 = vunpack.c.l.b16 %v4677
    %v4839 = vunpack.c.h.b16 %v4677
    %v4840 = vunpack.c.l.b16 %v4678
    %v4841 = vunpack.c.h.b16 %v4678
    %v4842 = vunpack.c.l.b16 %v4679
    %v4843 = vunpack.c.h.b16 %v4679
    %v4844 = vunpack.c.l.b16 %v4680
    %v4845 = vunpack.c.h.b16 %v4680
    %v4846 = vunpack.c.l.b16 %v4681
    %v4847 = vunpack.c.h.b16 %v4681
    %v4848 = vunpack.c.l.b16 %v4682
    %v4849 = vunpack.c.h.b16 %v4682
    %v4850 = vunpack.c.l.b16 %v4683
    %v4851 = vunpack.c.h.b16 %v4683
    %v4852 = vunpack.c.l.b16 %v4684
    %v4853 = vunpack.c.h.b16 %v4684
    %v4854 = vunpack.c.l.b16 %v4685
    %v4855 = vunpack.c.h.b16 %v4685
    %v4856 = vunpack.c.l.b16 %v4686
    %v4857 = vunpack.c.h.b16 %v4686
    %v4858 = vunpack.c.l.b16 %v4687
    %v4859 = vunpack.c.h.b16 %v4687
    %v4860 = vunpack.c.l.b16 %v4688
    %v4861 = vunpack.c.h.b16 %v4688
    %v4862 = vunpack.c.l.b16 %v4689
    %v4863 = vunpack.c.h.b16 %v4689
    %v4864 = vunpack.c.l.b16 %v4690
    %v4865 = vunpack.c.h.b16 %v4690
    %v4866 = vunpack.c.l.b16 %v4691
    %v4867 = vunpack.c.h.b16 %v4691
    %v4868 = vpack.c.b16 %v4840, %v4836
    %v4869 = vpack.c.b16 %v4841, %v4837
    %v4870 = vpack.c.b16 %v4842, %v4838
    %v4871 = vpack.c.b16 %v4843, %v4839
    %v4872 = vpack.c.b16 %v4848, %v4844
    %v4873 = vpack.c.b16 %v4849, %v4845
    %v4874 = vpack.c.b16 %v4850, %v4846
    %v4875 = vpack.c.b16 %v4851, %v4847
    %v4876 = vpack.c.b16 %v4856, %v4852
    %v4877 = vpack.c.b16 %v4857, %v4853
    %v4878 = vpack.c.b16 %v4858, %v4854
    %v4879 = vpack.c.b16 %v4859, %v4855
    %v4880 = vpack.c.b16 %v4864, %v4860
    %v4881 = vpack.c.b16 %v4865, %v4861
    %v4882 = vpack.c.b16 %v4866, %v4862
    %v4883 = vpack.c.b16 %v4867, %v4863
    %v5028 = vunpack.c.l.b16 %v4692
    %v5029 = vunpack.c.h.b16 %v4692
    %v5030 = vunpack.c.l.b16 %v4693
    %v5031 = vunpack.c.h.b16 %v4693
    %v5032 = vunpack.c.l.b16 %v4694
    %v5033 = vunpack.c.h.b16 %v4694
    %v5034 = vunpack.c.l.b16 %v4695
    %v5035 = vunpack.c.h.b16 %v4695
    %v5036 = vunpack.c.l.b16 %v4696
    %v5037 = vunpack.c.h.b16 %v4696
    %v5038 = vunpack.c.l.b16 %v4697
    %v5039 = vunpack.c.h.b16 %v4697
    %v5040 = vunpack.c.l.b16 %v4698
    %v5041 = vunpack.c.h.b16 %v4698
    %v5042 = vunpack.c.l.b16 %v4699
    %v5043 = vunpack.c.h.b16 %v4699
    %v5044 = vunpack.c.l.b16 %v4700
    %v5045 = vunpack.c.h.b16 %v4700
    %v5046 = vunpack.c.l.b16 %v4701
    %v5047 = vunpack.c.h.b16 %v4701
    %v5048 = vunpack.c.l.b16 %v4702
    %v5049 = vunpack.c.h.b16 %v4702
    %v5050 = vunpack.c.l.b16 %v4703
    %v5051 = vunpack.c.h.b16 %v4703
    %v5052 = vunpack.c.l.b16 %v4704
    %v5053 = vunpack.c.h.b16 %v4704
    %v5054 = vunpack.c.l.b16 %v4705
    %v5055 = vunpack.c.h.b16 %v4705
    %v5056 = vunpack.c.l.b16 %v4706
    %v5057 = vunpack.c.h.b16 %v4706
    %v5058 = vunpack.c.l.b16 %v4707
    %v5059 = vunpack.c.h.b16 %v4707
    %v5060 = vunpack.c.l.b16 %v4708
    %v5061 = vunpack.c.h.b16 %v4708
    %v5062 = vunpack.c.l.b16 %v4709
    %v5063 = vunpack.c.h.b16 %v4709
    %v5064 = vunpack.c.l.b16 %v4710
    %v5065 = vunpack.c.h.b16 %v4710
    %v5066 = vunpack.c.l.b16 %v4711
    %v5067 = vunpack.c.h.b16 %v4711
    %v5068 = vunpack.c.l.b16 %v4712
    %v5069 = vunpack.c.h.b16 %v4712
    %v5070 = vunpack.c.l.b16 %v4713
    %v5071 = vunpack.c.h.b16 %v4713
    %v5072 = vunpack.c.l.b16 %v4714
    %v5073 = vunpack.c.h.b16 %v4714
    %v5074 = vunpack.c.l.b16 %v4715
    %v5075 = vunpack.c.h.b16 %v4715
    %v5076 = vunpack.c.l.b16 %v4716
    %v5077 = vunpack.c.h.b16 %v4716
    %v5078 = vunpack.c.l.b16 %v4717
    %v5079 = vunpack.c.h.b16 %v4717
    %v5080 = vunpack.c.l.b16 %v4718
    %v5081 = vunpack.c.h.b16 %v4718
    %v5082 = vunpack.c.l.b16 %v4719
    %v5083 = vunpack.c.h.b16 %v4719
    %v5084 = vunpack.c.l.b16 %v4720
    %v5085 = vunpack.c.h.b16 %v4720
    %v5086 = vunpack.c.l.b16 %v4721
    %v5087 = vunpack.c.h.b16 %v4721
    %v5088 = vunpack.c.l.b16 %v4722
    %v5089 = vunpack.c.h.b16 %v4722
    %v5090 = vunpack.c.l.b16 %v4723
    %v5091 = vunpack.c.h.b16 %v4723
    %v5092 = vunpack.c.l.b16 %v4724
    %v5093 = vunpack.c.h.b16 %v4724
    %v5094 = vunpack.c.l.b16 %v4725
    %v5095 = vunpack.c.h.b16 %v4725
    %v5096 = vunpack.c.l.b16 %v4726
    %v5097 = vunpack.c.h.b16 %v4726
    %v5098 = vunpack.c.l.b16 %v4727
    %v5099 = vunpack.c.h.b16 %v4727
    %v5100 = vunpack.c.l.b16 %v4728
    %v5101 = vunpack.c.h.b16 %v4728
    %v5102 = vunpack.c.l.b16 %v4729
    %v5103 = vunpack.c.h.b16 %v4729
    %v5104 = vunpack.c.l.b16 %v4730
    %v5105 = vunpack.c.h.b16 %v4730
    %v5106 = vunpack.c.l.b16 %v4731
    %v5107 = vunpack.c.h.b16 %v4731
    %v5108 = vunpack.c.l.b16 %v4732
    %v5109 = vunpack.c.h.b16 %v4732
    %v5110 = vunpack.c.l.b16 %v4733
    %v5111 = vunpack.c.h.b16 %v4733
    %v5112 = vunpack.c.l.b16 %v4734
    %v5113 = vunpack.c.h.b16 %v4734
    %v5114 = vunpack.c.l.b16 %v4735
    %v5115 = vunpack.c.h.b16 %v4735
    %v5116 = vunpack.c.l.b16 %v4736
    %v5117 = vunpack.c.h.b16 %v4736
    %v5118 = vunpack.c.l.b16 %v4737
    %v5119 = vunpack.c.h.b16 %v4737
    %v5120 = vunpack.c.l.b16 %v4738
    %v5121 = vunpack.c.h.b16 %v4738
    %v5122 = vunpack.c.l.b16 %v4739
    %v5123 = vunpack.c.h.b16 %v4739
    %v5124 = vunpack.c.l.b16 %v4740
    %v5125 = vunpack.c.h.b16 %v4740
    %v5126 = vunpack.c.l.b16 %v4741
    %v5127 = vunpack.c.h.b16 %v4741
    %v5128 = vunpack.c.l.b16 %v4742
    %v5129 = vunpack.c.h.b16 %v4742
    %v5130 = vunpack.c.l.b16 %v4743
    %v5131 = vunpack.c.h.b16 %v4743
    %v5132 = vunpack.c.l.b16 %v4744
    %v5133 = vunpack.c.h.b16 %v4744
    %v5134 = vunpack.c.l.b16 %v4745
    %v5135 = vunpack.c.h.b16 %v4745
    %v5136 = vunpack.c.l.b16 %v4746
    %v5137 = vunpack.c.h.b16 %v4746
    %v5138 = vunpack.c.l.b16 %v4747
    %v5139 = vunpack.c.h.b16 %v4747
    %v5140 = vunpack.c.l.b16 %v4748
    %v5141 = vunpack.c.h.b16 %v4748
    %v5142 = vunpack.c.l.b16 %v4749
    %v5143 = vunpack.c.h.b16 %v4749
    %v5144 = vunpack.c.l.b16 %v4750
    %v5145 = vunpack.c.h.b16 %v4750
    %v5146 = vunpack.c.l.b16 %v4751
    %v5147 = vunpack.c.h.b16 %v4751
    %v5148 = vunpack.c.l.b16 %v4752
    %v5149 = vunpack.c.h.b16 %v4752
    %v5150 = vunpack.c.l.b16 %v4753
    %v5151 = vunpack.c.h.b16 %v4753
    %v5152 = vunpack.c.l.b16 %v4754
    %v5153 = vunpack.c.h.b16 %v4754
    %v5154 = vunpack.c.l.b16 %v4755
    %v5155 = vunpack.c.h.b16 %v4755
    %v5156 = vunpack.c.l.b16 %v4756
    %v5157 = vunpack.c.h.b16 %v4756
    %v5158 = vunpack.c.l.b16 %v4757
    %v5159 = vunpack.c.h.b16 %v4757
    %v5160 = vunpack.c.l.b16 %v4758
    %v5161 = vunpack.c.h.b16 %v4758
    %v5162 = vunpack.c.l.b16 %v4759
    %v5163 = vunpack.c.h.b16 %v4759
    %v5164 = vunpack.c.l.b16 %v4760
    %v5165 = vunpack.c.h.b16 %v4760
    %v5166 = vunpack.c.l.b16 %v4761
    %v5167 = vunpack.c.h.b16 %v4761
    %v5168 = vunpack.c.l.b16 %v4762
    %v5169 = vunpack.c.h.b16 %v4762
    %v5170 = vunpack.c.l.b16 %v4763
    %v5171 = vunpack.c.h.b16 %v4763
    %v5172 = vunpack.c.l.b16 %v4764
    %v5173 = vunpack.c.h.b16 %v4764
    %v5174 = vunpack.c.l.b16 %v4765
    %v5175 = vunpack.c.h.b16 %v4765
    %v5176 = vunpack.c.l.b16 %v4766
    %v5177 = vunpack.c.h.b16 %v4766
    %v5178 = vunpack.c.l.b16 %v4767
    %v5179 = vunpack.c.h.b16 %v4767
    %v5180 = vunpack.c.l.b16 %v4768
    %v5181 = vunpack.c.h.b16 %v4768
    %v5182 = vunpack.c.l.b16 %v4769
    %v5183 = vunpack.c.h.b16 %v4769
    %v5184 = vunpack.c.l.b16 %v4770
    %v5185 = vunpack.c.h.b16 %v4770
    %v5186 = vunpack.c.l.b16 %v4771
    %v5187 = vunpack.c.h.b16 %v4771
    %v5188 = vunpack.c.l.b16 %v4772
    %v5189 = vunpack.c.h.b16 %v4772
    %v5190 = vunpack.c.l.b16 %v4773
    %v5191 = vunpack.c.h.b16 %v4773
    %v5192 = vunpack.c.l.b16 %v4774
    %v5193 = vunpack.c.h.b16 %v4774
    %v5194 = vunpack.c.l.b16 %v4775
    %v5195 = vunpack.c.h.b16 %v4775
    %v5196 = vunpack.c.l.b16 %v4776
    %v5197 = vunpack.c.h.b16 %v4776
    %v5198 = vunpack.c.l.b16 %v4777
    %v5199 = vunpack.c.h.b16 %v4777
    %v5200 = vunpack.c.l.b16 %v4778
    %v5201 = vunpack.c.h.b16 %v4778
    %v5202 = vunpack.c.l.b16 %v4779
    %v5203 = vunpack.c.h.b16 %v4779
    %v5204 = vunpack.c.l.b16 %v4780
    %v5205 = vunpack.c.h.b16 %v4780
    %v5206 = vunpack.c.l.b16 %v4781
    %v5207 = vunpack.c.h.b16 %v4781
    %v5208 = vunpack.c.l.b16 %v4782
    %v5209 = vunpack.c.h.b16 %v4782
    %v5210 = vunpack.c.l.b16 %v4783
    %v5211 = vunpack.c.h.b16 %v4783
    %v5212 = vunpack.c.l.b16 %v4784
    %v5213 = vunpack.c.h.b16 %v4784
    %v5214 = vunpack.c.l.b16 %v4785
    %v5215 = vunpack.c.h.b16 %v4785
    %v5216 = vunpack.c.l.b16 %v4786
    %v5217 = vunpack.c.h.b16 %v4786
    %v5218 = vunpack.c.l.b16 %v4787
    %v5219 = vunpack.c.h.b16 %v4787
    %v5220 = vunpack.c.l.b16 %v4788
    %v5221 = vunpack.c.h.b16 %v4788
    %v5222 = vunpack.c.l.b16 %v4789
    %v5223 = vunpack.c.h.b16 %v4789
    %v5224 = vunpack.c.l.b16 %v4790
    %v5225 = vunpack.c.h.b16 %v4790
    %v5226 = vunpack.c.l.b16 %v4791
    %v5227 = vunpack.c.h.b16 %v4791
    %v5228 = vunpack.c.l.b16 %v4792
    %v5229 = vunpack.c.h.b16 %v4792
    %v5230 = vunpack.c.l.b16 %v4793
    %v5231 = vunpack.c.h.b16 %v4793
    %v5232 = vunpack.c.l.b16 %v4794
    %v5233 = vunpack.c.h.b16 %v4794
    %v5234 = vunpack.c.l.b16 %v4795
    %v5235 = vunpack.c.h.b16 %v4795
    %v5236 = vunpack.c.l.b16 %v4796
    %v5237 = vunpack.c.h.b16 %v4796
    %v5238 = vunpack.c.l.b16 %v4797
    %v5239 = vunpack.c.h.b16 %v4797
    %v5240 = vunpack.c.l.b16 %v4798
    %v5241 = vunpack.c.h.b16 %v4798
    %v5242 = vunpack.c.l.b16 %v4799
    %v5243 = vunpack.c.h.b16 %v4799
    %v5244 = vunpack.c.l.b16 %v4800
    %v5245 = vunpack.c.h.b16 %v4800
    %v5246 = vunpack.c.l.b16 %v4801
    %v5247 = vunpack.c.h.b16 %v4801
    %v5248 = vunpack.c.l.b16 %v4802
    %v5249 = vunpack.c.h.b16 %v4802
    %v5250 = vunpack.c.l.b16 %v4803
    %v5251 = vunpack.c.h.b16 %v4803
    %v5252 = vunpack.c.l.b16 %v4804
    %v5253 = vunpack.c.h.b16 %v4804
    %v5254 = vunpack.c.l.b16 %v4805
    %v5255 = vunpack.c.h.b16 %v4805
    %v5256 = vunpack.c.l.b16 %v4806
    %v5257 = vunpack.c.h.b16 %v4806
    %v5258 = vunpack.c.l.b16 %v4807
    %v5259 = vunpack.c.h.b16 %v4807
    %v5260 = vunpack.c.l.b16 %v4808
    %v5261 = vunpack.c.h.b16 %v4808
    %v5262 = vunpack.c.l.b16 %v4809
    %v5263 = vunpack.c.h.b16 %v4809
    %v5264 = vunpack.c.l.b16 %v4810
    %v5265 = vunpack.c.h.b16 %v4810
    %v5266 = vunpack.c.l.b16 %v4811
    %v5267 = vunpack.c.h.b16 %v4811
    %v5268 = vunpack.c.l.b16 %v4812
    %v5269 = vunpack.c.h.b16 %v4812
    %v5270 = vunpack.c.l.b16 %v4813
    %v5271 = vunpack.c.h.b16 %v4813
    %v5272 = vunpack.c.l.b16 %v4814
    %v5273 = vunpack.c.h.b16 %v4814
    %v5274 = vunpack.c.l.b16 %v4815
    %v5275 = vunpack.c.h.b16 %v4815
    %v5276 = vunpack.c.l.b16 %v4816
    %v5277 = vunpack.c.h.b16 %v4816
    %v5278 = vunpack.c.l.b16 %v4817
    %v5279 = vunpack.c.h.b16 %v4817
    %v5280 = vunpack.c.l.b16 %v4818
    %v5281 = vunpack.c.h.b16 %v4818
    %v5282 = vunpack.c.l.b16 %v4819
    %v5283 = vunpack.c.h.b16 %v4819
    %v5284 = vpack.c.b16 %v5032, %v5028
    %v5285 = vpack.c.b16 %v5033, %v5029
    %v5286 = vpack.c.b16 %v5034, %v5030
    %v5287 = vpack.c.b16 %v5035, %v5031
    %v5288 = vpack.c.b16 %v5040, %v5036
    %v5289 = vpack.c.b16 %v5041, %v5037
    %v5290 = vpack.c.b16 %v5042, %v5038
    %v5291 = vpack.c.b16 %v5043, %v5039
    %v5292 = vpack.c.b16 %v5048, %v5044
    %v5293 = vpack.c.b16 %v5049, %v5045
    %v5294 = vpack.c.b16 %v5050, %v5046
    %v5295 = vpack.c.b16 %v5051, %v5047
    %v5296 = vpack.c.b16 %v5056, %v5052
    %v5297 = vpack.c.b16 %v5057, %v5053
    %v5298 = vpack.c.b16 %v5058, %v5054
    %v5299 = vpack.c.b16 %v5059, %v5055
    %v5300 = vpack.c.b16 %v5064, %v5060
    %v5301 = vpack.c.b16 %v5065, %v5061
    %v5302 = vpack.c.b16 %v5066, %v5062
    %v5303 = vpack.c.b16 %v5067, %v5063
    %v5304 = vpack.c.b16 %v5072, %v5068
    %v5305 = vpack.c.b16 %v5073, %v5069
    %v5306 = vpack.c.b16 %v5074, %v5070
    %v5307 = vpack.c.b16 %v5075, %v5071
    %v5308 = vpack.c.b16 %v5080, %v5076
    %v5309 = vpack.c.b16 %v5081, %v5077
    %v5310 = vpack.c.b16 %v5082, %v5078
    %v5311 = vpack.c.b16 %v5083, %v5079
    %v5312 = vpack.c.b16 %v5088, %v5084
    %v5313 = vpack.c.b16 %v5089, %v5085
    %v5314 = vpack.c.b16 %v5090, %v5086
    %v5315 = vpack.c.b16 %v5091, %v5087
    %v5316 = vpack.c.b16 %v5096, %v5092
    %v5317 = vpack.c.b16 %v5097, %v5093
    %v5318 = vpack.c.b16 %v5098, %v5094
    %v5319 = vpack.c.b16 %v5099, %v5095
    %v5320 = vpack.c.b16 %v5104, %v5100
    %v5321 = vpack.c.b16 %v5105, %v5101
    %v5322 = vpack.c.b16 %v5106, %v5102
    %v5323 = vpack.c.b16 %v5107, %v5103
    %v5324 = vpack.c.b16 %v5112, %v5108
    %v5325 = vpack.c.b16 %v5113, %v5109
    %v5326 = vpack.c.b16 %v5114, %v5110
    %v5327 = vpack.c.b16 %v5115, %v5111
    %v5328 = vpack.c.b16 %v5120, %v5116
    %v5329 = vpack.c.b16 %v5121, %v5117
    %v5330 = vpack.c.b16 %v5122, %v5118
    %v5331 = vpack.c.b16 %v5123, %v5119
    %v5332 = vpack.c.b16 %v5128, %v5124
    %v5333 = vpack.c.b16 %v5129, %v5125
    %v5334 = vpack.c.b16 %v5130, %v5126
    %v5335 = vpack.c.b16 %v5131, %v5127
    %v5336 = vpack.c.b16 %v5136, %v5132
    %v5337 = vpack.c.b16 %v5137, %v5133
    %v5338 = vpack.c.b16 %v5138, %v5134
    %v5339 = vpack.c.b16 %v5139, %v5135
    %v5340 = vpack.c.b16 %v5144, %v5140
    %v5341 = vpack.c.b16 %v5145, %v5141
    %v5342 = vpack.c.b16 %v5146, %v5142
    %v5343 = vpack.c.b16 %v5147, %v5143
    %v5344 = vpack.c.b16 %v5152, %v5148
    %v5345 = vpack.c.b16 %v5153, %v5149
    %v5346 = vpack.c.b16 %v5154, %v5150
    %v5347 = vpack.c.b16 %v5155, %v5151
    %v5348 = vpack.c.b16 %v5160, %v5156
    %v5349 = vpack.c.b16 %v5161, %v5157
    %v5350 = vpack.c.b16 %v5162, %v5158
    %v5351 = vpack.c.b16 %v5163, %v5159
    %v5352 = vpack.c.b16 %v5168, %v5164
    %v5353 = vpack.c.b16 %v5169, %v5165
    %v5354 = vpack.c.b16 %v5170, %v5166
    %v5355 = vpack.c.b16 %v5171, %v5167
    %v5356 = vpack.c.b16 %v5176, %v5172
    %v5357 = vpack.c.b16 %v5177, %v5173
    %v5358 = vpack.c.b16 %v5178, %v5174
    %v5359 = vpack.c.b16 %v5179, %v5175
    %v5360 = vpack.c.b16 %v5184, %v5180
    %v5361 = vpack.c.b16 %v5185, %v5181
    %v5362 = vpack.c.b16 %v5186, %v5182
    %v5363 = vpack.c.b16 %v5187, %v5183
    %v5364 = vpack.c.b16 %v5192, %v5188
    %v5365 = vpack.c.b16 %v5193, %v5189
    %v5366 = vpack.c.b16 %v5194, %v5190
    %v5367 = vpack.c.b16 %v5195, %v5191
    %v5368 = vpack.c.b16 %v5200, %v5196
    %v5369 = vpack.c.b16 %v5201, %v5197
    %v5370 = vpack.c.b16 %v5202, %v5198
    %v5371 = vpack.c.b16 %v5203, %v5199
    %v5372 = vpack.c.b16 %v5208, %v5204
    %v5373 = vpack.c.b16 %v5209, %v5205
    %v5374 = vpack.c.b16 %v5210, %v5206
    %v5375 = vpack.c.b16 %v5211, %v5207
    %v5376 = vpack.c.b16 %v5216, %v5212
    %v5377 = vpack.c.b16 %v5217, %v5213
    %v5378 = vpack.c.b16 %v5218, %v5214
    %v5379 = vpack.c.b16 %v5219, %v5215
    %v5380 = vpack.c.b16 %v5224, %v5220
    %v5381 = vpack.c.b16 %v5225, %v5221
    %v5382 = vpack.c.b16 %v5226, %v5222
    %v5383 = vpack.c.b16 %v5227, %v5223
    %v5384 = vpack.c.b16 %v5232, %v5228
    %v5385 = vpack.c.b16 %v5233, %v5229
    %v5386 = vpack.c.b16 %v5234, %v5230
    %v5387 = vpack.c.b16 %v5235, %v5231
    %v5388 = vpack.c.b16 %v5240, %v5236
    %v5389 = vpack.c.b16 %v5241, %v5237
    %v5390 = vpack.c.b16 %v5242, %v5238
    %v5391 = vpack.c.b16 %v5243, %v5239
    %v5392 = vpack.c.b16 %v5248, %v5244
    %v5393 = vpack.c.b16 %v5249, %v5245
    %v5394 = vpack.c.b16 %v5250, %v5246
    %v5395 = vpack.c.b16 %v5251, %v5247
    %v5396 = vpack.c.b16 %v5256, %v5252
    %v5397 = vpack.c.b16 %v5257, %v5253
    %v5398 = vpack.c.b16 %v5258, %v5254
    %v5399 = vpack.c.b16 %v5259, %v5255
    %v5400 = vpack.c.b16 %v5264, %v5260
    %v5401 = vpack.c.b16 %v5265, %v5261
    %v5402 = vpack.c.b16 %v5266, %v5262
    %v5403 = vpack.c.b16 %v5267, %v5263
    %v5404 = vpack.c.b16 %v5272, %v5268
    %v5405 = vpack.c.b16 %v5273, %v5269
    %v5406 = vpack.c.b16 %v5274, %v5270
    %v5407 = vpack.c.b16 %v5275, %v5271
    %v5408 = vpack.c.b16 %v5280, %v5276
    %v5409 = vpack.c.b16 %v5281, %v5277
    %v5410 = vpack.c.b16 %v5282, %v5278
    %v5411 = vpack.c.b16 %v5283, %v5279
    %5540 = vmatprep.subr.bf16.mxu0 %v5285
    %5541 = vmatpush1.bf16.msra.mxu0 %v5284
    %5542 = vmatprep.subr.bf16.mxu0 %v5289
    %5543 = vmatpush1.bf16.msra.mxu0 %v5288
    %5544 = vmatprep.subr.bf16.mxu0 %v5293
    %5545 = vmatpush1.bf16.msra.mxu0 %v5292
    %5546 = vmatprep.subr.bf16.mxu0 %v5297
    %5547 = vmatpush1.bf16.msra.mxu0 %v5296
    %5548 = vmatprep.subr.bf16.mxu0 %v5301
    %5549 = vmatpush1.bf16.msra.mxu0 %v5300
    %5550 = vmatprep.subr.bf16.mxu0 %v5305
    %5551 = vmatpush1.bf16.msra.mxu0 %v5304
    %5552 = vmatprep.subr.bf16.mxu0 %v5309
    %5553 = vmatpush1.bf16.msra.mxu0 %v5308
    %5554 = vmatprep.subr.bf16.mxu0 %v5313
    %5555 = vmatpush1.bf16.msra.mxu0 %v5312
    %5556 = vmatprep.subr.bf16.mxu0 %v5317
    %5557 = vmatpush1.bf16.msra.mxu0 %v5316
    %5558 = vmatprep.subr.bf16.mxu0 %v5321
    %5559 = vmatpush1.bf16.msra.mxu0 %v5320
    %5560 = vmatprep.subr.bf16.mxu0 %v5325
    %5561 = vmatpush1.bf16.msra.mxu0 %v5324
    %5562 = vmatprep.subr.bf16.mxu0 %v5329
    %5563 = vmatpush1.bf16.msra.mxu0 %v5328
    %5564 = vmatprep.subr.bf16.mxu0 %v5333
    %5565 = vmatpush1.bf16.msra.mxu0 %v5332
    %5566 = vmatprep.subr.bf16.mxu0 %v5337
    %5567 = vmatpush1.bf16.msra.mxu0 %v5336
    %5568 = vmatprep.subr.bf16.mxu0 %v5341
    %5569 = vmatpush1.bf16.msra.mxu0 %v5340
    %5570 = vmatprep.subr.bf16.mxu0 %v5345
    %5571 = vmatpush1.bf16.msra.mxu0 %v5344
    %5572 = vmatprep.mubr.bf16.mxu0 %v4869
    %5573 = vmatmul.mubr.bf16.gmra.mrb[0].mxu0 %v4868
    %v5574 = vpop.f32.mrb[0].mxu0
    %v5575 = vadd.f32 0.0, %v5574
    %v5576 = vpop.f32.mrb[0].mxu0
    %v5577 = vadd.f32 0.0, %v5576
    %v5578 = vpop.f32.mrb[0].mxu0
    %v5579 = vadd.f32 0.0, %v5578
    %v5580 = vpop.f32.mrb[0].mxu0
    %v5581 = vadd.f32 0.0, %v5580
    %5582 = vmatprep.mubr.bf16.mxu0 %v4873
    %5583 = vmatmul.mubr.bf16.gmra.mrb[0].mxu0 %v4872
    %v5584 = vpop.f32.mrb[0].mxu0
    %v5585 = vadd.f32 0.0, %v5584
    %v5586 = vpop.f32.mrb[0].mxu0
    %v5587 = vadd.f32 0.0, %v5586
    %v5588 = vpop.f32.mrb[0].mxu0
    %v5589 = vadd.f32 0.0, %v5588
    %v5590 = vpop.f32.mrb[0].mxu0
    %v5591 = vadd.f32 0.0, %v5590
    %5592 = vmatprep.mubr.bf16.mxu0 %v4877
    %5593 = vmatmul.mubr.bf16.gmra.mrb[0].mxu0 %v4876
    %v5594 = vpop.f32.mrb[0].mxu0
    %v5595 = vadd.f32 0.0, %v5594
    %v5596 = vpop.f32.mrb[0].mxu0
    %v5597 = vadd.f32 0.0, %v5596
    %v5598 = vpop.f32.mrb[0].mxu0
    %v5599 = vadd.f32 0.0, %v5598
    %v5600 = vpop.f32.mrb[0].mxu0
    %v5601 = vadd.f32 0.0, %v5600
    %5602 = vmatprep.mubr.bf16.mxu0 %v4881
    %5603 = vmatmul.mubr.bf16.gmra.mrb[0].mxu0 %v4880
    %v5604 = vpop.f32.mrb[0].mxu0
    %v5605 = vadd.f32 0.0, %v5604
    %v5606 = vpop.f32.mrb[0].mxu0
    %v5607 = vadd.f32 0.0, %v5606
    %v5608 = vpop.f32.mrb[0].mxu0
    %v5609 = vadd.f32 0.0, %v5608
    %v5610 = vpop.f32.mrb[0].mxu0
    %v5611 = vadd.f32 0.0, %v5610
    %5612 = vdwg.mxu0
    %5613 = vmatprep.subr.bf16.mxu0 %v5349
    %5614 = vmatpush1.bf16.msra.mxu0 %v5348
    %5615 = vmatprep.subr.bf16.mxu0 %v5353
    %5616 = vmatpush1.bf16.msra.mxu0 %v5352
    %5617 = vmatprep.subr.bf16.mxu0 %v5357
    %5618 = vmatpush1.bf16.msra.mxu0 %v5356
    %5619 = vmatprep.subr.bf16.mxu0 %v5361
    %5620 = vmatpush1.bf16.msra.mxu0 %v5360
    %5621 = vmatprep.subr.bf16.mxu0 %v5365
    %5622 = vmatpush1.bf16.msra.mxu0 %v5364
    %5623 = vmatprep.subr.bf16.mxu0 %v5369
    %5624 = vmatpush1.bf16.msra.mxu0 %v5368
    %5625 = vmatprep.subr.bf16.mxu0 %v5373
    %5626 = vmatpush1.bf16.msra.mxu0 %v5372
    %5627 = vmatprep.subr.bf16.mxu0 %v5377
    %5628 = vmatpush1.bf16.msra.mxu0 %v5376
    %5629 = vmatprep.subr.bf16.mxu0 %v5381
    %5630 = vmatpush1.bf16.msra.mxu0 %v5380
    %5631 = vmatprep.subr.bf16.mxu0 %v5385
    %5632 = vmatpush1.bf16.msra.mxu0 %v5384
    %5633 = vmatprep.subr.bf16.mxu0 %v5389
    %5634 = vmatpush1.bf16.msra.mxu0 %v5388
    %5635 = vmatprep.subr.bf16.mxu0 %v5393
    %5636 = vmatpush1.bf16.msra.mxu0 %v5392
    %5637 = vmatprep.subr.bf16.mxu0 %v5397
    %5638 = vmatpush1.bf16.msra.mxu0 %v5396
    %5639 = vmatprep.subr.bf16.mxu0 %v5401
    %5640 = vmatpush1.bf16.msra.mxu0 %v5400
    %5641 = vmatprep.subr.bf16.mxu0 %v5405
    %5642 = vmatpush1.bf16.msra.mxu0 %v5404
    %5643 = vmatprep.subr.bf16.mxu0 %v5409
    %5644 = vmatpush1.bf16.msra.mxu0 %v5408
    %5645 = vmatprep.mubr.bf16.mxu0 %v4871
    %5646 = vmatmul.mubr.bf16.gmra.mrb[0].mxu0 %v4870
    %v5647 = vpop.f32.mrb[0].mxu0
    %v5648 = vadd.f32 %v5575, %v5647
    %v5649 = vpop.f32.mrb[0].mxu0
    %v5650 = vadd.f32 %v5577, %v5649
    %v5651 = vpop.f32.mrb[0].mxu0
    %v5652 = vadd.f32 %v5579, %v5651
    %v5653 = vpop.f32.mrb[0].mxu0
    %v5654 = vadd.f32 %v5581, %v5653
    %5655 = vmatprep.mubr.bf16.mxu0 %v4875
    %5656 = vmatmul.mubr.bf16.gmra.mrb[0].mxu0 %v4874
    %v5657 = vpop.f32.mrb[0].mxu0
    %v5658 = vadd.f32 %v5585, %v5657
    %v5659 = vpop.f32.mrb[0].mxu0
    %v5660 = vadd.f32 %v5587, %v5659
    %v5661 = vpop.f32.mrb[0].mxu0
    %v5662 = vadd.f32 %v5589, %v5661
    %v5663 = vpop.f32.mrb[0].mxu0
    %v5664 = vadd.f32 %v5591, %v5663
    %5665 = vmatprep.mubr.bf16.mxu0 %v4879
    %5666 = vmatmul.mubr.bf16.gmra.mrb[0].mxu0 %v4878
    %v5667 = vpop.f32.mrb[0].mxu0
    %v5668 = vadd.f32 %v5595, %v5667
    %v5669 = vpop.f32.mrb[0].mxu0
    %v5670 = vadd.f32 %v5597, %v5669
    %v5671 = vpop.f32.mrb[0].mxu0
    %v5672 = vadd.f32 %v5599, %v5671
    %v5673 = vpop.f32.mrb[0].mxu0
    %v5674 = vadd.f32 %v5601, %v5673
    %5675 = vmatprep.mubr.bf16.mxu0 %v4883
    %5676 = vmatmul.mubr.bf16.gmra.mrb[0].mxu0 %v4882
    %v5677 = vpop.f32.mrb[0].mxu0
    %v5678 = vadd.f32 %v5605, %v5677
    %v5679 = vpop.f32.mrb[0].mxu0
    %v5680 = vadd.f32 %v5607, %v5679
    %v5681 = vpop.f32.mrb[0].mxu0
    %v5682 = vadd.f32 %v5609, %v5681
    %v5683 = vpop.f32.mrb[0].mxu0
    %v5684 = vadd.f32 %v5611, %v5683
    %5685 = vdwg.mxu0
    %5686 = vmatprep.subr.bf16.mxu0 %v5287
    %5687 = vmatpush1.bf16.msra.mxu0 %v5286
    %5688 = vmatprep.subr.bf16.mxu0 %v5291
    %5689 = vmatpush1.bf16.msra.mxu0 %v5290
    %5690 = vmatprep.subr.bf16.mxu0 %v5295
    %5691 = vmatpush1.bf16.msra.mxu0 %v5294
    %5692 = vmatprep.subr.bf16.mxu0 %v5299
    %5693 = vmatpush1.bf16.msra.mxu0 %v5298
    %5694 = vmatprep.subr.bf16.mxu0 %v5303
    %5695 = vmatpush1.bf16.msra.mxu0 %v5302
    %5696 = vmatprep.subr.bf16.mxu0 %v5307
    %5697 = vmatpush1.bf16.msra.mxu0 %v5306
    %5698 = vmatprep.subr.bf16.mxu0 %v5311
    %5699 = vmatpush1.bf16.msra.mxu0 %v5310
    %5700 = vmatprep.subr.bf16.mxu0 %v5315
    %5701 = vmatpush1.bf16.msra.mxu0 %v5314
    %5702 = vmatprep.subr.bf16.mxu0 %v5319
    %5703 = vmatpush1.bf16.msra.mxu0 %v5318
    %5704 = vmatprep.subr.bf16.mxu0 %v5323
    %5705 = vmatpush1.bf16.msra.mxu0 %v5322
    %5706 = vmatprep.subr.bf16.mxu0 %v5327
    %5707 = vmatpush1.bf16.msra.mxu0 %v5326
    %5708 = vmatprep.subr.bf16.mxu0 %v5331
    %5709 = vmatpush1.bf16.msra.mxu0 %v5330
    %5710 = vmatprep.subr.bf16.mxu0 %v5335
    %5711 = vmatpush1.bf16.msra.mxu0 %v5334
    %5712 = vmatprep.subr.bf16.mxu0 %v5339
    %5713 = vmatpush1.bf16.msra.mxu0 %v5338
    %5714 = vmatprep.subr.bf16.mxu0 %v5343
    %5715 = vmatpush1.bf16.msra.mxu0 %v5342
    %5716 = vmatprep.subr.bf16.mxu0 %v5347
    %5717 = vmatpush1.bf16.msra.mxu0 %v5346
    %5718 = vmatprep.mubr.bf16.mxu0 %v4869
    %5719 = vmatmul.mubr.bf16.gmra.mrb[0].mxu0 %v4868
    %v5720 = vpop.f32.mrb[0].mxu0
    %v5721 = vadd.f32 0.0, %v5720
    %v5722 = vpop.f32.mrb[0].mxu0
    %v5723 = vadd.f32 0.0, %v5722
    %v5724 = vpop.f32.mrb[0].mxu0
    %v5725 = vadd.f32 0.0, %v5724
    %v5726 = vpop.f32.mrb[0].mxu0
    %v5727 = vadd.f32 0.0, %v5726
    %5728 = vmatprep.mubr.bf16.mxu0 %v4873
    %5729 = vmatmul.mubr.bf16.gmra.mrb[0].mxu0 %v4872
    %v5730 = vpop.f32.mrb[0].mxu0
    %v5731 = vadd.f32 0.0, %v5730
    %v5732 = vpop.f32.mrb[0].mxu0
    %v5733 = vadd.f32 0.0, %v5732
    %v5734 = vpop.f32.mrb[0].mxu0
    %v5735 = vadd.f32 0.0, %v5734
    %v5736 = vpop.f32.mrb[0].mxu0
    %v5737 = vadd.f32 0.0, %v5736
    %5738 = vmatprep.mubr.bf16.mxu0 %v4877
    %5739 = vmatmul.mubr.bf16.gmra.mrb[0].mxu0 %v4876
    %v5740 = vpop.f32.mrb[0].mxu0
    %v5741 = vadd.f32 0.0, %v5740
    %v5742 = vpop.f32.mrb[0].mxu0
    %v5743 = vadd.f32 0.0, %v5742
    %v5744 = vpop.f32.mrb[0].mxu0
    %v5745 = vadd.f32 0.0, %v5744
    %v5746 = vpop.f32.mrb[0].mxu0
    %v5747 = vadd.f32 0.0, %v5746
    %5748 = vmatprep.mubr.bf16.mxu0 %v4881
    %5749 = vmatmul.mubr.bf16.gmra.mrb[0].mxu0 %v4880
    %v5750 = vpop.f32.mrb[0].mxu0
    %v5751 = vadd.f32 0.0, %v5750
    %v5752 = vpop.f32.mrb[0].mxu0
    %v5753 = vadd.f32 0.0, %v5752
    %v5754 = vpop.f32.mrb[0].mxu0
    %v5755 = vadd.f32 0.0, %v5754
    %v5756 = vpop.f32.mrb[0].mxu0
    %v5757 = vadd.f32 0.0, %v5756
    %5758 = vdwg.mxu0
    %5759 = vmatprep.subr.bf16.mxu0 %v5351
    %5760 = vmatpush1.bf16.msra.mxu0 %v5350
    %5761 = vmatprep.subr.bf16.mxu0 %v5355
    %5762 = vmatpush1.bf16.msra.mxu0 %v5354
    %5763 = vmatprep.subr.bf16.mxu0 %v5359
    %5764 = vmatpush1.bf16.msra.mxu0 %v5358
    %5765 = vmatprep.subr.bf16.mxu0 %v5363
    %5766 = vmatpush1.bf16.msra.mxu0 %v5362
    %5767 = vmatprep.subr.bf16.mxu0 %v5367
    %5768 = vmatpush1.bf16.msra.mxu0 %v5366
    %5769 = vmatprep.subr.bf16.mxu0 %v5371
    %5770 = vmatpush1.bf16.msra.mxu0 %v5370
    %5771 = vmatprep.subr.bf16.mxu0 %v5375
    %5772 = vmatpush1.bf16.msra.mxu0 %v5374
    %5773 = vmatprep.subr.bf16.mxu0 %v5379
    %5774 = vmatpush1.bf16.msra.mxu0 %v5378
    %5775 = vmatprep.subr.bf16.mxu0 %v5383
    %5776 = vmatpush1.bf16.msra.mxu0 %v5382
    %5777 = vmatprep.subr.bf16.mxu0 %v5387
    %5778 = vmatpush1.bf16.msra.mxu0 %v5386
    %5779 = vmatprep.subr.bf16.mxu0 %v5391
    %5780 = vmatpush1.bf16.msra.mxu0 %v5390
    %5781 = vmatprep.subr.bf16.mxu0 %v5395
    %5782 = vmatpush1.bf16.msra.mxu0 %v5394
    %5783 = vmatprep.subr.bf16.mxu0 %v5399
    %5784 = vmatpush1.bf16.msra.mxu0 %v5398
    %5785 = vmatprep.subr.bf16.mxu0 %v5403
    %5786 = vmatpush1.bf16.msra.mxu0 %v5402
    %5787 = vmatprep.subr.bf16.mxu0 %v5407
    %5788 = vmatpush1.bf16.msra.mxu0 %v5406
    %5789 = vmatprep.subr.bf16.mxu0 %v5411
    %5790 = vmatpush1.bf16.msra.mxu0 %v5410
    %5791 = vmatprep.mubr.bf16.mxu0 %v4871
    %5792 = vmatmul.mubr.bf16.gmra.mrb[0].mxu0 %v4870
    %v5793 = vpop.f32.mrb[0].mxu0
    %v5794 = vadd.f32 %v5721, %v5793
    %v5795 = vpop.f32.mrb[0].mxu0
    %v5796 = vadd.f32 %v5723, %v5795
    %v5797 = vpop.f32.mrb[0].mxu0
    %v5798 = vadd.f32 %v5725, %v5797
    %v5799 = vpop.f32.mrb[0].mxu0
    %v5800 = vadd.f32 %v5727, %v5799
    %5801 = vmatprep.mubr.bf16.mxu0 %v4875
    %5802 = vmatmul.mubr.bf16.gmra.mrb[0].mxu0 %v4874
    %v5803 = vpop.f32.mrb[0].mxu0
    %v5804 = vadd.f32 %v5731, %v5803
    %v5805 = vpop.f32.mrb[0].mxu0
    %v5806 = vadd.f32 %v5733, %v5805
    %v5807 = vpop.f32.mrb[0].mxu0
    %v5808 = vadd.f32 %v5735, %v5807
    %v5809 = vpop.f32.mrb[0].mxu0
    %v5810 = vadd.f32 %v5737, %v5809
    %5811 = vmatprep.mubr.bf16.mxu0 %v4879
    %5812 = vmatmul.mubr.bf16.gmra.mrb[0].mxu0 %v4878
    %v5813 = vpop.f32.mrb[0].mxu0
    %v5814 = vadd.f32 %v5741, %v5813
    %v5815 = vpop.f32.mrb[0].mxu0
    %v5816 = vadd.f32 %v5743, %v5815
    %v5817 = vpop.f32.mrb[0].mxu0
    %v5818 = vadd.f32 %v5745, %v5817
    %v5819 = vpop.f32.mrb[0].mxu0
    %v5820 = vadd.f32 %v5747, %v5819
    %5821 = vmatprep.mubr.bf16.mxu0 %v4883
    %5822 = vmatmul.mubr.bf16.gmra.mrb[0].mxu0 %v4882
    %v5823 = vpop.f32.mrb[0].mxu0
    %v5824 = vadd.f32 %v5751, %v5823
    %v5825 = vpop.f32.mrb[0].mxu0
    %v5826 = vadd.f32 %v5753, %v5825
    %v5827 = vpop.f32.mrb[0].mxu0
    %v5828 = vadd.f32 %v5755, %v5827
    %v5829 = vpop.f32.mrb[0].mxu0
    %v5830 = vadd.f32 %v5757, %v5829
    %5831 = vdwg.mxu0
    %v5960 = vunpack.c.l.b16 %v4228
    %v5961 = vunpack.c.h.b16 %v4228
    %v5962 = vunpack.c.l.b16 %v4229
    %v5963 = vunpack.c.h.b16 %v4229
    %v5964 = vunpack.c.l.b16 %v4230
    %v5965 = vunpack.c.h.b16 %v4230
    %v5966 = vunpack.c.l.b16 %v4231
    %v5967 = vunpack.c.h.b16 %v4231
    %v5968 = vunpack.c.l.b16 %v4232
    %v5969 = vunpack.c.h.b16 %v4232
    %v5970 = vunpack.c.l.b16 %v4233
    %v5971 = vunpack.c.h.b16 %v4233
    %v5972 = vunpack.c.l.b16 %v4234
    %v5973 = vunpack.c.h.b16 %v4234
    %v5974 = vunpack.c.l.b16 %v4235
    %v5975 = vunpack.c.h.b16 %v4235
    %v5976 = vunpack.c.l.b16 %v4236
    %v5977 = vunpack.c.h.b16 %v4236
    %v5978 = vunpack.c.l.b16 %v4237
    %v5979 = vunpack.c.h.b16 %v4237
    %v5980 = vunpack.c.l.b16 %v4238
    %v5981 = vunpack.c.h.b16 %v4238
    %v5982 = vunpack.c.l.b16 %v4239
    %v5983 = vunpack.c.h.b16 %v4239
    %v5984 = vunpack.c.l.b16 %v4240
    %v5985 = vunpack.c.h.b16 %v4240
    %v5986 = vunpack.c.l.b16 %v4241
    %v5987 = vunpack.c.h.b16 %v4241
    %v5988 = vunpack.c.l.b16 %v4242
    %v5989 = vunpack.c.h.b16 %v4242
    %v5990 = vunpack.c.l.b16 %v4243
    %v5991 = vunpack.c.h.b16 %v4243
    %v5992 = vunpack.c.l.b16 %v4244
    %v5993 = vunpack.c.h.b16 %v4244
    %v5994 = vunpack.c.l.b16 %v4245
    %v5995 = vunpack.c.h.b16 %v4245
    %v5996 = vunpack.c.l.b16 %v4246
    %v5997 = vunpack.c.h.b16 %v4246
    %v5998 = vunpack.c.l.b16 %v4247
    %v5999 = vunpack.c.h.b16 %v4247
    %v6000 = vunpack.c.l.b16 %v4248
    %v6001 = vunpack.c.h.b16 %v4248
    %v6002 = vunpack.c.l.b16 %v4249
    %v6003 = vunpack.c.h.b16 %v4249
    %v6004 = vunpack.c.l.b16 %v4250
    %v6005 = vunpack.c.h.b16 %v4250
    %v6006 = vunpack.c.l.b16 %v4251
    %v6007 = vunpack.c.h.b16 %v4251
    %v6008 = vunpack.c.l.b16 %v4252
    %v6009 = vunpack.c.h.b16 %v4252
    %v6010 = vunpack.c.l.b16 %v4253
    %v6011 = vunpack.c.h.b16 %v4253
    %v6012 = vunpack.c.l.b16 %v4254
    %v6013 = vunpack.c.h.b16 %v4254
    %v6014 = vunpack.c.l.b16 %v4255
    %v6015 = vunpack.c.h.b16 %v4255
    %v6016 = vunpack.c.l.b16 %v4256
    %v6017 = vunpack.c.h.b16 %v4256
    %v6018 = vunpack.c.l.b16 %v4257
    %v6019 = vunpack.c.h.b16 %v4257
    %v6020 = vunpack.c.l.b16 %v4258
    %v6021 = vunpack.c.h.b16 %v4258
    %v6022 = vunpack.c.l.b16 %v4259
    %v6023 = vunpack.c.h.b16 %v4259
    %v6024 = vunpack.c.l.b16 %v4260
    %v6025 = vunpack.c.h.b16 %v4260
    %v6026 = vunpack.c.l.b16 %v4261
    %v6027 = vunpack.c.h.b16 %v4261
    %v6028 = vunpack.c.l.b16 %v4262
    %v6029 = vunpack.c.h.b16 %v4262
    %v6030 = vunpack.c.l.b16 %v4263
    %v6031 = vunpack.c.h.b16 %v4263
    %v6032 = vunpack.c.l.b16 %v4264
    %v6033 = vunpack.c.h.b16 %v4264
    %v6034 = vunpack.c.l.b16 %v4265
    %v6035 = vunpack.c.h.b16 %v4265
    %v6036 = vunpack.c.l.b16 %v4266
    %v6037 = vunpack.c.h.b16 %v4266
    %v6038 = vunpack.c.l.b16 %v4267
    %v6039 = vunpack.c.h.b16 %v4267
    %v6040 = vunpack.c.l.b16 %v4268
    %v6041 = vunpack.c.h.b16 %v4268
    %v6042 = vunpack.c.l.b16 %v4269
    %v6043 = vunpack.c.h.b16 %v4269
    %v6044 = vunpack.c.l.b16 %v4270
    %v6045 = vunpack.c.h.b16 %v4270
    %v6046 = vunpack.c.l.b16 %v4271
    %v6047 = vunpack.c.h.b16 %v4271
    %v6048 = vunpack.c.l.b16 %v4272
    %v6049 = vunpack.c.h.b16 %v4272
    %v6050 = vunpack.c.l.b16 %v4273
    %v6051 = vunpack.c.h.b16 %v4273
    %v6052 = vunpack.c.l.b16 %v4274
    %v6053 = vunpack.c.h.b16 %v4274
    %v6054 = vunpack.c.l.b16 %v4275
    %v6055 = vunpack.c.h.b16 %v4275
    %v6056 = vunpack.c.l.b16 %v4276
    %v6057 = vunpack.c.h.b16 %v4276
    %v6058 = vunpack.c.l.b16 %v4277
    %v6059 = vunpack.c.h.b16 %v4277
    %v6060 = vunpack.c.l.b16 %v4278
    %v6061 = vunpack.c.h.b16 %v4278
    %v6062 = vunpack.c.l.b16 %v4279
    %v6063 = vunpack.c.h.b16 %v4279
    %v6064 = vunpack.c.l.b16 %v4280
    %v6065 = vunpack.c.h.b16 %v4280
    %v6066 = vunpack.c.l.b16 %v4281
    %v6067 = vunpack.c.h.b16 %v4281
    %v6068 = vunpack.c.l.b16 %v4282
    %v6069 = vunpack.c.h.b16 %v4282
    %v6070 = vunpack.c.l.b16 %v4283
    %v6071 = vunpack.c.h.b16 %v4283
    %v6072 = vunpack.c.l.b16 %v4284
    %v6073 = vunpack.c.h.b16 %v4284
    %v6074 = vunpack.c.l.b16 %v4285
    %v6075 = vunpack.c.h.b16 %v4285
    %v6076 = vunpack.c.l.b16 %v4286
    %v6077 = vunpack.c.h.b16 %v4286
    %v6078 = vunpack.c.l.b16 %v4287
    %v6079 = vunpack.c.h.b16 %v4287
    %v6080 = vunpack.c.l.b16 %v4288
    %v6081 = vunpack.c.h.b16 %v4288
    %v6082 = vunpack.c.l.b16 %v4289
    %v6083 = vunpack.c.h.b16 %v4289
    %v6084 = vunpack.c.l.b16 %v4290
    %v6085 = vunpack.c.h.b16 %v4290
    %v6086 = vunpack.c.l.b16 %v4291
    %v6087 = vunpack.c.h.b16 %v4291
    %v6088 = vunpack.c.l.b16 %v4292
    %v6089 = vunpack.c.h.b16 %v4292
    %v6090 = vunpack.c.l.b16 %v4293
    %v6091 = vunpack.c.h.b16 %v4293
    %v6092 = vunpack.c.l.b16 %v4294
    %v6093 = vunpack.c.h.b16 %v4294
    %v6094 = vunpack.c.l.b16 %v4295
    %v6095 = vunpack.c.h.b16 %v4295
    %v6096 = vunpack.c.l.b16 %v4296
    %v6097 = vunpack.c.h.b16 %v4296
    %v6098 = vunpack.c.l.b16 %v4297
    %v6099 = vunpack.c.h.b16 %v4297
    %v6100 = vunpack.c.l.b16 %v4298
    %v6101 = vunpack.c.h.b16 %v4298
    %v6102 = vunpack.c.l.b16 %v4299
    %v6103 = vunpack.c.h.b16 %v4299
    %v6104 = vunpack.c.l.b16 %v4300
    %v6105 = vunpack.c.h.b16 %v4300
    %v6106 = vunpack.c.l.b16 %v4301
    %v6107 = vunpack.c.h.b16 %v4301
    %v6108 = vunpack.c.l.b16 %v4302
    %v6109 = vunpack.c.h.b16 %v4302
    %v6110 = vunpack.c.l.b16 %v4303
    %v6111 = vunpack.c.h.b16 %v4303
    %v6112 = vunpack.c.l.b16 %v4304
    %v6113 = vunpack.c.h.b16 %v4304
    %v6114 = vunpack.c.l.b16 %v4305
    %v6115 = vunpack.c.h.b16 %v4305
    %v6116 = vunpack.c.l.b16 %v4306
    %v6117 = vunpack.c.h.b16 %v4306
    %v6118 = vunpack.c.l.b16 %v4307
    %v6119 = vunpack.c.h.b16 %v4307
    %v6120 = vunpack.c.l.b16 %v4308
    %v6121 = vunpack.c.h.b16 %v4308
    %v6122 = vunpack.c.l.b16 %v4309
    %v6123 = vunpack.c.h.b16 %v4309
    %v6124 = vunpack.c.l.b16 %v4310
    %v6125 = vunpack.c.h.b16 %v4310
    %v6126 = vunpack.c.l.b16 %v4311
    %v6127 = vunpack.c.h.b16 %v4311
    %v6128 = vunpack.c.l.b16 %v4312
    %v6129 = vunpack.c.h.b16 %v4312
    %v6130 = vunpack.c.l.b16 %v4313
    %v6131 = vunpack.c.h.b16 %v4313
    %v6132 = vunpack.c.l.b16 %v4314
    %v6133 = vunpack.c.h.b16 %v4314
    %v6134 = vunpack.c.l.b16 %v4315
    %v6135 = vunpack.c.h.b16 %v4315
    %v6136 = vunpack.c.l.b16 %v4316
    %v6137 = vunpack.c.h.b16 %v4316
    %v6138 = vunpack.c.l.b16 %v4317
    %v6139 = vunpack.c.h.b16 %v4317
    %v6140 = vunpack.c.l.b16 %v4318
    %v6141 = vunpack.c.h.b16 %v4318
    %v6142 = vunpack.c.l.b16 %v4319
    %v6143 = vunpack.c.h.b16 %v4319
    %v6144 = vunpack.c.l.b16 %v4320
    %v6145 = vunpack.c.h.b16 %v4320
    %v6146 = vunpack.c.l.b16 %v4321
    %v6147 = vunpack.c.h.b16 %v4321
    %v6148 = vunpack.c.l.b16 %v4322
    %v6149 = vunpack.c.h.b16 %v4322
    %v6150 = vunpack.c.l.b16 %v4323
    %v6151 = vunpack.c.h.b16 %v4323
    %v6152 = vunpack.c.l.b16 %v4324
    %v6153 = vunpack.c.h.b16 %v4324
    %v6154 = vunpack.c.l.b16 %v4325
    %v6155 = vunpack.c.h.b16 %v4325
    %v6156 = vunpack.c.l.b16 %v4326
    %v6157 = vunpack.c.h.b16 %v4326
    %v6158 = vunpack.c.l.b16 %v4327
    %v6159 = vunpack.c.h.b16 %v4327
    %v6160 = vunpack.c.l.b16 %v4328
    %v6161 = vunpack.c.h.b16 %v4328
    %v6162 = vunpack.c.l.b16 %v4329
    %v6163 = vunpack.c.h.b16 %v4329
    %v6164 = vunpack.c.l.b16 %v4330
    %v6165 = vunpack.c.h.b16 %v4330
    %v6166 = vunpack.c.l.b16 %v4331
    %v6167 = vunpack.c.h.b16 %v4331
    %v6168 = vunpack.c.l.b16 %v4332
    %v6169 = vunpack.c.h.b16 %v4332
    %v6170 = vunpack.c.l.b16 %v4333
    %v6171 = vunpack.c.h.b16 %v4333
    %v6172 = vunpack.c.l.b16 %v4334
    %v6173 = vunpack.c.h.b16 %v4334
    %v6174 = vunpack.c.l.b16 %v4335
    %v6175 = vunpack.c.h.b16 %v4335
    %v6176 = vunpack.c.l.b16 %v4336
    %v6177 = vunpack.c.h.b16 %v4336
    %v6178 = vunpack.c.l.b16 %v4337
    %v6179 = vunpack.c.h.b16 %v4337
    %v6180 = vunpack.c.l.b16 %v4338
    %v6181 = vunpack.c.h.b16 %v4338
    %v6182 = vunpack.c.l.b16 %v4339
    %v6183 = vunpack.c.h.b16 %v4339
    %v6184 = vunpack.c.l.b16 %v4340
    %v6185 = vunpack.c.h.b16 %v4340
    %v6186 = vunpack.c.l.b16 %v4341
    %v6187 = vunpack.c.h.b16 %v4341
    %v6188 = vunpack.c.l.b16 %v4342
    %v6189 = vunpack.c.h.b16 %v4342
    %v6190 = vunpack.c.l.b16 %v4343
    %v6191 = vunpack.c.h.b16 %v4343
    %v6192 = vunpack.c.l.b16 %v4344
    %v6193 = vunpack.c.h.b16 %v4344
    %v6194 = vunpack.c.l.b16 %v4345
    %v6195 = vunpack.c.h.b16 %v4345
    %v6196 = vunpack.c.l.b16 %v4346
    %v6197 = vunpack.c.h.b16 %v4346
    %v6198 = vunpack.c.l.b16 %v4347
    %v6199 = vunpack.c.h.b16 %v4347
    %v6200 = vunpack.c.l.b16 %v4348
    %v6201 = vunpack.c.h.b16 %v4348
    %v6202 = vunpack.c.l.b16 %v4349
    %v6203 = vunpack.c.h.b16 %v4349
    %v6204 = vunpack.c.l.b16 %v4350
    %v6205 = vunpack.c.h.b16 %v4350
    %v6206 = vunpack.c.l.b16 %v4351
    %v6207 = vunpack.c.h.b16 %v4351
    %v6208 = vunpack.c.l.b16 %v4352
    %v6209 = vunpack.c.h.b16 %v4352
    %v6210 = vunpack.c.l.b16 %v4353
    %v6211 = vunpack.c.h.b16 %v4353
    %v6212 = vunpack.c.l.b16 %v4354
    %v6213 = vunpack.c.h.b16 %v4354
    %v6214 = vunpack.c.l.b16 %v4355
    %v6215 = vunpack.c.h.b16 %v4355
    %v6216 = vpack.c.b16 %v5964, %v5960
    %v6217 = vpack.c.b16 %v5965, %v5961
    %v6218 = vpack.c.b16 %v5966, %v5962
    %v6219 = vpack.c.b16 %v5967, %v5963
    %v6220 = vpack.c.b16 %v5972, %v5968
    %v6221 = vpack.c.b16 %v5973, %v5969
    %v6222 = vpack.c.b16 %v5974, %v5970
    %v6223 = vpack.c.b16 %v5975, %v5971
    %v6224 = vpack.c.b16 %v5980, %v5976
    %v6225 = vpack.c.b16 %v5981, %v5977
    %v6226 = vpack.c.b16 %v5982, %v5978
    %v6227 = vpack.c.b16 %v5983, %v5979
    %v6228 = vpack.c.b16 %v5988, %v5984
    %v6229 = vpack.c.b16 %v5989, %v5985
    %v6230 = vpack.c.b16 %v5990, %v5986
    %v6231 = vpack.c.b16 %v5991, %v5987
    %v6232 = vpack.c.b16 %v5996, %v5992
    %v6233 = vpack.c.b16 %v5997, %v5993
    %v6234 = vpack.c.b16 %v5998, %v5994
    %v6235 = vpack.c.b16 %v5999, %v5995
    %v6236 = vpack.c.b16 %v6004, %v6000
    %v6237 = vpack.c.b16 %v6005, %v6001
    %v6238 = vpack.c.b16 %v6006, %v6002
    %v6239 = vpack.c.b16 %v6007, %v6003
    %v6240 = vpack.c.b16 %v6012, %v6008
    %v6241 = vpack.c.b16 %v6013, %v6009
    %v6242 = vpack.c.b16 %v6014, %v6010
    %v6243 = vpack.c.b16 %v6015, %v6011
    %v6244 = vpack.c.b16 %v6020, %v6016
    %v6245 = vpack.c.b16 %v6021, %v6017
    %v6246 = vpack.c.b16 %v6022, %v6018
    %v6247 = vpack.c.b16 %v6023, %v6019
    %v6248 = vpack.c.b16 %v6028, %v6024
    %v6249 = vpack.c.b16 %v6029, %v6025
    %v6250 = vpack.c.b16 %v6030, %v6026
    %v6251 = vpack.c.b16 %v6031, %v6027
    %v6252 = vpack.c.b16 %v6036, %v6032
    %v6253 = vpack.c.b16 %v6037, %v6033
    %v6254 = vpack.c.b16 %v6038, %v6034
    %v6255 = vpack.c.b16 %v6039, %v6035
    %v6256 = vpack.c.b16 %v6044, %v6040
    %v6257 = vpack.c.b16 %v6045, %v6041
    %v6258 = vpack.c.b16 %v6046, %v6042
    %v6259 = vpack.c.b16 %v6047, %v6043
    %v6260 = vpack.c.b16 %v6052, %v6048
    %v6261 = vpack.c.b16 %v6053, %v6049
    %v6262 = vpack.c.b16 %v6054, %v6050
    %v6263 = vpack.c.b16 %v6055, %v6051
    %v6264 = vpack.c.b16 %v6060, %v6056
    %v6265 = vpack.c.b16 %v6061, %v6057
    %v6266 = vpack.c.b16 %v6062, %v6058
    %v6267 = vpack.c.b16 %v6063, %v6059
    %v6268 = vpack.c.b16 %v6068, %v6064
    %v6269 = vpack.c.b16 %v6069, %v6065
    %v6270 = vpack.c.b16 %v6070, %v6066
    %v6271 = vpack.c.b16 %v6071, %v6067
    %v6272 = vpack.c.b16 %v6076, %v6072
    %v6273 = vpack.c.b16 %v6077, %v6073
    %v6274 = vpack.c.b16 %v6078, %v6074
    %v6275 = vpack.c.b16 %v6079, %v6075
    %v6276 = vpack.c.b16 %v6084, %v6080
    %v6277 = vpack.c.b16 %v6085, %v6081
    %v6278 = vpack.c.b16 %v6086, %v6082
    %v6279 = vpack.c.b16 %v6087, %v6083
    %v6280 = vpack.c.b16 %v6092, %v6088
    %v6281 = vpack.c.b16 %v6093, %v6089
    %v6282 = vpack.c.b16 %v6094, %v6090
    %v6283 = vpack.c.b16 %v6095, %v6091
    %v6284 = vpack.c.b16 %v6100, %v6096
    %v6285 = vpack.c.b16 %v6101, %v6097
    %v6286 = vpack.c.b16 %v6102, %v6098
    %v6287 = vpack.c.b16 %v6103, %v6099
    %v6288 = vpack.c.b16 %v6108, %v6104
    %v6289 = vpack.c.b16 %v6109, %v6105
    %v6290 = vpack.c.b16 %v6110, %v6106
    %v6291 = vpack.c.b16 %v6111, %v6107
    %v6292 = vpack.c.b16 %v6116, %v6112
    %v6293 = vpack.c.b16 %v6117, %v6113
    %v6294 = vpack.c.b16 %v6118, %v6114
    %v6295 = vpack.c.b16 %v6119, %v6115
    %v6296 = vpack.c.b16 %v6124, %v6120
    %v6297 = vpack.c.b16 %v6125, %v6121
    %v6298 = vpack.c.b16 %v6126, %v6122
    %v6299 = vpack.c.b16 %v6127, %v6123
    %v6300 = vpack.c.b16 %v6132, %v6128
    %v6301 = vpack.c.b16 %v6133, %v6129
    %v6302 = vpack.c.b16 %v6134, %v6130
    %v6303 = vpack.c.b16 %v6135, %v6131
    %v6304 = vpack.c.b16 %v6140, %v6136
    %v6305 = vpack.c.b16 %v6141, %v6137
    %v6306 = vpack.c.b16 %v6142, %v6138
    %v6307 = vpack.c.b16 %v6143, %v6139
    %v6308 = vpack.c.b16 %v6148, %v6144
    %v6309 = vpack.c.b16 %v6149, %v6145
    %v6310 = vpack.c.b16 %v6150, %v6146
    %v6311 = vpack.c.b16 %v6151, %v6147
    %v6312 = vpack.c.b16 %v6156, %v6152
    %v6313 = vpack.c.b16 %v6157, %v6153
    %v6314 = vpack.c.b16 %v6158, %v6154
    %v6315 = vpack.c.b16 %v6159, %v6155
    %v6316 = vpack.c.b16 %v6164, %v6160
    %v6317 = vpack.c.b16 %v6165, %v6161
    %v6318 = vpack.c.b16 %v6166, %v6162
    %v6319 = vpack.c.b16 %v6167, %v6163
    %v6320 = vpack.c.b16 %v6172, %v6168
    %v6321 = vpack.c.b16 %v6173, %v6169
    %v6322 = vpack.c.b16 %v6174, %v6170
    %v6323 = vpack.c.b16 %v6175, %v6171
    %v6324 = vpack.c.b16 %v6180, %v6176
    %v6325 = vpack.c.b16 %v6181, %v6177
    %v6326 = vpack.c.b16 %v6182, %v6178
    %v6327 = vpack.c.b16 %v6183, %v6179
    %v6328 = vpack.c.b16 %v6188, %v6184
    %v6329 = vpack.c.b16 %v6189, %v6185
    %v6330 = vpack.c.b16 %v6190, %v6186
    %v6331 = vpack.c.b16 %v6191, %v6187
    %v6332 = vpack.c.b16 %v6196, %v6192
    %v6333 = vpack.c.b16 %v6197, %v6193
    %v6334 = vpack.c.b16 %v6198, %v6194
    %v6335 = vpack.c.b16 %v6199, %v6195
    %v6336 = vpack.c.b16 %v6204, %v6200
    %v6337 = vpack.c.b16 %v6205, %v6201
    %v6338 = vpack.c.b16 %v6206, %v6202
    %v6339 = vpack.c.b16 %v6207, %v6203
    %v6340 = vpack.c.b16 %v6212, %v6208
    %v6341 = vpack.c.b16 %v6213, %v6209
    %v6342 = vpack.c.b16 %v6214, %v6210
    %v6343 = vpack.c.b16 %v6215, %v6211
    %6472 = vmatprep.subr.bf16.mxu0 %v6217
    %6473 = vmatpush1.bf16.msra.mxu0 %v6216
    %6474 = vmatprep.subr.bf16.mxu0 %v6221
    %6475 = vmatpush1.bf16.msra.mxu0 %v6220
    %6476 = vmatprep.subr.bf16.mxu0 %v6225
    %6477 = vmatpush1.bf16.msra.mxu0 %v6224
    %6478 = vmatprep.subr.bf16.mxu0 %v6229
    %6479 = vmatpush1.bf16.msra.mxu0 %v6228
    %6480 = vmatprep.subr.bf16.mxu0 %v6233
    %6481 = vmatpush1.bf16.msra.mxu0 %v6232
    %6482 = vmatprep.subr.bf16.mxu0 %v6237
    %6483 = vmatpush1.bf16.msra.mxu0 %v6236
    %6484 = vmatprep.subr.bf16.mxu0 %v6241
    %6485 = vmatpush1.bf16.msra.mxu0 %v6240
    %6486 = vmatprep.subr.bf16.mxu0 %v6245
    %6487 = vmatpush1.bf16.msra.mxu0 %v6244
    %6488 = vmatprep.subr.bf16.mxu0 %v6249
    %6489 = vmatpush1.bf16.msra.mxu0 %v6248
    %6490 = vmatprep.subr.bf16.mxu0 %v6253
    %6491 = vmatpush1.bf16.msra.mxu0 %v6252
    %6492 = vmatprep.subr.bf16.mxu0 %v6257
    %6493 = vmatpush1.bf16.msra.mxu0 %v6256
    %6494 = vmatprep.subr.bf16.mxu0 %v6261
    %6495 = vmatpush1.bf16.msra.mxu0 %v6260
    %6496 = vmatprep.subr.bf16.mxu0 %v6265
    %6497 = vmatpush1.bf16.msra.mxu0 %v6264
    %6498 = vmatprep.subr.bf16.mxu0 %v6269
    %6499 = vmatpush1.bf16.msra.mxu0 %v6268
    %6500 = vmatprep.subr.bf16.mxu0 %v6273
    %6501 = vmatpush1.bf16.msra.mxu0 %v6272
    %6502 = vmatprep.subr.bf16.mxu0 %v6277
    %6503 = vmatpush1.bf16.msra.mxu0 %v6276
    %6504 = vmatprep.mubr.bf16.mxu0 %v4212
    %6505 = vmatmul.mubr.bf16.gmra.mrb[0].mxu0 %v4211
    %v6506 = vpop.f32.mrb[0].mxu0
    %v6507 = vadd.f32 %v5648, %v6506
    %v6508 = vpop.f32.mrb[0].mxu0
    %v6509 = vadd.f32 %v5650, %v6508
    %v6510 = vpop.f32.mrb[0].mxu0
    %v6511 = vadd.f32 %v5652, %v6510
    %v6512 = vpop.f32.mrb[0].mxu0
    %v6513 = vadd.f32 %v5654, %v6512
    %6514 = vmatprep.mubr.bf16.mxu0 %v4216
    %6515 = vmatmul.mubr.bf16.gmra.mrb[0].mxu0 %v4215
    %v6516 = vpop.f32.mrb[0].mxu0
    %v6517 = vadd.f32 %v5658, %v6516
    %v6518 = vpop.f32.mrb[0].mxu0
    %v6519 = vadd.f32 %v5660, %v6518
    %v6520 = vpop.f32.mrb[0].mxu0
    %v6521 = vadd.f32 %v5662, %v6520
    %v6522 = vpop.f32.mrb[0].mxu0
    %v6523 = vadd.f32 %v5664, %v6522
    %6524 = vmatprep.mubr.bf16.mxu0 %v4220
    %6525 = vmatmul.mubr.bf16.gmra.mrb[0].mxu0 %v4219
    %v6526 = vpop.f32.mrb[0].mxu0
    %v6527 = vadd.f32 %v5668, %v6526
    %v6528 = vpop.f32.mrb[0].mxu0
    %v6529 = vadd.f32 %v5670, %v6528
    %v6530 = vpop.f32.mrb[0].mxu0
    %v6531 = vadd.f32 %v5672, %v6530
    %v6532 = vpop.f32.mrb[0].mxu0
    %v6533 = vadd.f32 %v5674, %v6532
    %6534 = vmatprep.mubr.bf16.mxu0 %v4224
    %6535 = vmatmul.mubr.bf16.gmra.mrb[0].mxu0 %v4223
    %v6536 = vpop.f32.mrb[0].mxu0
    %v6537 = vadd.f32 %v5678, %v6536
    %v6538 = vpop.f32.mrb[0].mxu0
    %v6539 = vadd.f32 %v5680, %v6538
    %v6540 = vpop.f32.mrb[0].mxu0
    %v6541 = vadd.f32 %v5682, %v6540
    %v6542 = vpop.f32.mrb[0].mxu0
    %v6543 = vadd.f32 %v5684, %v6542
    %6544 = vdwg.mxu0
    %6545 = vmatprep.subr.bf16.mxu0 %v6281
    %6546 = vmatpush1.bf16.msra.mxu0 %v6280
    %6547 = vmatprep.subr.bf16.mxu0 %v6285
    %6548 = vmatpush1.bf16.msra.mxu0 %v6284
    %6549 = vmatprep.subr.bf16.mxu0 %v6289
    %6550 = vmatpush1.bf16.msra.mxu0 %v6288
    %6551 = vmatprep.subr.bf16.mxu0 %v6293
    %6552 = vmatpush1.bf16.msra.mxu0 %v6292
    %6553 = vmatprep.subr.bf16.mxu0 %v6297
    %6554 = vmatpush1.bf16.msra.mxu0 %v6296
    %6555 = vmatprep.subr.bf16.mxu0 %v6301
    %6556 = vmatpush1.bf16.msra.mxu0 %v6300
    %6557 = vmatprep.subr.bf16.mxu0 %v6305
    %6558 = vmatpush1.bf16.msra.mxu0 %v6304
    %6559 = vmatprep.subr.bf16.mxu0 %v6309
    %6560 = vmatpush1.bf16.msra.mxu0 %v6308
    %6561 = vmatprep.subr.bf16.mxu0 %v6313
    %6562 = vmatpush1.bf16.msra.mxu0 %v6312
    %6563 = vmatprep.subr.bf16.mxu0 %v6317
    %6564 = vmatpush1.bf16.msra.mxu0 %v6316
    %6565 = vmatprep.subr.bf16.mxu0 %v6321
    %6566 = vmatpush1.bf16.msra.mxu0 %v6320
    %6567 = vmatprep.subr.bf16.mxu0 %v6325
    %6568 = vmatpush1.bf16.msra.mxu0 %v6324
    %6569 = vmatprep.subr.bf16.mxu0 %v6329
    %6570 = vmatpush1.bf16.msra.mxu0 %v6328
    %6571 = vmatprep.subr.bf16.mxu0 %v6333
    %6572 = vmatpush1.bf16.msra.mxu0 %v6332
    %6573 = vmatprep.subr.bf16.mxu0 %v6337
    %6574 = vmatpush1.bf16.msra.mxu0 %v6336
    %6575 = vmatprep.subr.bf16.mxu0 %v6341
    %6576 = vmatpush1.bf16.msra.mxu0 %v6340
    %6577 = vmatprep.mubr.bf16.mxu0 %v4214
    %6578 = vmatmul.mubr.bf16.gmra.mrb[0].mxu0 %v4213
    %v6579 = vpop.f32.mrb[0].mxu0
    %v6580 = vadd.f32 %v6507, %v6579
    %v6581 = vpop.f32.mrb[0].mxu0
    %v6582 = vadd.f32 %v6509, %v6581
    %v6583 = vpop.f32.mrb[0].mxu0
    %v6584 = vadd.f32 %v6511, %v6583
    %v6585 = vpop.f32.mrb[0].mxu0
    %v6586 = vadd.f32 %v6513, %v6585
    %6587 = vmatprep.mubr.bf16.mxu0 %v4218
    %6588 = vmatmul.mubr.bf16.gmra.mrb[0].mxu0 %v4217
    %v6589 = vpop.f32.mrb[0].mxu0
    %v6590 = vadd.f32 %v6517, %v6589
    %v6591 = vpop.f32.mrb[0].mxu0
    %v6592 = vadd.f32 %v6519, %v6591
    %v6593 = vpop.f32.mrb[0].mxu0
    %v6594 = vadd.f32 %v6521, %v6593
    %v6595 = vpop.f32.mrb[0].mxu0
    %v6596 = vadd.f32 %v6523, %v6595
    %6597 = vmatprep.mubr.bf16.mxu0 %v4222
    %6598 = vmatmul.mubr.bf16.gmra.mrb[0].mxu0 %v4221
    %v6599 = vpop.f32.mrb[0].mxu0
    %v6600 = vadd.f32 %v6527, %v6599
    %v6601 = vpop.f32.mrb[0].mxu0
    %v6602 = vadd.f32 %v6529, %v6601
    %v6603 = vpop.f32.mrb[0].mxu0
    %v6604 = vadd.f32 %v6531, %v6603
    %v6605 = vpop.f32.mrb[0].mxu0
    %v6606 = vadd.f32 %v6533, %v6605
    %6607 = vmatprep.mubr.bf16.mxu0 %v4226
    %6608 = vmatmul.mubr.bf16.gmra.mrb[0].mxu0 %v4225
    %v6609 = vpop.f32.mrb[0].mxu0
    %v6610 = vadd.f32 %v6537, %v6609
    %v6611 = vpop.f32.mrb[0].mxu0
    %v6612 = vadd.f32 %v6539, %v6611
    %v6613 = vpop.f32.mrb[0].mxu0
    %v6614 = vadd.f32 %v6541, %v6613
    %v6615 = vpop.f32.mrb[0].mxu0
    %v6616 = vadd.f32 %v6543, %v6615
    %6617 = vdwg.mxu0
    %6618 = vmatprep.subr.bf16.mxu0 %v6219
    %6619 = vmatpush1.bf16.msra.mxu0 %v6218
    %6620 = vmatprep.subr.bf16.mxu0 %v6223
    %6621 = vmatpush1.bf16.msra.mxu0 %v6222
    %6622 = vmatprep.subr.bf16.mxu0 %v6227
    %6623 = vmatpush1.bf16.msra.mxu0 %v6226
    %6624 = vmatprep.subr.bf16.mxu0 %v6231
    %6625 = vmatpush1.bf16.msra.mxu0 %v6230
    %6626 = vmatprep.subr.bf16.mxu0 %v6235
    %6627 = vmatpush1.bf16.msra.mxu0 %v6234
    %6628 = vmatprep.subr.bf16.mxu0 %v6239
    %6629 = vmatpush1.bf16.msra.mxu0 %v6238
    %6630 = vmatprep.subr.bf16.mxu0 %v6243
    %6631 = vmatpush1.bf16.msra.mxu0 %v6242
    %6632 = vmatprep.subr.bf16.mxu0 %v6247
    %6633 = vmatpush1.bf16.msra.mxu0 %v6246
    %6634 = vmatprep.subr.bf16.mxu0 %v6251
    %6635 = vmatpush1.bf16.msra.mxu0 %v6250
    %6636 = vmatprep.subr.bf16.mxu0 %v6255
    %6637 = vmatpush1.bf16.msra.mxu0 %v6254
    %6638 = vmatprep.subr.bf16.mxu0 %v6259
    %6639 = vmatpush1.bf16.msra.mxu0 %v6258
    %6640 = vmatprep.subr.bf16.mxu0 %v6263
    %6641 = vmatpush1.bf16.msra.mxu0 %v6262
    %6642 = vmatprep.subr.bf16.mxu0 %v6267
    %6643 = vmatpush1.bf16.msra.mxu0 %v6266
    %6644 = vmatprep.subr.bf16.mxu0 %v6271
    %6645 = vmatpush1.bf16.msra.mxu0 %v6270
    %6646 = vmatprep.subr.bf16.mxu0 %v6275
    %6647 = vmatpush1.bf16.msra.mxu0 %v6274
    %6648 = vmatprep.subr.bf16.mxu0 %v6279
    %6649 = vmatpush1.bf16.msra.mxu0 %v6278
    %6650 = vmatprep.mubr.bf16.mxu0 %v4212
    %6651 = vmatmul.mubr.bf16.gmra.mrb[0].mxu0 %v4211
    %v6652 = vpop.f32.mrb[0].mxu0
    %v6653 = vadd.f32 %v5794, %v6652
    %v6654 = vpop.f32.mrb[0].mxu0
    %v6655 = vadd.f32 %v5796, %v6654
    %v6656 = vpop.f32.mrb[0].mxu0
    %v6657 = vadd.f32 %v5798, %v6656
    %v6658 = vpop.f32.mrb[0].mxu0
    %v6659 = vadd.f32 %v5800, %v6658
    %6660 = vmatprep.mubr.bf16.mxu0 %v4216
    %6661 = vmatmul.mubr.bf16.gmra.mrb[0].mxu0 %v4215
    %v6662 = vpop.f32.mrb[0].mxu0
    %v6663 = vadd.f32 %v5804, %v6662
    %v6664 = vpop.f32.mrb[0].mxu0
    %v6665 = vadd.f32 %v5806, %v6664
    %v6666 = vpop.f32.mrb[0].mxu0
    %v6667 = vadd.f32 %v5808, %v6666
    %v6668 = vpop.f32.mrb[0].mxu0
    %v6669 = vadd.f32 %v5810, %v6668
    %6670 = vmatprep.mubr.bf16.mxu0 %v4220
    %6671 = vmatmul.mubr.bf16.gmra.mrb[0].mxu0 %v4219
    %v6672 = vpop.f32.mrb[0].mxu0
    %v6673 = vadd.f32 %v5814, %v6672
    %v6674 = vpop.f32.mrb[0].mxu0
    %v6675 = vadd.f32 %v5816, %v6674
    %v6676 = vpop.f32.mrb[0].mxu0
    %v6677 = vadd.f32 %v5818, %v6676
    %v6678 = vpop.f32.mrb[0].mxu0
    %v6679 = vadd.f32 %v5820, %v6678
    %6680 = vmatprep.mubr.bf16.mxu0 %v4224
    %6681 = vmatmul.mubr.bf16.gmra.mrb[0].mxu0 %v4223
    %v6682 = vpop.f32.mrb[0].mxu0
    %v6683 = vadd.f32 %v5824, %v6682
    %v6684 = vpop.f32.mrb[0].mxu0
    %v6685 = vadd.f32 %v5826, %v6684
    %v6686 = vpop.f32.mrb[0].mxu0
    %v6687 = vadd.f32 %v5828, %v6686
    %v6688 = vpop.f32.mrb[0].mxu0
    %v6689 = vadd.f32 %v5830, %v6688
    %6690 = vdwg.mxu0
    %6691 = vmatprep.subr.bf16.mxu0 %v6283
    %6692 = vmatpush1.bf16.msra.mxu0 %v6282
    %6693 = vmatprep.subr.bf16.mxu0 %v6287
    %6694 = vmatpush1.bf16.msra.mxu0 %v6286
    %6695 = vmatprep.subr.bf16.mxu0 %v6291
    %6696 = vmatpush1.bf16.msra.mxu0 %v6290
    %6697 = vmatprep.subr.bf16.mxu0 %v6295
    %6698 = vmatpush1.bf16.msra.mxu0 %v6294
    %6699 = vmatprep.subr.bf16.mxu0 %v6299
    %6700 = vmatpush1.bf16.msra.mxu0 %v6298
    %6701 = vmatprep.subr.bf16.mxu0 %v6303
    %6702 = vmatpush1.bf16.msra.mxu0 %v6302
    %6703 = vmatprep.subr.bf16.mxu0 %v6307
    %6704 = vmatpush1.bf16.msra.mxu0 %v6306
    %6705 = vmatprep.subr.bf16.mxu0 %v6311
    %6706 = vmatpush1.bf16.msra.mxu0 %v6310
    %6707 = vmatprep.subr.bf16.mxu0 %v6315
    %6708 = vmatpush1.bf16.msra.mxu0 %v6314
    %6709 = vmatprep.subr.bf16.mxu0 %v6319
    %6710 = vmatpush1.bf16.msra.mxu0 %v6318
    %6711 = vmatprep.subr.bf16.mxu0 %v6323
    %6712 = vmatpush1.bf16.msra.mxu0 %v6322
    %6713 = vmatprep.subr.bf16.mxu0 %v6327
    %6714 = vmatpush1.bf16.msra.mxu0 %v6326
    %6715 = vmatprep.subr.bf16.mxu0 %v6331
    %6716 = vmatpush1.bf16.msra.mxu0 %v6330
    %6717 = vmatprep.subr.bf16.mxu0 %v6335
    %6718 = vmatpush1.bf16.msra.mxu0 %v6334
    %6719 = vmatprep.subr.bf16.mxu0 %v6339
    %6720 = vmatpush1.bf16.msra.mxu0 %v6338
    %6721 = vmatprep.subr.bf16.mxu0 %v6343
    %6722 = vmatpush1.bf16.msra.mxu0 %v6342
    %6723 = vmatprep.mubr.bf16.mxu0 %v4214
    %6724 = vmatmul.mubr.bf16.gmra.mrb[0].mxu0 %v4213
    %v6725 = vpop.f32.mrb[0].mxu0
    %v6726 = vadd.f32 %v6653, %v6725
    %v6727 = vpop.f32.mrb[0].mxu0
    %v6728 = vadd.f32 %v6655, %v6727
    %v6729 = vpop.f32.mrb[0].mxu0
    %v6730 = vadd.f32 %v6657, %v6729
    %v6731 = vpop.f32.mrb[0].mxu0
    %v6732 = vadd.f32 %v6659, %v6731
    %6733 = vmatprep.mubr.bf16.mxu0 %v4218
    %6734 = vmatmul.mubr.bf16.gmra.mrb[0].mxu0 %v4217
    %v6735 = vpop.f32.mrb[0].mxu0
    %v6736 = vadd.f32 %v6663, %v6735
    %v6737 = vpop.f32.mrb[0].mxu0
    %v6738 = vadd.f32 %v6665, %v6737
    %v6739 = vpop.f32.mrb[0].mxu0
    %v6740 = vadd.f32 %v6667, %v6739
    %v6741 = vpop.f32.mrb[0].mxu0
    %v6742 = vadd.f32 %v6669, %v6741
    %6743 = vmatprep.mubr.bf16.mxu0 %v4222
    %6744 = vmatmul.mubr.bf16.gmra.mrb[0].mxu0 %v4221
    %v6745 = vpop.f32.mrb[0].mxu0
    %v6746 = vadd.f32 %v6673, %v6745
    %v6747 = vpop.f32.mrb[0].mxu0
    %v6748 = vadd.f32 %v6675, %v6747
    %v6749 = vpop.f32.mrb[0].mxu0
    %v6750 = vadd.f32 %v6677, %v6749
    %v6751 = vpop.f32.mrb[0].mxu0
    %v6752 = vadd.f32 %v6679, %v6751
    %6753 = vmatprep.mubr.bf16.mxu0 %v4226
    %6754 = vmatmul.mubr.bf16.gmra.mrb[0].mxu0 %v4225
    %v6755 = vpop.f32.mrb[0].mxu0
    %v6756 = vadd.f32 %v6683, %v6755
    %v6757 = vpop.f32.mrb[0].mxu0
    %v6758 = vadd.f32 %v6685, %v6757
    %v6759 = vpop.f32.mrb[0].mxu0
    %v6760 = vadd.f32 %v6687, %v6759
    %v6761 = vpop.f32.mrb[0].mxu0
    %v6762 = vadd.f32 %v6689, %v6761
    %6763 = vdwg.mxu0
    %v6764 = vld [vmem:[#allocation2] sm:$0xee]
    %v6765 = vld [vmem:[#allocation2 + $0x8] sm:$0xee]
    %v6766 = vld [vmem:[#allocation2 + $0x10] sm:$0x11]
    %v6767 = vld [vmem:[#allocation2 + $0x18] sm:$0x11]
    %v6768 = vld [vmem:[#allocation2 + $0x20] sm:$0xee]
    %v6769 = vld [vmem:[#allocation2 + $0x28] sm:$0xee]
    %v6770 = vld [vmem:[#allocation2 + $0x30] sm:$0x11]
    %v6771 = vld [vmem:[#allocation2 + $0x38] sm:$0x11]
    %v6772 = vld [vmem:[#allocation2 + $0x40] sm:$0xee]
    %v6773 = vld [vmem:[#allocation2 + $0x48] sm:$0xee]
    %v6774 = vld [vmem:[#allocation2 + $0x50] sm:$0x11]
    %v6775 = vld [vmem:[#allocation2 + $0x58] sm:$0x11]
    %v6776 = vld [vmem:[#allocation2 + $0x60] sm:$0xee]
    %v6777 = vld [vmem:[#allocation2 + $0x68] sm:$0xee]
    %v6778 = vld [vmem:[#allocation2 + $0x70] sm:$0x11]
    %v6779 = vld [vmem:[#allocation2 + $0x78] sm:$0x11]
    %v6780 = vld [vmem:[#allocation2 + $0x80] sm:$0xee]
    %v6781 = vld [vmem:[#allocation2 + $0x88] sm:$0xee]
    %v6782 = vld [vmem:[#allocation2 + $0x90] sm:$0x11]
    %v6783 = vld [vmem:[#allocation2 + $0x98] sm:$0x11]
    %v6784 = vld [vmem:[#allocation2 + $0xa0] sm:$0xee]
    %v6785 = vld [vmem:[#allocation2 + $0xa8] sm:$0xee]
    %v6786 = vld [vmem:[#allocation2 + $0xb0] sm:$0x11]
    %v6787 = vld [vmem:[#allocation2 + $0xb8] sm:$0x11]
    %v6788 = vld [vmem:[#allocation2 + $0xc0] sm:$0xee]
    %v6789 = vld [vmem:[#allocation2 + $0xc8] sm:$0xee]
    %v6790 = vld [vmem:[#allocation2 + $0xd0] sm:$0x11]
    %v6791 = vld [vmem:[#allocation2 + $0xd8] sm:$0x11]
    %v6792 = vld [vmem:[#allocation2 + $0xe0] sm:$0xee]
    %v6793 = vld [vmem:[#allocation2 + $0xe8] sm:$0xee]
    %v6794 = vld [vmem:[#allocation2 + $0xf0] sm:$0x11]
    %v6795 = vld [vmem:[#allocation2 + $0xf8] sm:$0x11]
    %v6828 = vrot.slane %v6764, 5
    %v6829 = vrot.slane %v6828, 4
    %v6830 = vrot.slane %v6766, 5
    %v6831 = vsel %vm2849, %v6829, %v6830
    %v6832 = vrot.slane %v6765, 5
    %v6833 = vrot.slane %v6832, 4
    %v6834 = vrot.slane %v6767, 5
    %v6835 = vsel %vm2849, %v6833, %v6834
    %v6836 = vrot.slane %v6768, 5
    %v6837 = vrot.slane %v6836, 4
    %v6838 = vrot.slane %v6770, 5
    %v6839 = vsel %vm2849, %v6837, %v6838
    %v6840 = vrot.slane %v6769, 5
    %v6841 = vrot.slane %v6840, 4
    %v6842 = vrot.slane %v6771, 5
    %v6843 = vsel %vm2849, %v6841, %v6842
    %v6844 = vrot.slane %v6772, 5
    %v6845 = vrot.slane %v6844, 4
    %v6846 = vrot.slane %v6774, 5
    %v6847 = vsel %vm2849, %v6845, %v6846
    %v6848 = vrot.slane %v6773, 5
    %v6849 = vrot.slane %v6848, 4
    %v6850 = vrot.slane %v6775, 5
    %v6851 = vsel %vm2849, %v6849, %v6850
    %v6852 = vrot.slane %v6776, 5
    %v6853 = vrot.slane %v6852, 4
    %v6854 = vrot.slane %v6778, 5
    %v6855 = vsel %vm2849, %v6853, %v6854
    %v6856 = vrot.slane %v6777, 5
    %v6857 = vrot.slane %v6856, 4
    %v6858 = vrot.slane %v6779, 5
    %v6859 = vsel %vm2849, %v6857, %v6858
    %v6860 = vrot.slane %v6780, 5
    %v6861 = vrot.slane %v6860, 4
    %v6862 = vrot.slane %v6782, 5
    %v6863 = vsel %vm2849, %v6861, %v6862
    %v6864 = vrot.slane %v6781, 5
    %v6865 = vrot.slane %v6864, 4
    %v6866 = vrot.slane %v6783, 5
    %v6867 = vsel %vm2849, %v6865, %v6866
    %v6868 = vrot.slane %v6784, 5
    %v6869 = vrot.slane %v6868, 4
    %v6870 = vrot.slane %v6786, 5
    %v6871 = vsel %vm2849, %v6869, %v6870
    %v6872 = vrot.slane %v6785, 5
    %v6873 = vrot.slane %v6872, 4
    %v6874 = vrot.slane %v6787, 5
    %v6875 = vsel %vm2849, %v6873, %v6874
    %v6876 = vrot.slane %v6788, 5
    %v6877 = vrot.slane %v6876, 4
    %v6878 = vrot.slane %v6790, 5
    %v6879 = vsel %vm2849, %v6877, %v6878
    %v6880 = vrot.slane %v6789, 5
    %v6881 = vrot.slane %v6880, 4
    %v6882 = vrot.slane %v6791, 5
    %v6883 = vsel %vm2849, %v6881, %v6882
    %v6884 = vrot.slane %v6792, 5
    %v6885 = vrot.slane %v6884, 4
    %v6886 = vrot.slane %v6794, 5
    %v6887 = vsel %vm2849, %v6885, %v6886
    %v6888 = vrot.slane %v6793, 5
    %v6889 = vrot.slane %v6888, 4
    %v6890 = vrot.slane %v6795, 5
    %v6891 = vsel %vm2849, %v6889, %v6890
    %s6892 = scalar_lea.vmem [#allocation5], 2048
    %v6893 = vld [vmem:[%s6892] sm:$0xff]
    %v6894 = vld [vmem:[%s6892 + $0x8] sm:$0xff]
    %v6895 = vld [vmem:[%s6892 + $0x10] sm:$0xff]
    %v6896 = vld [vmem:[%s6892 + $0x18] sm:$0xff]
    %v6897 = vld [vmem:[%s6892 + $0x20] sm:$0xff]
    %v6898 = vld [vmem:[%s6892 + $0x28] sm:$0xff]
    %v6899 = vld [vmem:[%s6892 + $0x30] sm:$0xff]
    %v6900 = vld [vmem:[%s6892 + $0x38] sm:$0xff]
    %v6901 = vld [vmem:[%s6892 + $0x40] sm:$0xff]
    %v6902 = vld [vmem:[%s6892 + $0x48] sm:$0xff]
    %v6903 = vld [vmem:[%s6892 + $0x50] sm:$0xff]
    %v6904 = vld [vmem:[%s6892 + $0x58] sm:$0xff]
    %v6905 = vld [vmem:[%s6892 + $0x60] sm:$0xff]
    %v6906 = vld [vmem:[%s6892 + $0x68] sm:$0xff]
    %v6907 = vld [vmem:[%s6892 + $0x70] sm:$0xff]
    %v6908 = vld [vmem:[%s6892 + $0x78] sm:$0xff]
    %v6909 = vld [vmem:[%s6892 + $0x80] sm:$0xff]
    %v6910 = vld [vmem:[%s6892 + $0x88] sm:$0xff]
    %v6911 = vld [vmem:[%s6892 + $0x90] sm:$0xff]
    %v6912 = vld [vmem:[%s6892 + $0x98] sm:$0xff]
    %v6913 = vld [vmem:[%s6892 + $0xa0] sm:$0xff]
    %v6914 = vld [vmem:[%s6892 + $0xa8] sm:$0xff]
    %v6915 = vld [vmem:[%s6892 + $0xb0] sm:$0xff]
    %v6916 = vld [vmem:[%s6892 + $0xb8] sm:$0xff]
    %v6917 = vld [vmem:[%s6892 + $0xc0] sm:$0xff]
    %v6918 = vld [vmem:[%s6892 + $0xc8] sm:$0xff]
    %v6919 = vld [vmem:[%s6892 + $0xd0] sm:$0xff]
    %v6920 = vld [vmem:[%s6892 + $0xd8] sm:$0xff]
    %v6921 = vld [vmem:[%s6892 + $0xe0] sm:$0xff]
    %v6922 = vld [vmem:[%s6892 + $0xe8] sm:$0xff]
    %v6923 = vld [vmem:[%s6892 + $0xf0] sm:$0xff]
    %v6924 = vld [vmem:[%s6892 + $0xf8] sm:$0xff]
    %v6925 = vld [vmem:[%s6892 + $0x100] sm:$0xff]
    %v6926 = vld [vmem:[%s6892 + $0x108] sm:$0xff]
    %v6927 = vld [vmem:[%s6892 + $0x110] sm:$0xff]
    %v6928 = vld [vmem:[%s6892 + $0x118] sm:$0xff]
    %v6929 = vld [vmem:[%s6892 + $0x120] sm:$0xff]
    %v6930 = vld [vmem:[%s6892 + $0x128] sm:$0xff]
    %v6931 = vld [vmem:[%s6892 + $0x130] sm:$0xff]
    %v6932 = vld [vmem:[%s6892 + $0x138] sm:$0xff]
    %v6933 = vld [vmem:[%s6892 + $0x140] sm:$0xff]
    %v6934 = vld [vmem:[%s6892 + $0x148] sm:$0xff]
    %v6935 = vld [vmem:[%s6892 + $0x150] sm:$0xff]
    %v6936 = vld [vmem:[%s6892 + $0x158] sm:$0xff]
    %v6937 = vld [vmem:[%s6892 + $0x160] sm:$0xff]
    %v6938 = vld [vmem:[%s6892 + $0x168] sm:$0xff]
    %v6939 = vld [vmem:[%s6892 + $0x170] sm:$0xff]
    %v6940 = vld [vmem:[%s6892 + $0x178] sm:$0xff]
    %v6941 = vld [vmem:[%s6892 + $0x180] sm:$0xff]
    %v6942 = vld [vmem:[%s6892 + $0x188] sm:$0xff]
    %v6943 = vld [vmem:[%s6892 + $0x190] sm:$0xff]
    %v6944 = vld [vmem:[%s6892 + $0x198] sm:$0xff]
    %v6945 = vld [vmem:[%s6892 + $0x1a0] sm:$0xff]
    %v6946 = vld [vmem:[%s6892 + $0x1a8] sm:$0xff]
    %v6947 = vld [vmem:[%s6892 + $0x1b0] sm:$0xff]
    %v6948 = vld [vmem:[%s6892 + $0x1b8] sm:$0xff]
    %v6949 = vld [vmem:[%s6892 + $0x1c0] sm:$0xff]
    %v6950 = vld [vmem:[%s6892 + $0x1c8] sm:$0xff]
    %v6951 = vld [vmem:[%s6892 + $0x1d0] sm:$0xff]
    %v6952 = vld [vmem:[%s6892 + $0x1d8] sm:$0xff]
    %v6953 = vld [vmem:[%s6892 + $0x1e0] sm:$0xff]
    %v6954 = vld [vmem:[%s6892 + $0x1e8] sm:$0xff]
    %v6955 = vld [vmem:[%s6892 + $0x1f0] sm:$0xff]
    %v6956 = vld [vmem:[%s6892 + $0x1f8] sm:$0xff]
    %v6957 = vld [vmem:[%s6892 + $0x200] sm:$0xff]
    %v6958 = vld [vmem:[%s6892 + $0x208] sm:$0xff]
    %v6959 = vld [vmem:[%s6892 + $0x210] sm:$0xff]
    %v6960 = vld [vmem:[%s6892 + $0x218] sm:$0xff]
    %v6961 = vld [vmem:[%s6892 + $0x220] sm:$0xff]
    %v6962 = vld [vmem:[%s6892 + $0x228] sm:$0xff]
    %v6963 = vld [vmem:[%s6892 + $0x230] sm:$0xff]
    %v6964 = vld [vmem:[%s6892 + $0x238] sm:$0xff]
    %v6965 = vld [vmem:[%s6892 + $0x240] sm:$0xff]
    %v6966 = vld [vmem:[%s6892 + $0x248] sm:$0xff]
    %v6967 = vld [vmem:[%s6892 + $0x250] sm:$0xff]
    %v6968 = vld [vmem:[%s6892 + $0x258] sm:$0xff]
    %v6969 = vld [vmem:[%s6892 + $0x260] sm:$0xff]
    %v6970 = vld [vmem:[%s6892 + $0x268] sm:$0xff]
    %v6971 = vld [vmem:[%s6892 + $0x270] sm:$0xff]
    %v6972 = vld [vmem:[%s6892 + $0x278] sm:$0xff]
    %v6973 = vld [vmem:[%s6892 + $0x280] sm:$0xff]
    %v6974 = vld [vmem:[%s6892 + $0x288] sm:$0xff]
    %v6975 = vld [vmem:[%s6892 + $0x290] sm:$0xff]
    %v6976 = vld [vmem:[%s6892 + $0x298] sm:$0xff]
    %v6977 = vld [vmem:[%s6892 + $0x2a0] sm:$0xff]
    %v6978 = vld [vmem:[%s6892 + $0x2a8] sm:$0xff]
    %v6979 = vld [vmem:[%s6892 + $0x2b0] sm:$0xff]
    %v6980 = vld [vmem:[%s6892 + $0x2b8] sm:$0xff]
    %v6981 = vld [vmem:[%s6892 + $0x2c0] sm:$0xff]
    %v6982 = vld [vmem:[%s6892 + $0x2c8] sm:$0xff]
    %v6983 = vld [vmem:[%s6892 + $0x2d0] sm:$0xff]
    %v6984 = vld [vmem:[%s6892 + $0x2d8] sm:$0xff]
    %v6985 = vld [vmem:[%s6892 + $0x2e0] sm:$0xff]
    %v6986 = vld [vmem:[%s6892 + $0x2e8] sm:$0xff]
    %v6987 = vld [vmem:[%s6892 + $0x2f0] sm:$0xff]
    %v6988 = vld [vmem:[%s6892 + $0x2f8] sm:$0xff]
    %v6989 = vld [vmem:[%s6892 + $0x300] sm:$0xff]
    %v6990 = vld [vmem:[%s6892 + $0x308] sm:$0xff]
    %v6991 = vld [vmem:[%s6892 + $0x310] sm:$0xff]
    %v6992 = vld [vmem:[%s6892 + $0x318] sm:$0xff]
    %v6993 = vld [vmem:[%s6892 + $0x320] sm:$0xff]
    %v6994 = vld [vmem:[%s6892 + $0x328] sm:$0xff]
    %v6995 = vld [vmem:[%s6892 + $0x330] sm:$0xff]
    %v6996 = vld [vmem:[%s6892 + $0x338] sm:$0xff]
    %v6997 = vld [vmem:[%s6892 + $0x340] sm:$0xff]
    %v6998 = vld [vmem:[%s6892 + $0x348] sm:$0xff]
    %v6999 = vld [vmem:[%s6892 + $0x350] sm:$0xff]
    %v7000 = vld [vmem:[%s6892 + $0x358] sm:$0xff]
    %v7001 = vld [vmem:[%s6892 + $0x360] sm:$0xff]
    %v7002 = vld [vmem:[%s6892 + $0x368] sm:$0xff]
    %v7003 = vld [vmem:[%s6892 + $0x370] sm:$0xff]
    %v7004 = vld [vmem:[%s6892 + $0x378] sm:$0xff]
    %v7005 = vld [vmem:[%s6892 + $0x380] sm:$0xff]
    %v7006 = vld [vmem:[%s6892 + $0x388] sm:$0xff]
    %v7007 = vld [vmem:[%s6892 + $0x390] sm:$0xff]
    %v7008 = vld [vmem:[%s6892 + $0x398] sm:$0xff]
    %v7009 = vld [vmem:[%s6892 + $0x3a0] sm:$0xff]
    %v7010 = vld [vmem:[%s6892 + $0x3a8] sm:$0xff]
    %v7011 = vld [vmem:[%s6892 + $0x3b0] sm:$0xff]
    %v7012 = vld [vmem:[%s6892 + $0x3b8] sm:$0xff]
    %v7013 = vld [vmem:[%s6892 + $0x3c0] sm:$0xff]
    %v7014 = vld [vmem:[%s6892 + $0x3c8] sm:$0xff]
    %v7015 = vld [vmem:[%s6892 + $0x3d0] sm:$0xff]
    %v7016 = vld [vmem:[%s6892 + $0x3d8] sm:$0xff]
    %v7017 = vld [vmem:[%s6892 + $0x3e0] sm:$0xff]
    %v7018 = vld [vmem:[%s6892 + $0x3e8] sm:$0xff]
    %v7019 = vld [vmem:[%s6892 + $0x3f0] sm:$0xff]
    %v7020 = vld [vmem:[%s6892 + $0x3f8] sm:$0xff]
    %v7021 = vunpack.c.l.b16 %v6831
    %v7022 = vunpack.c.h.b16 %v6831
    %v7023 = vunpack.c.l.b16 %v6835
    %v7024 = vunpack.c.h.b16 %v6835
    %v7025 = vunpack.c.l.b16 %v6839
    %v7026 = vunpack.c.h.b16 %v6839
    %v7027 = vunpack.c.l.b16 %v6843
    %v7028 = vunpack.c.h.b16 %v6843
    %v7029 = vunpack.c.l.b16 %v6847
    %v7030 = vunpack.c.h.b16 %v6847
    %v7031 = vunpack.c.l.b16 %v6851
    %v7032 = vunpack.c.h.b16 %v6851
    %v7033 = vunpack.c.l.b16 %v6855
    %v7034 = vunpack.c.h.b16 %v6855
    %v7035 = vunpack.c.l.b16 %v6859
    %v7036 = vunpack.c.h.b16 %v6859
    %v7037 = vunpack.c.l.b16 %v6863
    %v7038 = vunpack.c.h.b16 %v6863
    %v7039 = vunpack.c.l.b16 %v6867
    %v7040 = vunpack.c.h.b16 %v6867
    %v7041 = vunpack.c.l.b16 %v6871
    %v7042 = vunpack.c.h.b16 %v6871
    %v7043 = vunpack.c.l.b16 %v6875
    %v7044 = vunpack.c.h.b16 %v6875
    %v7045 = vunpack.c.l.b16 %v6879
    %v7046 = vunpack.c.h.b16 %v6879
    %v7047 = vunpack.c.l.b16 %v6883
    %v7048 = vunpack.c.h.b16 %v6883
    %v7049 = vunpack.c.l.b16 %v6887
    %v7050 = vunpack.c.h.b16 %v6887
    %v7051 = vunpack.c.l.b16 %v6891
    %v7052 = vunpack.c.h.b16 %v6891
    %v7053 = vpack.c.b16 %v7025, %v7021
    %v7054 = vpack.c.b16 %v7026, %v7022
    %v7055 = vpack.c.b16 %v7027, %v7023
    %v7056 = vpack.c.b16 %v7028, %v7024
    %v7057 = vpack.c.b16 %v7033, %v7029
    %v7058 = vpack.c.b16 %v7034, %v7030
    %v7059 = vpack.c.b16 %v7035, %v7031
    %v7060 = vpack.c.b16 %v7036, %v7032
    %v7061 = vpack.c.b16 %v7041, %v7037
    %v7062 = vpack.c.b16 %v7042, %v7038
    %v7063 = vpack.c.b16 %v7043, %v7039
    %v7064 = vpack.c.b16 %v7044, %v7040
    %v7065 = vpack.c.b16 %v7049, %v7045
    %v7066 = vpack.c.b16 %v7050, %v7046
    %v7067 = vpack.c.b16 %v7051, %v7047
    %v7068 = vpack.c.b16 %v7052, %v7048
    %v7213 = vunpack.c.l.b16 %v6893
    %v7214 = vunpack.c.h.b16 %v6893
    %v7215 = vunpack.c.l.b16 %v6894
    %v7216 = vunpack.c.h.b16 %v6894
    %v7217 = vunpack.c.l.b16 %v6895
    %v7218 = vunpack.c.h.b16 %v6895
    %v7219 = vunpack.c.l.b16 %v6896
    %v7220 = vunpack.c.h.b16 %v6896
    %v7221 = vunpack.c.l.b16 %v6897
    %v7222 = vunpack.c.h.b16 %v6897
    %v7223 = vunpack.c.l.b16 %v6898
    %v7224 = vunpack.c.h.b16 %v6898
    %v7225 = vunpack.c.l.b16 %v6899
    %v7226 = vunpack.c.h.b16 %v6899
    %v7227 = vunpack.c.l.b16 %v6900
    %v7228 = vunpack.c.h.b16 %v6900
    %v7229 = vunpack.c.l.b16 %v6901
    %v7230 = vunpack.c.h.b16 %v6901
    %v7231 = vunpack.c.l.b16 %v6902
    %v7232 = vunpack.c.h.b16 %v6902
    %v7233 = vunpack.c.l.b16 %v6903
    %v7234 = vunpack.c.h.b16 %v6903
    %v7235 = vunpack.c.l.b16 %v6904
    %v7236 = vunpack.c.h.b16 %v6904
    %v7237 = vunpack.c.l.b16 %v6905
    %v7238 = vunpack.c.h.b16 %v6905
    %v7239 = vunpack.c.l.b16 %v6906
    %v7240 = vunpack.c.h.b16 %v6906
    %v7241 = vunpack.c.l.b16 %v6907
    %v7242 = vunpack.c.h.b16 %v6907
    %v7243 = vunpack.c.l.b16 %v6908
    %v7244 = vunpack.c.h.b16 %v6908
    %v7245 = vunpack.c.l.b16 %v6909
    %v7246 = vunpack.c.h.b16 %v6909
    %v7247 = vunpack.c.l.b16 %v6910
    %v7248 = vunpack.c.h.b16 %v6910
    %v7249 = vunpack.c.l.b16 %v6911
    %v7250 = vunpack.c.h.b16 %v6911
    %v7251 = vunpack.c.l.b16 %v6912
    %v7252 = vunpack.c.h.b16 %v6912
    %v7253 = vunpack.c.l.b16 %v6913
    %v7254 = vunpack.c.h.b16 %v6913
    %v7255 = vunpack.c.l.b16 %v6914
    %v7256 = vunpack.c.h.b16 %v6914
    %v7257 = vunpack.c.l.b16 %v6915
    %v7258 = vunpack.c.h.b16 %v6915
    %v7259 = vunpack.c.l.b16 %v6916
    %v7260 = vunpack.c.h.b16 %v6916
    %v7261 = vunpack.c.l.b16 %v6917
    %v7262 = vunpack.c.h.b16 %v6917
    %v7263 = vunpack.c.l.b16 %v6918
    %v7264 = vunpack.c.h.b16 %v6918
    %v7265 = vunpack.c.l.b16 %v6919
    %v7266 = vunpack.c.h.b16 %v6919
    %v7267 = vunpack.c.l.b16 %v6920
    %v7268 = vunpack.c.h.b16 %v6920
    %v7269 = vunpack.c.l.b16 %v6921
    %v7270 = vunpack.c.h.b16 %v6921
    %v7271 = vunpack.c.l.b16 %v6922
    %v7272 = vunpack.c.h.b16 %v6922
    %v7273 = vunpack.c.l.b16 %v6923
    %v7274 = vunpack.c.h.b16 %v6923
    %v7275 = vunpack.c.l.b16 %v6924
    %v7276 = vunpack.c.h.b16 %v6924
    %v7277 = vunpack.c.l.b16 %v6925
    %v7278 = vunpack.c.h.b16 %v6925
    %v7279 = vunpack.c.l.b16 %v6926
    %v7280 = vunpack.c.h.b16 %v6926
    %v7281 = vunpack.c.l.b16 %v6927
    %v7282 = vunpack.c.h.b16 %v6927
    %v7283 = vunpack.c.l.b16 %v6928
    %v7284 = vunpack.c.h.b16 %v6928
    %v7285 = vunpack.c.l.b16 %v6929
    %v7286 = vunpack.c.h.b16 %v6929
    %v7287 = vunpack.c.l.b16 %v6930
    %v7288 = vunpack.c.h.b16 %v6930
    %v7289 = vunpack.c.l.b16 %v6931
    %v7290 = vunpack.c.h.b16 %v6931
    %v7291 = vunpack.c.l.b16 %v6932
    %v7292 = vunpack.c.h.b16 %v6932
    %v7293 = vunpack.c.l.b16 %v6933
    %v7294 = vunpack.c.h.b16 %v6933
    %v7295 = vunpack.c.l.b16 %v6934
    %v7296 = vunpack.c.h.b16 %v6934
    %v7297 = vunpack.c.l.b16 %v6935
    %v7298 = vunpack.c.h.b16 %v6935
    %v7299 = vunpack.c.l.b16 %v6936
    %v7300 = vunpack.c.h.b16 %v6936
    %v7301 = vunpack.c.l.b16 %v6937
    %v7302 = vunpack.c.h.b16 %v6937
    %v7303 = vunpack.c.l.b16 %v6938
    %v7304 = vunpack.c.h.b16 %v6938
    %v7305 = vunpack.c.l.b16 %v6939
    %v7306 = vunpack.c.h.b16 %v6939
    %v7307 = vunpack.c.l.b16 %v6940
    %v7308 = vunpack.c.h.b16 %v6940
    %v7309 = vunpack.c.l.b16 %v6941
    %v7310 = vunpack.c.h.b16 %v6941
    %v7311 = vunpack.c.l.b16 %v6942
    %v7312 = vunpack.c.h.b16 %v6942
    %v7313 = vunpack.c.l.b16 %v6943
    %v7314 = vunpack.c.h.b16 %v6943
    %v7315 = vunpack.c.l.b16 %v6944
    %v7316 = vunpack.c.h.b16 %v6944
    %v7317 = vunpack.c.l.b16 %v6945
    %v7318 = vunpack.c.h.b16 %v6945
    %v7319 = vunpack.c.l.b16 %v6946
    %v7320 = vunpack.c.h.b16 %v6946
    %v7321 = vunpack.c.l.b16 %v6947
    %v7322 = vunpack.c.h.b16 %v6947
    %v7323 = vunpack.c.l.b16 %v6948
    %v7324 = vunpack.c.h.b16 %v6948
    %v7325 = vunpack.c.l.b16 %v6949
    %v7326 = vunpack.c.h.b16 %v6949
    %v7327 = vunpack.c.l.b16 %v6950
    %v7328 = vunpack.c.h.b16 %v6950
    %v7329 = vunpack.c.l.b16 %v6951
    %v7330 = vunpack.c.h.b16 %v6951
    %v7331 = vunpack.c.l.b16 %v6952
    %v7332 = vunpack.c.h.b16 %v6952
    %v7333 = vunpack.c.l.b16 %v6953
    %v7334 = vunpack.c.h.b16 %v6953
    %v7335 = vunpack.c.l.b16 %v6954
    %v7336 = vunpack.c.h.b16 %v6954
    %v7337 = vunpack.c.l.b16 %v6955
    %v7338 = vunpack.c.h.b16 %v6955
    %v7339 = vunpack.c.l.b16 %v6956
    %v7340 = vunpack.c.h.b16 %v6956
    %v7341 = vunpack.c.l.b16 %v6957
    %v7342 = vunpack.c.h.b16 %v6957
    %v7343 = vunpack.c.l.b16 %v6958
    %v7344 = vunpack.c.h.b16 %v6958
    %v7345 = vunpack.c.l.b16 %v6959
    %v7346 = vunpack.c.h.b16 %v6959
    %v7347 = vunpack.c.l.b16 %v6960
    %v7348 = vunpack.c.h.b16 %v6960
    %v7349 = vunpack.c.l.b16 %v6961
    %v7350 = vunpack.c.h.b16 %v6961
    %v7351 = vunpack.c.l.b16 %v6962
    %v7352 = vunpack.c.h.b16 %v6962
    %v7353 = vunpack.c.l.b16 %v6963
    %v7354 = vunpack.c.h.b16 %v6963
    %v7355 = vunpack.c.l.b16 %v6964
    %v7356 = vunpack.c.h.b16 %v6964
    %v7357 = vunpack.c.l.b16 %v6965
    %v7358 = vunpack.c.h.b16 %v6965
    %v7359 = vunpack.c.l.b16 %v6966
    %v7360 = vunpack.c.h.b16 %v6966
    %v7361 = vunpack.c.l.b16 %v6967
    %v7362 = vunpack.c.h.b16 %v6967
    %v7363 = vunpack.c.l.b16 %v6968
    %v7364 = vunpack.c.h.b16 %v6968
    %v7365 = vunpack.c.l.b16 %v6969
    %v7366 = vunpack.c.h.b16 %v6969
    %v7367 = vunpack.c.l.b16 %v6970
    %v7368 = vunpack.c.h.b16 %v6970
    %v7369 = vunpack.c.l.b16 %v6971
    %v7370 = vunpack.c.h.b16 %v6971
    %v7371 = vunpack.c.l.b16 %v6972
    %v7372 = vunpack.c.h.b16 %v6972
    %v7373 = vunpack.c.l.b16 %v6973
    %v7374 = vunpack.c.h.b16 %v6973
    %v7375 = vunpack.c.l.b16 %v6974
    %v7376 = vunpack.c.h.b16 %v6974
    %v7377 = vunpack.c.l.b16 %v6975
    %v7378 = vunpack.c.h.b16 %v6975
    %v7379 = vunpack.c.l.b16 %v6976
    %v7380 = vunpack.c.h.b16 %v6976
    %v7381 = vunpack.c.l.b16 %v6977
    %v7382 = vunpack.c.h.b16 %v6977
    %v7383 = vunpack.c.l.b16 %v6978
    %v7384 = vunpack.c.h.b16 %v6978
    %v7385 = vunpack.c.l.b16 %v6979
    %v7386 = vunpack.c.h.b16 %v6979
    %v7387 = vunpack.c.l.b16 %v6980
    %v7388 = vunpack.c.h.b16 %v6980
    %v7389 = vunpack.c.l.b16 %v6981
    %v7390 = vunpack.c.h.b16 %v6981
    %v7391 = vunpack.c.l.b16 %v6982
    %v7392 = vunpack.c.h.b16 %v6982
    %v7393 = vunpack.c.l.b16 %v6983
    %v7394 = vunpack.c.h.b16 %v6983
    %v7395 = vunpack.c.l.b16 %v6984
    %v7396 = vunpack.c.h.b16 %v6984
    %v7397 = vunpack.c.l.b16 %v6985
    %v7398 = vunpack.c.h.b16 %v6985
    %v7399 = vunpack.c.l.b16 %v6986
    %v7400 = vunpack.c.h.b16 %v6986
    %v7401 = vunpack.c.l.b16 %v6987
    %v7402 = vunpack.c.h.b16 %v6987
    %v7403 = vunpack.c.l.b16 %v6988
    %v7404 = vunpack.c.h.b16 %v6988
    %v7405 = vunpack.c.l.b16 %v6989
    %v7406 = vunpack.c.h.b16 %v6989
    %v7407 = vunpack.c.l.b16 %v6990
    %v7408 = vunpack.c.h.b16 %v6990
    %v7409 = vunpack.c.l.b16 %v6991
    %v7410 = vunpack.c.h.b16 %v6991
    %v7411 = vunpack.c.l.b16 %v6992
    %v7412 = vunpack.c.h.b16 %v6992
    %v7413 = vunpack.c.l.b16 %v6993
    %v7414 = vunpack.c.h.b16 %v6993
    %v7415 = vunpack.c.l.b16 %v6994
    %v7416 = vunpack.c.h.b16 %v6994
    %v7417 = vunpack.c.l.b16 %v6995
    %v7418 = vunpack.c.h.b16 %v6995
    %v7419 = vunpack.c.l.b16 %v6996
    %v7420 = vunpack.c.h.b16 %v6996
    %v7421 = vunpack.c.l.b16 %v6997
    %v7422 = vunpack.c.h.b16 %v6997
    %v7423 = vunpack.c.l.b16 %v6998
    %v7424 = vunpack.c.h.b16 %v6998
    %v7425 = vunpack.c.l.b16 %v6999
    %v7426 = vunpack.c.h.b16 %v6999
    %v7427 = vunpack.c.l.b16 %v7000
    %v7428 = vunpack.c.h.b16 %v7000
    %v7429 = vunpack.c.l.b16 %v7001
    %v7430 = vunpack.c.h.b16 %v7001
    %v7431 = vunpack.c.l.b16 %v7002
    %v7432 = vunpack.c.h.b16 %v7002
    %v7433 = vunpack.c.l.b16 %v7003
    %v7434 = vunpack.c.h.b16 %v7003
    %v7435 = vunpack.c.l.b16 %v7004
    %v7436 = vunpack.c.h.b16 %v7004
    %v7437 = vunpack.c.l.b16 %v7005
    %v7438 = vunpack.c.h.b16 %v7005
    %v7439 = vunpack.c.l.b16 %v7006
    %v7440 = vunpack.c.h.b16 %v7006
    %v7441 = vunpack.c.l.b16 %v7007
    %v7442 = vunpack.c.h.b16 %v7007
    %v7443 = vunpack.c.l.b16 %v7008
    %v7444 = vunpack.c.h.b16 %v7008
    %v7445 = vunpack.c.l.b16 %v7009
    %v7446 = vunpack.c.h.b16 %v7009
    %v7447 = vunpack.c.l.b16 %v7010
    %v7448 = vunpack.c.h.b16 %v7010
    %v7449 = vunpack.c.l.b16 %v7011
    %v7450 = vunpack.c.h.b16 %v7011
    %v7451 = vunpack.c.l.b16 %v7012
    %v7452 = vunpack.c.h.b16 %v7012
    %v7453 = vunpack.c.l.b16 %v7013
    %v7454 = vunpack.c.h.b16 %v7013
    %v7455 = vunpack.c.l.b16 %v7014
    %v7456 = vunpack.c.h.b16 %v7014
    %v7457 = vunpack.c.l.b16 %v7015
    %v7458 = vunpack.c.h.b16 %v7015
    %v7459 = vunpack.c.l.b16 %v7016
    %v7460 = vunpack.c.h.b16 %v7016
    %v7461 = vunpack.c.l.b16 %v7017
    %v7462 = vunpack.c.h.b16 %v7017
    %v7463 = vunpack.c.l.b16 %v7018
    %v7464 = vunpack.c.h.b16 %v7018
    %v7465 = vunpack.c.l.b16 %v7019
    %v7466 = vunpack.c.h.b16 %v7019
    %v7467 = vunpack.c.l.b16 %v7020
    %v7468 = vunpack.c.h.b16 %v7020
    %v7469 = vpack.c.b16 %v7217, %v7213
    %v7470 = vpack.c.b16 %v7218, %v7214
    %v7471 = vpack.c.b16 %v7219, %v7215
    %v7472 = vpack.c.b16 %v7220, %v7216
    %v7473 = vpack.c.b16 %v7225, %v7221
    %v7474 = vpack.c.b16 %v7226, %v7222
    %v7475 = vpack.c.b16 %v7227, %v7223
    %v7476 = vpack.c.b16 %v7228, %v7224
    %v7477 = vpack.c.b16 %v7233, %v7229
    %v7478 = vpack.c.b16 %v7234, %v7230
    %v7479 = vpack.c.b16 %v7235, %v7231
    %v7480 = vpack.c.b16 %v7236, %v7232
    %v7481 = vpack.c.b16 %v7241, %v7237
    %v7482 = vpack.c.b16 %v7242, %v7238
    %v7483 = vpack.c.b16 %v7243, %v7239
    %v7484 = vpack.c.b16 %v7244, %v7240
    %v7485 = vpack.c.b16 %v7249, %v7245
    %v7486 = vpack.c.b16 %v7250, %v7246
    %v7487 = vpack.c.b16 %v7251, %v7247
    %v7488 = vpack.c.b16 %v7252, %v7248
    %v7489 = vpack.c.b16 %v7257, %v7253
    %v7490 = vpack.c.b16 %v7258, %v7254
    %v7491 = vpack.c.b16 %v7259, %v7255
    %v7492 = vpack.c.b16 %v7260, %v7256
    %v7493 = vpack.c.b16 %v7265, %v7261
    %v7494 = vpack.c.b16 %v7266, %v7262
    %v7495 = vpack.c.b16 %v7267, %v7263
    %v7496 = vpack.c.b16 %v7268, %v7264
    %v7497 = vpack.c.b16 %v7273, %v7269
    %v7498 = vpack.c.b16 %v7274, %v7270
    %v7499 = vpack.c.b16 %v7275, %v7271
    %v7500 = vpack.c.b16 %v7276, %v7272
    %v7501 = vpack.c.b16 %v7281, %v7277
    %v7502 = vpack.c.b16 %v7282, %v7278
    %v7503 = vpack.c.b16 %v7283, %v7279
    %v7504 = vpack.c.b16 %v7284, %v7280
    %v7505 = vpack.c.b16 %v7289, %v7285
    %v7506 = vpack.c.b16 %v7290, %v7286
    %v7507 = vpack.c.b16 %v7291, %v7287
    %v7508 = vpack.c.b16 %v7292, %v7288
    %v7509 = vpack.c.b16 %v7297, %v7293
    %v7510 = vpack.c.b16 %v7298, %v7294
    %v7511 = vpack.c.b16 %v7299, %v7295
    %v7512 = vpack.c.b16 %v7300, %v7296
    %v7513 = vpack.c.b16 %v7305, %v7301
    %v7514 = vpack.c.b16 %v7306, %v7302
    %v7515 = vpack.c.b16 %v7307, %v7303
    %v7516 = vpack.c.b16 %v7308, %v7304
    %v7517 = vpack.c.b16 %v7313, %v7309
    %v7518 = vpack.c.b16 %v7314, %v7310
    %v7519 = vpack.c.b16 %v7315, %v7311
    %v7520 = vpack.c.b16 %v7316, %v7312
    %v7521 = vpack.c.b16 %v7321, %v7317
    %v7522 = vpack.c.b16 %v7322, %v7318
    %v7523 = vpack.c.b16 %v7323, %v7319
    %v7524 = vpack.c.b16 %v7324, %v7320
    %v7525 = vpack.c.b16 %v7329, %v7325
    %v7526 = vpack.c.b16 %v7330, %v7326
    %v7527 = vpack.c.b16 %v7331, %v7327
    %v7528 = vpack.c.b16 %v7332, %v7328
    %v7529 = vpack.c.b16 %v7337, %v7333
    %v7530 = vpack.c.b16 %v7338, %v7334
    %v7531 = vpack.c.b16 %v7339, %v7335
    %v7532 = vpack.c.b16 %v7340, %v7336
    %v7533 = vpack.c.b16 %v7345, %v7341
    %v7534 = vpack.c.b16 %v7346, %v7342
    %v7535 = vpack.c.b16 %v7347, %v7343
    %v7536 = vpack.c.b16 %v7348, %v7344
    %v7537 = vpack.c.b16 %v7353, %v7349
    %v7538 = vpack.c.b16 %v7354, %v7350
    %v7539 = vpack.c.b16 %v7355, %v7351
    %v7540 = vpack.c.b16 %v7356, %v7352
    %v7541 = vpack.c.b16 %v7361, %v7357
    %v7542 = vpack.c.b16 %v7362, %v7358
    %v7543 = vpack.c.b16 %v7363, %v7359
    %v7544 = vpack.c.b16 %v7364, %v7360
    %v7545 = vpack.c.b16 %v7369, %v7365
    %v7546 = vpack.c.b16 %v7370, %v7366
    %v7547 = vpack.c.b16 %v7371, %v7367
    %v7548 = vpack.c.b16 %v7372, %v7368
    %v7549 = vpack.c.b16 %v7377, %v7373
    %v7550 = vpack.c.b16 %v7378, %v7374
    %v7551 = vpack.c.b16 %v7379, %v7375
    %v7552 = vpack.c.b16 %v7380, %v7376
    %v7553 = vpack.c.b16 %v7385, %v7381
    %v7554 = vpack.c.b16 %v7386, %v7382
    %v7555 = vpack.c.b16 %v7387, %v7383
    %v7556 = vpack.c.b16 %v7388, %v7384
    %v7557 = vpack.c.b16 %v7393, %v7389
    %v7558 = vpack.c.b16 %v7394, %v7390
    %v7559 = vpack.c.b16 %v7395, %v7391
    %v7560 = vpack.c.b16 %v7396, %v7392
    %v7561 = vpack.c.b16 %v7401, %v7397
    %v7562 = vpack.c.b16 %v7402, %v7398
    %v7563 = vpack.c.b16 %v7403, %v7399
    %v7564 = vpack.c.b16 %v7404, %v7400
    %v7565 = vpack.c.b16 %v7409, %v7405
    %v7566 = vpack.c.b16 %v7410, %v7406
    %v7567 = vpack.c.b16 %v7411, %v7407
    %v7568 = vpack.c.b16 %v7412, %v7408
    %v7569 = vpack.c.b16 %v7417, %v7413
    %v7570 = vpack.c.b16 %v7418, %v7414
    %v7571 = vpack.c.b16 %v7419, %v7415
    %v7572 = vpack.c.b16 %v7420, %v7416
    %v7573 = vpack.c.b16 %v7425, %v7421
    %v7574 = vpack.c.b16 %v7426, %v7422
    %v7575 = vpack.c.b16 %v7427, %v7423
    %v7576 = vpack.c.b16 %v7428, %v7424
    %v7577 = vpack.c.b16 %v7433, %v7429
    %v7578 = vpack.c.b16 %v7434, %v7430
    %v7579 = vpack.c.b16 %v7435, %v7431
    %v7580 = vpack.c.b16 %v7436, %v7432
    %v7581 = vpack.c.b16 %v7441, %v7437
    %v7582 = vpack.c.b16 %v7442, %v7438
    %v7583 = vpack.c.b16 %v7443, %v7439
    %v7584 = vpack.c.b16 %v7444, %v7440
    %v7585 = vpack.c.b16 %v7449, %v7445
    %v7586 = vpack.c.b16 %v7450, %v7446
    %v7587 = vpack.c.b16 %v7451, %v7447
    %v7588 = vpack.c.b16 %v7452, %v7448
    %v7589 = vpack.c.b16 %v7457, %v7453
    %v7590 = vpack.c.b16 %v7458, %v7454
    %v7591 = vpack.c.b16 %v7459, %v7455
    %v7592 = vpack.c.b16 %v7460, %v7456
    %v7593 = vpack.c.b16 %v7465, %v7461
    %v7594 = vpack.c.b16 %v7466, %v7462
    %v7595 = vpack.c.b16 %v7467, %v7463
    %v7596 = vpack.c.b16 %v7468, %v7464
    %7725 = vmatprep.subr.bf16.mxu0 %v7470
    %7726 = vmatpush1.bf16.msra.mxu0 %v7469
    %7727 = vmatprep.subr.bf16.mxu0 %v7474
    %7728 = vmatpush1.bf16.msra.mxu0 %v7473
    %7729 = vmatprep.subr.bf16.mxu0 %v7478
    %7730 = vmatpush1.bf16.msra.mxu0 %v7477
    %7731 = vmatprep.subr.bf16.mxu0 %v7482
    %7732 = vmatpush1.bf16.msra.mxu0 %v7481
    %7733 = vmatprep.subr.bf16.mxu0 %v7486
    %7734 = vmatpush1.bf16.msra.mxu0 %v7485
    %7735 = vmatprep.subr.bf16.mxu0 %v7490
    %7736 = vmatpush1.bf16.msra.mxu0 %v7489
    %7737 = vmatprep.subr.bf16.mxu0 %v7494
    %7738 = vmatpush1.bf16.msra.mxu0 %v7493
    %7739 = vmatprep.subr.bf16.mxu0 %v7498
    %7740 = vmatpush1.bf16.msra.mxu0 %v7497
    %7741 = vmatprep.subr.bf16.mxu0 %v7502
    %7742 = vmatpush1.bf16.msra.mxu0 %v7501
    %7743 = vmatprep.subr.bf16.mxu0 %v7506
    %7744 = vmatpush1.bf16.msra.mxu0 %v7505
    %7745 = vmatprep.subr.bf16.mxu0 %v7510
    %7746 = vmatpush1.bf16.msra.mxu0 %v7509
    %7747 = vmatprep.subr.bf16.mxu0 %v7514
    %7748 = vmatpush1.bf16.msra.mxu0 %v7513
    %7749 = vmatprep.subr.bf16.mxu0 %v7518
    %7750 = vmatpush1.bf16.msra.mxu0 %v7517
    %7751 = vmatprep.subr.bf16.mxu0 %v7522
    %7752 = vmatpush1.bf16.msra.mxu0 %v7521
    %7753 = vmatprep.subr.bf16.mxu0 %v7526
    %7754 = vmatpush1.bf16.msra.mxu0 %v7525
    %7755 = vmatprep.subr.bf16.mxu0 %v7530
    %7756 = vmatpush1.bf16.msra.mxu0 %v7529
    %7757 = vmatprep.mubr.bf16.mxu0 %v7054
    %7758 = vmatmul.mubr.bf16.gmra.mrb[0].mxu0 %v7053
    %v7759 = vpop.f32.mrb[0].mxu0
    %v7760 = vadd.f32 0.0, %v7759
    %v7761 = vpop.f32.mrb[0].mxu0
    %v7762 = vadd.f32 0.0, %v7761
    %v7763 = vpop.f32.mrb[0].mxu0
    %v7764 = vadd.f32 0.0, %v7763
    %v7765 = vpop.f32.mrb[0].mxu0
    %v7766 = vadd.f32 0.0, %v7765
    %7767 = vmatprep.mubr.bf16.mxu0 %v7058
    %7768 = vmatmul.mubr.bf16.gmra.mrb[0].mxu0 %v7057
    %v7769 = vpop.f32.mrb[0].mxu0
    %v7770 = vadd.f32 0.0, %v7769
    %v7771 = vpop.f32.mrb[0].mxu0
    %v7772 = vadd.f32 0.0, %v7771
    %v7773 = vpop.f32.mrb[0].mxu0
    %v7774 = vadd.f32 0.0, %v7773
    %v7775 = vpop.f32.mrb[0].mxu0
    %v7776 = vadd.f32 0.0, %v7775
    %7777 = vmatprep.mubr.bf16.mxu0 %v7062
    %7778 = vmatmul.mubr.bf16.gmra.mrb[0].mxu0 %v7061
    %v7779 = vpop.f32.mrb[0].mxu0
    %v7780 = vadd.f32 0.0, %v7779
    %v7781 = vpop.f32.mrb[0].mxu0
    %v7782 = vadd.f32 0.0, %v7781
    %v7783 = vpop.f32.mrb[0].mxu0
    %v7784 = vadd.f32 0.0, %v7783
    %v7785 = vpop.f32.mrb[0].mxu0
    %v7786 = vadd.f32 0.0, %v7785
    %7787 = vmatprep.mubr.bf16.mxu0 %v7066
    %7788 = vmatmul.mubr.bf16.gmra.mrb[0].mxu0 %v7065
    %v7789 = vpop.f32.mrb[0].mxu0
    %v7790 = vadd.f32 0.0, %v7789
    %v7791 = vpop.f32.mrb[0].mxu0
    %v7792 = vadd.f32 0.0, %v7791
    %v7793 = vpop.f32.mrb[0].mxu0
    %v7794 = vadd.f32 0.0, %v7793
    %v7795 = vpop.f32.mrb[0].mxu0
    %v7796 = vadd.f32 0.0, %v7795
    %7797 = vdwg.mxu0
    %7798 = vmatprep.subr.bf16.mxu0 %v7534
    %7799 = vmatpush1.bf16.msra.mxu0 %v7533
    %7800 = vmatprep.subr.bf16.mxu0 %v7538
    %7801 = vmatpush1.bf16.msra.mxu0 %v7537
    %7802 = vmatprep.subr.bf16.mxu0 %v7542
    %7803 = vmatpush1.bf16.msra.mxu0 %v7541
    %7804 = vmatprep.subr.bf16.mxu0 %v7546
    %7805 = vmatpush1.bf16.msra.mxu0 %v7545
    %7806 = vmatprep.subr.bf16.mxu0 %v7550
    %7807 = vmatpush1.bf16.msra.mxu0 %v7549
    %7808 = vmatprep.subr.bf16.mxu0 %v7554
    %7809 = vmatpush1.bf16.msra.mxu0 %v7553
    %7810 = vmatprep.subr.bf16.mxu0 %v7558
    %7811 = vmatpush1.bf16.msra.mxu0 %v7557
    %7812 = vmatprep.subr.bf16.mxu0 %v7562
    %7813 = vmatpush1.bf16.msra.mxu0 %v7561
    %7814 = vmatprep.subr.bf16.mxu0 %v7566
    %7815 = vmatpush1.bf16.msra.mxu0 %v7565
    %7816 = vmatprep.subr.bf16.mxu0 %v7570
    %7817 = vmatpush1.bf16.msra.mxu0 %v7569
    %7818 = vmatprep.subr.bf16.mxu0 %v7574
    %7819 = vmatpush1.bf16.msra.mxu0 %v7573
    %7820 = vmatprep.subr.bf16.mxu0 %v7578
    %7821 = vmatpush1.bf16.msra.mxu0 %v7577
    %7822 = vmatprep.subr.bf16.mxu0 %v7582
    %7823 = vmatpush1.bf16.msra.mxu0 %v7581
    %7824 = vmatprep.subr.bf16.mxu0 %v7586
    %7825 = vmatpush1.bf16.msra.mxu0 %v7585
    %7826 = vmatprep.subr.bf16.mxu0 %v7590
    %7827 = vmatpush1.bf16.msra.mxu0 %v7589
    %7828 = vmatprep.subr.bf16.mxu0 %v7594
    %7829 = vmatpush1.bf16.msra.mxu0 %v7593
    %7830 = vmatprep.mubr.bf16.mxu0 %v7056
    %7831 = vmatmul.mubr.bf16.gmra.mrb[0].mxu0 %v7055
    %v7832 = vpop.f32.mrb[0].mxu0
    %v7833 = vadd.f32 %v7760, %v7832
    %v7834 = vpop.f32.mrb[0].mxu0
    %v7835 = vadd.f32 %v7762, %v7834
    %v7836 = vpop.f32.mrb[0].mxu0
    %v7837 = vadd.f32 %v7764, %v7836
    %v7838 = vpop.f32.mrb[0].mxu0
    %v7839 = vadd.f32 %v7766, %v7838
    %7840 = vmatprep.mubr.bf16.mxu0 %v7060
    %7841 = vmatmul.mubr.bf16.gmra.mrb[0].mxu0 %v7059
    %v7842 = vpop.f32.mrb[0].mxu0
    %v7843 = vadd.f32 %v7770, %v7842
    %v7844 = vpop.f32.mrb[0].mxu0
    %v7845 = vadd.f32 %v7772, %v7844
    %v7846 = vpop.f32.mrb[0].mxu0
    %v7847 = vadd.f32 %v7774, %v7846
    %v7848 = vpop.f32.mrb[0].mxu0
    %v7849 = vadd.f32 %v7776, %v7848
    %7850 = vmatprep.mubr.bf16.mxu0 %v7064
    %7851 = vmatmul.mubr.bf16.gmra.mrb[0].mxu0 %v7063
    %v7852 = vpop.f32.mrb[0].mxu0
    %v7853 = vadd.f32 %v7780, %v7852
    %v7854 = vpop.f32.mrb[0].mxu0
    %v7855 = vadd.f32 %v7782, %v7854
    %v7856 = vpop.f32.mrb[0].mxu0
    %v7857 = vadd.f32 %v7784, %v7856
    %v7858 = vpop.f32.mrb[0].mxu0
    %v7859 = vadd.f32 %v7786, %v7858
    %7860 = vmatprep.mubr.bf16.mxu0 %v7068
    %7861 = vmatmul.mubr.bf16.gmra.mrb[0].mxu0 %v7067
    %v7862 = vpop.f32.mrb[0].mxu0
    %v7863 = vadd.f32 %v7790, %v7862
    %v7864 = vpop.f32.mrb[0].mxu0
    %v7865 = vadd.f32 %v7792, %v7864
    %v7866 = vpop.f32.mrb[0].mxu0
    %v7867 = vadd.f32 %v7794, %v7866
    %v7868 = vpop.f32.mrb[0].mxu0
    %v7869 = vadd.f32 %v7796, %v7868
    %7870 = vdwg.mxu0
    %7871 = vmatprep.subr.bf16.mxu0 %v7472
    %7872 = vmatpush1.bf16.msra.mxu0 %v7471
    %7873 = vmatprep.subr.bf16.mxu0 %v7476
    %7874 = vmatpush1.bf16.msra.mxu0 %v7475
    %7875 = vmatprep.subr.bf16.mxu0 %v7480
    %7876 = vmatpush1.bf16.msra.mxu0 %v7479
    %7877 = vmatprep.subr.bf16.mxu0 %v7484
    %7878 = vmatpush1.bf16.msra.mxu0 %v7483
    %7879 = vmatprep.subr.bf16.mxu0 %v7488
    %7880 = vmatpush1.bf16.msra.mxu0 %v7487
    %7881 = vmatprep.subr.bf16.mxu0 %v7492
    %7882 = vmatpush1.bf16.msra.mxu0 %v7491
    %7883 = vmatprep.subr.bf16.mxu0 %v7496
    %7884 = vmatpush1.bf16.msra.mxu0 %v7495
    %7885 = vmatprep.subr.bf16.mxu0 %v7500
    %7886 = vmatpush1.bf16.msra.mxu0 %v7499
    %7887 = vmatprep.subr.bf16.mxu0 %v7504
    %7888 = vmatpush1.bf16.msra.mxu0 %v7503
    %7889 = vmatprep.subr.bf16.mxu0 %v7508
    %7890 = vmatpush1.bf16.msra.mxu0 %v7507
    %7891 = vmatprep.subr.bf16.mxu0 %v7512
    %7892 = vmatpush1.bf16.msra.mxu0 %v7511
    %7893 = vmatprep.subr.bf16.mxu0 %v7516
    %7894 = vmatpush1.bf16.msra.mxu0 %v7515
    %7895 = vmatprep.subr.bf16.mxu0 %v7520
    %7896 = vmatpush1.bf16.msra.mxu0 %v7519
    %7897 = vmatprep.subr.bf16.mxu0 %v7524
    %7898 = vmatpush1.bf16.msra.mxu0 %v7523
    %7899 = vmatprep.subr.bf16.mxu0 %v7528
    %7900 = vmatpush1.bf16.msra.mxu0 %v7527
    %7901 = vmatprep.subr.bf16.mxu0 %v7532
    %7902 = vmatpush1.bf16.msra.mxu0 %v7531
    %7903 = vmatprep.mubr.bf16.mxu0 %v7054
    %7904 = vmatmul.mubr.bf16.gmra.mrb[0].mxu0 %v7053
    %v7905 = vpop.f32.mrb[0].mxu0
    %v7906 = vadd.f32 0.0, %v7905
    %v7907 = vpop.f32.mrb[0].mxu0
    %v7908 = vadd.f32 0.0, %v7907
    %v7909 = vpop.f32.mrb[0].mxu0
    %v7910 = vadd.f32 0.0, %v7909
    %v7911 = vpop.f32.mrb[0].mxu0
    %v7912 = vadd.f32 0.0, %v7911
    %7913 = vmatprep.mubr.bf16.mxu0 %v7058
    %7914 = vmatmul.mubr.bf16.gmra.mrb[0].mxu0 %v7057
    %v7915 = vpop.f32.mrb[0].mxu0
    %v7916 = vadd.f32 0.0, %v7915
    %v7917 = vpop.f32.mrb[0].mxu0
    %v7918 = vadd.f32 0.0, %v7917
    %v7919 = vpop.f32.mrb[0].mxu0
    %v7920 = vadd.f32 0.0, %v7919
    %v7921 = vpop.f32.mrb[0].mxu0
    %v7922 = vadd.f32 0.0, %v7921
    %7923 = vmatprep.mubr.bf16.mxu0 %v7062
    %7924 = vmatmul.mubr.bf16.gmra.mrb[0].mxu0 %v7061
    %v7925 = vpop.f32.mrb[0].mxu0
    %v7926 = vadd.f32 0.0, %v7925
    %v7927 = vpop.f32.mrb[0].mxu0
    %v7928 = vadd.f32 0.0, %v7927
    %v7929 = vpop.f32.mrb[0].mxu0
    %v7930 = vadd.f32 0.0, %v7929
    %v7931 = vpop.f32.mrb[0].mxu0
    %v7932 = vadd.f32 0.0, %v7931
    %7933 = vmatprep.mubr.bf16.mxu0 %v7066
    %7934 = vmatmul.mubr.bf16.gmra.mrb[0].mxu0 %v7065
    %v7935 = vpop.f32.mrb[0].mxu0
    %v7936 = vadd.f32 0.0, %v7935
    %v7937 = vpop.f32.mrb[0].mxu0
    %v7938 = vadd.f32 0.0, %v7937
    %v7939 = vpop.f32.mrb[0].mxu0
    %v7940 = vadd.f32 0.0, %v7939
    %v7941 = vpop.f32.mrb[0].mxu0
    %v7942 = vadd.f32 0.0, %v7941
    %7943 = vdwg.mxu0
    %7944 = vmatprep.subr.bf16.mxu0 %v7536
    %7945 = vmatpush1.bf16.msra.mxu0 %v7535
    %7946 = vmatprep.subr.bf16.mxu0 %v7540
    %7947 = vmatpush1.bf16.msra.mxu0 %v7539
    %7948 = vmatprep.subr.bf16.mxu0 %v7544
    %7949 = vmatpush1.bf16.msra.mxu0 %v7543
    %7950 = vmatprep.subr.bf16.mxu0 %v7548
    %7951 = vmatpush1.bf16.msra.mxu0 %v7547
    %7952 = vmatprep.subr.bf16.mxu0 %v7552
    %7953 = vmatpush1.bf16.msra.mxu0 %v7551
    %7954 = vmatprep.subr.bf16.mxu0 %v7556
    %7955 = vmatpush1.bf16.msra.mxu0 %v7555
    %7956 = vmatprep.subr.bf16.mxu0 %v7560
    %7957 = vmatpush1.bf16.msra.mxu0 %v7559
    %7958 = vmatprep.subr.bf16.mxu0 %v7564
    %7959 = vmatpush1.bf16.msra.mxu0 %v7563
    %7960 = vmatprep.subr.bf16.mxu0 %v7568
    %7961 = vmatpush1.bf16.msra.mxu0 %v7567
    %7962 = vmatprep.subr.bf16.mxu0 %v7572
    %7963 = vmatpush1.bf16.msra.mxu0 %v7571
    %7964 = vmatprep.subr.bf16.mxu0 %v7576
    %7965 = vmatpush1.bf16.msra.mxu0 %v7575
    %7966 = vmatprep.subr.bf16.mxu0 %v7580
    %7967 = vmatpush1.bf16.msra.mxu0 %v7579
    %7968 = vmatprep.subr.bf16.mxu0 %v7584
    %7969 = vmatpush1.bf16.msra.mxu0 %v7583
    %7970 = vmatprep.subr.bf16.mxu0 %v7588
    %7971 = vmatpush1.bf16.msra.mxu0 %v7587
    %7972 = vmatprep.subr.bf16.mxu0 %v7592
    %7973 = vmatpush1.bf16.msra.mxu0 %v7591
    %7974 = vmatprep.subr.bf16.mxu0 %v7596
    %7975 = vmatpush1.bf16.msra.mxu0 %v7595
    %7976 = vmatprep.mubr.bf16.mxu0 %v7056
    %7977 = vmatmul.mubr.bf16.gmra.mrb[0].mxu0 %v7055
    %v7978 = vpop.f32.mrb[0].mxu0
    %v7979 = vadd.f32 %v7906, %v7978
    %v7980 = vpop.f32.mrb[0].mxu0
    %v7981 = vadd.f32 %v7908, %v7980
    %v7982 = vpop.f32.mrb[0].mxu0
    %v7983 = vadd.f32 %v7910, %v7982
    %v7984 = vpop.f32.mrb[0].mxu0
    %v7985 = vadd.f32 %v7912, %v7984
    %7986 = vmatprep.mubr.bf16.mxu0 %v7060
    %7987 = vmatmul.mubr.bf16.gmra.mrb[0].mxu0 %v7059
    %v7988 = vpop.f32.mrb[0].mxu0
    %v7989 = vadd.f32 %v7916, %v7988
    %v7990 = vpop.f32.mrb[0].mxu0
    %v7991 = vadd.f32 %v7918, %v7990
    %v7992 = vpop.f32.mrb[0].mxu0
    %v7993 = vadd.f32 %v7920, %v7992
    %v7994 = vpop.f32.mrb[0].mxu0
    %v7995 = vadd.f32 %v7922, %v7994
    %7996 = vmatprep.mubr.bf16.mxu0 %v7064
    %7997 = vmatmul.mubr.bf16.gmra.mrb[0].mxu0 %v7063
    %v7998 = vpop.f32.mrb[0].mxu0
    %v7999 = vadd.f32 %v7926, %v7998
    %v8000 = vpop.f32.mrb[0].mxu0
    %v8001 = vadd.f32 %v7928, %v8000
    %v8002 = vpop.f32.mrb[0].mxu0
    %v8003 = vadd.f32 %v7930, %v8002
    %v8004 = vpop.f32.mrb[0].mxu0
    %v8005 = vadd.f32 %v7932, %v8004
    %8006 = vmatprep.mubr.bf16.mxu0 %v7068
    %8007 = vmatmul.mubr.bf16.gmra.mrb[0].mxu0 %v7067
    %v8008 = vpop.f32.mrb[0].mxu0
    %v8009 = vadd.f32 %v7936, %v8008
    %v8010 = vpop.f32.mrb[0].mxu0
    %v8011 = vadd.f32 %v7938, %v8010
    %v8012 = vpop.f32.mrb[0].mxu0
    %v8013 = vadd.f32 %v7940, %v8012
    %v8014 = vpop.f32.mrb[0].mxu0
    %v8015 = vadd.f32 %v7942, %v8014
    %8016 = vdwg.mxu0
    %v8017 = vadd.f32 %v6580, %v7833
    %v8018 = vadd.f32 %v6582, %v7835
    %v8019 = vadd.f32 %v6726, %v7979
    %v8020 = vadd.f32 %v6728, %v7981
    %v8021 = vadd.f32 %v6584, %v7837
    %v8022 = vadd.f32 %v6586, %v7839
    %v8023 = vadd.f32 %v6730, %v7983
    %v8024 = vadd.f32 %v6732, %v7985
    %v8025 = vadd.f32 %v6590, %v7843
    %v8026 = vadd.f32 %v6592, %v7845
    %v8027 = vadd.f32 %v6736, %v7989
    %v8028 = vadd.f32 %v6738, %v7991
    %v8029 = vadd.f32 %v6594, %v7847
    %v8030 = vadd.f32 %v6596, %v7849
    %v8031 = vadd.f32 %v6740, %v7993
    %v8032 = vadd.f32 %v6742, %v7995
    %v8033 = vadd.f32 %v6600, %v7853
    %v8034 = vadd.f32 %v6602, %v7855
    %v8035 = vadd.f32 %v6746, %v7999
    %v8036 = vadd.f32 %v6748, %v8001
    %v8037 = vadd.f32 %v6604, %v7857
    %v8038 = vadd.f32 %v6606, %v7859
    %v8039 = vadd.f32 %v6750, %v8003
    %v8040 = vadd.f32 %v6752, %v8005
    %v8041 = vadd.f32 %v6610, %v7863
    %v8042 = vadd.f32 %v6612, %v7865
    %v8043 = vadd.f32 %v6756, %v8009
    %v8044 = vadd.f32 %v6758, %v8011
    %v8045 = vadd.f32 %v6614, %v7867
    %v8046 = vadd.f32 %v6616, %v7869
    %v8047 = vadd.f32 %v6760, %v8013
    %v8048 = vadd.f32 %v6762, %v8015
    %v8049 = vunpack.c.l.bf16 %v209
    %v8050 = vunpack.c.h.bf16 %v209
    %v8051 = vunpack.c.l.bf16 %v210
    %v8052 = vunpack.c.h.bf16 %v210
    %v8053 = vunpack.c.l.bf16 %v211
    %v8054 = vunpack.c.h.bf16 %v211
    %v8055 = vunpack.c.l.bf16 %v212
    %v8056 = vunpack.c.h.bf16 %v212
    %v8057 = vunpack.c.l.bf16 %v213
    %v8058 = vunpack.c.h.bf16 %v213
    %v8059 = vunpack.c.l.bf16 %v214
    %v8060 = vunpack.c.h.bf16 %v214
    %v8061 = vunpack.c.l.bf16 %v215
    %v8062 = vunpack.c.h.bf16 %v215
    %v8063 = vunpack.c.l.bf16 %v216
    %v8064 = vunpack.c.h.bf16 %v216
    %v8065 = vunpack.c.l.bf16 %v217
    %v8066 = vunpack.c.h.bf16 %v217
    %v8067 = vunpack.c.l.bf16 %v218
    %v8068 = vunpack.c.h.bf16 %v218
    %v8069 = vunpack.c.l.bf16 %v219
    %v8070 = vunpack.c.h.bf16 %v219
    %v8071 = vunpack.c.l.bf16 %v220
    %v8072 = vunpack.c.h.bf16 %v220
    %v8073 = vunpack.c.l.bf16 %v221
    %v8074 = vunpack.c.h.bf16 %v221
    %v8075 = vunpack.c.l.bf16 %v222
    %v8076 = vunpack.c.h.bf16 %v222
    %v8077 = vunpack.c.l.bf16 %v223
    %v8078 = vunpack.c.h.bf16 %v223
    %v8079 = vunpack.c.l.bf16 %v224
    %v8080 = vunpack.c.h.bf16 %v224
    %v8081 = vld [vmem:[#allocation10] sm:$0xf]
    %v8083 = vlaneseq
    %v8084 = vshrl.u32 %v8083, 7
    %v8085 = vsub.s32 0, %v8084
    %v8086 = vrot.slane %v8081, %v8085
    %v8087 = vlaneseq
    %v8088 = vshrl.u32 %v8087, 7
    %v8089 = vsub.s32 1, %v8088
    %v8090 = vrot.slane %v8081, %v8089
    %v8091 = vlaneseq
    %v8092 = vshrl.u32 %v8091, 7
    %v8093 = vsub.s32 2, %v8092
    %v8094 = vrot.slane %v8081, %v8093
    %v8095 = vlaneseq
    %v8096 = vshrl.u32 %v8095, 7
    %v8097 = vsub.s32 3, %v8096
    %v8098 = vrot.slane %v8081, %v8097
    %v8103 = vmul.f32 %v8017, %v8086
    %v8104 = vmul.f32 %v8018, %v8090
    %v8105 = vmul.f32 %v8019, %v8094
    %v8106 = vmul.f32 %v8020, %v8098
    %v8107 = vmul.f32 %v8021, %v8086
    %v8108 = vmul.f32 %v8022, %v8090
    %v8109 = vmul.f32 %v8023, %v8094
    %v8110 = vmul.f32 %v8024, %v8098
    %v8111 = vmul.f32 %v8025, %v8086
    %v8112 = vmul.f32 %v8026, %v8090
    %v8113 = vmul.f32 %v8027, %v8094
    %v8114 = vmul.f32 %v8028, %v8098
    %v8115 = vmul.f32 %v8029, %v8086
    %v8116 = vmul.f32 %v8030, %v8090
    %v8117 = vmul.f32 %v8031, %v8094
    %v8118 = vmul.f32 %v8032, %v8098
    %v8119 = vmul.f32 %v8033, %v8086
    %v8120 = vmul.f32 %v8034, %v8090
    %v8121 = vmul.f32 %v8035, %v8094
    %v8122 = vmul.f32 %v8036, %v8098
    %v8123 = vmul.f32 %v8037, %v8086
    %v8124 = vmul.f32 %v8038, %v8090
    %v8125 = vmul.f32 %v8039, %v8094
    %v8126 = vmul.f32 %v8040, %v8098
    %v8127 = vmul.f32 %v8041, %v8086
    %v8128 = vmul.f32 %v8042, %v8090
    %v8129 = vmul.f32 %v8043, %v8094
    %v8130 = vmul.f32 %v8044, %v8098
    %v8131 = vmul.f32 %v8045, %v8086
    %v8132 = vmul.f32 %v8046, %v8090
    %v8133 = vmul.f32 %v8047, %v8094
    %v8134 = vmul.f32 %v8048, %v8098
    %v8135 = vld [vmem:[#allocation11] sm:$0xf]
    %v8137 = vlaneseq
    %v8138 = vshrl.u32 %v8137, 7
    %v8139 = vsub.s32 0, %v8138
    %v8140 = vrot.slane %v8135, %v8139
    %v8141 = vlaneseq
    %v8142 = vshrl.u32 %v8141, 7
    %v8143 = vsub.s32 1, %v8142
    %v8144 = vrot.slane %v8135, %v8143
    %v8145 = vlaneseq
    %v8146 = vshrl.u32 %v8145, 7
    %v8147 = vsub.s32 2, %v8146
    %v8148 = vrot.slane %v8135, %v8147
    %v8149 = vlaneseq
    %v8150 = vshrl.u32 %v8149, 7
    %v8151 = vsub.s32 3, %v8150
    %v8152 = vrot.slane %v8135, %v8151
    %v8157 = vadd.f32 %v8103, %v8140
    %v8158 = vadd.f32 %v8104, %v8144
    %v8159 = vadd.f32 %v8105, %v8148
    %v8160 = vadd.f32 %v8106, %v8152
    %v8161 = vadd.f32 %v8107, %v8140
    %v8162 = vadd.f32 %v8108, %v8144
    %v8163 = vadd.f32 %v8109, %v8148
    %v8164 = vadd.f32 %v8110, %v8152
    %v8165 = vadd.f32 %v8111, %v8140
    %v8166 = vadd.f32 %v8112, %v8144
    %v8167 = vadd.f32 %v8113, %v8148
    %v8168 = vadd.f32 %v8114, %v8152
    %v8169 = vadd.f32 %v8115, %v8140
    %v8170 = vadd.f32 %v8116, %v8144
    %v8171 = vadd.f32 %v8117, %v8148
    %v8172 = vadd.f32 %v8118, %v8152
    %v8173 = vadd.f32 %v8119, %v8140
    %v8174 = vadd.f32 %v8120, %v8144
    %v8175 = vadd.f32 %v8121, %v8148
    %v8176 = vadd.f32 %v8122, %v8152
    %v8177 = vadd.f32 %v8123, %v8140
    %v8178 = vadd.f32 %v8124, %v8144
    %v8179 = vadd.f32 %v8125, %v8148
    %v8180 = vadd.f32 %v8126, %v8152
    %v8181 = vadd.f32 %v8127, %v8140
    %v8182 = vadd.f32 %v8128, %v8144
    %v8183 = vadd.f32 %v8129, %v8148
    %v8184 = vadd.f32 %v8130, %v8152
    %v8185 = vadd.f32 %v8131, %v8140
    %v8186 = vadd.f32 %v8132, %v8144
    %v8187 = vadd.f32 %v8133, %v8148
    %v8188 = vadd.f32 %v8134, %v8152
    %v8189 = vadd.f32 %v8157, %v8049
    %v8190 = vadd.f32 %v8158, %v8050
    %v8191 = vadd.f32 %v8159, %v8051
    %v8192 = vadd.f32 %v8160, %v8052
    %v8193 = vadd.f32 %v8161, %v8053
    %v8194 = vadd.f32 %v8162, %v8054
    %v8195 = vadd.f32 %v8163, %v8055
    %v8196 = vadd.f32 %v8164, %v8056
    %v8197 = vadd.f32 %v8165, %v8057
    %v8198 = vadd.f32 %v8166, %v8058
    %v8199 = vadd.f32 %v8167, %v8059
    %v8200 = vadd.f32 %v8168, %v8060
    %v8201 = vadd.f32 %v8169, %v8061
    %v8202 = vadd.f32 %v8170, %v8062
    %v8203 = vadd.f32 %v8171, %v8063
    %v8204 = vadd.f32 %v8172, %v8064
    %v8205 = vadd.f32 %v8173, %v8065
    %v8206 = vadd.f32 %v8174, %v8066
    %v8207 = vadd.f32 %v8175, %v8067
    %v8208 = vadd.f32 %v8176, %v8068
    %v8209 = vadd.f32 %v8177, %v8069
    %v8210 = vadd.f32 %v8178, %v8070
    %v8211 = vadd.f32 %v8179, %v8071
    %v8212 = vadd.f32 %v8180, %v8072
    %v8213 = vadd.f32 %v8181, %v8073
    %v8214 = vadd.f32 %v8182, %v8074
    %v8215 = vadd.f32 %v8183, %v8075
    %v8216 = vadd.f32 %v8184, %v8076
    %v8217 = vadd.f32 %v8185, %v8077
    %v8218 = vadd.f32 %v8186, %v8078
    %v8219 = vadd.f32 %v8187, %v8079
    %v8220 = vadd.f32 %v8188, %v8080
    %v8221 = vmax.f32 %v8189, 0.0
    %v8222 = vmax.f32 %v8190, 0.0
    %v8223 = vmax.f32 %v8191, 0.0
    %v8224 = vmax.f32 %v8192, 0.0
    %v8225 = vmax.f32 %v8193, 0.0
    %v8226 = vmax.f32 %v8194, 0.0
    %v8227 = vmax.f32 %v8195, 0.0
    %v8228 = vmax.f32 %v8196, 0.0
    %v8229 = vmax.f32 %v8197, 0.0
    %v8230 = vmax.f32 %v8198, 0.0
    %v8231 = vmax.f32 %v8199, 0.0
    %v8232 = vmax.f32 %v8200, 0.0
    %v8233 = vmax.f32 %v8201, 0.0
    %v8234 = vmax.f32 %v8202, 0.0
    %v8235 = vmax.f32 %v8203, 0.0
    %v8236 = vmax.f32 %v8204, 0.0
    %v8237 = vmax.f32 %v8205, 0.0
    %v8238 = vmax.f32 %v8206, 0.0
    %v8239 = vmax.f32 %v8207, 0.0
    %v8240 = vmax.f32 %v8208, 0.0
    %v8241 = vmax.f32 %v8209, 0.0
    %v8242 = vmax.f32 %v8210, 0.0
    %v8243 = vmax.f32 %v8211, 0.0
    %v8244 = vmax.f32 %v8212, 0.0
    %v8245 = vmax.f32 %v8213, 0.0
    %v8246 = vmax.f32 %v8214, 0.0
    %v8247 = vmax.f32 %v8215, 0.0
    %v8248 = vmax.f32 %v8216, 0.0
    %v8249 = vmax.f32 %v8217, 0.0
    %v8250 = vmax.f32 %v8218, 0.0
    %v8251 = vmax.f32 %v8219, 0.0
    %v8252 = vmax.f32 %v8220, 0.0
    %v8253 = vpack.c.bf16 %v8221, %v8221
    %v8254 = vpack.c.bf16 %v8222, %v8222
    %v8255 = vpack.c.bf16 %v8223, %v8223
    %v8256 = vpack.c.bf16 %v8224, %v8224
    %v8257 = vpack.c.bf16 %v8225, %v8225
    %v8258 = vpack.c.bf16 %v8226, %v8226
    %v8259 = vpack.c.bf16 %v8227, %v8227
    %v8260 = vpack.c.bf16 %v8228, %v8228
    %v8261 = vpack.c.bf16 %v8229, %v8229
    %v8262 = vpack.c.bf16 %v8230, %v8230
    %v8263 = vpack.c.bf16 %v8231, %v8231
    %v8264 = vpack.c.bf16 %v8232, %v8232
    %v8265 = vpack.c.bf16 %v8233, %v8233
    %v8266 = vpack.c.bf16 %v8234, %v8234
    %v8267 = vpack.c.bf16 %v8235, %v8235
    %v8268 = vpack.c.bf16 %v8236, %v8236
    %v8269 = vpack.c.bf16 %v8237, %v8237
    %v8270 = vpack.c.bf16 %v8238, %v8238
    %v8271 = vpack.c.bf16 %v8239, %v8239
    %v8272 = vpack.c.bf16 %v8240, %v8240
    %v8273 = vpack.c.bf16 %v8241, %v8241
    %v8274 = vpack.c.bf16 %v8242, %v8242
    %v8275 = vpack.c.bf16 %v8243, %v8243
    %v8276 = vpack.c.bf16 %v8244, %v8244
    %v8277 = vpack.c.bf16 %v8245, %v8245
    %v8278 = vpack.c.bf16 %v8246, %v8246
    %v8279 = vpack.c.bf16 %v8247, %v8247
    %v8280 = vpack.c.bf16 %v8248, %v8248
    %v8281 = vpack.c.bf16 %v8249, %v8249
    %v8282 = vpack.c.bf16 %v8250, %v8250
    %v8283 = vpack.c.bf16 %v8251, %v8251
    %v8284 = vpack.c.bf16 %v8252, %v8252
    %v8317 = vunpack.c.l.b16 %v8253
    %v8318 = vunpack.c.l.b16 %v8254
    %v8319 = vunpack.c.l.b16 %v8255
    %v8320 = vunpack.c.l.b16 %v8256
    %v8321 = vunpack.c.l.b16 %v8257
    %v8322 = vunpack.c.l.b16 %v8258
    %v8323 = vunpack.c.l.b16 %v8259
    %v8324 = vunpack.c.l.b16 %v8260
    %v8325 = vunpack.c.l.b16 %v8261
    %v8326 = vunpack.c.l.b16 %v8262
    %v8327 = vunpack.c.l.b16 %v8263
    %v8328 = vunpack.c.l.b16 %v8264
    %v8329 = vunpack.c.l.b16 %v8265
    %v8330 = vunpack.c.l.b16 %v8266
    %v8331 = vunpack.c.l.b16 %v8267
    %v8332 = vunpack.c.l.b16 %v8268
    %v8333 = vunpack.c.l.b16 %v8269
    %v8334 = vunpack.c.l.b16 %v8270
    %v8335 = vunpack.c.l.b16 %v8271
    %v8336 = vunpack.c.l.b16 %v8272
    %v8337 = vunpack.c.l.b16 %v8273
    %v8338 = vunpack.c.l.b16 %v8274
    %v8339 = vunpack.c.l.b16 %v8275
    %v8340 = vunpack.c.l.b16 %v8276
    %v8341 = vunpack.c.l.b16 %v8277
    %v8342 = vunpack.c.l.b16 %v8278
    %v8343 = vunpack.c.l.b16 %v8279
    %v8344 = vunpack.c.l.b16 %v8280
    %v8345 = vunpack.c.l.b16 %v8281
    %v8346 = vunpack.c.l.b16 %v8282
    %v8347 = vunpack.c.l.b16 %v8283
    %v8348 = vunpack.c.l.b16 %v8284
    %v8349 = vpack.c.b16 %v8318, %v8317
    %v8350 = vpack.c.b16 %v8320, %v8319
    %v8351 = vpack.c.b16 %v8322, %v8321
    %v8352 = vpack.c.b16 %v8324, %v8323
    %v8353 = vpack.c.b16 %v8326, %v8325
    %v8354 = vpack.c.b16 %v8328, %v8327
    %v8355 = vpack.c.b16 %v8330, %v8329
    %v8356 = vpack.c.b16 %v8332, %v8331
    %v8357 = vpack.c.b16 %v8334, %v8333
    %v8358 = vpack.c.b16 %v8336, %v8335
    %v8359 = vpack.c.b16 %v8338, %v8337
    %v8360 = vpack.c.b16 %v8340, %v8339
    %v8361 = vpack.c.b16 %v8342, %v8341
    %v8362 = vpack.c.b16 %v8344, %v8343
    %v8363 = vpack.c.b16 %v8346, %v8345
    %v8364 = vpack.c.b16 %v8348, %v8347
    %8381 = vst [vmem:[%s7] sm:$0xff] %v8349
    %8382 = vst [vmem:[%s7 + $0x8] sm:$0xff] %v8350
    %8383 = vst [vmem:[%s7 + $0x10] sm:$0xff] %v8351
    %8384 = vst [vmem:[%s7 + $0x18] sm:$0xff] %v8352
    %8385 = vst [vmem:[%s7 + $0x20] sm:$0xff] %v8353
    %8386 = vst [vmem:[%s7 + $0x28] sm:$0xff] %v8354
    %8387 = vst [vmem:[%s7 + $0x30] sm:$0xff] %v8355
    %8388 = vst [vmem:[%s7 + $0x38] sm:$0xff] %v8356
    %8389 = vst [vmem:[%s7 + $0x40] sm:$0xff] %v8357
    %8390 = vst [vmem:[%s7 + $0x48] sm:$0xff] %v8358
    %8391 = vst [vmem:[%s7 + $0x50] sm:$0xff] %v8359
    %8392 = vst [vmem:[%s7 + $0x58] sm:$0xff] %v8360
    %8393 = vst [vmem:[%s7 + $0x60] sm:$0xff] %v8361
    %8394 = vst [vmem:[%s7 + $0x68] sm:$0xff] %v8362
    %8395 = vst [vmem:[%s7 + $0x70] sm:$0xff] %v8363
    %8396 = vst [vmem:[%s7 + $0x78] sm:$0xff] %v8364
    // Predicated region
    $region54: #{resblock_pallas_nchw.1} parent=1 // pred_check
      _
    $region55: #{resblock_pallas_nchw.1} parent=1 // pred_check_branch
      %8398 = sbr.rel (0) target = $region57
    $region56: #{resblock_pallas_nchw.1} parent=1 // pred_region
      _
    $region57: #{resblock_pallas_nchw.1} parent=1 // pred_fallthru
      _
    // Predicated region
    $region58: #{resblock_pallas_nchw.1} parent=1 // pred_check
      _
    $region59: #{resblock_pallas_nchw.1} parent=1 // pred_check_branch
      %8400 = sbr.rel (0) target = $region61
    $region60: #{resblock_pallas_nchw.1} parent=1 // pred_region
      _
    $region61: #{resblock_pallas_nchw.1} parent=1 // pred_fallthru
      _
    %8401 = vsyncpa [#allocation4], 1
    %8402 = vsyncpa [#allocation6], 1
    %8403 = vsyncpa [#allocation9], 1
    %8404 = vsyncpa [#allocation12], 1

</llo_original>
